<compile_context>
chip_gen: v7x
topology: tpu7x:2x2x1
jax: 0.10.0
libtpu: 0.0.40
codegen_flags: <defaults>
</compile_context>

<pallas_src>
import functools
import numpy as np

import jax
import jax.numpy as jnp
from jax import lax
from jax.experimental import pallas as pl
from jax.experimental.pallas import tpu as pltpu

# ----------------------- configuration -----------------------
VOCAB = 100
HIDDEN = 32
NUM_HEADS = 2
NUM_LAYERS = 2
INTERMEDIATE = 64
MAX_POS = 64
NUM_CLASSES = 8          # CRF num_tags
BATCH = 2
SEQ = 8
PAD_ID = 0
GRU_HID = HIDDEN // 2    # per-direction GRU hidden

VMEM_LIMIT = 16 * 1024 * 1024   # modest explicit limit (plenty for <1 MiB resident state)


# ===================== 1) fused BERT encoder =====================
def _encoder_kernel(x_ref, embg_ref, embb_ref, bias_ref,
                    wqkv_ref, bqkv_ref, wo_ref, bo_ref,
                    ln1g_ref, ln1b_ref, w1_ref, b1_ref,
                    w2_ref, b2_ref, ln2g_ref, ln2b_ref,
                    out_ref, *, n_heads):
    S, H = x_ref.shape
    Dh = H // n_heads
    scale = 1.0 / float(np.sqrt(Dh))

    def ln(v, g, b):
        mu = jnp.mean(v, axis=-1, keepdims=True)
        var = jnp.mean(jnp.square(v - mu), axis=-1, keepdims=True)
        return (v - mu) * lax.rsqrt(var + 1e-12) * g + b

    # layer 0: embedding LayerNorm -> out_ref becomes the resident activation slab
    @pl.when(pl.program_id(1) == 0)
    def _():
        out_ref[...] = ln(x_ref[...], embg_ref[...], embb_ref[...])

    x = out_ref[...]                                              # (S, H) resident slab

    # fused QKV projection (one MXU push instead of three)
    qkv = jnp.dot(x, wqkv_ref[...],
                  preferred_element_type=jnp.float32) + bqkv_ref[...]
    q = qkv[:, :H]
    k = qkv[:, H:2 * H]
    v = qkv[:, 2 * H:]

    bias = bias_ref[...]                                          # (1, S) additive mask
    wo = wo_ref[...]

    # per-head attention, accumulated directly into the output projection
    # (no concatenates, no batch loop -- the grid slices the batch).
    attn = None
    for h in range(n_heads):
        c0, c1 = h * Dh, (h + 1) * Dh
        s = lax.dot_general(q[:, c0:c1], k[:, c0:c1], (((1,), (1,)), ((), ())),
                            preferred_element_type=jnp.float32) * scale + bias
        s = s - jnp.max(s, axis=-1, keepdims=True)
        p = jnp.exp(s)
        p = p / jnp.sum(p, axis=-1, keepdims=True)
        ctx = jnp.dot(p, v[:, c0:c1], preferred_element_type=jnp.float32)
        contrib = jnp.dot(ctx, wo[c0:c1, :], preferred_element_type=jnp.float32)
        attn = contrib if attn is None else attn + contrib

    attn_out = attn + bo_ref[...]
    x1 = ln(attn_out + x, ln1g_ref[...], ln1b_ref[...])

    inter = jnp.dot(x1, w1_ref[...],
                    preferred_element_type=jnp.float32) + b1_ref[...]
    inter = 0.5 * inter * (1.0 + lax.erf(inter * 0.7071067811865476))   # exact gelu
    ffn = jnp.dot(inter, w2_ref[...],
                  preferred_element_type=jnp.float32) + b2_ref[...]
    out_ref[...] = ln(ffn + x1, ln2g_ref[...], ln2b_ref[...])


def encoder_forward(x_flat, attn_bias, emb_g, emb_b, enc):
    M = x_flat.shape[0]
    H, I, L, B, S = HIDDEN, INTERMEDIATE, NUM_LAYERS, BATCH, SEQ

    def shared2(r, c):
        return pl.BlockSpec((r, c), lambda b, l: (0, 0))

    def per_layer(r, c):
        return pl.BlockSpec((None, r, c), lambda b, l: (l, 0, 0))

    return pl.pallas_call(
        functools.partial(_encoder_kernel, n_heads=NUM_HEADS),
        grid=(B, L),
        in_specs=[
            pl.BlockSpec((S, H), lambda b, l: (b, 0)),        # embeddings (only read at l==0)
            shared2(1, H), shared2(1, H),                     # embedding LN gamma / beta
            pl.BlockSpec((None, 1, S), lambda b, l: (b, 0, 0)),   # additive attention bias
            per_layer(H, 3 * H), per_layer(1, 3 * H),         # fused Wqkv, bqkv
            per_layer(H, H), per_layer(1, H),                 # Wo, bo
            per_layer(1, H), per_layer(1, H),                 # LN1 gamma / beta
            per_layer(H, I), per_layer(1, I),                 # FFN W1, b1
            per_layer(I, H), per_layer(1, H),                 # FFN W2, b2
            per_layer(1, H), per_layer(1, H),                 # LN2 gamma / beta
        ],
        out_specs=pl.BlockSpec((S, H), lambda b, l: (b, 0)),  # resident across layer axis
        out_shape=jax.ShapeDtypeStruct((M, H), jnp.float32),
        compiler_params=pltpu.CompilerParams(
            dimension_semantics=("parallel", "arbitrary"),
            vmem_limit_bytes=VMEM_LIMIT),
    )(x_flat, emb_g, emb_b, attn_bias,
      enc["wqkv"], enc["bqkv"], enc["wo"], enc["bo"],
      enc["ln1_g"], enc["ln1_b"], enc["w1"], enc["b1"],
      enc["w2"], enc["b2"], enc["ln2_g"], enc["ln2_b"])


# ===================== 2) bidirectional GRU (both directions folded) =====================
def _bigru_kernel(x_ref, wih_ref, bih_ref, whh_ref, bhh_ref, mask_ref,
                  of_ref, ob_ref, gif_scr, gib_scr,
                  *, seq, batch, hid, pad_val):
    x = x_ref[...]                                        # (B*S, H), row = b*seq + t
    # fused 3-gate input projections for all timesteps & both directions (2 MXU matmuls)
    gif_scr[...] = jnp.dot(x, wih_ref[0],
                           preferred_element_type=jnp.float32) + bih_ref[0]
    gib_scr[...] = jnp.dot(x, wih_ref[1],
                           preferred_element_type=jnp.float32) + bih_ref[1]

    # hoist hidden weights / biases out of the serial loop
    whh_f, bhh_f = whh_ref[0], bhh_ref[0]
    whh_b, bhh_b = whh_ref[1], bhh_ref[1]

    def cell(g, gh, h):
        r = jax.nn.sigmoid(g[:, :hid] + gh[:, :hid])
        z = jax.nn.sigmoid(g[:, hid:2 * hid] + gh[:, hid:2 * hid])
        n = jnp.tanh(g[:, 2 * hid:] + r * gh[:, 2 * hid:])
        return (1.0 - z) * n + z * h

    def step(i, carry):
        h_f, h_b = carry
        tb = seq - 1 - i
        # strided gate-row reads (batch-major rows b*seq + t), no time-major scatter
        g_f = gif_scr[pl.ds(i, batch, stride=seq), :]
        g_b = gib_scr[pl.ds(tb, batch, stride=seq), :]
        gh_f = jnp.dot(h_f, whh_f, preferred_element_type=jnp.float32) + bhh_f
        gh_b = jnp.dot(h_b, whh_b, preferred_element_type=jnp.float32) + bhh_b
        m_f = mask_ref[i]                                  # (B, 1)
        m_b = mask_ref[tb]
        hn_f = cell(g_f, gh_f, h_f)
        hn_b = cell(g_b, gh_b, h_b)
        h_f = m_f * hn_f + (1.0 - m_f) * h_f               # pack_padded: freeze state on pads
        h_b = m_b * hn_b + (1.0 - m_b) * h_b
        # time-major flat outputs (row = t*B + b): contiguous per-step VMEM stores,
        # written back to HBM once at the end of the grid.
        of_ref[pl.ds(i * batch, batch), :] = m_f * h_f + (1.0 - m_f) * pad_val
        ob_ref[pl.ds(tb * batch, batch), :] = m_b * h_b + (1.0 - m_b) * pad_val
        return (h_f, h_b)

    h0 = jnp.zeros((batch, hid), jnp.float32)
    lax.fori_loop(0, seq, step, (h0, h0), unroll=True)


def bigru_forward(x_flat, gru, mask_tb, pad_id):
    S, B, Hd, H = SEQ, BATCH, GRU_HID, HIDDEN
    return pl.pallas_call(
        functools.partial(_bigru_kernel, seq=S, batch=B, hid=Hd,
                          pad_val=float(pad_id)),
        grid=(1,),
        in_specs=[
            pl.BlockSpec((B * S, H), lambda i: (0, 0)),
            pl.BlockSpec((2, H, 3 * Hd), lambda i: (0, 0, 0)),
            pl.BlockSpec((2, 1, 3 * Hd), lambda i: (0, 0, 0)),
            pl.BlockSpec((2, Hd, 3 * Hd), lambda i: (0, 0, 0)),
            pl.BlockSpec((2, 1, 3 * Hd), lambda i: (0, 0, 0)),
            pl.BlockSpec((S, B, 1), lambda i: (0, 0, 0)),
        ],
        out_specs=[pl.BlockSpec((S * B, Hd), lambda i: (0, 0)),
                   pl.BlockSpec((S * B, Hd), lambda i: (0, 0))],
        out_shape=(jax.ShapeDtypeStruct((S * B, Hd), jnp.float32),
                   jax.ShapeDtypeStruct((S * B, Hd), jnp.float32)),
        scratch_shapes=[pltpu.VMEM((B * S, 3 * Hd), jnp.float32),
                        pltpu.VMEM((B * S, 3 * Hd), jnp.float32)],
        compiler_params=pltpu.CompilerParams(
            dimension_semantics=("arbitrary",),
            vmem_limit_bytes=VMEM_LIMIT),
    )(x_flat, gru["wih"], gru["bih"], gru["whh"], gru["bhh"], mask_tb)


# ===================== 3) fused CRF (emissions + llh + viterbi fwd) =====================
def _crf_kernel(gxf_ref, gxb_ref, ffw_ref, ffb_ref, trans_ref, start_ref, end_ref,
                mask_ref, tags_ref, llh_ref, vs_ref, hist_ref, em_scr,
                *, seq, batch, num_tags, hid):
    R = seq * batch
    ffw = ffw_ref[...]
    # emissions directly from the two GRU direction slabs (no XLA concat between kernels)
    em = (jnp.dot(gxf_ref[...], ffw[:hid, :], preferred_element_type=jnp.float32)
          + jnp.dot(gxb_ref[...], ffw[hid:, :], preferred_element_type=jnp.float32)
          + ffb_ref[...])                                    # (S*B, K), row = t*B + b
    em_scr[...] = em

    trans = trans_ref[...]            # (K, K)
    start = start_ref[...]            # (1, K)
    end = end_ref[...]                # (1, K)
    m_all = mask_ref[...]             # (S*B, 1)

    iota_k = lax.broadcasted_iota(jnp.int32, (R, num_tags), 1)
    oh_all = (iota_k == tags_ref[...]).astype(jnp.float32)   # (S*B, K) one-hot gold tags

    # ----- numerator (gold-path score), fully hoisted out of the serial chain -----
    rb = (seq - 1) * batch
    start_term = jnp.sum(start * oh_all[:batch, :])
    em_term = jnp.sum(em * oh_all * m_all)                   # mask[0] is all-ones
    trans_term = jnp.sum(
        jnp.dot(oh_all[:rb, :], trans, preferred_element_type=jnp.float32)
        * oh_all[batch:, :] * m_all[batch:, :])
    # last valid timestep per batch (monotone / all-ones mask, as produced by this module)
    m_next = jnp.concatenate(
        [m_all[batch:, :], jnp.zeros((batch, 1), jnp.float32)], axis=0)
    w_last = m_all * (1.0 - m_next)
    end_term = jnp.sum(oh_all * w_last * end)
    numerator = start_term + em_term + trans_term + end_term

    # ----- normalizer (logsumexp) + Viterbi forward recurrences -----
    init = start + em[:batch, :]                             # (B, K)

    def step(t, carry):
        alpha, vit = carry
        em_t = em_scr[pl.ds(t * batch, batch), :]            # (B, K)
        m = mask_ref[pl.ds(t * batch, batch), :]             # (B, 1)
        base = trans[None, :, :] + em_t[:, None, :]          # shared broadcast (B, K, K)

        ns = alpha[:, :, None] + base
        mx = jnp.max(ns, axis=1, keepdims=True)
        lse = jnp.squeeze(mx, 1) + jnp.log(jnp.sum(jnp.exp(ns - mx), axis=1))
        alpha = jnp.where(m > 0.5, lse, alpha)

        vs = vit[:, :, None] + base
        vmax = jnp.max(vs, axis=1)                           # (B, K)
        iota3 = lax.broadcasted_iota(jnp.int32, vs.shape, 1)
        # TODO(synk): argmax tie-break picks the minimum index; torch.max tie behavior may differ.
        idx = jnp.min(jnp.where(vs >= vmax[:, None, :], iota3, num_tags), axis=1)
        hist_ref[t - 1] = idx.astype(jnp.int32)
        vit = jnp.where(m > 0.5, vmax, vit)
        return (alpha, vit)

    alpha, vit = lax.fori_loop(1, seq, step, (init, init), unroll=True)

    alpha_f = alpha + end
    mx = jnp.max(alpha_f, axis=1, keepdims=True)
    denom = jnp.sum(mx + jnp.log(jnp.sum(jnp.exp(alpha_f - mx), axis=1, keepdims=True)))
    llh_ref[0, 0] = numerator - denom                        # scalar llh via SMEM (reduction='sum')
    vs_ref[...] = vit + end


def crf_forward(gru_f, gru_b, params, mask_flat, tags_flat):
    S, B, K, H, Hd = SEQ, BATCH, NUM_CLASSES, HIDDEN, GRU_HID

    def full(shape):
        n = len(shape)
        return pl.BlockSpec(shape, lambda i, _n=n: (0,) * _n)

    llh, vit_score, vit_hist = pl.pallas_call(
        functools.partial(_crf_kernel, seq=S, batch=B, num_tags=K, hid=Hd),
        grid=(1,),
        in_specs=[full((S * B, Hd)), full((S * B, Hd)),
                  full((H, K)), full((1, K)), full((K, K)),
                  full((1, K)), full((1, K)),
                  full((S * B, 1)), full((S * B, 1))],
        out_specs=[pl.BlockSpec(memory_space=pltpu.MemorySpace.SMEM),
                   full((B, K)), full((S - 1, B, K))],
        out_shape=(jax.ShapeDtypeStruct((1, 1), jnp.float32),
                   jax.ShapeDtypeStruct((B, K), jnp.float32),
                   jax.ShapeDtypeStruct((S - 1, B, K), jnp.int32)),
        scratch_shapes=[pltpu.VMEM((S * B, K), jnp.float32)],
        compiler_params=pltpu.CompilerParams(vmem_limit_bytes=VMEM_LIMIT),
    )(gru_f, gru_b, params["ff_w"], params["ff_b"], params["crf_trans"],
      params["crf_start"], params["crf_end"], mask_flat, tags_flat)
    return llh[0, 0], vit_score, vit_hist


# ===================== parameters =====================
def init_params(key):
    keys = iter(jax.random.split(key, 64))

    def nrm(shape):
        return 0.02 * jax.random.normal(next(keys), shape, dtype=jnp.float32)

    def uni(shape, b):
        return jax.random.uniform(next(keys), shape, jnp.float32, -b, b)

    p = {
        "word_emb": nrm((VOCAB, HIDDEN)),
        "pos_emb": nrm((MAX_POS, HIDDEN)),
        "type_emb": nrm((2, HIDDEN)),
        "emb_ln_g": jnp.ones((1, HIDDEN), jnp.float32),
        "emb_ln_b": jnp.zeros((1, HIDDEN), jnp.float32),
    }

    acc = {k: [] for k in ("wqkv", "bqkv", "wo", "bo", "ln1_g", "ln1_b",
                           "w1", "b1", "w2", "b2", "ln2_g", "ln2_b")}
    for _ in range(NUM_LAYERS):
        wq, wk, wv = nrm((HIDDEN, HIDDEN)), nrm((HIDDEN, HIDDEN)), nrm((HIDDEN, HIDDEN))
        acc["wqkv"].append(jnp.concatenate([wq, wk, wv], axis=1))
        acc["bqkv"].append(jnp.zeros((1, 3 * HIDDEN), jnp.float32))
        acc["wo"].append(nrm((HIDDEN, HIDDEN)))
        acc["bo"].append(jnp.zeros((1, HIDDEN), jnp.float32))
        acc["ln1_g"].append(jnp.ones((1, HIDDEN), jnp.float32))
        acc["ln1_b"].append(jnp.zeros((1, HIDDEN), jnp.float32))
        acc["w1"].append(nrm((HIDDEN, INTERMEDIATE)))
        acc["b1"].append(jnp.zeros((1, INTERMEDIATE), jnp.float32))
        acc["w2"].append(nrm((INTERMEDIATE, HIDDEN)))
        acc["b2"].append(jnp.zeros((1, HIDDEN), jnp.float32))
        acc["ln2_g"].append(jnp.ones((1, HIDDEN), jnp.float32))
        acc["ln2_b"].append(jnp.zeros((1, HIDDEN), jnp.float32))
    p["enc"] = {k: jnp.stack(v) for k, v in acc.items()}

    gb = 1.0 / float(np.sqrt(GRU_HID))
    wih, bih, whh, bhh = [], [], [], []
    for _ in range(2):                                   # fwd, bwd
        wih.append(uni((3 * GRU_HID, HIDDEN), gb).T)     # (H, 3*Hd) fused gates r|z|n
        whh.append(uni((3 * GRU_HID, GRU_HID), gb).T)    # (Hd, 3*Hd)
        bih.append(uni((1, 3 * GRU_HID), gb))
        bhh.append(uni((1, 3 * GRU_HID), gb))
    p["gru"] = dict(wih=jnp.stack(wih), bih=jnp.stack(bih),
                    whh=jnp.stack(whh), bhh=jnp.stack(bhh))

    p["ff_w"] = nrm((HIDDEN, NUM_CLASSES))
    p["ff_b"] = jnp.zeros((1, NUM_CLASSES), jnp.float32)
    p["crf_start"] = uni((1, NUM_CLASSES), 0.1)
    p["crf_end"] = uni((1, NUM_CLASSES), 0.1)
    p["crf_trans"] = uni((NUM_CLASSES, NUM_CLASSES), 0.1)
    return p


# ===================== full forward =====================
def kobert_bigru_crf_forward(params, input_ids, token_type_ids, tags, pad_id):
    B, S, H = BATCH, SEQ, HIDDEN

    attn_mask = (input_ids != pad_id).astype(jnp.float32)            # (B, S)
    attn_bias = ((1.0 - attn_mask) * -10000.0).reshape(B, 1, S)      # additive mask bias

    # embeddings (table gathers in plain JAX; embedding LN fused into encoder kernel)
    x = (params["word_emb"][input_ids]
         + params["pos_emb"][jnp.arange(S)][None, :, :]
         + params["type_emb"][token_type_ids])
    x_flat = x.reshape(B * S, H)

    # fused multi-layer encoder (dropout = identity, eval mode)
    enc_out = encoder_forward(x_flat, attn_bias, params["emb_ln_g"],
                              params["emb_ln_b"], params["enc"])      # (B*S, H)

    # BiGRU (pack_padded_sequence emulated via masking); both directions folded into one call
    mask_tb = attn_mask.T.reshape(S, B, 1)
    gru_f, gru_b = bigru_forward(enc_out, params["gru"], mask_tb, pad_id)   # (S*B, Hd) each, time-major

    # CRF: module calls crf(emissions, tags) / crf.decode(emissions) with mask=None -> ones
    tags_flat = tags.T.reshape(S * B, 1).astype(jnp.int32)            # time-major rows t*B+b
    crf_mask_flat = jnp.ones((S * B, 1), jnp.float32)
    llh, vit_score, vit_hist = crf_forward(gru_f, gru_b, params, crf_mask_flat, tags_flat)
    return llh, vit_score, vit_hist


def viterbi_backtrack(vit_score, vit_hist):
    # TODO(synk): data-dependent Python-list backtracking stays on host (matches torch .item() loop).
    score_np = np.asarray(vit_score)
    hist_np = np.asarray(vit_hist)
    B = score_np.shape[0]
    Sm1 = hist_np.shape[0]
    best_tags_list = []
    for b in range(B):
        best = int(np.argmax(score_np[b]))
        tags_b = [best]
        for t in range(Sm1 - 1, -1, -1):
            best = int(hist_np[t, b, best])
            tags_b.append(best)
        tags_b.reverse()
        best_tags_list.append(tags_b)
    return best_tags_list


# ----------------------- main -----------------------
if __name__ == "__main__":
    key = jax.random.PRNGKey(0)
    pkey, ikey, tkey = jax.random.split(key, 3)
    params = init_params(pkey)

    input_ids = jax.random.randint(ikey, (BATCH, SEQ), 2, VOCAB, dtype=jnp.int32)
    input_ids = input_ids.at[1, 6:].set(PAD_ID)             # second sequence has 2 pads
    token_type_ids = jnp.zeros((BATCH, SEQ), jnp.int32)
    tags = jax.random.randint(tkey, (BATCH, SEQ), 0, NUM_CLASSES, dtype=jnp.int32)

    fwd = jax.jit(functools.partial(kobert_bigru_crf_forward, pad_id=PAD_ID))
    llh, vit_score, vit_hist = fwd(params, input_ids, token_type_ids, tags)
    llh = jax.block_until_ready(llh)
    vit_score = jax.block_until_ready(vit_score)
    vit_hist = jax.block_until_ready(vit_hist)

    sequence_of_tags = viterbi_backtrack(vit_score, vit_hist)

    assert np.isfinite(float(llh))
    assert len(sequence_of_tags) == BATCH and all(len(s) == SEQ for s in sequence_of_tags)
    print("KERNEL_OK")
</pallas_src>

<mosaic_0001>
module attributes {stable_mosaic.version = 11 : i64} {
  func.func @_encoder_kernel(%arg0: i32, %arg1: i32, %arg2: memref<8x32xf32, #tpu.memory_space<vmem>>, %arg3: memref<1x32xf32, #tpu.memory_space<vmem>>, %arg4: memref<1x32xf32, #tpu.memory_space<vmem>>, %arg5: memref<1x1x8xf32, #tpu.memory_space<vmem>>, %arg6: memref<1x32x96xf32, #tpu.memory_space<vmem>>, %arg7: memref<1x1x96xf32, #tpu.memory_space<vmem>>, %arg8: memref<1x32x32xf32, #tpu.memory_space<vmem>>, %arg9: memref<1x1x32xf32, #tpu.memory_space<vmem>>, %arg10: memref<1x1x32xf32, #tpu.memory_space<vmem>>, %arg11: memref<1x1x32xf32, #tpu.memory_space<vmem>>, %arg12: memref<1x32x64xf32, #tpu.memory_space<vmem>>, %arg13: memref<1x1x64xf32, #tpu.memory_space<vmem>>, %arg14: memref<1x64x32xf32, #tpu.memory_space<vmem>>, %arg15: memref<1x1x32xf32, #tpu.memory_space<vmem>>, %arg16: memref<1x1x32xf32, #tpu.memory_space<vmem>>, %arg17: memref<1x1x32xf32, #tpu.memory_space<vmem>>, %arg18: memref<8x32xf32, #tpu.memory_space<vmem>>) attributes {dimension_semantics = [#tpu.dimension_semantics<parallel>, #tpu.dimension_semantics<arbitrary>], iteration_bounds = array<i64: 2, 2>, scalar_prefetch = 0 : i64, scratch_operands = 0 : i64, tpu.core_type = #tpu.core_type<tc>, window_params = [{transform_indices = @transform_0, window_bounds = array<i64: 8, 32>}, {pipeline_mode = #tpu.pipeline_mode<synchronous>, transform_indices = @transform_1, window_bounds = array<i64: 1, 32>}, {pipeline_mode = #tpu.pipeline_mode<synchronous>, transform_indices = @transform_2, window_bounds = array<i64: 1, 32>}, {transform_indices = @transform_3, window_bounds = array<i64: 1, 1, 8>}, {transform_indices = @transform_4, window_bounds = array<i64: 1, 32, 96>}, {transform_indices = @transform_5, window_bounds = array<i64: 1, 1, 96>}, {transform_indices = @transform_6, window_bounds = array<i64: 1, 32, 32>}, {transform_indices = @transform_7, window_bounds = array<i64: 1, 1, 32>}, {transform_indices = @transform_8, window_bounds = array<i64: 1, 1, 32>}, {transform_indices = @transform_9, window_bounds = array<i64: 1, 1, 32>}, {transform_indices = @transform_10, window_bounds = array<i64: 1, 32, 64>}, {transform_indices = @transform_11, window_bounds = array<i64: 1, 1, 64>}, {transform_indices = @transform_12, window_bounds = array<i64: 1, 64, 32>}, {transform_indices = @transform_13, window_bounds = array<i64: 1, 1, 32>}, {transform_indices = @transform_14, window_bounds = array<i64: 1, 1, 32>}, {transform_indices = @transform_15, window_bounds = array<i64: 1, 1, 32>}, {transform_indices = @transform_16, window_bounds = array<i64: 8, 32>}]} {
    %c0_i32 = arith.constant 0 : i32
    %0 = arith.cmpi eq, %arg1, %c0_i32 : i32
    %1 = arith.extui %0 : i1 to i32
    %c0_i32_0 = arith.constant 0 : i32
    %2 = arith.cmpi ne, %1, %c0_i32_0 : i32
    scf.if %2 {
      %c0_70 = arith.constant 0 : index
      %c0_71 = arith.constant 0 : index
      %140 = vector.load %arg2[%c0_70, %c0_71] : memref<8x32xf32, #tpu.memory_space<vmem>>, vector<8x32xf32>
      %c0_72 = arith.constant 0 : index
      %c0_73 = arith.constant 0 : index
      %141 = vector.load %arg3[%c0_72, %c0_73] : memref<1x32xf32, #tpu.memory_space<vmem>>, vector<1x32xf32>
      %c0_74 = arith.constant 0 : index
      %c0_75 = arith.constant 0 : index
      %142 = vector.load %arg4[%c0_74, %c0_75] : memref<1x32xf32, #tpu.memory_space<vmem>>, vector<1x32xf32>
      %cst_76 = arith.constant dense<0.000000e+00> : vector<8xf32>
      %143 = vector.multi_reduction <add>, %140, %cst_76 [1] : vector<8x32xf32> to vector<8xf32>
      %144 = vector.shape_cast %143 : vector<8xf32> to vector<8x1xf32>
      %cst_77 = arith.constant 3.200000e+01 : f32
      %145 = vector.broadcast %cst_77 : f32 to vector<8x1xf32>
      %146 = arith.divf %144, %145 : vector<8x1xf32>
      %147 = vector.broadcast %146 : vector<8x1xf32> to vector<8x32xf32>
      %148 = arith.subf %140, %147 : vector<8x32xf32>
      %149 = arith.mulf %148, %148 : vector<8x32xf32>
      %cst_78 = arith.constant dense<0.000000e+00> : vector<8xf32>
      %150 = vector.multi_reduction <add>, %149, %cst_78 [1] : vector<8x32xf32> to vector<8xf32>
      %151 = vector.shape_cast %150 : vector<8xf32> to vector<8x1xf32>
      %cst_79 = arith.constant 3.200000e+01 : f32
      %152 = vector.broadcast %cst_79 : f32 to vector<8x1xf32>
      %153 = arith.divf %151, %152 : vector<8x1xf32>
      %154 = vector.broadcast %146 : vector<8x1xf32> to vector<8x32xf32>
      %155 = arith.subf %140, %154 : vector<8x32xf32>
      %cst_80 = arith.constant 9.99999996E-13 : f32
      %156 = vector.broadcast %cst_80 : f32 to vector<8x1xf32>
      %157 = arith.addf %153, %156 : vector<8x1xf32>
      %158 = math.rsqrt %157 : vector<8x1xf32>
      %159 = vector.broadcast %158 : vector<8x1xf32> to vector<8x32xf32>
      %160 = arith.mulf %155, %159 : vector<8x32xf32>
      %161 = vector.broadcast %141 : vector<1x32xf32> to vector<8x32xf32>
      %162 = arith.mulf %160, %161 : vector<8x32xf32>
      %163 = vector.broadcast %142 : vector<1x32xf32> to vector<8x32xf32>
      %164 = arith.addf %162, %163 : vector<8x32xf32>
      %c0_81 = arith.constant 0 : index
      %c0_82 = arith.constant 0 : index
      %165 = vector.load %arg18[%c0_81, %c0_82] : memref<8x32xf32, #tpu.memory_space<vmem>>, vector<8x32xf32>
      tpu.vector_store %arg18[%c0_81, %c0_82], %164 {strides = array<i32>} : memref<8x32xf32, #tpu.memory_space<vmem>>, vector<8x32xf32>,
    } else {
    }
    %c0 = arith.constant 0 : index
    %c0_1 = arith.constant 0 : index
    %3 = vector.load %arg18[%c0, %c0_1] : memref<8x32xf32, #tpu.memory_space<vmem>>, vector<8x32xf32>
    %c0_2 = arith.constant 0 : index
    %c0_3 = arith.constant 0 : index
    %c0_4 = arith.constant 0 : index
    %4 = vector.load %arg6[%c0_2, %c0_3, %c0_4] : memref<1x32x96xf32, #tpu.memory_space<vmem>>, vector<1x32x96xf32>
    %5 = vector.shape_cast %4 : vector<1x32x96xf32> to vector<32x96xf32>
    %cst = arith.constant dense<0.000000e+00> : vector<8x96xf32>
    %6 = tpu.matmul %3, %5, %cst {dimension_numbers = #tpu.dot_dimension_numbers<[1], [0], [0], [1], [0, 0, 1, 1], [], []>} : vector<8x32xf32>, vector<32x96xf32>, vector<8x96xf32> -> vector<8x96xf32>
    %c0_5 = arith.constant 0 : index
    %c0_6 = arith.constant 0 : index
    %c0_7 = arith.constant 0 : index
    %7 = vector.load %arg7[%c0_5, %c0_6, %c0_7] : memref<1x1x96xf32, #tpu.memory_space<vmem>>, vector<1x1x96xf32>
    %8 = vector.shape_cast %7 : vector<1x1x96xf32> to vector<1x96xf32>
    %9 = vector.broadcast %8 : vector<1x96xf32> to vector<8x96xf32>
    %10 = arith.addf %6, %9 : vector<8x96xf32>
    %11 = vector.extract_strided_slice %10 {offsets = [0, 0], sizes = [8, 32], strides = [1, 1]} : vector<8x96xf32> to vector<8x32xf32>
    %12 = vector.extract_strided_slice %10 {offsets = [0, 32], sizes = [8, 32], strides = [1, 1]} : vector<8x96xf32> to vector<8x32xf32>
    %13 = vector.extract_strided_slice %10 {offsets = [0, 64], sizes = [8, 32], strides = [1, 1]} : vector<8x96xf32> to vector<8x32xf32>
    %c0_8 = arith.constant 0 : index
    %c0_9 = arith.constant 0 : index
    %c0_10 = arith.constant 0 : index
    %14 = vector.load %arg5[%c0_8, %c0_9, %c0_10] : memref<1x1x8xf32, #tpu.memory_space<vmem>>, vector<1x1x8xf32>
    %15 = vector.shape_cast %14 : vector<1x1x8xf32> to vector<1x8xf32>
    %c0_11 = arith.constant 0 : index
    %c0_12 = arith.constant 0 : index
    %c0_13 = arith.constant 0 : index
    %16 = vector.load %arg8[%c0_11, %c0_12, %c0_13] : memref<1x32x32xf32, #tpu.memory_space<vmem>>, vector<1x32x32xf32>
    %17 = vector.shape_cast %16 : vector<1x32x32xf32> to vector<32x32xf32>
    %18 = vector.extract_strided_slice %11 {offsets = [0, 0], sizes = [8, 16], strides = [1, 1]} : vector<8x32xf32> to vector<8x16xf32>
    %19 = vector.extract_strided_slice %12 {offsets = [0, 0], sizes = [8, 16], strides = [1, 1]} : vector<8x32xf32> to vector<8x16xf32>
    %cst_14 = arith.constant dense<0.000000e+00> : vector<8x8xf32>
    %20 = tpu.matmul %18, %19, %cst_14 {dimension_numbers = #tpu.dot_dimension_numbers<[1], [1], [0], [0], [0, 0, 1, 0], [], []>} : vector<8x16xf32>, vector<8x16xf32>, vector<8x8xf32> -> vector<8x8xf32>
    %cst_15 = arith.constant 2.500000e-01 : f32
    %21 = vector.broadcast %cst_15 : f32 to vector<8x8xf32>
    %22 = arith.mulf %20, %21 : vector<8x8xf32>
    %23 = vector.broadcast %15 : vector<1x8xf32> to vector<8x8xf32>
    %24 = arith.addf %22, %23 : vector<8x8xf32>
    %cst_16 = arith.constant dense<0xFF800000> : vector<8xf32>
    %25 = vector.multi_reduction <maximumf>, %24, %cst_16 [1] : vector<8x8xf32> to vector<8xf32>
    %26 = vector.shape_cast %25 : vector<8xf32> to vector<8x1xf32>
    %27 = vector.broadcast %26 : vector<8x1xf32> to vector<8x8xf32>
    %28 = arith.subf %24, %27 : vector<8x8xf32>
    %29 = math.exp %28 : vector<8x8xf32>
    %cst_17 = arith.constant dense<0.000000e+00> : vector<8xf32>
    %30 = vector.multi_reduction <add>, %29, %cst_17 [1] : vector<8x8xf32> to vector<8xf32>
    %31 = vector.shape_cast %30 : vector<8xf32> to vector<8x1xf32>
    %32 = vector.broadcast %31 : vector<8x1xf32> to vector<8x8xf32>
    %33 = arith.divf %29, %32 : vector<8x8xf32>
    %34 = vector.extract_strided_slice %13 {offsets = [0, 0], sizes = [8, 16], strides = [1, 1]} : vector<8x32xf32> to vector<8x16xf32>
    %cst_18 = arith.constant dense<0.000000e+00> : vector<8x16xf32>
    %35 = tpu.matmul %33, %34, %cst_18 {dimension_numbers = #tpu.dot_dimension_numbers<[1], [0], [0], [1], [0, 0, 1, 1], [], []>} : vector<8x8xf32>, vector<8x16xf32>, vector<8x16xf32> -> vector<8x16xf32>
    %36 = vector.extract_strided_slice %17 {offsets = [0, 0], sizes = [16, 32], strides = [1, 1]} : vector<32x32xf32> to vector<16x32xf32>
    %cst_19 = arith.constant dense<0.000000e+00> : vector<8x32xf32>
    %37 = tpu.matmul %35, %36, %cst_19 {dimension_numbers = #tpu.dot_dimension_numbers<[1], [0], [0], [1], [0, 0, 1, 1], [], []>} : vector<8x16xf32>, vector<16x32xf32>, vector<8x32xf32> -> vector<8x32xf32>
    %38 = vector.extract_strided_slice %11 {offsets = [0, 16], sizes = [8, 16], strides = [1, 1]} : vector<8x32xf32> to vector<8x16xf32>
    %39 = vector.extract_strided_slice %12 {offsets = [0, 16], sizes = [8, 16], strides = [1, 1]} : vector<8x32xf32> to vector<8x16xf32>
    %cst_20 = arith.constant dense<0.000000e+00> : vector<8x8xf32>
    %40 = tpu.matmul %38, %39, %cst_20 {dimension_numbers = #tpu.dot_dimension_numbers<[1], [1], [0], [0], [0, 0, 1, 0], [], []>} : vector<8x16xf32>, vector<8x16xf32>, vector<8x8xf32> -> vector<8x8xf32>
    %cst_21 = arith.constant 2.500000e-01 : f32
    %41 = vector.broadcast %cst_21 : f32 to vector<8x8xf32>
    %42 = arith.mulf %40, %41 : vector<8x8xf32>
    %43 = vector.broadcast %15 : vector<1x8xf32> to vector<8x8xf32>
    %44 = arith.addf %42, %43 : vector<8x8xf32>
    %cst_22 = arith.constant dense<0xFF800000> : vector<8xf32>
    %45 = vector.multi_reduction <maximumf>, %44, %cst_22 [1] : vector<8x8xf32> to vector<8xf32>
    %46 = vector.shape_cast %45 : vector<8xf32> to vector<8x1xf32>
    %47 = vector.broadcast %46 : vector<8x1xf32> to vector<8x8xf32>
    %48 = arith.subf %44, %47 : vector<8x8xf32>
    %49 = math.exp %48 : vector<8x8xf32>
    %cst_23 = arith.constant dense<0.000000e+00> : vector<8xf32>
    %50 = vector.multi_reduction <add>, %49, %cst_23 [1] : vector<8x8xf32> to vector<8xf32>
    %51 = vector.shape_cast %50 : vector<8xf32> to vector<8x1xf32>
    %52 = vector.broadcast %51 : vector<8x1xf32> to vector<8x8xf32>
    %53 = arith.divf %49, %52 : vector<8x8xf32>
    %54 = vector.extract_strided_slice %13 {offsets = [0, 16], sizes = [8, 16], strides = [1, 1]} : vector<8x32xf32> to vector<8x16xf32>
    %cst_24 = arith.constant dense<0.000000e+00> : vector<8x16xf32>
    %55 = tpu.matmul %53, %54, %cst_24 {dimension_numbers = #tpu.dot_dimension_numbers<[1], [0], [0], [1], [0, 0, 1, 1], [], []>} : vector<8x8xf32>, vector<8x16xf32>, vector<8x16xf32> -> vector<8x16xf32>
    %56 = vector.extract_strided_slice %17 {offsets = [16, 0], sizes = [16, 32], strides = [1, 1]} : vector<32x32xf32> to vector<16x32xf32>
    %cst_25 = arith.constant dense<0.000000e+00> : vector<8x32xf32>
    %57 = tpu.matmul %55, %56, %cst_25 {dimension_numbers = #tpu.dot_dimension_numbers<[1], [0], [0], [1], [0, 0, 1, 1], [], []>} : vector<8x16xf32>, vector<16x32xf32>, vector<8x32xf32> -> vector<8x32xf32>
    %58 = arith.addf %37, %57 : vector<8x32xf32>
    %c0_26 = arith.constant 0 : index
    %c0_27 = arith.constant 0 : index
    %c0_28 = arith.constant 0 : index
    %59 = vector.load %arg9[%c0_26, %c0_27, %c0_28] : memref<1x1x32xf32, #tpu.memory_space<vmem>>, vector<1x1x32xf32>
    %60 = vector.shape_cast %59 : vector<1x1x32xf32> to vector<1x32xf32>
    %61 = vector.broadcast %60 : vector<1x32xf32> to vector<8x32xf32>
    %62 = arith.addf %58, %61 : vector<8x32xf32>
    %63 = arith.addf %62, %3 : vector<8x32xf32>
    %c0_29 = arith.constant 0 : index
    %c0_30 = arith.constant 0 : index
    %c0_31 = arith.constant 0 : index
    %64 = vector.load %arg10[%c0_29, %c0_30, %c0_31] : memref<1x1x32xf32, #tpu.memory_space<vmem>>, vector<1x1x32xf32>
    %65 = vector.shape_cast %64 : vector<1x1x32xf32> to vector<1x32xf32>
    %c0_32 = arith.constant 0 : index
    %c0_33 = arith.constant 0 : index
    %c0_34 = arith.constant 0 : index
    %66 = vector.load %arg11[%c0_32, %c0_33, %c0_34] : memref<1x1x32xf32, #tpu.memory_space<vmem>>, vector<1x1x32xf32>
    %67 = vector.shape_cast %66 : vector<1x1x32xf32> to vector<1x32xf32>
    %cst_35 = arith.constant dense<0.000000e+00> : vector<8xf32>
    %68 = vector.multi_reduction <add>, %63, %cst_35 [1] : vector<8x32xf32> to vector<8xf32>
    %69 = vector.shape_cast %68 : vector<8xf32> to vector<8x1xf32>
    %cst_36 = arith.constant 3.200000e+01 : f32
    %70 = vector.broadcast %cst_36 : f32 to vector<8x1xf32>
    %71 = arith.divf %69, %70 : vector<8x1xf32>
    %72 = vector.broadcast %71 : vector<8x1xf32> to vector<8x32xf32>
    %73 = arith.subf %63, %72 : vector<8x32xf32>
    %74 = arith.mulf %73, %73 : vector<8x32xf32>
    %cst_37 = arith.constant dense<0.000000e+00> : vector<8xf32>
    %75 = vector.multi_reduction <add>, %74, %cst_37 [1] : vector<8x32xf32> to vector<8xf32>
    %76 = vector.shape_cast %75 : vector<8xf32> to vector<8x1xf32>
    %cst_38 = arith.constant 3.200000e+01 : f32
    %77 = vector.broadcast %cst_38 : f32 to vector<8x1xf32>
    %78 = arith.divf %76, %77 : vector<8x1xf32>
    %79 = vector.broadcast %71 : vector<8x1xf32> to vector<8x32xf32>
    %80 = arith.subf %63, %79 : vector<8x32xf32>
    %cst_39 = arith.constant 9.99999996E-13 : f32
    %81 = vector.broadcast %cst_39 : f32 to vector<8x1xf32>
    %82 = arith.addf %78, %81 : vector<8x1xf32>
    %83 = math.rsqrt %82 : vector<8x1xf32>
    %84 = vector.broadcast %83 : vector<8x1xf32> to vector<8x32xf32>
    %85 = arith.mulf %80, %84 : vector<8x32xf32>
    %86 = vector.broadcast %65 : vector<1x32xf32> to vector<8x32xf32>
    %87 = arith.mulf %85, %86 : vector<8x32xf32>
    %88 = vector.broadcast %67 : vector<1x32xf32> to vector<8x32xf32>
    %89 = arith.addf %87, %88 : vector<8x32xf32>
    %c0_40 = arith.constant 0 : index
    %c0_41 = arith.constant 0 : index
    %c0_42 = arith.constant 0 : index
    %90 = vector.load %arg12[%c0_40, %c0_41, %c0_42] : memref<1x32x64xf32, #tpu.memory_space<vmem>>, vector<1x32x64xf32>
    %91 = vector.shape_cast %90 : vector<1x32x64xf32> to vector<32x64xf32>
    %cst_43 = arith.constant dense<0.000000e+00> : vector<8x64xf32>
    %92 = tpu.matmul %89, %91, %cst_43 {dimension_numbers = #tpu.dot_dimension_numbers<[1], [0], [0], [1], [0, 0, 1, 1], [], []>} : vector<8x32xf32>, vector<32x64xf32>, vector<8x64xf32> -> vector<8x64xf32>
    %c0_44 = arith.constant 0 : index
    %c0_45 = arith.constant 0 : index
    %c0_46 = arith.constant 0 : index
    %93 = vector.load %arg13[%c0_44, %c0_45, %c0_46] : memref<1x1x64xf32, #tpu.memory_space<vmem>>, vector<1x1x64xf32>
    %94 = vector.shape_cast %93 : vector<1x1x64xf32> to vector<1x64xf32>
    %95 = vector.broadcast %94 : vector<1x64xf32> to vector<8x64xf32>
    %96 = arith.addf %92, %95 : vector<8x64xf32>
    %cst_47 = arith.constant 5.000000e-01 : f32
    %97 = vector.broadcast %cst_47 : f32 to vector<8x64xf32>
    %98 = arith.mulf %97, %96 : vector<8x64xf32>
    %cst_48 = arith.constant 0.707106769 : f32
    %99 = vector.broadcast %cst_48 : f32 to vector<8x64xf32>
    %100 = arith.mulf %96, %99 : vector<8x64xf32>
    %101 = math.erf %100 : vector<8x64xf32>
    %cst_49 = arith.constant 1.000000e+00 : f32
    %102 = vector.broadcast %cst_49 : f32 to vector<8x64xf32>
    %103 = arith.addf %102, %101 : vector<8x64xf32>
    %104 = arith.mulf %98, %103 : vector<8x64xf32>
    %c0_50 = arith.constant 0 : index
    %c0_51 = arith.constant 0 : index
    %c0_52 = arith.constant 0 : index
    %105 = vector.load %arg14[%c0_50, %c0_51, %c0_52] : memref<1x64x32xf32, #tpu.memory_space<vmem>>, vector<1x64x32xf32>
    %106 = vector.shape_cast %105 : vector<1x64x32xf32> to vector<64x32xf32>
    %cst_53 = arith.constant dense<0.000000e+00> : vector<8x32xf32>
    %107 = tpu.matmul %104, %106, %cst_53 {dimension_numbers = #tpu.dot_dimension_numbers<[1], [0], [0], [1], [0, 0, 1, 1], [], []>} : vector<8x64xf32>, vector<64x32xf32>, vector<8x32xf32> -> vector<8x32xf32>
    %c0_54 = arith.constant 0 : index
    %c0_55 = arith.constant 0 : index
    %c0_56 = arith.constant 0 : index
    %108 = vector.load %arg15[%c0_54, %c0_55, %c0_56] : memref<1x1x32xf32, #tpu.memory_space<vmem>>, vector<1x1x32xf32>
    %109 = vector.shape_cast %108 : vector<1x1x32xf32> to vector<1x32xf32>
    %110 = vector.broadcast %109 : vector<1x32xf32> to vector<8x32xf32>
    %111 = arith.addf %107, %110 : vector<8x32xf32>
    %112 = arith.addf %111, %89 : vector<8x32xf32>
    %c0_57 = arith.constant 0 : index
    %c0_58 = arith.constant 0 : index
    %c0_59 = arith.constant 0 : index
    %113 = vector.load %arg16[%c0_57, %c0_58, %c0_59] : memref<1x1x32xf32, #tpu.memory_space<vmem>>, vector<1x1x32xf32>
    %114 = vector.shape_cast %113 : vector<1x1x32xf32> to vector<1x32xf32>
    %c0_60 = arith.constant 0 : index
    %c0_61 = arith.constant 0 : index
    %c0_62 = arith.constant 0 : index
    %115 = vector.load %arg17[%c0_60, %c0_61, %c0_62] : memref<1x1x32xf32, #tpu.memory_space<vmem>>, vector<1x1x32xf32>
    %116 = vector.shape_cast %115 : vector<1x1x32xf32> to vector<1x32xf32>
    %cst_63 = arith.constant dense<0.000000e+00> : vector<8xf32>
    %117 = vector.multi_reduction <add>, %112, %cst_63 [1] : vector<8x32xf32> to vector<8xf32>
    %118 = vector.shape_cast %117 : vector<8xf32> to vector<8x1xf32>
    %cst_64 = arith.constant 3.200000e+01 : f32
    %119 = vector.broadcast %cst_64 : f32 to vector<8x1xf32>
    %120 = arith.divf %118, %119 : vector<8x1xf32>
    %121 = vector.broadcast %120 : vector<8x1xf32> to vector<8x32xf32>
    %122 = arith.subf %112, %121 : vector<8x32xf32>
    %123 = arith.mulf %122, %122 : vector<8x32xf32>
    %cst_65 = arith.constant dense<0.000000e+00> : vector<8xf32>
    %124 = vector.multi_reduction <add>, %123, %cst_65 [1] : vector<8x32xf32> to vector<8xf32>
    %125 = vector.shape_cast %124 : vector<8xf32> to vector<8x1xf32>
    %cst_66 = arith.constant 3.200000e+01 : f32
    %126 = vector.broadcast %cst_66 : f32 to vector<8x1xf32>
    %127 = arith.divf %125, %126 : vector<8x1xf32>
    %128 = vector.broadcast %120 : vector<8x1xf32> to vector<8x32xf32>
    %129 = arith.subf %112, %128 : vector<8x32xf32>
    %cst_67 = arith.constant 9.99999996E-13 : f32
    %130 = vector.broadcast %cst_67 : f32 to vector<8x1xf32>
    %131 = arith.addf %127, %130 : vector<8x1xf32>
    %132 = math.rsqrt %131 : vector<8x1xf32>
    %133 = vector.broadcast %132 : vector<8x1xf32> to vector<8x32xf32>
    %134 = arith.mulf %129, %133 : vector<8x32xf32>
    %135 = vector.broadcast %114 : vector<1x32xf32> to vector<8x32xf32>
    %136 = arith.mulf %134, %135 : vector<8x32xf32>
    %137 = vector.broadcast %116 : vector<1x32xf32> to vector<8x32xf32>
    %138 = arith.addf %136, %137 : vector<8x32xf32>
    %c0_68 = arith.constant 0 : index
    %c0_69 = arith.constant 0 : index
    %139 = vector.load %arg18[%c0_68, %c0_69] : memref<8x32xf32, #tpu.memory_space<vmem>>, vector<8x32xf32>
    tpu.vector_store %arg18[%c0_68, %c0_69], %138 {strides = array<i32>} : memref<8x32xf32, #tpu.memory_space<vmem>>, vector<8x32xf32>,
    return
  }
  func.func @transform_0(%arg0: i32, %arg1: i32) -> (i32, i32) {
    %c0_i32 = arith.constant 0 : i32
    %c0_i32_0 = arith.constant 0 : i32
    return %arg0, %c0_i32 : i32, i32
  }
  func.func @transform_1(%arg0: i32, %arg1: i32) -> (i32, i32) {
    %c0_i32 = arith.constant 0 : i32
    %c0_i32_0 = arith.constant 0 : i32
    %c0_i32_1 = arith.constant 0 : i32
    return %c0_i32, %c0_i32_0 : i32, i32
  }
  func.func @transform_2(%arg0: i32, %arg1: i32) -> (i32, i32) {
    %c0_i32 = arith.constant 0 : i32
    %c0_i32_0 = arith.constant 0 : i32
    %c0_i32_1 = arith.constant 0 : i32
    return %c0_i32, %c0_i32_0 : i32, i32
  }
  func.func @transform_3(%arg0: i32, %arg1: i32) -> (i32, i32, i32) {
    %c0_i32 = arith.constant 0 : i32
    %c0_i32_0 = arith.constant 0 : i32
    %c0_i32_1 = arith.constant 0 : i32
    return %arg0, %c0_i32, %c0_i32_0 : i32, i32, i32
  }
  func.func @transform_4(%arg0: i32, %arg1: i32) -> (i32, i32, i32) {
    %c0_i32 = arith.constant 0 : i32
    %c0_i32_0 = arith.constant 0 : i32
    %c0_i32_1 = arith.constant 0 : i32
    return %arg1, %c0_i32, %c0_i32_0 : i32, i32, i32
  }
  func.func @transform_5(%arg0: i32, %arg1: i32) -> (i32, i32, i32) {
    %c0_i32 = arith.constant 0 : i32
    %c0_i32_0 = arith.constant 0 : i32
    %c0_i32_1 = arith.constant 0 : i32
    return %arg1, %c0_i32, %c0_i32_0 : i32, i32, i32
  }
  func.func @transform_6(%arg0: i32, %arg1: i32) -> (i32, i32, i32) {
    %c0_i32 = arith.constant 0 : i32
    %c0_i32_0 = arith.constant 0 : i32
    %c0_i32_1 = arith.constant 0 : i32
    return %arg1, %c0_i32, %c0_i32_0 : i32, i32, i32
  }
  func.func @transform_7(%arg0: i32, %arg1: i32) -> (i32, i32, i32) {
    %c0_i32 = arith.constant 0 : i32
    %c0_i32_0 = arith.constant 0 : i32
    %c0_i32_1 = arith.constant 0 : i32
    return %arg1, %c0_i32, %c0_i32_0 : i32, i32, i32
  }
  func.func @transform_8(%arg0: i32, %arg1: i32) -> (i32, i32, i32) {
    %c0_i32 = arith.constant 0 : i32
    %c0_i32_0 = arith.constant 0 : i32
    %c0_i32_1 = arith.constant 0 : i32
    return %arg1, %c0_i32, %c0_i32_0 : i32, i32, i32
  }
  func.func @transform_9(%arg0: i32, %arg1: i32) -> (i32, i32, i32) {
    %c0_i32 = arith.constant 0 : i32
    %c0_i32_0 = arith.constant 0 : i32
    %c0_i32_1 = arith.constant 0 : i32
    return %arg1, %c0_i32, %c0_i32_0 : i32, i32, i32
  }
  func.func @transform_10(%arg0: i32, %arg1: i32) -> (i32, i32, i32) {
    %c0_i32 = arith.constant 0 : i32
    %c0_i32_0 = arith.constant 0 : i32
    %c0_i32_1 = arith.constant 0 : i32
    return %arg1, %c0_i32, %c0_i32_0 : i32, i32, i32
  }
  func.func @transform_11(%arg0: i32, %arg1: i32) -> (i32, i32, i32) {
    %c0_i32 = arith.constant 0 : i32
    %c0_i32_0 = arith.constant 0 : i32
    %c0_i32_1 = arith.constant 0 : i32
    return %arg1, %c0_i32, %c0_i32_0 : i32, i32, i32
  }
  func.func @transform_12(%arg0: i32, %arg1: i32) -> (i32, i32, i32) {
    %c0_i32 = arith.constant 0 : i32
    %c0_i32_0 = arith.constant 0 : i32
    %c0_i32_1 = arith.constant 0 : i32
    return %arg1, %c0_i32, %c0_i32_0 : i32, i32, i32
  }
  func.func @transform_13(%arg0: i32, %arg1: i32) -> (i32, i32, i32) {
    %c0_i32 = arith.constant 0 : i32
    %c0_i32_0 = arith.constant 0 : i32
    %c0_i32_1 = arith.constant 0 : i32
    return %arg1, %c0_i32, %c0_i32_0 : i32, i32, i32
  }
  func.func @transform_14(%arg0: i32, %arg1: i32) -> (i32, i32, i32) {
    %c0_i32 = arith.constant 0 : i32
    %c0_i32_0 = arith.constant 0 : i32
    %c0_i32_1 = arith.constant 0 : i32
    return %arg1, %c0_i32, %c0_i32_0 : i32, i32, i32
  }
  func.func @transform_15(%arg0: i32, %arg1: i32) -> (i32, i32, i32) {
    %c0_i32 = arith.constant 0 : i32
    %c0_i32_0 = arith.constant 0 : i32
    %c0_i32_1 = arith.constant 0 : i32
    return %arg1, %c0_i32, %c0_i32_0 : i32, i32, i32
  }
  func.func @transform_16(%arg0: i32, %arg1: i32) -> (i32, i32) {
    %c0_i32 = arith.constant 0 : i32
    %c0_i32_0 = arith.constant 0 : i32
    return %arg0, %c0_i32 : i32, i32
  }
}

module attributes {stable_mosaic.version = 11 : i64} {
  func.func @_bigru_kernel(%arg0: i32, %arg1: memref<16x32xf32, #tpu.memory_space<vmem>>, %arg2: memref<2x32x48xf32, #tpu.memory_space<vmem>>, %arg3: memref<2x1x48xf32, #tpu.memory_space<vmem>>, %arg4: memref<2x16x48xf32, #tpu.memory_space<vmem>>, %arg5: memref<2x1x48xf32, #tpu.memory_space<vmem>>, %arg6: memref<8x2x1xf32, #tpu.memory_space<vmem>>, %arg7: memref<16x16xf32, #tpu.memory_space<vmem>>, %arg8: memref<16x16xf32, #tpu.memory_space<vmem>>, %arg9: memref<16x48xf32, #tpu.memory_space<vmem>>, %arg10: memref<16x48xf32, #tpu.memory_space<vmem>>) attributes {dimension_semantics = [#tpu.dimension_semantics<arbitrary>], iteration_bounds = array<i64: 1>, scalar_prefetch = 0 : i64, scratch_operands = 2 : i64, tpu.core_type = #tpu.core_type<tc>, window_params = [{pipeline_mode = #tpu.pipeline_mode<synchronous>, transform_indices = @transform_0, window_bounds = array<i64: 16, 32>}, {pipeline_mode = #tpu.pipeline_mode<synchronous>, transform_indices = @transform_1, window_bounds = array<i64: 2, 32, 48>}, {pipeline_mode = #tpu.pipeline_mode<synchronous>, transform_indices = @transform_2, window_bounds = array<i64: 2, 1, 48>}, {pipeline_mode = #tpu.pipeline_mode<synchronous>, transform_indices = @transform_3, window_bounds = array<i64: 2, 16, 48>}, {pipeline_mode = #tpu.pipeline_mode<synchronous>, transform_indices = @transform_4, window_bounds = array<i64: 2, 1, 48>}, {pipeline_mode = #tpu.pipeline_mode<synchronous>, transform_indices = @transform_5, window_bounds = array<i64: 8, 2, 1>}, {pipeline_mode = #tpu.pipeline_mode<synchronous>, transform_indices = @transform_6, window_bounds = array<i64: 16, 16>}, {pipeline_mode = #tpu.pipeline_mode<synchronous>, transform_indices = @transform_7, window_bounds = array<i64: 16, 16>}]} {
    %c0 = arith.constant 0 : index
    %c0_0 = arith.constant 0 : index
    %0 = vector.load %arg1[%c0, %c0_0] : memref<16x32xf32, #tpu.memory_space<vmem>>, vector<16x32xf32>
    %c0_1 = arith.constant 0 : index
    %c0_2 = arith.constant 0 : index
    %c0_3 = arith.constant 0 : index
    %1 = vector.load %arg2[%c0_1, %c0_2, %c0_3] : memref<2x32x48xf32, #tpu.memory_space<vmem>>, vector<1x32x48xf32>
    %2 = vector.shape_cast %1 : vector<1x32x48xf32> to vector<32x48xf32>
    %cst = arith.constant dense<0.000000e+00> : vector<16x48xf32>
    %3 = tpu.matmul %0, %2, %cst {dimension_numbers = #tpu.dot_dimension_numbers<[1], [0], [0], [1], [0, 0, 1, 1], [], []>} : vector<16x32xf32>, vector<32x48xf32>, vector<16x48xf32> -> vector<16x48xf32>
    %c0_4 = arith.constant 0 : index
    %c0_5 = arith.constant 0 : index
    %c0_6 = arith.constant 0 : index
    %4 = vector.load %arg3[%c0_4, %c0_5, %c0_6] : memref<2x1x48xf32, #tpu.memory_space<vmem>>, vector<1x1x48xf32>
    %5 = vector.shape_cast %4 : vector<1x1x48xf32> to vector<1x48xf32>
    %6 = vector.broadcast %5 : vector<1x48xf32> to vector<16x48xf32>
    %7 = arith.addf %3, %6 : vector<16x48xf32>
    %c0_7 = arith.constant 0 : index
    %c0_8 = arith.constant 0 : index
    %8 = vector.load %arg9[%c0_7, %c0_8] : memref<16x48xf32, #tpu.memory_space<vmem>>, vector<16x48xf32>
    tpu.vector_store %arg9[%c0_7, %c0_8], %7 {strides = array<i32>} : memref<16x48xf32, #tpu.memory_space<vmem>>, vector<16x48xf32>,
    %c1 = arith.constant 1 : index
    %c0_9 = arith.constant 0 : index
    %c0_10 = arith.constant 0 : index
    %9 = vector.load %arg2[%c1, %c0_9, %c0_10] : memref<2x32x48xf32, #tpu.memory_space<vmem>>, vector<1x32x48xf32>
    %10 = vector.shape_cast %9 : vector<1x32x48xf32> to vector<32x48xf32>
    %cst_11 = arith.constant dense<0.000000e+00> : vector<16x48xf32>
    %11 = tpu.matmul %0, %10, %cst_11 {dimension_numbers = #tpu.dot_dimension_numbers<[1], [0], [0], [1], [0, 0, 1, 1], [], []>} : vector<16x32xf32>, vector<32x48xf32>, vector<16x48xf32> -> vector<16x48xf32>
    %c1_12 = arith.constant 1 : index
    %c0_13 = arith.constant 0 : index
    %c0_14 = arith.constant 0 : index
    %12 = vector.load %arg3[%c1_12, %c0_13, %c0_14] : memref<2x1x48xf32, #tpu.memory_space<vmem>>, vector<1x1x48xf32>
    %13 = vector.shape_cast %12 : vector<1x1x48xf32> to vector<1x48xf32>
    %14 = vector.broadcast %13 : vector<1x48xf32> to vector<16x48xf32>
    %15 = arith.addf %11, %14 : vector<16x48xf32>
    %c0_15 = arith.constant 0 : index
    %c0_16 = arith.constant 0 : index
    %16 = vector.load %arg10[%c0_15, %c0_16] : memref<16x48xf32, #tpu.memory_space<vmem>>, vector<16x48xf32>
    tpu.vector_store %arg10[%c0_15, %c0_16], %15 {strides = array<i32>} : memref<16x48xf32, #tpu.memory_space<vmem>>, vector<16x48xf32>,
    %c0_17 = arith.constant 0 : index
    %c0_18 = arith.constant 0 : index
    %c0_19 = arith.constant 0 : index
    %17 = vector.load %arg4[%c0_17, %c0_18, %c0_19] : memref<2x16x48xf32, #tpu.memory_space<vmem>>, vector<1x16x48xf32>
    %18 = vector.shape_cast %17 : vector<1x16x48xf32> to vector<16x48xf32>
    %c0_20 = arith.constant 0 : index
    %c0_21 = arith.constant 0 : index
    %c0_22 = arith.constant 0 : index
    %19 = vector.load %arg5[%c0_20, %c0_21, %c0_22] : memref<2x1x48xf32, #tpu.memory_space<vmem>>, vector<1x1x48xf32>
    %20 = vector.shape_cast %19 : vector<1x1x48xf32> to vector<1x48xf32>
    %c1_23 = arith.constant 1 : index
    %c0_24 = arith.constant 0 : index
    %c0_25 = arith.constant 0 : index
    %21 = vector.load %arg4[%c1_23, %c0_24, %c0_25] : memref<2x16x48xf32, #tpu.memory_space<vmem>>, vector<1x16x48xf32>
    %22 = vector.shape_cast %21 : vector<1x16x48xf32> to vector<16x48xf32>
    %c1_26 = arith.constant 1 : index
    %c0_27 = arith.constant 0 : index
    %c0_28 = arith.constant 0 : index
    %23 = vector.load %arg5[%c1_26, %c0_27, %c0_28] : memref<2x1x48xf32, #tpu.memory_space<vmem>>, vector<1x1x48xf32>
    %24 = vector.shape_cast %23 : vector<1x1x48xf32> to vector<1x48xf32>
    %cst_29 = arith.constant 0.000000e+00 : f32
    %25 = vector.broadcast %cst_29 : f32 to vector<2x16xf32>
    %c0_i32 = arith.constant 0 : i32
    %c7_i32 = arith.constant 7 : i32
    %26 = arith.subi %c7_i32, %c0_i32 : i32
    %27 = arith.index_cast %c0_i32 : i32 to index
    %c0_30 = arith.constant 0 : index
    %28 = tpu.strided_load %arg9[%27, %c0_30] {strides = array<i32: 8, 1>} : memref<16x48xf32, #tpu.memory_space<vmem>>, vector<2x48xf32>
    %29 = arith.index_cast %26 : i32 to index
    %c0_31 = arith.constant 0 : index
    %30 = tpu.strided_load %arg10[%29, %c0_31] {strides = array<i32: 8, 1>} : memref<16x48xf32, #tpu.memory_space<vmem>>, vector<2x48xf32>
    %cst_32 = arith.constant dense<0.000000e+00> : vector<2x48xf32>
    %31 = tpu.matmul %25, %18, %cst_32 {dimension_numbers = #tpu.dot_dimension_numbers<[1], [0], [0], [1], [0, 0, 1, 1], [], []>} : vector<2x16xf32>, vector<16x48xf32>, vector<2x48xf32> -> vector<2x48xf32>
    %32 = vector.broadcast %20 : vector<1x48xf32> to vector<2x48xf32>
    %33 = arith.addf %31, %32 : vector<2x48xf32>
    %cst_33 = arith.constant dense<0.000000e+00> : vector<2x48xf32>
    %34 = tpu.matmul %25, %22, %cst_33 {dimension_numbers = #tpu.dot_dimension_numbers<[1], [0], [0], [1], [0, 0, 1, 1], [], []>} : vector<2x16xf32>, vector<16x48xf32>, vector<2x48xf32> -> vector<2x48xf32>
    %35 = vector.broadcast %24 : vector<1x48xf32> to vector<2x48xf32>
    %36 = arith.addf %34, %35 : vector<2x48xf32>
    %37 = arith.index_cast %c0_i32 : i32 to index
    %c0_34 = arith.constant 0 : index
    %c0_35 = arith.constant 0 : index
    %38 = vector.load %arg6[%37, %c0_34, %c0_35] : memref<8x2x1xf32, #tpu.memory_space<vmem>>, vector<1x2x1xf32>
    %39 = vector.shape_cast %38 : vector<1x2x1xf32> to vector<2x1xf32>
    %40 = arith.index_cast %26 : i32 to index
    %c0_36 = arith.constant 0 : index
    %c0_37 = arith.constant 0 : index
    %41 = vector.load %arg6[%40, %c0_36, %c0_37] : memref<8x2x1xf32, #tpu.memory_space<vmem>>, vector<1x2x1xf32>
    %42 = vector.shape_cast %41 : vector<1x2x1xf32> to vector<2x1xf32>
    %43 = vector.extract_strided_slice %28 {offsets = [0, 0], sizes = [2, 16], strides = [1, 1]} : vector<2x48xf32> to vector<2x16xf32>
    %44 = vector.extract_strided_slice %33 {offsets = [0, 0], sizes = [2, 16], strides = [1, 1]} : vector<2x48xf32> to vector<2x16xf32>
    %45 = arith.addf %43, %44 : vector<2x16xf32>
    %46 = arith.negf %45 : vector<2x16xf32>
    %47 = math.exp %46 : vector<2x16xf32>
    %cst_38 = arith.constant 1.000000e+00 : f32
    %48 = vector.broadcast %cst_38 : f32 to vector<2x16xf32>
    %49 = arith.addf %48, %47 : vector<2x16xf32>
    %50 = arith.divf %48, %49 : vector<2x16xf32>
    %51 = vector.extract_strided_slice %28 {offsets = [0, 16], sizes = [2, 16], strides = [1, 1]} : vector<2x48xf32> to vector<2x16xf32>
    %52 = vector.extract_strided_slice %33 {offsets = [0, 16], sizes = [2, 16], strides = [1, 1]} : vector<2x48xf32> to vector<2x16xf32>
    %53 = arith.addf %51, %52 : vector<2x16xf32>
    %54 = arith.negf %53 : vector<2x16xf32>
    %55 = math.exp %54 : vector<2x16xf32>
    %cst_39 = arith.constant 1.000000e+00 : f32
    %56 = vector.broadcast %cst_39 : f32 to vector<2x16xf32>
    %57 = arith.addf %56, %55 : vector<2x16xf32>
    %58 = arith.divf %56, %57 : vector<2x16xf32>
    %59 = vector.extract_strided_slice %28 {offsets = [0, 32], sizes = [2, 16], strides = [1, 1]} : vector<2x48xf32> to vector<2x16xf32>
    %60 = vector.extract_strided_slice %33 {offsets = [0, 32], sizes = [2, 16], strides = [1, 1]} : vector<2x48xf32> to vector<2x16xf32>
    %61 = arith.mulf %50, %60 : vector<2x16xf32>
    %62 = arith.addf %59, %61 : vector<2x16xf32>
    %63 = math.tanh %62 : vector<2x16xf32>
    %cst_40 = arith.constant 1.000000e+00 : f32
    %64 = vector.broadcast %cst_40 : f32 to vector<2x16xf32>
    %65 = arith.subf %64, %58 : vector<2x16xf32>
    %66 = arith.mulf %65, %63 : vector<2x16xf32>
    %67 = arith.mulf %58, %25 : vector<2x16xf32>
    %68 = arith.addf %66, %67 : vector<2x16xf32>
    %69 = vector.extract_strided_slice %30 {offsets = [0, 0], sizes = [2, 16], strides = [1, 1]} : vector<2x48xf32> to vector<2x16xf32>
    %70 = vector.extract_strided_slice %36 {offsets = [0, 0], sizes = [2, 16], strides = [1, 1]} : vector<2x48xf32> to vector<2x16xf32>
    %71 = arith.addf %69, %70 : vector<2x16xf32>
    %72 = arith.negf %71 : vector<2x16xf32>
    %73 = math.exp %72 : vector<2x16xf32>
    %cst_41 = arith.constant 1.000000e+00 : f32
    %74 = vector.broadcast %cst_41 : f32 to vector<2x16xf32>
    %75 = arith.addf %74, %73 : vector<2x16xf32>
    %76 = arith.divf %74, %75 : vector<2x16xf32>
    %77 = vector.extract_strided_slice %30 {offsets = [0, 16], sizes = [2, 16], strides = [1, 1]} : vector<2x48xf32> to vector<2x16xf32>
    %78 = vector.extract_strided_slice %36 {offsets = [0, 16], sizes = [2, 16], strides = [1, 1]} : vector<2x48xf32> to vector<2x16xf32>
    %79 = arith.addf %77, %78 : vector<2x16xf32>
    %80 = arith.negf %79 : vector<2x16xf32>
    %81 = math.exp %80 : vector<2x16xf32>
    %cst_42 = arith.constant 1.000000e+00 : f32
    %82 = vector.broadcast %cst_42 : f32 to vector<2x16xf32>
    %83 = arith.addf %82, %81 : vector<2x16xf32>
    %84 = arith.divf %82, %83 : vector<2x16xf32>
    %85 = vector.extract_strided_slice %30 {offsets = [0, 32], sizes = [2, 16], strides = [1, 1]} : vector<2x48xf32> to vector<2x16xf32>
    %86 = vector.extract_strided_slice %36 {offsets = [0, 32], sizes = [2, 16], strides = [1, 1]} : vector<2x48xf32> to vector<2x16xf32>
    %87 = arith.mulf %76, %86 : vector<2x16xf32>
    %88 = arith.addf %85, %87 : vector<2x16xf32>
    %89 = math.tanh %88 : vector<2x16xf32>
    %cst_43 = arith.constant 1.000000e+00 : f32
    %90 = vector.broadcast %cst_43 : f32 to vector<2x16xf32>
    %91 = arith.subf %90, %84 : vector<2x16xf32>
    %92 = arith.mulf %91, %89 : vector<2x16xf32>
    %93 = arith.mulf %84, %25 : vector<2x16xf32>
    %94 = arith.addf %92, %93 : vector<2x16xf32>
    %95 = vector.broadcast %39 : vector<2x1xf32> to vector<2x16xf32>
    %96 = arith.mulf %95, %68 : vector<2x16xf32>
    %cst_44 = arith.constant 1.000000e+00 : f32
    %97 = vector.broadcast %cst_44 : f32 to vector<2x1xf32>
    %98 = arith.subf %97, %39 : vector<2x1xf32>
    %99 = vector.broadcast %98 : vector<2x1xf32> to vector<2x16xf32>
    %100 = arith.mulf %99, %25 : vector<2x16xf32>
    %101 = arith.addf %96, %100 : vector<2x16xf32>
    %102 = vector.broadcast %42 : vector<2x1xf32> to vector<2x16xf32>
    %103 = arith.mulf %102, %94 : vector<2x16xf32>
    %cst_45 = arith.constant 1.000000e+00 : f32
    %104 = vector.broadcast %cst_45 : f32 to vector<2x1xf32>
    %105 = arith.subf %104, %42 : vector<2x1xf32>
    %106 = vector.broadcast %105 : vector<2x1xf32> to vector<2x16xf32>
    %107 = arith.mulf %106, %25 : vector<2x16xf32>
    %108 = arith.addf %103, %107 : vector<2x16xf32>
    %109 = vector.broadcast %39 : vector<2x1xf32> to vector<2x16xf32>
    %110 = arith.mulf %109, %101 : vector<2x16xf32>
    %cst_46 = arith.constant 1.000000e+00 : f32
    %111 = vector.broadcast %cst_46 : f32 to vector<2x1xf32>
    %112 = arith.subf %111, %39 : vector<2x1xf32>
    %cst_47 = arith.constant 0.000000e+00 : f32
    %113 = vector.broadcast %cst_47 : f32 to vector<2x1xf32>
    %114 = arith.mulf %112, %113 : vector<2x1xf32>
    %115 = vector.broadcast %114 : vector<2x1xf32> to vector<2x16xf32>
    %116 = arith.addf %110, %115 : vector<2x16xf32>
    %c2_i32 = arith.constant 2 : i32
    %117 = arith.muli %c0_i32, %c2_i32 : i32
    %118 = arith.index_cast %117 : i32 to index
    %c0_48 = arith.constant 0 : index
    %119 = vector.load %arg7[%118, %c0_48] : memref<16x16xf32, #tpu.memory_space<vmem>>, vector<2x16xf32>
    tpu.vector_store %arg7[%118, %c0_48], %116 {strides = array<i32>} : memref<16x16xf32, #tpu.memory_space<vmem>>, vector<2x16xf32>,
    %120 = vector.broadcast %42 : vector<2x1xf32> to vector<2x16xf32>
    %121 = arith.mulf %120, %108 : vector<2x16xf32>
    %cst_49 = arith.constant 1.000000e+00 : f32
    %122 = vector.broadcast %cst_49 : f32 to vector<2x1xf32>
    %123 = arith.subf %122, %42 : vector<2x1xf32>
    %cst_50 = arith.constant 0.000000e+00 : f32
    %124 = vector.broadcast %cst_50 : f32 to vector<2x1xf32>
    %125 = arith.mulf %123, %124 : vector<2x1xf32>
    %126 = vector.broadcast %125 : vector<2x1xf32> to vector<2x16xf32>
    %127 = arith.addf %121, %126 : vector<2x16xf32>
    %c2_i32_51 = arith.constant 2 : i32
    %128 = arith.muli %26, %c2_i32_51 : i32
    %129 = arith.index_cast %128 : i32 to index
    %c0_52 = arith.constant 0 : index
    %130 = vector.load %arg8[%129, %c0_52] : memref<16x16xf32, #tpu.memory_space<vmem>>, vector<2x16xf32>
    tpu.vector_store %arg8[%129, %c0_52], %127 {strides = array<i32>} : memref<16x16xf32, #tpu.memory_space<vmem>>, vector<2x16xf32>,
    %c1_i32 = arith.constant 1 : i32
    %c7_i32_53 = arith.constant 7 : i32
    %131 = arith.subi %c7_i32_53, %c1_i32 : i32
    %132 = arith.index_cast %c1_i32 : i32 to index
    %c0_54 = arith.constant 0 : index
    %133 = tpu.strided_load %arg9[%132, %c0_54] {strides = array<i32: 8, 1>} : memref<16x48xf32, #tpu.memory_space<vmem>>, vector<2x48xf32>
    %134 = arith.index_cast %131 : i32 to index
    %c0_55 = arith.constant 0 : index
    %135 = tpu.strided_load %arg10[%134, %c0_55] {strides = array<i32: 8, 1>} : memref<16x48xf32, #tpu.memory_space<vmem>>, vector<2x48xf32>
    %cst_56 = arith.constant dense<0.000000e+00> : vector<2x48xf32>
    %136 = tpu.matmul %101, %18, %cst_56 {dimension_numbers = #tpu.dot_dimension_numbers<[1], [0], [0], [1], [0, 0, 1, 1], [], []>} : vector<2x16xf32>, vector<16x48xf32>, vector<2x48xf32> -> vector<2x48xf32>
    %137 = vector.broadcast %20 : vector<1x48xf32> to vector<2x48xf32>
    %138 = arith.addf %136, %137 : vector<2x48xf32>
    %cst_57 = arith.constant dense<0.000000e+00> : vector<2x48xf32>
    %139 = tpu.matmul %108, %22, %cst_57 {dimension_numbers = #tpu.dot_dimension_numbers<[1], [0], [0], [1], [0, 0, 1, 1], [], []>} : vector<2x16xf32>, vector<16x48xf32>, vector<2x48xf32> -> vector<2x48xf32>
    %140 = vector.broadcast %24 : vector<1x48xf32> to vector<2x48xf32>
    %141 = arith.addf %139, %140 : vector<2x48xf32>
    %142 = arith.index_cast %c1_i32 : i32 to index
    %c0_58 = arith.constant 0 : index
    %c0_59 = arith.constant 0 : index
    %143 = vector.load %arg6[%142, %c0_58, %c0_59] : memref<8x2x1xf32, #tpu.memory_space<vmem>>, vector<1x2x1xf32>
    %144 = vector.shape_cast %143 : vector<1x2x1xf32> to vector<2x1xf32>
    %145 = arith.index_cast %131 : i32 to index
    %c0_60 = arith.constant 0 : index
    %c0_61 = arith.constant 0 : index
    %146 = vector.load %arg6[%145, %c0_60, %c0_61] : memref<8x2x1xf32, #tpu.memory_space<vmem>>, vector<1x2x1xf32>
    %147 = vector.shape_cast %146 : vector<1x2x1xf32> to vector<2x1xf32>
    %148 = vector.extract_strided_slice %133 {offsets = [0, 0], sizes = [2, 16], strides = [1, 1]} : vector<2x48xf32> to vector<2x16xf32>
    %149 = vector.extract_strided_slice %138 {offsets = [0, 0], sizes = [2, 16], strides = [1, 1]} : vector<2x48xf32> to vector<2x16xf32>
    %150 = arith.addf %148, %149 : vector<2x16xf32>
    %151 = arith.negf %150 : vector<2x16xf32>
    %152 = math.exp %151 : vector<2x16xf32>
    %cst_62 = arith.constant 1.000000e+00 : f32
    %153 = vector.broadcast %cst_62 : f32 to vector<2x16xf32>
    %154 = arith.addf %153, %152 : vector<2x16xf32>
    %155 = arith.divf %153, %154 : vector<2x16xf32>
    %156 = vector.extract_strided_slice %133 {offsets = [0, 16], sizes = [2, 16], strides = [1, 1]} : vector<2x48xf32> to vector<2x16xf32>
    %157 = vector.extract_strided_slice %138 {offsets = [0, 16], sizes = [2, 16], strides = [1, 1]} : vector<2x48xf32> to vector<2x16xf32>
    %158 = arith.addf %156, %157 : vector<2x16xf32>
    %159 = arith.negf %158 : vector<2x16xf32>
    %160 = math.exp %159 : vector<2x16xf32>
    %cst_63 = arith.constant 1.000000e+00 : f32
    %161 = vector.broadcast %cst_63 : f32 to vector<2x16xf32>
    %162 = arith.addf %161, %160 : vector<2x16xf32>
    %163 = arith.divf %161, %162 : vector<2x16xf32>
    %164 = vector.extract_strided_slice %133 {offsets = [0, 32], sizes = [2, 16], strides = [1, 1]} : vector<2x48xf32> to vector<2x16xf32>
    %165 = vector.extract_strided_slice %138 {offsets = [0, 32], sizes = [2, 16], strides = [1, 1]} : vector<2x48xf32> to vector<2x16xf32>
    %166 = arith.mulf %155, %165 : vector<2x16xf32>
    %167 = arith.addf %164, %166 : vector<2x16xf32>
    %168 = math.tanh %167 : vector<2x16xf32>
    %cst_64 = arith.constant 1.000000e+00 : f32
    %169 = vector.broadcast %cst_64 : f32 to vector<2x16xf32>
    %170 = arith.subf %169, %163 : vector<2x16xf32>
    %171 = arith.mulf %170, %168 : vector<2x16xf32>
    %172 = arith.mulf %163, %101 : vector<2x16xf32>
    %173 = arith.addf %171, %172 : vector<2x16xf32>
    %174 = vector.extract_strided_slice %135 {offsets = [0, 0], sizes = [2, 16], strides = [1, 1]} : vector<2x48xf32> to vector<2x16xf32>
    %175 = vector.extract_strided_slice %141 {offsets = [0, 0], sizes = [2, 16], strides = [1, 1]} : vector<2x48xf32> to vector<2x16xf32>
    %176 = arith.addf %174, %175 : vector<2x16xf32>
    %177 = arith.negf %176 : vector<2x16xf32>
    %178 = math.exp %177 : vector<2x16xf32>
    %cst_65 = arith.constant 1.000000e+00 : f32
    %179 = vector.broadcast %cst_65 : f32 to vector<2x16xf32>
    %180 = arith.addf %179, %178 : vector<2x16xf32>
    %181 = arith.divf %179, %180 : vector<2x16xf32>
    %182 = vector.extract_strided_slice %135 {offsets = [0, 16], sizes = [2, 16], strides = [1, 1]} : vector<2x48xf32> to vector<2x16xf32>
    %183 = vector.extract_strided_slice %141 {offsets = [0, 16], sizes = [2, 16], strides = [1, 1]} : vector<2x48xf32> to vector<2x16xf32>
    %184 = arith.addf %182, %183 : vector<2x16xf32>
    %185 = arith.negf %184 : vector<2x16xf32>
    %186 = math.exp %185 : vector<2x16xf32>
    %cst_66 = arith.constant 1.000000e+00 : f32
    %187 = vector.broadcast %cst_66 : f32 to vector<2x16xf32>
    %188 = arith.addf %187, %186 : vector<2x16xf32>
    %189 = arith.divf %187, %188 : vector<2x16xf32>
    %190 = vector.extract_strided_slice %135 {offsets = [0, 32], sizes = [2, 16], strides = [1, 1]} : vector<2x48xf32> to vector<2x16xf32>
    %191 = vector.extract_strided_slice %141 {offsets = [0, 32], sizes = [2, 16], strides = [1, 1]} : vector<2x48xf32> to vector<2x16xf32>
    %192 = arith.mulf %181, %191 : vector<2x16xf32>
    %193 = arith.addf %190, %192 : vector<2x16xf32>
    %194 = math.tanh %193 : vector<2x16xf32>
    %cst_67 = arith.constant 1.000000e+00 : f32
    %195 = vector.broadcast %cst_67 : f32 to vector<2x16xf32>
    %196 = arith.subf %195, %189 : vector<2x16xf32>
    %197 = arith.mulf %196, %194 : vector<2x16xf32>
    %198 = arith.mulf %189, %108 : vector<2x16xf32>
    %199 = arith.addf %197, %198 : vector<2x16xf32>
    %200 = vector.broadcast %144 : vector<2x1xf32> to vector<2x16xf32>
    %201 = arith.mulf %200, %173 : vector<2x16xf32>
    %cst_68 = arith.constant 1.000000e+00 : f32
    %202 = vector.broadcast %cst_68 : f32 to vector<2x1xf32>
    %203 = arith.subf %202, %144 : vector<2x1xf32>
    %204 = vector.broadcast %203 : vector<2x1xf32> to vector<2x16xf32>
    %205 = arith.mulf %204, %101 : vector<2x16xf32>
    %206 = arith.addf %201, %205 : vector<2x16xf32>
    %207 = vector.broadcast %147 : vector<2x1xf32> to vector<2x16xf32>
    %208 = arith.mulf %207, %199 : vector<2x16xf32>
    %cst_69 = arith.constant 1.000000e+00 : f32
    %209 = vector.broadcast %cst_69 : f32 to vector<2x1xf32>
    %210 = arith.subf %209, %147 : vector<2x1xf32>
    %211 = vector.broadcast %210 : vector<2x1xf32> to vector<2x16xf32>
    %212 = arith.mulf %211, %108 : vector<2x16xf32>
    %213 = arith.addf %208, %212 : vector<2x16xf32>
    %214 = vector.broadcast %144 : vector<2x1xf32> to vector<2x16xf32>
    %215 = arith.mulf %214, %206 : vector<2x16xf32>
    %cst_70 = arith.constant 1.000000e+00 : f32
    %216 = vector.broadcast %cst_70 : f32 to vector<2x1xf32>
    %217 = arith.subf %216, %144 : vector<2x1xf32>
    %cst_71 = arith.constant 0.000000e+00 : f32
    %218 = vector.broadcast %cst_71 : f32 to vector<2x1xf32>
    %219 = arith.mulf %217, %218 : vector<2x1xf32>
    %220 = vector.broadcast %219 : vector<2x1xf32> to vector<2x16xf32>
    %221 = arith.addf %215, %220 : vector<2x16xf32>
    %c2_i32_72 = arith.constant 2 : i32
    %222 = arith.muli %c1_i32, %c2_i32_72 : i32
    %223 = arith.index_cast %222 : i32 to index
    %c0_73 = arith.constant 0 : index
    %224 = vector.load %arg7[%223, %c0_73] : memref<16x16xf32, #tpu.memory_space<vmem>>, vector<2x16xf32>
    tpu.vector_store %arg7[%223, %c0_73], %221 {strides = array<i32>} : memref<16x16xf32, #tpu.memory_space<vmem>>, vector<2x16xf32>,
    %225 = vector.broadcast %147 : vector<2x1xf32> to vector<2x16xf32>
    %226 = arith.mulf %225, %213 : vector<2x16xf32>
    %cst_74 = arith.constant 1.000000e+00 : f32
    %227 = vector.broadcast %cst_74 : f32 to vector<2x1xf32>
    %228 = arith.subf %227, %147 : vector<2x1xf32>
    %cst_75 = arith.constant 0.000000e+00 : f32
    %229 = vector.broadcast %cst_75 : f32 to vector<2x1xf32>
    %230 = arith.mulf %228, %229 : vector<2x1xf32>
    %231 = vector.broadcast %230 : vector<2x1xf32> to vector<2x16xf32>
    %232 = arith.addf %226, %231 : vector<2x16xf32>
    %c2_i32_76 = arith.constant 2 : i32
    %233 = arith.muli %131, %c2_i32_76 : i32
    %234 = arith.index_cast %233 : i32 to index
    %c0_77 = arith.constant 0 : index
    %235 = vector.load %arg8[%234, %c0_77] : memref<16x16xf32, #tpu.memory_space<vmem>>, vector<2x16xf32>
    tpu.vector_store %arg8[%234, %c0_77], %232 {strides = array<i32>} : memref<16x16xf32, #tpu.memory_space<vmem>>, vector<2x16xf32>,
    %c2_i32_78 = arith.constant 2 : i32
    %c7_i32_79 = arith.constant 7 : i32
    %236 = arith.subi %c7_i32_79, %c2_i32_78 : i32
    %237 = arith.index_cast %c2_i32_78 : i32 to index
    %c0_80 = arith.constant 0 : index
    %238 = tpu.strided_load %arg9[%237, %c0_80] {strides = array<i32: 8, 1>} : memref<16x48xf32, #tpu.memory_space<vmem>>, vector<2x48xf32>
    %239 = arith.index_cast %236 : i32 to index
    %c0_81 = arith.constant 0 : index
    %240 = tpu.strided_load %arg10[%239, %c0_81] {strides = array<i32: 8, 1>} : memref<16x48xf32, #tpu.memory_space<vmem>>, vector<2x48xf32>
    %cst_82 = arith.constant dense<0.000000e+00> : vector<2x48xf32>
    %241 = tpu.matmul %206, %18, %cst_82 {dimension_numbers = #tpu.dot_dimension_numbers<[1], [0], [0], [1], [0, 0, 1, 1], [], []>} : vector<2x16xf32>, vector<16x48xf32>, vector<2x48xf32> -> vector<2x48xf32>
    %242 = vector.broadcast %20 : vector<1x48xf32> to vector<2x48xf32>
    %243 = arith.addf %241, %242 : vector<2x48xf32>
    %cst_83 = arith.constant dense<0.000000e+00> : vector<2x48xf32>
    %244 = tpu.matmul %213, %22, %cst_83 {dimension_numbers = #tpu.dot_dimension_numbers<[1], [0], [0], [1], [0, 0, 1, 1], [], []>} : vector<2x16xf32>, vector<16x48xf32>, vector<2x48xf32> -> vector<2x48xf32>
    %245 = vector.broadcast %24 : vector<1x48xf32> to vector<2x48xf32>
    %246 = arith.addf %244, %245 : vector<2x48xf32>
    %247 = arith.index_cast %c2_i32_78 : i32 to index
    %c0_84 = arith.constant 0 : index
    %c0_85 = arith.constant 0 : index
    %248 = vector.load %arg6[%247, %c0_84, %c0_85] : memref<8x2x1xf32, #tpu.memory_space<vmem>>, vector<1x2x1xf32>
    %249 = vector.shape_cast %248 : vector<1x2x1xf32> to vector<2x1xf32>
    %250 = arith.index_cast %236 : i32 to index
    %c0_86 = arith.constant 0 : index
    %c0_87 = arith.constant 0 : index
    %251 = vector.load %arg6[%250, %c0_86, %c0_87] : memref<8x2x1xf32, #tpu.memory_space<vmem>>, vector<1x2x1xf32>
    %252 = vector.shape_cast %251 : vector<1x2x1xf32> to vector<2x1xf32>
    %253 = vector.extract_strided_slice %238 {offsets = [0, 0], sizes = [2, 16], strides = [1, 1]} : vector<2x48xf32> to vector<2x16xf32>
    %254 = vector.extract_strided_slice %243 {offsets = [0, 0], sizes = [2, 16], strides = [1, 1]} : vector<2x48xf32> to vector<2x16xf32>
    %255 = arith.addf %253, %254 : vector<2x16xf32>
    %256 = arith.negf %255 : vector<2x16xf32>
    %257 = math.exp %256 : vector<2x16xf32>
    %cst_88 = arith.constant 1.000000e+00 : f32
    %258 = vector.broadcast %cst_88 : f32 to vector<2x16xf32>
    %259 = arith.addf %258, %257 : vector<2x16xf32>
    %260 = arith.divf %258, %259 : vector<2x16xf32>
    %261 = vector.extract_strided_slice %238 {offsets = [0, 16], sizes = [2, 16], strides = [1, 1]} : vector<2x48xf32> to vector<2x16xf32>
    %262 = vector.extract_strided_slice %243 {offsets = [0, 16], sizes = [2, 16], strides = [1, 1]} : vector<2x48xf32> to vector<2x16xf32>
    %263 = arith.addf %261, %262 : vector<2x16xf32>
    %264 = arith.negf %263 : vector<2x16xf32>
    %265 = math.exp %264 : vector<2x16xf32>
    %cst_89 = arith.constant 1.000000e+00 : f32
    %266 = vector.broadcast %cst_89 : f32 to vector<2x16xf32>
    %267 = arith.addf %266, %265 : vector<2x16xf32>
    %268 = arith.divf %266, %267 : vector<2x16xf32>
    %269 = vector.extract_strided_slice %238 {offsets = [0, 32], sizes = [2, 16], strides = [1, 1]} : vector<2x48xf32> to vector<2x16xf32>
    %270 = vector.extract_strided_slice %243 {offsets = [0, 32], sizes = [2, 16], strides = [1, 1]} : vector<2x48xf32> to vector<2x16xf32>
    %271 = arith.mulf %260, %270 : vector<2x16xf32>
    %272 = arith.addf %269, %271 : vector<2x16xf32>
    %273 = math.tanh %272 : vector<2x16xf32>
    %cst_90 = arith.constant 1.000000e+00 : f32
    %274 = vector.broadcast %cst_90 : f32 to vector<2x16xf32>
    %275 = arith.subf %274, %268 : vector<2x16xf32>
    %276 = arith.mulf %275, %273 : vector<2x16xf32>
    %277 = arith.mulf %268, %206 : vector<2x16xf32>
    %278 = arith.addf %276, %277 : vector<2x16xf32>
    %279 = vector.extract_strided_slice %240 {offsets = [0, 0], sizes = [2, 16], strides = [1, 1]} : vector<2x48xf32> to vector<2x16xf32>
    %280 = vector.extract_strided_slice %246 {offsets = [0, 0], sizes = [2, 16], strides = [1, 1]} : vector<2x48xf32> to vector<2x16xf32>
    %281 = arith.addf %279, %280 : vector<2x16xf32>
    %282 = arith.negf %281 : vector<2x16xf32>
    %283 = math.exp %282 : vector<2x16xf32>
    %cst_91 = arith.constant 1.000000e+00 : f32
    %284 = vector.broadcast %cst_91 : f32 to vector<2x16xf32>
    %285 = arith.addf %284, %283 : vector<2x16xf32>
    %286 = arith.divf %284, %285 : vector<2x16xf32>
    %287 = vector.extract_strided_slice %240 {offsets = [0, 16], sizes = [2, 16], strides = [1, 1]} : vector<2x48xf32> to vector<2x16xf32>
    %288 = vector.extract_strided_slice %246 {offsets = [0, 16], sizes = [2, 16], strides = [1, 1]} : vector<2x48xf32> to vector<2x16xf32>
    %289 = arith.addf %287, %288 : vector<2x16xf32>
    %290 = arith.negf %289 : vector<2x16xf32>
    %291 = math.exp %290 : vector<2x16xf32>
    %cst_92 = arith.constant 1.000000e+00 : f32
    %292 = vector.broadcast %cst_92 : f32 to vector<2x16xf32>
    %293 = arith.addf %292, %291 : vector<2x16xf32>
    %294 = arith.divf %292, %293 : vector<2x16xf32>
    %295 = vector.extract_strided_slice %240 {offsets = [0, 32], sizes = [2, 16], strides = [1, 1]} : vector<2x48xf32> to vector<2x16xf32>
    %296 = vector.extract_strided_slice %246 {offsets = [0, 32], sizes = [2, 16], strides = [1, 1]} : vector<2x48xf32> to vector<2x16xf32>
    %297 = arith.mulf %286, %296 : vector<2x16xf32>
    %298 = arith.addf %295, %297 : vector<2x16xf32>
    %299 = math.tanh %298 : vector<2x16xf32>
    %cst_93 = arith.constant 1.000000e+00 : f32
    %300 = vector.broadcast %cst_93 : f32 to vector<2x16xf32>
    %301 = arith.subf %300, %294 : vector<2x16xf32>
    %302 = arith.mulf %301, %299 : vector<2x16xf32>
    %303 = arith.mulf %294, %213 : vector<2x16xf32>
    %304 = arith.addf %302, %303 : vector<2x16xf32>
    %305 = vector.broadcast %249 : vector<2x1xf32> to vector<2x16xf32>
    %306 = arith.mulf %305, %278 : vector<2x16xf32>
    %cst_94 = arith.constant 1.000000e+00 : f32
    %307 = vector.broadcast %cst_94 : f32 to vector<2x1xf32>
    %308 = arith.subf %307, %249 : vector<2x1xf32>
    %309 = vector.broadcast %308 : vector<2x1xf32> to vector<2x16xf32>
    %310 = arith.mulf %309, %206 : vector<2x16xf32>
    %311 = arith.addf %306, %310 : vector<2x16xf32>
    %312 = vector.broadcast %252 : vector<2x1xf32> to vector<2x16xf32>
    %313 = arith.mulf %312, %304 : vector<2x16xf32>
    %cst_95 = arith.constant 1.000000e+00 : f32
    %314 = vector.broadcast %cst_95 : f32 to vector<2x1xf32>
    %315 = arith.subf %314, %252 : vector<2x1xf32>
    %316 = vector.broadcast %315 : vector<2x1xf32> to vector<2x16xf32>
    %317 = arith.mulf %316, %213 : vector<2x16xf32>
    %318 = arith.addf %313, %317 : vector<2x16xf32>
    %319 = vector.broadcast %249 : vector<2x1xf32> to vector<2x16xf32>
    %320 = arith.mulf %319, %311 : vector<2x16xf32>
    %cst_96 = arith.constant 1.000000e+00 : f32
    %321 = vector.broadcast %cst_96 : f32 to vector<2x1xf32>
    %322 = arith.subf %321, %249 : vector<2x1xf32>
    %cst_97 = arith.constant 0.000000e+00 : f32
    %323 = vector.broadcast %cst_97 : f32 to vector<2x1xf32>
    %324 = arith.mulf %322, %323 : vector<2x1xf32>
    %325 = vector.broadcast %324 : vector<2x1xf32> to vector<2x16xf32>
    %326 = arith.addf %320, %325 : vector<2x16xf32>
    %c2_i32_98 = arith.constant 2 : i32
    %327 = arith.muli %c2_i32_78, %c2_i32_98 : i32
    %328 = arith.index_cast %327 : i32 to index
    %c0_99 = arith.constant 0 : index
    %329 = vector.load %arg7[%328, %c0_99] : memref<16x16xf32, #tpu.memory_space<vmem>>, vector<2x16xf32>
    tpu.vector_store %arg7[%328, %c0_99], %326 {strides = array<i32>} : memref<16x16xf32, #tpu.memory_space<vmem>>, vector<2x16xf32>,
    %330 = vector.broadcast %252 : vector<2x1xf32> to vector<2x16xf32>
    %331 = arith.mulf %330, %318 : vector<2x16xf32>
    %cst_100 = arith.constant 1.000000e+00 : f32
    %332 = vector.broadcast %cst_100 : f32 to vector<2x1xf32>
    %333 = arith.subf %332, %252 : vector<2x1xf32>
    %cst_101 = arith.constant 0.000000e+00 : f32
    %334 = vector.broadcast %cst_101 : f32 to vector<2x1xf32>
    %335 = arith.mulf %333, %334 : vector<2x1xf32>
    %336 = vector.broadcast %335 : vector<2x1xf32> to vector<2x16xf32>
    %337 = arith.addf %331, %336 : vector<2x16xf32>
    %c2_i32_102 = arith.constant 2 : i32
    %338 = arith.muli %236, %c2_i32_102 : i32
    %339 = arith.index_cast %338 : i32 to index
    %c0_103 = arith.constant 0 : index
    %340 = vector.load %arg8[%339, %c0_103] : memref<16x16xf32, #tpu.memory_space<vmem>>, vector<2x16xf32>
    tpu.vector_store %arg8[%339, %c0_103], %337 {strides = array<i32>} : memref<16x16xf32, #tpu.memory_space<vmem>>, vector<2x16xf32>,
    %c3_i32 = arith.constant 3 : i32
    %c7_i32_104 = arith.constant 7 : i32
    %341 = arith.subi %c7_i32_104, %c3_i32 : i32
    %342 = arith.index_cast %c3_i32 : i32 to index
    %c0_105 = arith.constant 0 : index
    %343 = tpu.strided_load %arg9[%342, %c0_105] {strides = array<i32: 8, 1>} : memref<16x48xf32, #tpu.memory_space<vmem>>, vector<2x48xf32>
    %344 = arith.index_cast %341 : i32 to index
    %c0_106 = arith.constant 0 : index
    %345 = tpu.strided_load %arg10[%344, %c0_106] {strides = array<i32: 8, 1>} : memref<16x48xf32, #tpu.memory_space<vmem>>, vector<2x48xf32>
    %cst_107 = arith.constant dense<0.000000e+00> : vector<2x48xf32>
    %346 = tpu.matmul %311, %18, %cst_107 {dimension_numbers = #tpu.dot_dimension_numbers<[1], [0], [0], [1], [0, 0, 1, 1], [], []>} : vector<2x16xf32>, vector<16x48xf32>, vector<2x48xf32> -> vector<2x48xf32>
    %347 = vector.broadcast %20 : vector<1x48xf32> to vector<2x48xf32>
    %348 = arith.addf %346, %347 : vector<2x48xf32>
    %cst_108 = arith.constant dense<0.000000e+00> : vector<2x48xf32>
    %349 = tpu.matmul %318, %22, %cst_108 {dimension_numbers = #tpu.dot_dimension_numbers<[1], [0], [0], [1], [0, 0, 1, 1], [], []>} : vector<2x16xf32>, vector<16x48xf32>, vector<2x48xf32> -> vector<2x48xf32>
    %350 = vector.broadcast %24 : vector<1x48xf32> to vector<2x48xf32>
    %351 = arith.addf %349, %350 : vector<2x48xf32>
    %352 = arith.index_cast %c3_i32 : i32 to index
    %c0_109 = arith.constant 0 : index
    %c0_110 = arith.constant 0 : index
    %353 = vector.load %arg6[%352, %c0_109, %c0_110] : memref<8x2x1xf32, #tpu.memory_space<vmem>>, vector<1x2x1xf32>
    %354 = vector.shape_cast %353 : vector<1x2x1xf32> to vector<2x1xf32>
    %355 = arith.index_cast %341 : i32 to index
    %c0_111 = arith.constant 0 : index
    %c0_112 = arith.constant 0 : index
    %356 = vector.load %arg6[%355, %c0_111, %c0_112] : memref<8x2x1xf32, #tpu.memory_space<vmem>>, vector<1x2x1xf32>
    %357 = vector.shape_cast %356 : vector<1x2x1xf32> to vector<2x1xf32>
    %358 = vector.extract_strided_slice %343 {offsets = [0, 0], sizes = [2, 16], strides = [1, 1]} : vector<2x48xf32> to vector<2x16xf32>
    %359 = vector.extract_strided_slice %348 {offsets = [0, 0], sizes = [2, 16], strides = [1, 1]} : vector<2x48xf32> to vector<2x16xf32>
    %360 = arith.addf %358, %359 : vector<2x16xf32>
    %361 = arith.negf %360 : vector<2x16xf32>
    %362 = math.exp %361 : vector<2x16xf32>
    %cst_113 = arith.constant 1.000000e+00 : f32
    %363 = vector.broadcast %cst_113 : f32 to vector<2x16xf32>
    %364 = arith.addf %363, %362 : vector<2x16xf32>
    %365 = arith.divf %363, %364 : vector<2x16xf32>
    %366 = vector.extract_strided_slice %343 {offsets = [0, 16], sizes = [2, 16], strides = [1, 1]} : vector<2x48xf32> to vector<2x16xf32>
    %367 = vector.extract_strided_slice %348 {offsets = [0, 16], sizes = [2, 16], strides = [1, 1]} : vector<2x48xf32> to vector<2x16xf32>
    %368 = arith.addf %366, %367 : vector<2x16xf32>
    %369 = arith.negf %368 : vector<2x16xf32>
    %370 = math.exp %369 : vector<2x16xf32>
    %cst_114 = arith.constant 1.000000e+00 : f32
    %371 = vector.broadcast %cst_114 : f32 to vector<2x16xf32>
    %372 = arith.addf %371, %370 : vector<2x16xf32>
    %373 = arith.divf %371, %372 : vector<2x16xf32>
    %374 = vector.extract_strided_slice %343 {offsets = [0, 32], sizes = [2, 16], strides = [1, 1]} : vector<2x48xf32> to vector<2x16xf32>
    %375 = vector.extract_strided_slice %348 {offsets = [0, 32], sizes = [2, 16], strides = [1, 1]} : vector<2x48xf32> to vector<2x16xf32>
    %376 = arith.mulf %365, %375 : vector<2x16xf32>
    %377 = arith.addf %374, %376 : vector<2x16xf32>
    %378 = math.tanh %377 : vector<2x16xf32>
    %cst_115 = arith.constant 1.000000e+00 : f32
    %379 = vector.broadcast %cst_115 : f32 to vector<2x16xf32>
    %380 = arith.subf %379, %373 : vector<2x16xf32>
    %381 = arith.mulf %380, %378 : vector<2x16xf32>
    %382 = arith.mulf %373, %311 : vector<2x16xf32>
    %383 = arith.addf %381, %382 : vector<2x16xf32>
    %384 = vector.extract_strided_slice %345 {offsets = [0, 0], sizes = [2, 16], strides = [1, 1]} : vector<2x48xf32> to vector<2x16xf32>
    %385 = vector.extract_strided_slice %351 {offsets = [0, 0], sizes = [2, 16], strides = [1, 1]} : vector<2x48xf32> to vector<2x16xf32>
    %386 = arith.addf %384, %385 : vector<2x16xf32>
    %387 = arith.negf %386 : vector<2x16xf32>
    %388 = math.exp %387 : vector<2x16xf32>
    %cst_116 = arith.constant 1.000000e+00 : f32
    %389 = vector.broadcast %cst_116 : f32 to vector<2x16xf32>
    %390 = arith.addf %389, %388 : vector<2x16xf32>
    %391 = arith.divf %389, %390 : vector<2x16xf32>
    %392 = vector.extract_strided_slice %345 {offsets = [0, 16], sizes = [2, 16], strides = [1, 1]} : vector<2x48xf32> to vector<2x16xf32>
    %393 = vector.extract_strided_slice %351 {offsets = [0, 16], sizes = [2, 16], strides = [1, 1]} : vector<2x48xf32> to vector<2x16xf32>
    %394 = arith.addf %392, %393 : vector<2x16xf32>
    %395 = arith.negf %394 : vector<2x16xf32>
    %396 = math.exp %395 : vector<2x16xf32>
    %cst_117 = arith.constant 1.000000e+00 : f32
    %397 = vector.broadcast %cst_117 : f32 to vector<2x16xf32>
    %398 = arith.addf %397, %396 : vector<2x16xf32>
    %399 = arith.divf %397, %398 : vector<2x16xf32>
    %400 = vector.extract_strided_slice %345 {offsets = [0, 32], sizes = [2, 16], strides = [1, 1]} : vector<2x48xf32> to vector<2x16xf32>
    %401 = vector.extract_strided_slice %351 {offsets = [0, 32], sizes = [2, 16], strides = [1, 1]} : vector<2x48xf32> to vector<2x16xf32>
    %402 = arith.mulf %391, %401 : vector<2x16xf32>
    %403 = arith.addf %400, %402 : vector<2x16xf32>
    %404 = math.tanh %403 : vector<2x16xf32>
    %cst_118 = arith.constant 1.000000e+00 : f32
    %405 = vector.broadcast %cst_118 : f32 to vector<2x16xf32>
    %406 = arith.subf %405, %399 : vector<2x16xf32>
    %407 = arith.mulf %406, %404 : vector<2x16xf32>
    %408 = arith.mulf %399, %318 : vector<2x16xf32>
    %409 = arith.addf %407, %408 : vector<2x16xf32>
    %410 = vector.broadcast %354 : vector<2x1xf32> to vector<2x16xf32>
    %411 = arith.mulf %410, %383 : vector<2x16xf32>
    %cst_119 = arith.constant 1.000000e+00 : f32
    %412 = vector.broadcast %cst_119 : f32 to vector<2x1xf32>
    %413 = arith.subf %412, %354 : vector<2x1xf32>
    %414 = vector.broadcast %413 : vector<2x1xf32> to vector<2x16xf32>
    %415 = arith.mulf %414, %311 : vector<2x16xf32>
    %416 = arith.addf %411, %415 : vector<2x16xf32>
    %417 = vector.broadcast %357 : vector<2x1xf32> to vector<2x16xf32>
    %418 = arith.mulf %417, %409 : vector<2x16xf32>
    %cst_120 = arith.constant 1.000000e+00 : f32
    %419 = vector.broadcast %cst_120 : f32 to vector<2x1xf32>
    %420 = arith.subf %419, %357 : vector<2x1xf32>
    %421 = vector.broadcast %420 : vector<2x1xf32> to vector<2x16xf32>
    %422 = arith.mulf %421, %318 : vector<2x16xf32>
    %423 = arith.addf %418, %422 : vector<2x16xf32>
    %424 = vector.broadcast %354 : vector<2x1xf32> to vector<2x16xf32>
    %425 = arith.mulf %424, %416 : vector<2x16xf32>
    %cst_121 = arith.constant 1.000000e+00 : f32
    %426 = vector.broadcast %cst_121 : f32 to vector<2x1xf32>
    %427 = arith.subf %426, %354 : vector<2x1xf32>
    %cst_122 = arith.constant 0.000000e+00 : f32
    %428 = vector.broadcast %cst_122 : f32 to vector<2x1xf32>
    %429 = arith.mulf %427, %428 : vector<2x1xf32>
    %430 = vector.broadcast %429 : vector<2x1xf32> to vector<2x16xf32>
    %431 = arith.addf %425, %430 : vector<2x16xf32>
    %c2_i32_123 = arith.constant 2 : i32
    %432 = arith.muli %c3_i32, %c2_i32_123 : i32
    %433 = arith.index_cast %432 : i32 to index
    %c0_124 = arith.constant 0 : index
    %434 = vector.load %arg7[%433, %c0_124] : memref<16x16xf32, #tpu.memory_space<vmem>>, vector<2x16xf32>
    tpu.vector_store %arg7[%433, %c0_124], %431 {strides = array<i32>} : memref<16x16xf32, #tpu.memory_space<vmem>>, vector<2x16xf32>,
    %435 = vector.broadcast %357 : vector<2x1xf32> to vector<2x16xf32>
    %436 = arith.mulf %435, %423 : vector<2x16xf32>
    %cst_125 = arith.constant 1.000000e+00 : f32
    %437 = vector.broadcast %cst_125 : f32 to vector<2x1xf32>
    %438 = arith.subf %437, %357 : vector<2x1xf32>
    %cst_126 = arith.constant 0.000000e+00 : f32
    %439 = vector.broadcast %cst_126 : f32 to vector<2x1xf32>
    %440 = arith.mulf %438, %439 : vector<2x1xf32>
    %441 = vector.broadcast %440 : vector<2x1xf32> to vector<2x16xf32>
    %442 = arith.addf %436, %441 : vector<2x16xf32>
    %c2_i32_127 = arith.constant 2 : i32
    %443 = arith.muli %341, %c2_i32_127 : i32
    %444 = arith.index_cast %443 : i32 to index
    %c0_128 = arith.constant 0 : index
    %445 = vector.load %arg8[%444, %c0_128] : memref<16x16xf32, #tpu.memory_space<vmem>>, vector<2x16xf32>
    tpu.vector_store %arg8[%444, %c0_128], %442 {strides = array<i32>} : memref<16x16xf32, #tpu.memory_space<vmem>>, vector<2x16xf32>,
    %c4_i32 = arith.constant 4 : i32
    %c7_i32_129 = arith.constant 7 : i32
    %446 = arith.subi %c7_i32_129, %c4_i32 : i32
    %447 = arith.index_cast %c4_i32 : i32 to index
    %c0_130 = arith.constant 0 : index
    %448 = tpu.strided_load %arg9[%447, %c0_130] {strides = array<i32: 8, 1>} : memref<16x48xf32, #tpu.memory_space<vmem>>, vector<2x48xf32>
    %449 = arith.index_cast %446 : i32 to index
    %c0_131 = arith.constant 0 : index
    %450 = tpu.strided_load %arg10[%449, %c0_131] {strides = array<i32: 8, 1>} : memref<16x48xf32, #tpu.memory_space<vmem>>, vector<2x48xf32>
    %cst_132 = arith.constant dense<0.000000e+00> : vector<2x48xf32>
    %451 = tpu.matmul %416, %18, %cst_132 {dimension_numbers = #tpu.dot_dimension_numbers<[1], [0], [0], [1], [0, 0, 1, 1], [], []>} : vector<2x16xf32>, vector<16x48xf32>, vector<2x48xf32> -> vector<2x48xf32>
    %452 = vector.broadcast %20 : vector<1x48xf32> to vector<2x48xf32>
    %453 = arith.addf %451, %452 : vector<2x48xf32>
    %cst_133 = arith.constant dense<0.000000e+00> : vector<2x48xf32>
    %454 = tpu.matmul %423, %22, %cst_133 {dimension_numbers = #tpu.dot_dimension_numbers<[1], [0], [0], [1], [0, 0, 1, 1], [], []>} : vector<2x16xf32>, vector<16x48xf32>, vector<2x48xf32> -> vector<2x48xf32>
    %455 = vector.broadcast %24 : vector<1x48xf32> to vector<2x48xf32>
    %456 = arith.addf %454, %455 : vector<2x48xf32>
    %457 = arith.index_cast %c4_i32 : i32 to index
    %c0_134 = arith.constant 0 : index
    %c0_135 = arith.constant 0 : index
    %458 = vector.load %arg6[%457, %c0_134, %c0_135] : memref<8x2x1xf32, #tpu.memory_space<vmem>>, vector<1x2x1xf32>
    %459 = vector.shape_cast %458 : vector<1x2x1xf32> to vector<2x1xf32>
    %460 = arith.index_cast %446 : i32 to index
    %c0_136 = arith.constant 0 : index
    %c0_137 = arith.constant 0 : index
    %461 = vector.load %arg6[%460, %c0_136, %c0_137] : memref<8x2x1xf32, #tpu.memory_space<vmem>>, vector<1x2x1xf32>
    %462 = vector.shape_cast %461 : vector<1x2x1xf32> to vector<2x1xf32>
    %463 = vector.extract_strided_slice %448 {offsets = [0, 0], sizes = [2, 16], strides = [1, 1]} : vector<2x48xf32> to vector<2x16xf32>
    %464 = vector.extract_strided_slice %453 {offsets = [0, 0], sizes = [2, 16], strides = [1, 1]} : vector<2x48xf32> to vector<2x16xf32>
    %465 = arith.addf %463, %464 : vector<2x16xf32>
    %466 = arith.negf %465 : vector<2x16xf32>
    %467 = math.exp %466 : vector<2x16xf32>
    %cst_138 = arith.constant 1.000000e+00 : f32
    %468 = vector.broadcast %cst_138 : f32 to vector<2x16xf32>
    %469 = arith.addf %468, %467 : vector<2x16xf32>
    %470 = arith.divf %468, %469 : vector<2x16xf32>
    %471 = vector.extract_strided_slice %448 {offsets = [0, 16], sizes = [2, 16], strides = [1, 1]} : vector<2x48xf32> to vector<2x16xf32>
    %472 = vector.extract_strided_slice %453 {offsets = [0, 16], sizes = [2, 16], strides = [1, 1]} : vector<2x48xf32> to vector<2x16xf32>
    %473 = arith.addf %471, %472 : vector<2x16xf32>
    %474 = arith.negf %473 : vector<2x16xf32>
    %475 = math.exp %474 : vector<2x16xf32>
    %cst_139 = arith.constant 1.000000e+00 : f32
    %476 = vector.broadcast %cst_139 : f32 to vector<2x16xf32>
    %477 = arith.addf %476, %475 : vector<2x16xf32>
    %478 = arith.divf %476, %477 : vector<2x16xf32>
    %479 = vector.extract_strided_slice %448 {offsets = [0, 32], sizes = [2, 16], strides = [1, 1]} : vector<2x48xf32> to vector<2x16xf32>
    %480 = vector.extract_strided_slice %453 {offsets = [0, 32], sizes = [2, 16], strides = [1, 1]} : vector<2x48xf32> to vector<2x16xf32>
    %481 = arith.mulf %470, %480 : vector<2x16xf32>
    %482 = arith.addf %479, %481 : vector<2x16xf32>
    %483 = math.tanh %482 : vector<2x16xf32>
    %cst_140 = arith.constant 1.000000e+00 : f32
    %484 = vector.broadcast %cst_140 : f32 to vector<2x16xf32>
    %485 = arith.subf %484, %478 : vector<2x16xf32>
    %486 = arith.mulf %485, %483 : vector<2x16xf32>
    %487 = arith.mulf %478, %416 : vector<2x16xf32>
    %488 = arith.addf %486, %487 : vector<2x16xf32>
    %489 = vector.extract_strided_slice %450 {offsets = [0, 0], sizes = [2, 16], strides = [1, 1]} : vector<2x48xf32> to vector<2x16xf32>
    %490 = vector.extract_strided_slice %456 {offsets = [0, 0], sizes = [2, 16], strides = [1, 1]} : vector<2x48xf32> to vector<2x16xf32>
    %491 = arith.addf %489, %490 : vector<2x16xf32>
    %492 = arith.negf %491 : vector<2x16xf32>
    %493 = math.exp %492 : vector<2x16xf32>
    %cst_141 = arith.constant 1.000000e+00 : f32
    %494 = vector.broadcast %cst_141 : f32 to vector<2x16xf32>
    %495 = arith.addf %494, %493 : vector<2x16xf32>
    %496 = arith.divf %494, %495 : vector<2x16xf32>
    %497 = vector.extract_strided_slice %450 {offsets = [0, 16], sizes = [2, 16], strides = [1, 1]} : vector<2x48xf32> to vector<2x16xf32>
    %498 = vector.extract_strided_slice %456 {offsets = [0, 16], sizes = [2, 16], strides = [1, 1]} : vector<2x48xf32> to vector<2x16xf32>
    %499 = arith.addf %497, %498 : vector<2x16xf32>
    %500 = arith.negf %499 : vector<2x16xf32>
    %501 = math.exp %500 : vector<2x16xf32>
    %cst_142 = arith.constant 1.000000e+00 : f32
    %502 = vector.broadcast %cst_142 : f32 to vector<2x16xf32>
    %503 = arith.addf %502, %501 : vector<2x16xf32>
    %504 = arith.divf %502, %503 : vector<2x16xf32>
    %505 = vector.extract_strided_slice %450 {offsets = [0, 32], sizes = [2, 16], strides = [1, 1]} : vector<2x48xf32> to vector<2x16xf32>
    %506 = vector.extract_strided_slice %456 {offsets = [0, 32], sizes = [2, 16], strides = [1, 1]} : vector<2x48xf32> to vector<2x16xf32>
    %507 = arith.mulf %496, %506 : vector<2x16xf32>
    %508 = arith.addf %505, %507 : vector<2x16xf32>
    %509 = math.tanh %508 : vector<2x16xf32>
    %cst_143 = arith.constant 1.000000e+00 : f32
    %510 = vector.broadcast %cst_143 : f32 to vector<2x16xf32>
    %511 = arith.subf %510, %504 : vector<2x16xf32>
    %512 = arith.mulf %511, %509 : vector<2x16xf32>
    %513 = arith.mulf %504, %423 : vector<2x16xf32>
    %514 = arith.addf %512, %513 : vector<2x16xf32>
    %515 = vector.broadcast %459 : vector<2x1xf32> to vector<2x16xf32>
    %516 = arith.mulf %515, %488 : vector<2x16xf32>
    %cst_144 = arith.constant 1.000000e+00 : f32
    %517 = vector.broadcast %cst_144 : f32 to vector<2x1xf32>
    %518 = arith.subf %517, %459 : vector<2x1xf32>
    %519 = vector.broadcast %518 : vector<2x1xf32> to vector<2x16xf32>
    %520 = arith.mulf %519, %416 : vector<2x16xf32>
    %521 = arith.addf %516, %520 : vector<2x16xf32>
    %522 = vector.broadcast %462 : vector<2x1xf32> to vector<2x16xf32>
    %523 = arith.mulf %522, %514 : vector<2x16xf32>
    %cst_145 = arith.constant 1.000000e+00 : f32
    %524 = vector.broadcast %cst_145 : f32 to vector<2x1xf32>
    %525 = arith.subf %524, %462 : vector<2x1xf32>
    %526 = vector.broadcast %525 : vector<2x1xf32> to vector<2x16xf32>
    %527 = arith.mulf %526, %423 : vector<2x16xf32>
    %528 = arith.addf %523, %527 : vector<2x16xf32>
    %529 = vector.broadcast %459 : vector<2x1xf32> to vector<2x16xf32>
    %530 = arith.mulf %529, %521 : vector<2x16xf32>
    %cst_146 = arith.constant 1.000000e+00 : f32
    %531 = vector.broadcast %cst_146 : f32 to vector<2x1xf32>
    %532 = arith.subf %531, %459 : vector<2x1xf32>
    %cst_147 = arith.constant 0.000000e+00 : f32
    %533 = vector.broadcast %cst_147 : f32 to vector<2x1xf32>
    %534 = arith.mulf %532, %533 : vector<2x1xf32>
    %535 = vector.broadcast %534 : vector<2x1xf32> to vector<2x16xf32>
    %536 = arith.addf %530, %535 : vector<2x16xf32>
    %c2_i32_148 = arith.constant 2 : i32
    %537 = arith.muli %c4_i32, %c2_i32_148 : i32
    %538 = arith.index_cast %537 : i32 to index
    %c0_149 = arith.constant 0 : index
    %539 = vector.load %arg7[%538, %c0_149] : memref<16x16xf32, #tpu.memory_space<vmem>>, vector<2x16xf32>
    tpu.vector_store %arg7[%538, %c0_149], %536 {strides = array<i32>} : memref<16x16xf32, #tpu.memory_space<vmem>>, vector<2x16xf32>,
    %540 = vector.broadcast %462 : vector<2x1xf32> to vector<2x16xf32>
    %541 = arith.mulf %540, %528 : vector<2x16xf32>
    %cst_150 = arith.constant 1.000000e+00 : f32
    %542 = vector.broadcast %cst_150 : f32 to vector<2x1xf32>
    %543 = arith.subf %542, %462 : vector<2x1xf32>
    %cst_151 = arith.constant 0.000000e+00 : f32
    %544 = vector.broadcast %cst_151 : f32 to vector<2x1xf32>
    %545 = arith.mulf %543, %544 : vector<2x1xf32>
    %546 = vector.broadcast %545 : vector<2x1xf32> to vector<2x16xf32>
    %547 = arith.addf %541, %546 : vector<2x16xf32>
    %c2_i32_152 = arith.constant 2 : i32
    %548 = arith.muli %446, %c2_i32_152 : i32
    %549 = arith.index_cast %548 : i32 to index
    %c0_153 = arith.constant 0 : index
    %550 = vector.load %arg8[%549, %c0_153] : memref<16x16xf32, #tpu.memory_space<vmem>>, vector<2x16xf32>
    tpu.vector_store %arg8[%549, %c0_153], %547 {strides = array<i32>} : memref<16x16xf32, #tpu.memory_space<vmem>>, vector<2x16xf32>,
    %c5_i32 = arith.constant 5 : i32
    %c7_i32_154 = arith.constant 7 : i32
    %551 = arith.subi %c7_i32_154, %c5_i32 : i32
    %552 = arith.index_cast %c5_i32 : i32 to index
    %c0_155 = arith.constant 0 : index
    %553 = tpu.strided_load %arg9[%552, %c0_155] {strides = array<i32: 8, 1>} : memref<16x48xf32, #tpu.memory_space<vmem>>, vector<2x48xf32>
    %554 = arith.index_cast %551 : i32 to index
    %c0_156 = arith.constant 0 : index
    %555 = tpu.strided_load %arg10[%554, %c0_156] {strides = array<i32: 8, 1>} : memref<16x48xf32, #tpu.memory_space<vmem>>, vector<2x48xf32>
    %cst_157 = arith.constant dense<0.000000e+00> : vector<2x48xf32>
    %556 = tpu.matmul %521, %18, %cst_157 {dimension_numbers = #tpu.dot_dimension_numbers<[1], [0], [0], [1], [0, 0, 1, 1], [], []>} : vector<2x16xf32>, vector<16x48xf32>, vector<2x48xf32> -> vector<2x48xf32>
    %557 = vector.broadcast %20 : vector<1x48xf32> to vector<2x48xf32>
    %558 = arith.addf %556, %557 : vector<2x48xf32>
    %cst_158 = arith.constant dense<0.000000e+00> : vector<2x48xf32>
    %559 = tpu.matmul %528, %22, %cst_158 {dimension_numbers = #tpu.dot_dimension_numbers<[1], [0], [0], [1], [0, 0, 1, 1], [], []>} : vector<2x16xf32>, vector<16x48xf32>, vector<2x48xf32> -> vector<2x48xf32>
    %560 = vector.broadcast %24 : vector<1x48xf32> to vector<2x48xf32>
    %561 = arith.addf %559, %560 : vector<2x48xf32>
    %562 = arith.index_cast %c5_i32 : i32 to index
    %c0_159 = arith.constant 0 : index
    %c0_160 = arith.constant 0 : index
    %563 = vector.load %arg6[%562, %c0_159, %c0_160] : memref<8x2x1xf32, #tpu.memory_space<vmem>>, vector<1x2x1xf32>
    %564 = vector.shape_cast %563 : vector<1x2x1xf32> to vector<2x1xf32>
    %565 = arith.index_cast %551 : i32 to index
    %c0_161 = arith.constant 0 : index
    %c0_162 = arith.constant 0 : index
    %566 = vector.load %arg6[%565, %c0_161, %c0_162] : memref<8x2x1xf32, #tpu.memory_space<vmem>>, vector<1x2x1xf32>
    %567 = vector.shape_cast %566 : vector<1x2x1xf32> to vector<2x1xf32>
    %568 = vector.extract_strided_slice %553 {offsets = [0, 0], sizes = [2, 16], strides = [1, 1]} : vector<2x48xf32> to vector<2x16xf32>
    %569 = vector.extract_strided_slice %558 {offsets = [0, 0], sizes = [2, 16], strides = [1, 1]} : vector<2x48xf32> to vector<2x16xf32>
    %570 = arith.addf %568, %569 : vector<2x16xf32>
    %571 = arith.negf %570 : vector<2x16xf32>
    %572 = math.exp %571 : vector<2x16xf32>
    %cst_163 = arith.constant 1.000000e+00 : f32
    %573 = vector.broadcast %cst_163 : f32 to vector<2x16xf32>
    %574 = arith.addf %573, %572 : vector<2x16xf32>
    %575 = arith.divf %573, %574 : vector<2x16xf32>
    %576 = vector.extract_strided_slice %553 {offsets = [0, 16], sizes = [2, 16], strides = [1, 1]} : vector<2x48xf32> to vector<2x16xf32>
    %577 = vector.extract_strided_slice %558 {offsets = [0, 16], sizes = [2, 16], strides = [1, 1]} : vector<2x48xf32> to vector<2x16xf32>
    %578 = arith.addf %576, %577 : vector<2x16xf32>
    %579 = arith.negf %578 : vector<2x16xf32>
    %580 = math.exp %579 : vector<2x16xf32>
    %cst_164 = arith.constant 1.000000e+00 : f32
    %581 = vector.broadcast %cst_164 : f32 to vector<2x16xf32>
    %582 = arith.addf %581, %580 : vector<2x16xf32>
    %583 = arith.divf %581, %582 : vector<2x16xf32>
    %584 = vector.extract_strided_slice %553 {offsets = [0, 32], sizes = [2, 16], strides = [1, 1]} : vector<2x48xf32> to vector<2x16xf32>
    %585 = vector.extract_strided_slice %558 {offsets = [0, 32], sizes = [2, 16], strides = [1, 1]} : vector<2x48xf32> to vector<2x16xf32>
    %586 = arith.mulf %575, %585 : vector<2x16xf32>
    %587 = arith.addf %584, %586 : vector<2x16xf32>
    %588 = math.tanh %587 : vector<2x16xf32>
    %cst_165 = arith.constant 1.000000e+00 : f32
    %589 = vector.broadcast %cst_165 : f32 to vector<2x16xf32>
    %590 = arith.subf %589, %583 : vector<2x16xf32>
    %591 = arith.mulf %590, %588 : vector<2x16xf32>
    %592 = arith.mulf %583, %521 : vector<2x16xf32>
    %593 = arith.addf %591, %592 : vector<2x16xf32>
    %594 = vector.extract_strided_slice %555 {offsets = [0, 0], sizes = [2, 16], strides = [1, 1]} : vector<2x48xf32> to vector<2x16xf32>
    %595 = vector.extract_strided_slice %561 {offsets = [0, 0], sizes = [2, 16], strides = [1, 1]} : vector<2x48xf32> to vector<2x16xf32>
    %596 = arith.addf %594, %595 : vector<2x16xf32>
    %597 = arith.negf %596 : vector<2x16xf32>
    %598 = math.exp %597 : vector<2x16xf32>
    %cst_166 = arith.constant 1.000000e+00 : f32
    %599 = vector.broadcast %cst_166 : f32 to vector<2x16xf32>
    %600 = arith.addf %599, %598 : vector<2x16xf32>
    %601 = arith.divf %599, %600 : vector<2x16xf32>
    %602 = vector.extract_strided_slice %555 {offsets = [0, 16], sizes = [2, 16], strides = [1, 1]} : vector<2x48xf32> to vector<2x16xf32>
    %603 = vector.extract_strided_slice %561 {offsets = [0, 16], sizes = [2, 16], strides = [1, 1]} : vector<2x48xf32> to vector<2x16xf32>
    %604 = arith.addf %602, %603 : vector<2x16xf32>
    %605 = arith.negf %604 : vector<2x16xf32>
    %606 = math.exp %605 : vector<2x16xf32>
    %cst_167 = arith.constant 1.000000e+00 : f32
    %607 = vector.broadcast %cst_167 : f32 to vector<2x16xf32>
    %608 = arith.addf %607, %606 : vector<2x16xf32>
    %609 = arith.divf %607, %608 : vector<2x16xf32>
    %610 = vector.extract_strided_slice %555 {offsets = [0, 32], sizes = [2, 16], strides = [1, 1]} : vector<2x48xf32> to vector<2x16xf32>
    %611 = vector.extract_strided_slice %561 {offsets = [0, 32], sizes = [2, 16], strides = [1, 1]} : vector<2x48xf32> to vector<2x16xf32>
    %612 = arith.mulf %601, %611 : vector<2x16xf32>
    %613 = arith.addf %610, %612 : vector<2x16xf32>
    %614 = math.tanh %613 : vector<2x16xf32>
    %cst_168 = arith.constant 1.000000e+00 : f32
    %615 = vector.broadcast %cst_168 : f32 to vector<2x16xf32>
    %616 = arith.subf %615, %609 : vector<2x16xf32>
    %617 = arith.mulf %616, %614 : vector<2x16xf32>
    %618 = arith.mulf %609, %528 : vector<2x16xf32>
    %619 = arith.addf %617, %618 : vector<2x16xf32>
    %620 = vector.broadcast %564 : vector<2x1xf32> to vector<2x16xf32>
    %621 = arith.mulf %620, %593 : vector<2x16xf32>
    %cst_169 = arith.constant 1.000000e+00 : f32
    %622 = vector.broadcast %cst_169 : f32 to vector<2x1xf32>
    %623 = arith.subf %622, %564 : vector<2x1xf32>
    %624 = vector.broadcast %623 : vector<2x1xf32> to vector<2x16xf32>
    %625 = arith.mulf %624, %521 : vector<2x16xf32>
    %626 = arith.addf %621, %625 : vector<2x16xf32>
    %627 = vector.broadcast %567 : vector<2x1xf32> to vector<2x16xf32>
    %628 = arith.mulf %627, %619 : vector<2x16xf32>
    %cst_170 = arith.constant 1.000000e+00 : f32
    %629 = vector.broadcast %cst_170 : f32 to vector<2x1xf32>
    %630 = arith.subf %629, %567 : vector<2x1xf32>
    %631 = vector.broadcast %630 : vector<2x1xf32> to vector<2x16xf32>
    %632 = arith.mulf %631, %528 : vector<2x16xf32>
    %633 = arith.addf %628, %632 : vector<2x16xf32>
    %634 = vector.broadcast %564 : vector<2x1xf32> to vector<2x16xf32>
    %635 = arith.mulf %634, %626 : vector<2x16xf32>
    %cst_171 = arith.constant 1.000000e+00 : f32
    %636 = vector.broadcast %cst_171 : f32 to vector<2x1xf32>
    %637 = arith.subf %636, %564 : vector<2x1xf32>
    %cst_172 = arith.constant 0.000000e+00 : f32
    %638 = vector.broadcast %cst_172 : f32 to vector<2x1xf32>
    %639 = arith.mulf %637, %638 : vector<2x1xf32>
    %640 = vector.broadcast %639 : vector<2x1xf32> to vector<2x16xf32>
    %641 = arith.addf %635, %640 : vector<2x16xf32>
    %c2_i32_173 = arith.constant 2 : i32
    %642 = arith.muli %c5_i32, %c2_i32_173 : i32
    %643 = arith.index_cast %642 : i32 to index
    %c0_174 = arith.constant 0 : index
    %644 = vector.load %arg7[%643, %c0_174] : memref<16x16xf32, #tpu.memory_space<vmem>>, vector<2x16xf32>
    tpu.vector_store %arg7[%643, %c0_174], %641 {strides = array<i32>} : memref<16x16xf32, #tpu.memory_space<vmem>>, vector<2x16xf32>,
    %645 = vector.broadcast %567 : vector<2x1xf32> to vector<2x16xf32>
    %646 = arith.mulf %645, %633 : vector<2x16xf32>
    %cst_175 = arith.constant 1.000000e+00 : f32
    %647 = vector.broadcast %cst_175 : f32 to vector<2x1xf32>
    %648 = arith.subf %647, %567 : vector<2x1xf32>
    %cst_176 = arith.constant 0.000000e+00 : f32
    %649 = vector.broadcast %cst_176 : f32 to vector<2x1xf32>
    %650 = arith.mulf %648, %649 : vector<2x1xf32>
    %651 = vector.broadcast %650 : vector<2x1xf32> to vector<2x16xf32>
    %652 = arith.addf %646, %651 : vector<2x16xf32>
    %c2_i32_177 = arith.constant 2 : i32
    %653 = arith.muli %551, %c2_i32_177 : i32
    %654 = arith.index_cast %653 : i32 to index
    %c0_178 = arith.constant 0 : index
    %655 = vector.load %arg8[%654, %c0_178] : memref<16x16xf32, #tpu.memory_space<vmem>>, vector<2x16xf32>
    tpu.vector_store %arg8[%654, %c0_178], %652 {strides = array<i32>} : memref<16x16xf32, #tpu.memory_space<vmem>>, vector<2x16xf32>,
    %c6_i32 = arith.constant 6 : i32
    %c7_i32_179 = arith.constant 7 : i32
    %656 = arith.subi %c7_i32_179, %c6_i32 : i32
    %657 = arith.index_cast %c6_i32 : i32 to index
    %c0_180 = arith.constant 0 : index
    %658 = tpu.strided_load %arg9[%657, %c0_180] {strides = array<i32: 8, 1>} : memref<16x48xf32, #tpu.memory_space<vmem>>, vector<2x48xf32>
    %659 = arith.index_cast %656 : i32 to index
    %c0_181 = arith.constant 0 : index
    %660 = tpu.strided_load %arg10[%659, %c0_181] {strides = array<i32: 8, 1>} : memref<16x48xf32, #tpu.memory_space<vmem>>, vector<2x48xf32>
    %cst_182 = arith.constant dense<0.000000e+00> : vector<2x48xf32>
    %661 = tpu.matmul %626, %18, %cst_182 {dimension_numbers = #tpu.dot_dimension_numbers<[1], [0], [0], [1], [0, 0, 1, 1], [], []>} : vector<2x16xf32>, vector<16x48xf32>, vector<2x48xf32> -> vector<2x48xf32>
    %662 = vector.broadcast %20 : vector<1x48xf32> to vector<2x48xf32>
    %663 = arith.addf %661, %662 : vector<2x48xf32>
    %cst_183 = arith.constant dense<0.000000e+00> : vector<2x48xf32>
    %664 = tpu.matmul %633, %22, %cst_183 {dimension_numbers = #tpu.dot_dimension_numbers<[1], [0], [0], [1], [0, 0, 1, 1], [], []>} : vector<2x16xf32>, vector<16x48xf32>, vector<2x48xf32> -> vector<2x48xf32>
    %665 = vector.broadcast %24 : vector<1x48xf32> to vector<2x48xf32>
    %666 = arith.addf %664, %665 : vector<2x48xf32>
    %667 = arith.index_cast %c6_i32 : i32 to index
    %c0_184 = arith.constant 0 : index
    %c0_185 = arith.constant 0 : index
    %668 = vector.load %arg6[%667, %c0_184, %c0_185] : memref<8x2x1xf32, #tpu.memory_space<vmem>>, vector<1x2x1xf32>
    %669 = vector.shape_cast %668 : vector<1x2x1xf32> to vector<2x1xf32>
    %670 = arith.index_cast %656 : i32 to index
    %c0_186 = arith.constant 0 : index
    %c0_187 = arith.constant 0 : index
    %671 = vector.load %arg6[%670, %c0_186, %c0_187] : memref<8x2x1xf32, #tpu.memory_space<vmem>>, vector<1x2x1xf32>
    %672 = vector.shape_cast %671 : vector<1x2x1xf32> to vector<2x1xf32>
    %673 = vector.extract_strided_slice %658 {offsets = [0, 0], sizes = [2, 16], strides = [1, 1]} : vector<2x48xf32> to vector<2x16xf32>
    %674 = vector.extract_strided_slice %663 {offsets = [0, 0], sizes = [2, 16], strides = [1, 1]} : vector<2x48xf32> to vector<2x16xf32>
    %675 = arith.addf %673, %674 : vector<2x16xf32>
    %676 = arith.negf %675 : vector<2x16xf32>
    %677 = math.exp %676 : vector<2x16xf32>
    %cst_188 = arith.constant 1.000000e+00 : f32
    %678 = vector.broadcast %cst_188 : f32 to vector<2x16xf32>
    %679 = arith.addf %678, %677 : vector<2x16xf32>
    %680 = arith.divf %678, %679 : vector<2x16xf32>
    %681 = vector.extract_strided_slice %658 {offsets = [0, 16], sizes = [2, 16], strides = [1, 1]} : vector<2x48xf32> to vector<2x16xf32>
    %682 = vector.extract_strided_slice %663 {offsets = [0, 16], sizes = [2, 16], strides = [1, 1]} : vector<2x48xf32> to vector<2x16xf32>
    %683 = arith.addf %681, %682 : vector<2x16xf32>
    %684 = arith.negf %683 : vector<2x16xf32>
    %685 = math.exp %684 : vector<2x16xf32>
    %cst_189 = arith.constant 1.000000e+00 : f32
    %686 = vector.broadcast %cst_189 : f32 to vector<2x16xf32>
    %687 = arith.addf %686, %685 : vector<2x16xf32>
    %688 = arith.divf %686, %687 : vector<2x16xf32>
    %689 = vector.extract_strided_slice %658 {offsets = [0, 32], sizes = [2, 16], strides = [1, 1]} : vector<2x48xf32> to vector<2x16xf32>
    %690 = vector.extract_strided_slice %663 {offsets = [0, 32], sizes = [2, 16], strides = [1, 1]} : vector<2x48xf32> to vector<2x16xf32>
    %691 = arith.mulf %680, %690 : vector<2x16xf32>
    %692 = arith.addf %689, %691 : vector<2x16xf32>
    %693 = math.tanh %692 : vector<2x16xf32>
    %cst_190 = arith.constant 1.000000e+00 : f32
    %694 = vector.broadcast %cst_190 : f32 to vector<2x16xf32>
    %695 = arith.subf %694, %688 : vector<2x16xf32>
    %696 = arith.mulf %695, %693 : vector<2x16xf32>
    %697 = arith.mulf %688, %626 : vector<2x16xf32>
    %698 = arith.addf %696, %697 : vector<2x16xf32>
    %699 = vector.extract_strided_slice %660 {offsets = [0, 0], sizes = [2, 16], strides = [1, 1]} : vector<2x48xf32> to vector<2x16xf32>
    %700 = vector.extract_strided_slice %666 {offsets = [0, 0], sizes = [2, 16], strides = [1, 1]} : vector<2x48xf32> to vector<2x16xf32>
    %701 = arith.addf %699, %700 : vector<2x16xf32>
    %702 = arith.negf %701 : vector<2x16xf32>
    %703 = math.exp %702 : vector<2x16xf32>
    %cst_191 = arith.constant 1.000000e+00 : f32
    %704 = vector.broadcast %cst_191 : f32 to vector<2x16xf32>
    %705 = arith.addf %704, %703 : vector<2x16xf32>
    %706 = arith.divf %704, %705 : vector<2x16xf32>
    %707 = vector.extract_strided_slice %660 {offsets = [0, 16], sizes = [2, 16], strides = [1, 1]} : vector<2x48xf32> to vector<2x16xf32>
    %708 = vector.extract_strided_slice %666 {offsets = [0, 16], sizes = [2, 16], strides = [1, 1]} : vector<2x48xf32> to vector<2x16xf32>
    %709 = arith.addf %707, %708 : vector<2x16xf32>
    %710 = arith.negf %709 : vector<2x16xf32>
    %711 = math.exp %710 : vector<2x16xf32>
    %cst_192 = arith.constant 1.000000e+00 : f32
    %712 = vector.broadcast %cst_192 : f32 to vector<2x16xf32>
    %713 = arith.addf %712, %711 : vector<2x16xf32>
    %714 = arith.divf %712, %713 : vector<2x16xf32>
    %715 = vector.extract_strided_slice %660 {offsets = [0, 32], sizes = [2, 16], strides = [1, 1]} : vector<2x48xf32> to vector<2x16xf32>
    %716 = vector.extract_strided_slice %666 {offsets = [0, 32], sizes = [2, 16], strides = [1, 1]} : vector<2x48xf32> to vector<2x16xf32>
    %717 = arith.mulf %706, %716 : vector<2x16xf32>
    %718 = arith.addf %715, %717 : vector<2x16xf32>
    %719 = math.tanh %718 : vector<2x16xf32>
    %cst_193 = arith.constant 1.000000e+00 : f32
    %720 = vector.broadcast %cst_193 : f32 to vector<2x16xf32>
    %721 = arith.subf %720, %714 : vector<2x16xf32>
    %722 = arith.mulf %721, %719 : vector<2x16xf32>
    %723 = arith.mulf %714, %633 : vector<2x16xf32>
    %724 = arith.addf %722, %723 : vector<2x16xf32>
    %725 = vector.broadcast %669 : vector<2x1xf32> to vector<2x16xf32>
    %726 = arith.mulf %725, %698 : vector<2x16xf32>
    %cst_194 = arith.constant 1.000000e+00 : f32
    %727 = vector.broadcast %cst_194 : f32 to vector<2x1xf32>
    %728 = arith.subf %727, %669 : vector<2x1xf32>
    %729 = vector.broadcast %728 : vector<2x1xf32> to vector<2x16xf32>
    %730 = arith.mulf %729, %626 : vector<2x16xf32>
    %731 = arith.addf %726, %730 : vector<2x16xf32>
    %732 = vector.broadcast %672 : vector<2x1xf32> to vector<2x16xf32>
    %733 = arith.mulf %732, %724 : vector<2x16xf32>
    %cst_195 = arith.constant 1.000000e+00 : f32
    %734 = vector.broadcast %cst_195 : f32 to vector<2x1xf32>
    %735 = arith.subf %734, %672 : vector<2x1xf32>
    %736 = vector.broadcast %735 : vector<2x1xf32> to vector<2x16xf32>
    %737 = arith.mulf %736, %633 : vector<2x16xf32>
    %738 = arith.addf %733, %737 : vector<2x16xf32>
    %739 = vector.broadcast %669 : vector<2x1xf32> to vector<2x16xf32>
    %740 = arith.mulf %739, %731 : vector<2x16xf32>
    %cst_196 = arith.constant 1.000000e+00 : f32
    %741 = vector.broadcast %cst_196 : f32 to vector<2x1xf32>
    %742 = arith.subf %741, %669 : vector<2x1xf32>
    %cst_197 = arith.constant 0.000000e+00 : f32
    %743 = vector.broadcast %cst_197 : f32 to vector<2x1xf32>
    %744 = arith.mulf %742, %743 : vector<2x1xf32>
    %745 = vector.broadcast %744 : vector<2x1xf32> to vector<2x16xf32>
    %746 = arith.addf %740, %745 : vector<2x16xf32>
    %c2_i32_198 = arith.constant 2 : i32
    %747 = arith.muli %c6_i32, %c2_i32_198 : i32
    %748 = arith.index_cast %747 : i32 to index
    %c0_199 = arith.constant 0 : index
    %749 = vector.load %arg7[%748, %c0_199] : memref<16x16xf32, #tpu.memory_space<vmem>>, vector<2x16xf32>
    tpu.vector_store %arg7[%748, %c0_199], %746 {strides = array<i32>} : memref<16x16xf32, #tpu.memory_space<vmem>>, vector<2x16xf32>,
    %750 = vector.broadcast %672 : vector<2x1xf32> to vector<2x16xf32>
    %751 = arith.mulf %750, %738 : vector<2x16xf32>
    %cst_200 = arith.constant 1.000000e+00 : f32
    %752 = vector.broadcast %cst_200 : f32 to vector<2x1xf32>
    %753 = arith.subf %752, %672 : vector<2x1xf32>
    %cst_201 = arith.constant 0.000000e+00 : f32
    %754 = vector.broadcast %cst_201 : f32 to vector<2x1xf32>
    %755 = arith.mulf %753, %754 : vector<2x1xf32>
    %756 = vector.broadcast %755 : vector<2x1xf32> to vector<2x16xf32>
    %757 = arith.addf %751, %756 : vector<2x16xf32>
    %c2_i32_202 = arith.constant 2 : i32
    %758 = arith.muli %656, %c2_i32_202 : i32
    %759 = arith.index_cast %758 : i32 to index
    %c0_203 = arith.constant 0 : index
    %760 = vector.load %arg8[%759, %c0_203] : memref<16x16xf32, #tpu.memory_space<vmem>>, vector<2x16xf32>
    tpu.vector_store %arg8[%759, %c0_203], %757 {strides = array<i32>} : memref<16x16xf32, #tpu.memory_space<vmem>>, vector<2x16xf32>,
    %c7_i32_204 = arith.constant 7 : i32
    %c7_i32_205 = arith.constant 7 : i32
    %761 = arith.subi %c7_i32_205, %c7_i32_204 : i32
    %762 = arith.index_cast %c7_i32_204 : i32 to index
    %c0_206 = arith.constant 0 : index
    %763 = tpu.strided_load %arg9[%762, %c0_206] {strides = array<i32: 8, 1>} : memref<16x48xf32, #tpu.memory_space<vmem>>, vector<2x48xf32>
    %764 = arith.index_cast %761 : i32 to index
    %c0_207 = arith.constant 0 : index
    %765 = tpu.strided_load %arg10[%764, %c0_207] {strides = array<i32: 8, 1>} : memref<16x48xf32, #tpu.memory_space<vmem>>, vector<2x48xf32>
    %cst_208 = arith.constant dense<0.000000e+00> : vector<2x48xf32>
    %766 = tpu.matmul %731, %18, %cst_208 {dimension_numbers = #tpu.dot_dimension_numbers<[1], [0], [0], [1], [0, 0, 1, 1], [], []>} : vector<2x16xf32>, vector<16x48xf32>, vector<2x48xf32> -> vector<2x48xf32>
    %767 = vector.broadcast %20 : vector<1x48xf32> to vector<2x48xf32>
    %768 = arith.addf %766, %767 : vector<2x48xf32>
    %cst_209 = arith.constant dense<0.000000e+00> : vector<2x48xf32>
    %769 = tpu.matmul %738, %22, %cst_209 {dimension_numbers = #tpu.dot_dimension_numbers<[1], [0], [0], [1], [0, 0, 1, 1], [], []>} : vector<2x16xf32>, vector<16x48xf32>, vector<2x48xf32> -> vector<2x48xf32>
    %770 = vector.broadcast %24 : vector<1x48xf32> to vector<2x48xf32>
    %771 = arith.addf %769, %770 : vector<2x48xf32>
    %772 = arith.index_cast %c7_i32_204 : i32 to index
    %c0_210 = arith.constant 0 : index
    %c0_211 = arith.constant 0 : index
    %773 = vector.load %arg6[%772, %c0_210, %c0_211] : memref<8x2x1xf32, #tpu.memory_space<vmem>>, vector<1x2x1xf32>
    %774 = vector.shape_cast %773 : vector<1x2x1xf32> to vector<2x1xf32>
    %775 = arith.index_cast %761 : i32 to index
    %c0_212 = arith.constant 0 : index
    %c0_213 = arith.constant 0 : index
    %776 = vector.load %arg6[%775, %c0_212, %c0_213] : memref<8x2x1xf32, #tpu.memory_space<vmem>>, vector<1x2x1xf32>
    %777 = vector.shape_cast %776 : vector<1x2x1xf32> to vector<2x1xf32>
    %778 = vector.extract_strided_slice %763 {offsets = [0, 0], sizes = [2, 16], strides = [1, 1]} : vector<2x48xf32> to vector<2x16xf32>
    %779 = vector.extract_strided_slice %768 {offsets = [0, 0], sizes = [2, 16], strides = [1, 1]} : vector<2x48xf32> to vector<2x16xf32>
    %780 = arith.addf %778, %779 : vector<2x16xf32>
    %781 = arith.negf %780 : vector<2x16xf32>
    %782 = math.exp %781 : vector<2x16xf32>
    %cst_214 = arith.constant 1.000000e+00 : f32
    %783 = vector.broadcast %cst_214 : f32 to vector<2x16xf32>
    %784 = arith.addf %783, %782 : vector<2x16xf32>
    %785 = arith.divf %783, %784 : vector<2x16xf32>
    %786 = vector.extract_strided_slice %763 {offsets = [0, 16], sizes = [2, 16], strides = [1, 1]} : vector<2x48xf32> to vector<2x16xf32>
    %787 = vector.extract_strided_slice %768 {offsets = [0, 16], sizes = [2, 16], strides = [1, 1]} : vector<2x48xf32> to vector<2x16xf32>
    %788 = arith.addf %786, %787 : vector<2x16xf32>
    %789 = arith.negf %788 : vector<2x16xf32>
    %790 = math.exp %789 : vector<2x16xf32>
    %cst_215 = arith.constant 1.000000e+00 : f32
    %791 = vector.broadcast %cst_215 : f32 to vector<2x16xf32>
    %792 = arith.addf %791, %790 : vector<2x16xf32>
    %793 = arith.divf %791, %792 : vector<2x16xf32>
    %794 = vector.extract_strided_slice %763 {offsets = [0, 32], sizes = [2, 16], strides = [1, 1]} : vector<2x48xf32> to vector<2x16xf32>
    %795 = vector.extract_strided_slice %768 {offsets = [0, 32], sizes = [2, 16], strides = [1, 1]} : vector<2x48xf32> to vector<2x16xf32>
    %796 = arith.mulf %785, %795 : vector<2x16xf32>
    %797 = arith.addf %794, %796 : vector<2x16xf32>
    %798 = math.tanh %797 : vector<2x16xf32>
    %cst_216 = arith.constant 1.000000e+00 : f32
    %799 = vector.broadcast %cst_216 : f32 to vector<2x16xf32>
    %800 = arith.subf %799, %793 : vector<2x16xf32>
    %801 = arith.mulf %800, %798 : vector<2x16xf32>
    %802 = arith.mulf %793, %731 : vector<2x16xf32>
    %803 = arith.addf %801, %802 : vector<2x16xf32>
    %804 = vector.extract_strided_slice %765 {offsets = [0, 0], sizes = [2, 16], strides = [1, 1]} : vector<2x48xf32> to vector<2x16xf32>
    %805 = vector.extract_strided_slice %771 {offsets = [0, 0], sizes = [2, 16], strides = [1, 1]} : vector<2x48xf32> to vector<2x16xf32>
    %806 = arith.addf %804, %805 : vector<2x16xf32>
    %807 = arith.negf %806 : vector<2x16xf32>
    %808 = math.exp %807 : vector<2x16xf32>
    %cst_217 = arith.constant 1.000000e+00 : f32
    %809 = vector.broadcast %cst_217 : f32 to vector<2x16xf32>
    %810 = arith.addf %809, %808 : vector<2x16xf32>
    %811 = arith.divf %809, %810 : vector<2x16xf32>
    %812 = vector.extract_strided_slice %765 {offsets = [0, 16], sizes = [2, 16], strides = [1, 1]} : vector<2x48xf32> to vector<2x16xf32>
    %813 = vector.extract_strided_slice %771 {offsets = [0, 16], sizes = [2, 16], strides = [1, 1]} : vector<2x48xf32> to vector<2x16xf32>
    %814 = arith.addf %812, %813 : vector<2x16xf32>
    %815 = arith.negf %814 : vector<2x16xf32>
    %816 = math.exp %815 : vector<2x16xf32>
    %cst_218 = arith.constant 1.000000e+00 : f32
    %817 = vector.broadcast %cst_218 : f32 to vector<2x16xf32>
    %818 = arith.addf %817, %816 : vector<2x16xf32>
    %819 = arith.divf %817, %818 : vector<2x16xf32>
    %820 = vector.extract_strided_slice %765 {offsets = [0, 32], sizes = [2, 16], strides = [1, 1]} : vector<2x48xf32> to vector<2x16xf32>
    %821 = vector.extract_strided_slice %771 {offsets = [0, 32], sizes = [2, 16], strides = [1, 1]} : vector<2x48xf32> to vector<2x16xf32>
    %822 = arith.mulf %811, %821 : vector<2x16xf32>
    %823 = arith.addf %820, %822 : vector<2x16xf32>
    %824 = math.tanh %823 : vector<2x16xf32>
    %cst_219 = arith.constant 1.000000e+00 : f32
    %825 = vector.broadcast %cst_219 : f32 to vector<2x16xf32>
    %826 = arith.subf %825, %819 : vector<2x16xf32>
    %827 = arith.mulf %826, %824 : vector<2x16xf32>
    %828 = arith.mulf %819, %738 : vector<2x16xf32>
    %829 = arith.addf %827, %828 : vector<2x16xf32>
    %830 = vector.broadcast %774 : vector<2x1xf32> to vector<2x16xf32>
    %831 = arith.mulf %830, %803 : vector<2x16xf32>
    %cst_220 = arith.constant 1.000000e+00 : f32
    %832 = vector.broadcast %cst_220 : f32 to vector<2x1xf32>
    %833 = arith.subf %832, %774 : vector<2x1xf32>
    %834 = vector.broadcast %833 : vector<2x1xf32> to vector<2x16xf32>
    %835 = arith.mulf %834, %731 : vector<2x16xf32>
    %836 = arith.addf %831, %835 : vector<2x16xf32>
    %837 = vector.broadcast %777 : vector<2x1xf32> to vector<2x16xf32>
    %838 = arith.mulf %837, %829 : vector<2x16xf32>
    %cst_221 = arith.constant 1.000000e+00 : f32
    %839 = vector.broadcast %cst_221 : f32 to vector<2x1xf32>
    %840 = arith.subf %839, %777 : vector<2x1xf32>
    %841 = vector.broadcast %840 : vector<2x1xf32> to vector<2x16xf32>
    %842 = arith.mulf %841, %738 : vector<2x16xf32>
    %843 = arith.addf %838, %842 : vector<2x16xf32>
    %844 = vector.broadcast %774 : vector<2x1xf32> to vector<2x16xf32>
    %845 = arith.mulf %844, %836 : vector<2x16xf32>
    %cst_222 = arith.constant 1.000000e+00 : f32
    %846 = vector.broadcast %cst_222 : f32 to vector<2x1xf32>
    %847 = arith.subf %846, %774 : vector<2x1xf32>
    %cst_223 = arith.constant 0.000000e+00 : f32
    %848 = vector.broadcast %cst_223 : f32 to vector<2x1xf32>
    %849 = arith.mulf %847, %848 : vector<2x1xf32>
    %850 = vector.broadcast %849 : vector<2x1xf32> to vector<2x16xf32>
    %851 = arith.addf %845, %850 : vector<2x16xf32>
    %c2_i32_224 = arith.constant 2 : i32
    %852 = arith.muli %c7_i32_204, %c2_i32_224 : i32
    %853 = arith.index_cast %852 : i32 to index
    %c0_225 = arith.constant 0 : index
    %854 = vector.load %arg7[%853, %c0_225] : memref<16x16xf32, #tpu.memory_space<vmem>>, vector<2x16xf32>
    tpu.vector_store %arg7[%853, %c0_225], %851 {strides = array<i32>} : memref<16x16xf32, #tpu.memory_space<vmem>>, vector<2x16xf32>,
    %855 = vector.broadcast %777 : vector<2x1xf32> to vector<2x16xf32>
    %856 = arith.mulf %855, %843 : vector<2x16xf32>
    %cst_226 = arith.constant 1.000000e+00 : f32
    %857 = vector.broadcast %cst_226 : f32 to vector<2x1xf32>
    %858 = arith.subf %857, %777 : vector<2x1xf32>
    %cst_227 = arith.constant 0.000000e+00 : f32
    %859 = vector.broadcast %cst_227 : f32 to vector<2x1xf32>
    %860 = arith.mulf %858, %859 : vector<2x1xf32>
    %861 = vector.broadcast %860 : vector<2x1xf32> to vector<2x16xf32>
    %862 = arith.addf %856, %861 : vector<2x16xf32>
    %c2_i32_228 = arith.constant 2 : i32
    %863 = arith.muli %761, %c2_i32_228 : i32
    %864 = arith.index_cast %863 : i32 to index
    %c0_229 = arith.constant 0 : index
    %865 = vector.load %arg8[%864, %c0_229] : memref<16x16xf32, #tpu.memory_space<vmem>>, vector<2x16xf32>
    tpu.vector_store %arg8[%864, %c0_229], %862 {strides = array<i32>} : memref<16x16xf32, #tpu.memory_space<vmem>>, vector<2x16xf32>,
    %c8_i32 = arith.constant 8 : i32
    return
  }
  func.func @transform_0(%arg0: i32) -> (i32, i32) {
    %c0_i32 = arith.constant 0 : i32
    %c0_i32_0 = arith.constant 0 : i32
    %c0_i32_1 = arith.constant 0 : i32
    return %c0_i32, %c0_i32_0 : i32, i32
  }
  func.func @transform_1(%arg0: i32) -> (i32, i32, i32) {
    %c0_i32 = arith.constant 0 : i32
    %c0_i32_0 = arith.constant 0 : i32
    %c0_i32_1 = arith.constant 0 : i32
    %c0_i32_2 = arith.constant 0 : i32
    return %c0_i32, %c0_i32_0, %c0_i32_1 : i32, i32, i32
  }
  func.func @transform_2(%arg0: i32) -> (i32, i32, i32) {
    %c0_i32 = arith.constant 0 : i32
    %c0_i32_0 = arith.constant 0 : i32
    %c0_i32_1 = arith.constant 0 : i32
    %c0_i32_2 = arith.constant 0 : i32
    return %c0_i32, %c0_i32_0, %c0_i32_1 : i32, i32, i32
  }
  func.func @transform_3(%arg0: i32) -> (i32, i32, i32) {
    %c0_i32 = arith.constant 0 : i32
    %c0_i32_0 = arith.constant 0 : i32
    %c0_i32_1 = arith.constant 0 : i32
    %c0_i32_2 = arith.constant 0 : i32
    return %c0_i32, %c0_i32_0, %c0_i32_1 : i32, i32, i32
  }
  func.func @transform_4(%arg0: i32) -> (i32, i32, i32) {
    %c0_i32 = arith.constant 0 : i32
    %c0_i32_0 = arith.constant 0 : i32
    %c0_i32_1 = arith.constant 0 : i32
    %c0_i32_2 = arith.constant 0 : i32
    return %c0_i32, %c0_i32_0, %c0_i32_1 : i32, i32, i32
  }
  func.func @transform_5(%arg0: i32) -> (i32, i32, i32) {
    %c0_i32 = arith.constant 0 : i32
    %c0_i32_0 = arith.constant 0 : i32
    %c0_i32_1 = arith.constant 0 : i32
    %c0_i32_2 = arith.constant 0 : i32
    return %c0_i32, %c0_i32_0, %c0_i32_1 : i32, i32, i32
  }
  func.func @transform_6(%arg0: i32) -> (i32, i32) {
    %c0_i32 = arith.constant 0 : i32
    %c0_i32_0 = arith.constant 0 : i32
    %c0_i32_1 = arith.constant 0 : i32
    return %c0_i32, %c0_i32_0 : i32, i32
  }
  func.func @transform_7(%arg0: i32) -> (i32, i32) {
    %c0_i32 = arith.constant 0 : i32
    %c0_i32_0 = arith.constant 0 : i32
    %c0_i32_1 = arith.constant 0 : i32
    return %c0_i32, %c0_i32_0 : i32, i32
  }
}

module attributes {stable_mosaic.version = 11 : i64} {
  func.func @_crf_kernel(%arg0: i32, %arg1: memref<16x16xf32, #tpu.memory_space<vmem>>, %arg2: memref<16x16xf32, #tpu.memory_space<vmem>>, %arg3: memref<32x8xf32, #tpu.memory_space<vmem>>, %arg4: memref<1x8xf32, #tpu.memory_space<vmem>>, %arg5: memref<8x8xf32, #tpu.memory_space<vmem>>, %arg6: memref<1x8xf32, #tpu.memory_space<vmem>>, %arg7: memref<1x8xf32, #tpu.memory_space<vmem>>, %arg8: memref<16x1xf32, #tpu.memory_space<vmem>>, %arg9: memref<16x1xi32, #tpu.memory_space<vmem>>, %arg10: memref<1x1xf32, #tpu.memory_space<smem>>, %arg11: memref<2x8xf32, #tpu.memory_space<vmem>>, %arg12: memref<7x2x8xi32, #tpu.memory_space<vmem>>, %arg13: memref<16x8xf32, #tpu.memory_space<vmem>>) attributes {dimension_semantics = [#tpu.dimension_semantics<arbitrary>], iteration_bounds = array<i64: 1>, scalar_prefetch = 0 : i64, scratch_operands = 1 : i64, tpu.core_type = #tpu.core_type<tc>, window_params = [{pipeline_mode = #tpu.pipeline_mode<synchronous>, transform_indices = @transform_0, window_bounds = array<i64: 16, 16>}, {pipeline_mode = #tpu.pipeline_mode<synchronous>, transform_indices = @transform_1, window_bounds = array<i64: 16, 16>}, {pipeline_mode = #tpu.pipeline_mode<synchronous>, transform_indices = @transform_2, window_bounds = array<i64: 32, 8>}, {pipeline_mode = #tpu.pipeline_mode<synchronous>, transform_indices = @transform_3, window_bounds = array<i64: 1, 8>}, {pipeline_mode = #tpu.pipeline_mode<synchronous>, transform_indices = @transform_4, window_bounds = array<i64: 8, 8>}, {pipeline_mode = #tpu.pipeline_mode<synchronous>, transform_indices = @transform_5, window_bounds = array<i64: 1, 8>}, {pipeline_mode = #tpu.pipeline_mode<synchronous>, transform_indices = @transform_6, window_bounds = array<i64: 1, 8>}, {pipeline_mode = #tpu.pipeline_mode<synchronous>, transform_indices = @transform_7, window_bounds = array<i64: 16, 1>}, {pipeline_mode = #tpu.pipeline_mode<synchronous>, transform_indices = @transform_8, window_bounds = array<i64: 16, 1>}, {transform_indices = @transform_9, window_bounds = array<i64: 1, 1>}, {pipeline_mode = #tpu.pipeline_mode<synchronous>, transform_indices = @transform_10, window_bounds = array<i64: 2, 8>}, {pipeline_mode = #tpu.pipeline_mode<synchronous>, transform_indices = @transform_11, window_bounds = array<i64: 7, 2, 8>}]} {
    %c0 = arith.constant 0 : index
    %c0_0 = arith.constant 0 : index
    %0 = vector.load %arg3[%c0, %c0_0] : memref<32x8xf32, #tpu.memory_space<vmem>>, vector<32x8xf32>
    %c0_1 = arith.constant 0 : index
    %c0_2 = arith.constant 0 : index
    %1 = vector.load %arg1[%c0_1, %c0_2] : memref<16x16xf32, #tpu.memory_space<vmem>>, vector<16x16xf32>
    %2 = vector.extract_strided_slice %0 {offsets = [0, 0], sizes = [16, 8], strides = [1, 1]} : vector<32x8xf32> to vector<16x8xf32>
    %cst = arith.constant dense<0.000000e+00> : vector<16x8xf32>
    %3 = tpu.matmul %1, %2, %cst {dimension_numbers = #tpu.dot_dimension_numbers<[1], [0], [0], [1], [0, 0, 1, 1], [], []>} : vector<16x16xf32>, vector<16x8xf32>, vector<16x8xf32> -> vector<16x8xf32>
    %c0_3 = arith.constant 0 : index
    %c0_4 = arith.constant 0 : index
    %4 = vector.load %arg2[%c0_3, %c0_4] : memref<16x16xf32, #tpu.memory_space<vmem>>, vector<16x16xf32>
    %5 = vector.extract_strided_slice %0 {offsets = [16, 0], sizes = [16, 8], strides = [1, 1]} : vector<32x8xf32> to vector<16x8xf32>
    %cst_5 = arith.constant dense<0.000000e+00> : vector<16x8xf32>
    %6 = tpu.matmul %4, %5, %cst_5 {dimension_numbers = #tpu.dot_dimension_numbers<[1], [0], [0], [1], [0, 0, 1, 1], [], []>} : vector<16x16xf32>, vector<16x8xf32>, vector<16x8xf32> -> vector<16x8xf32>
    %7 = arith.addf %3, %6 : vector<16x8xf32>
    %c0_6 = arith.constant 0 : index
    %c0_7 = arith.constant 0 : index
    %8 = vector.load %arg4[%c0_6, %c0_7] : memref<1x8xf32, #tpu.memory_space<vmem>>, vector<1x8xf32>
    %9 = vector.broadcast %8 : vector<1x8xf32> to vector<16x8xf32>
    %10 = arith.addf %7, %9 : vector<16x8xf32>
    %c0_8 = arith.constant 0 : index
    %c0_9 = arith.constant 0 : index
    %11 = vector.load %arg13[%c0_8, %c0_9] : memref<16x8xf32, #tpu.memory_space<vmem>>, vector<16x8xf32>
    tpu.vector_store %arg13[%c0_8, %c0_9], %10 {strides = array<i32>} : memref<16x8xf32, #tpu.memory_space<vmem>>, vector<16x8xf32>,
    %c0_10 = arith.constant 0 : index
    %c0_11 = arith.constant 0 : index
    %12 = vector.load %arg5[%c0_10, %c0_11] : memref<8x8xf32, #tpu.memory_space<vmem>>, vector<8x8xf32>
    %c0_12 = arith.constant 0 : index
    %c0_13 = arith.constant 0 : index
    %13 = vector.load %arg6[%c0_12, %c0_13] : memref<1x8xf32, #tpu.memory_space<vmem>>, vector<1x8xf32>
    %c0_14 = arith.constant 0 : index
    %c0_15 = arith.constant 0 : index
    %14 = vector.load %arg7[%c0_14, %c0_15] : memref<1x8xf32, #tpu.memory_space<vmem>>, vector<1x8xf32>
    %c0_16 = arith.constant 0 : index
    %c0_17 = arith.constant 0 : index
    %15 = vector.load %arg8[%c0_16, %c0_17] : memref<16x1xf32, #tpu.memory_space<vmem>>, vector<16x1xf32>
    %16 = tpu.iota {dimensions = array<i32: 1>} : vector<16x8xi32>
    %c0_18 = arith.constant 0 : index
    %c0_19 = arith.constant 0 : index
    %17 = vector.load %arg9[%c0_18, %c0_19] : memref<16x1xi32, #tpu.memory_space<vmem>>, vector<16x1xi32>
    %18 = vector.broadcast %17 : vector<16x1xi32> to vector<16x8xi32>
    %19 = arith.cmpi eq, %16, %18 : vector<16x8xi32>
    %20 = arith.extui %19 : vector<16x8xi1> to vector<16x8xi32>
    %21 = arith.sitofp %20 : vector<16x8xi32> to vector<16x8xf32>
    %22 = vector.extract_strided_slice %21 {offsets = [0, 0], sizes = [2, 8], strides = [1, 1]} : vector<16x8xf32> to vector<2x8xf32>
    %23 = vector.broadcast %13 : vector<1x8xf32> to vector<2x8xf32>
    %24 = arith.mulf %23, %22 : vector<2x8xf32>
    %25 = vector.shape_cast %24 : vector<2x8xf32> to vector<1x2x8xf32>
    %cst_20 = arith.constant dense<0.000000e+00> : vector<1xf32>
    %26 = vector.multi_reduction <add>, %25, %cst_20 [1, 2] : vector<1x2x8xf32> to vector<1xf32>
    %27 = vector.shape_cast %26 : vector<1xf32> to vector<1x1x1xf32>
    %28 = vector.extract %27[0, 0, 0] : f32 from vector<1x1x1xf32>
    %29 = arith.mulf %10, %21 : vector<16x8xf32>
    %30 = vector.broadcast %15 : vector<16x1xf32> to vector<16x8xf32>
    %31 = arith.mulf %29, %30 : vector<16x8xf32>
    %32 = vector.shape_cast %31 : vector<16x8xf32> to vector<1x16x8xf32>
    %cst_21 = arith.constant dense<0.000000e+00> : vector<1xf32>
    %33 = vector.multi_reduction <add>, %32, %cst_21 [1, 2] : vector<1x16x8xf32> to vector<1xf32>
    %34 = vector.shape_cast %33 : vector<1xf32> to vector<1x1x1xf32>
    %35 = vector.extract %34[0, 0, 0] : f32 from vector<1x1x1xf32>
    %36 = vector.extract_strided_slice %21 {offsets = [0, 0], sizes = [14, 8], strides = [1, 1]} : vector<16x8xf32> to vector<14x8xf32>
    %cst_22 = arith.constant dense<0.000000e+00> : vector<14x8xf32>
    %37 = tpu.matmul %36, %12, %cst_22 {dimension_numbers = #tpu.dot_dimension_numbers<[1], [0], [0], [1], [0, 0, 1, 1], [], []>} : vector<14x8xf32>, vector<8x8xf32>, vector<14x8xf32> -> vector<14x8xf32>
    %38 = vector.extract_strided_slice %21 {offsets = [2, 0], sizes = [14, 8], strides = [1, 1]} : vector<16x8xf32> to vector<14x8xf32>
    %39 = arith.mulf %37, %38 : vector<14x8xf32>
    %40 = vector.extract_strided_slice %15 {offsets = [2, 0], sizes = [14, 1], strides = [1, 1]} : vector<16x1xf32> to vector<14x1xf32>
    %41 = vector.broadcast %40 : vector<14x1xf32> to vector<14x8xf32>
    %42 = arith.mulf %39, %41 : vector<14x8xf32>
    %43 = vector.shape_cast %42 : vector<14x8xf32> to vector<1x14x8xf32>
    %cst_23 = arith.constant dense<0.000000e+00> : vector<1xf32>
    %44 = vector.multi_reduction <add>, %43, %cst_23 [1, 2] : vector<1x14x8xf32> to vector<1xf32>
    %45 = vector.shape_cast %44 : vector<1xf32> to vector<1x1x1xf32>
    %46 = vector.extract %45[0, 0, 0] : f32 from vector<1x1x1xf32>
    %47 = vector.extract_strided_slice %15 {offsets = [2, 0], sizes = [14, 1], strides = [1, 1]} : vector<16x1xf32> to vector<14x1xf32>
    %cst_24 = arith.constant 0.000000e+00 : f32
    %48 = vector.broadcast %cst_24 : f32 to vector<2x1xf32>
    %49 = tpu.concatenate %47, %48 in 0 : vector<14x1xf32>, vector<2x1xf32> -> vector<16x1xf32>
    %cst_25 = arith.constant 1.000000e+00 : f32
    %50 = vector.broadcast %cst_25 : f32 to vector<16x1xf32>
    %51 = arith.subf %50, %49 : vector<16x1xf32>
    %52 = arith.mulf %15, %51 : vector<16x1xf32>
    %53 = vector.broadcast %52 : vector<16x1xf32> to vector<16x8xf32>
    %54 = arith.mulf %21, %53 : vector<16x8xf32>
    %55 = vector.broadcast %14 : vector<1x8xf32> to vector<16x8xf32>
    %56 = arith.mulf %54, %55 : vector<16x8xf32>
    %57 = vector.shape_cast %56 : vector<16x8xf32> to vector<1x16x8xf32>
    %cst_26 = arith.constant dense<0.000000e+00> : vector<1xf32>
    %58 = vector.multi_reduction <add>, %57, %cst_26 [1, 2] : vector<1x16x8xf32> to vector<1xf32>
    %59 = vector.shape_cast %58 : vector<1xf32> to vector<1x1x1xf32>
    %60 = vector.extract %59[0, 0, 0] : f32 from vector<1x1x1xf32>
    %61 = arith.addf %28, %35 : f32
    %62 = arith.addf %61, %46 : f32
    %63 = arith.addf %62, %60 : f32
    %64 = vector.extract_strided_slice %10 {offsets = [0, 0], sizes = [2, 8], strides = [1, 1]} : vector<16x8xf32> to vector<2x8xf32>
    %65 = vector.broadcast %13 : vector<1x8xf32> to vector<2x8xf32>
    %66 = arith.addf %65, %64 : vector<2x8xf32>
    %c1_i32 = arith.constant 1 : i32
    %c2_i32 = arith.constant 2 : i32
    %67 = arith.muli %c1_i32, %c2_i32 : i32
    %68 = arith.index_cast %67 : i32 to index
    %c0_27 = arith.constant 0 : index
    %69 = vector.load %arg13[%68, %c0_27] : memref<16x8xf32, #tpu.memory_space<vmem>>, vector<2x8xf32>
    %c2_i32_28 = arith.constant 2 : i32
    %70 = arith.muli %c1_i32, %c2_i32_28 : i32
    %71 = arith.index_cast %70 : i32 to index
    %c0_29 = arith.constant 0 : index
    %72 = vector.load %arg8[%71, %c0_29] : memref<16x1xf32, #tpu.memory_space<vmem>>, vector<2x1xf32>
    %73 = vector.shape_cast %12 : vector<8x8xf32> to vector<1x8x8xf32>
    %74 = vector.shape_cast %69 : vector<2x8xf32> to vector<2x1x8xf32>
    %75 = vector.broadcast %73 : vector<1x8x8xf32> to vector<2x8x8xf32>
    %76 = vector.broadcast %74 : vector<2x1x8xf32> to vector<2x8x8xf32>
    %77 = arith.addf %75, %76 : vector<2x8x8xf32>
    %78 = vector.shape_cast %66 : vector<2x8xf32> to vector<2x8x1xf32>
    %79 = vector.broadcast %78 : vector<2x8x1xf32> to vector<2x8x8xf32>
    %80 = arith.addf %79, %77 : vector<2x8x8xf32>
    %cst_30 = arith.constant dense<0xFF800000> : vector<2x8xf32>
    %81 = vector.multi_reduction <maximumf>, %80, %cst_30 [1] : vector<2x8x8xf32> to vector<2x8xf32>
    %82 = vector.shape_cast %81 : vector<2x8xf32> to vector<2x1x8xf32>
    %83 = vector.shape_cast %82 : vector<2x1x8xf32> to vector<2x8xf32>
    %84 = vector.broadcast %82 : vector<2x1x8xf32> to vector<2x8x8xf32>
    %85 = arith.subf %80, %84 : vector<2x8x8xf32>
    %86 = math.exp %85 : vector<2x8x8xf32>
    %cst_31 = arith.constant dense<0.000000e+00> : vector<2x8xf32>
    %87 = vector.multi_reduction <add>, %86, %cst_31 [1] : vector<2x8x8xf32> to vector<2x8xf32>
    %88 = math.log %87 : vector<2x8xf32>
    %89 = arith.addf %83, %88 : vector<2x8xf32>
    %cst_32 = arith.constant 5.000000e-01 : f32
    %90 = vector.broadcast %cst_32 : f32 to vector<2x1xf32>
    %91 = arith.cmpf ogt, %72, %90 : vector<2x1xf32>
    %92 = vector.shape_cast %91 : vector<2x1xi1> to vector<2x1xi1>
    %93 = vector.broadcast %92 : vector<2x1xi1> to vector<2x8xi1>
    %94 = arith.select %93, %89, %66 : vector<2x8xi1>, vector<2x8xf32>
    %95 = vector.shape_cast %66 : vector<2x8xf32> to vector<2x8x1xf32>
    %96 = vector.broadcast %95 : vector<2x8x1xf32> to vector<2x8x8xf32>
    %97 = arith.addf %96, %77 : vector<2x8x8xf32>
    %cst_33 = arith.constant dense<0xFF800000> : vector<2x8xf32>
    %98 = vector.multi_reduction <maximumf>, %97, %cst_33 [1] : vector<2x8x8xf32> to vector<2x8xf32>
    %99 = tpu.iota {dimensions = array<i32: 1>} : vector<2x8x8xi32>
    %100 = vector.shape_cast %98 : vector<2x8xf32> to vector<2x1x8xf32>
    %101 = vector.broadcast %100 : vector<2x1x8xf32> to vector<2x8x8xf32>
    %102 = arith.cmpf oge, %97, %101 : vector<2x8x8xf32>
    %c8_i32 = arith.constant 8 : i32
    %103 = vector.broadcast %c8_i32 : i32 to vector<2x8x8xi32>
    %104 = arith.select %102, %99, %103 : vector<2x8x8xi1>, vector<2x8x8xi32>
    %cst_34 = arith.constant dense<2147483647> : vector<2x8xi32>
    %105 = vector.multi_reduction <minsi>, %104, %cst_34 [1] : vector<2x8x8xi32> to vector<2x8xi32>
    %c1_i32_35 = arith.constant 1 : i32
    %106 = arith.subi %c1_i32, %c1_i32_35 : i32
    %107 = arith.index_cast %106 : i32 to index
    %c0_36 = arith.constant 0 : index
    %c0_37 = arith.constant 0 : index
    %108 = vector.load %arg12[%107, %c0_36, %c0_37] : memref<7x2x8xi32, #tpu.memory_space<vmem>>, vector<1x2x8xi32>
    %109 = vector.shape_cast %108 : vector<1x2x8xi32> to vector<2x8xi32>
    %110 = vector.shape_cast %105 : vector<2x8xi32> to vector<1x2x8xi32>
    tpu.vector_store %arg12[%107, %c0_36, %c0_37], %110 {strides = array<i32>} : memref<7x2x8xi32, #tpu.memory_space<vmem>>, vector<1x2x8xi32>,
    %cst_38 = arith.constant 5.000000e-01 : f32
    %111 = vector.broadcast %cst_38 : f32 to vector<2x1xf32>
    %112 = arith.cmpf ogt, %72, %111 : vector<2x1xf32>
    %113 = vector.shape_cast %112 : vector<2x1xi1> to vector<2x1xi1>
    %114 = vector.broadcast %113 : vector<2x1xi1> to vector<2x8xi1>
    %115 = arith.select %114, %98, %66 : vector<2x8xi1>, vector<2x8xf32>
    %c2_i32_39 = arith.constant 2 : i32
    %c2_i32_40 = arith.constant 2 : i32
    %116 = arith.muli %c2_i32_39, %c2_i32_40 : i32
    %117 = arith.index_cast %116 : i32 to index
    %c0_41 = arith.constant 0 : index
    %118 = vector.load %arg13[%117, %c0_41] : memref<16x8xf32, #tpu.memory_space<vmem>>, vector<2x8xf32>
    %c2_i32_42 = arith.constant 2 : i32
    %119 = arith.muli %c2_i32_39, %c2_i32_42 : i32
    %120 = arith.index_cast %119 : i32 to index
    %c0_43 = arith.constant 0 : index
    %121 = vector.load %arg8[%120, %c0_43] : memref<16x1xf32, #tpu.memory_space<vmem>>, vector<2x1xf32>
    %122 = vector.shape_cast %12 : vector<8x8xf32> to vector<1x8x8xf32>
    %123 = vector.shape_cast %118 : vector<2x8xf32> to vector<2x1x8xf32>
    %124 = vector.broadcast %122 : vector<1x8x8xf32> to vector<2x8x8xf32>
    %125 = vector.broadcast %123 : vector<2x1x8xf32> to vector<2x8x8xf32>
    %126 = arith.addf %124, %125 : vector<2x8x8xf32>
    %127 = vector.shape_cast %94 : vector<2x8xf32> to vector<2x8x1xf32>
    %128 = vector.broadcast %127 : vector<2x8x1xf32> to vector<2x8x8xf32>
    %129 = arith.addf %128, %126 : vector<2x8x8xf32>
    %cst_44 = arith.constant dense<0xFF800000> : vector<2x8xf32>
    %130 = vector.multi_reduction <maximumf>, %129, %cst_44 [1] : vector<2x8x8xf32> to vector<2x8xf32>
    %131 = vector.shape_cast %130 : vector<2x8xf32> to vector<2x1x8xf32>
    %132 = vector.shape_cast %131 : vector<2x1x8xf32> to vector<2x8xf32>
    %133 = vector.broadcast %131 : vector<2x1x8xf32> to vector<2x8x8xf32>
    %134 = arith.subf %129, %133 : vector<2x8x8xf32>
    %135 = math.exp %134 : vector<2x8x8xf32>
    %cst_45 = arith.constant dense<0.000000e+00> : vector<2x8xf32>
    %136 = vector.multi_reduction <add>, %135, %cst_45 [1] : vector<2x8x8xf32> to vector<2x8xf32>
    %137 = math.log %136 : vector<2x8xf32>
    %138 = arith.addf %132, %137 : vector<2x8xf32>
    %cst_46 = arith.constant 5.000000e-01 : f32
    %139 = vector.broadcast %cst_46 : f32 to vector<2x1xf32>
    %140 = arith.cmpf ogt, %121, %139 : vector<2x1xf32>
    %141 = vector.shape_cast %140 : vector<2x1xi1> to vector<2x1xi1>
    %142 = vector.broadcast %141 : vector<2x1xi1> to vector<2x8xi1>
    %143 = arith.select %142, %138, %94 : vector<2x8xi1>, vector<2x8xf32>
    %144 = vector.shape_cast %115 : vector<2x8xf32> to vector<2x8x1xf32>
    %145 = vector.broadcast %144 : vector<2x8x1xf32> to vector<2x8x8xf32>
    %146 = arith.addf %145, %126 : vector<2x8x8xf32>
    %cst_47 = arith.constant dense<0xFF800000> : vector<2x8xf32>
    %147 = vector.multi_reduction <maximumf>, %146, %cst_47 [1] : vector<2x8x8xf32> to vector<2x8xf32>
    %148 = tpu.iota {dimensions = array<i32: 1>} : vector<2x8x8xi32>
    %149 = vector.shape_cast %147 : vector<2x8xf32> to vector<2x1x8xf32>
    %150 = vector.broadcast %149 : vector<2x1x8xf32> to vector<2x8x8xf32>
    %151 = arith.cmpf oge, %146, %150 : vector<2x8x8xf32>
    %c8_i32_48 = arith.constant 8 : i32
    %152 = vector.broadcast %c8_i32_48 : i32 to vector<2x8x8xi32>
    %153 = arith.select %151, %148, %152 : vector<2x8x8xi1>, vector<2x8x8xi32>
    %cst_49 = arith.constant dense<2147483647> : vector<2x8xi32>
    %154 = vector.multi_reduction <minsi>, %153, %cst_49 [1] : vector<2x8x8xi32> to vector<2x8xi32>
    %c1_i32_50 = arith.constant 1 : i32
    %155 = arith.subi %c2_i32_39, %c1_i32_50 : i32
    %156 = arith.index_cast %155 : i32 to index
    %c0_51 = arith.constant 0 : index
    %c0_52 = arith.constant 0 : index
    %157 = vector.load %arg12[%156, %c0_51, %c0_52] : memref<7x2x8xi32, #tpu.memory_space<vmem>>, vector<1x2x8xi32>
    %158 = vector.shape_cast %157 : vector<1x2x8xi32> to vector<2x8xi32>
    %159 = vector.shape_cast %154 : vector<2x8xi32> to vector<1x2x8xi32>
    tpu.vector_store %arg12[%156, %c0_51, %c0_52], %159 {strides = array<i32>} : memref<7x2x8xi32, #tpu.memory_space<vmem>>, vector<1x2x8xi32>,
    %cst_53 = arith.constant 5.000000e-01 : f32
    %160 = vector.broadcast %cst_53 : f32 to vector<2x1xf32>
    %161 = arith.cmpf ogt, %121, %160 : vector<2x1xf32>
    %162 = vector.shape_cast %161 : vector<2x1xi1> to vector<2x1xi1>
    %163 = vector.broadcast %162 : vector<2x1xi1> to vector<2x8xi1>
    %164 = arith.select %163, %147, %115 : vector<2x8xi1>, vector<2x8xf32>
    %c3_i32 = arith.constant 3 : i32
    %c2_i32_54 = arith.constant 2 : i32
    %165 = arith.muli %c3_i32, %c2_i32_54 : i32
    %166 = arith.index_cast %165 : i32 to index
    %c0_55 = arith.constant 0 : index
    %167 = vector.load %arg13[%166, %c0_55] : memref<16x8xf32, #tpu.memory_space<vmem>>, vector<2x8xf32>
    %c2_i32_56 = arith.constant 2 : i32
    %168 = arith.muli %c3_i32, %c2_i32_56 : i32
    %169 = arith.index_cast %168 : i32 to index
    %c0_57 = arith.constant 0 : index
    %170 = vector.load %arg8[%169, %c0_57] : memref<16x1xf32, #tpu.memory_space<vmem>>, vector<2x1xf32>
    %171 = vector.shape_cast %12 : vector<8x8xf32> to vector<1x8x8xf32>
    %172 = vector.shape_cast %167 : vector<2x8xf32> to vector<2x1x8xf32>
    %173 = vector.broadcast %171 : vector<1x8x8xf32> to vector<2x8x8xf32>
    %174 = vector.broadcast %172 : vector<2x1x8xf32> to vector<2x8x8xf32>
    %175 = arith.addf %173, %174 : vector<2x8x8xf32>
    %176 = vector.shape_cast %143 : vector<2x8xf32> to vector<2x8x1xf32>
    %177 = vector.broadcast %176 : vector<2x8x1xf32> to vector<2x8x8xf32>
    %178 = arith.addf %177, %175 : vector<2x8x8xf32>
    %cst_58 = arith.constant dense<0xFF800000> : vector<2x8xf32>
    %179 = vector.multi_reduction <maximumf>, %178, %cst_58 [1] : vector<2x8x8xf32> to vector<2x8xf32>
    %180 = vector.shape_cast %179 : vector<2x8xf32> to vector<2x1x8xf32>
    %181 = vector.shape_cast %180 : vector<2x1x8xf32> to vector<2x8xf32>
    %182 = vector.broadcast %180 : vector<2x1x8xf32> to vector<2x8x8xf32>
    %183 = arith.subf %178, %182 : vector<2x8x8xf32>
    %184 = math.exp %183 : vector<2x8x8xf32>
    %cst_59 = arith.constant dense<0.000000e+00> : vector<2x8xf32>
    %185 = vector.multi_reduction <add>, %184, %cst_59 [1] : vector<2x8x8xf32> to vector<2x8xf32>
    %186 = math.log %185 : vector<2x8xf32>
    %187 = arith.addf %181, %186 : vector<2x8xf32>
    %cst_60 = arith.constant 5.000000e-01 : f32
    %188 = vector.broadcast %cst_60 : f32 to vector<2x1xf32>
    %189 = arith.cmpf ogt, %170, %188 : vector<2x1xf32>
    %190 = vector.shape_cast %189 : vector<2x1xi1> to vector<2x1xi1>
    %191 = vector.broadcast %190 : vector<2x1xi1> to vector<2x8xi1>
    %192 = arith.select %191, %187, %143 : vector<2x8xi1>, vector<2x8xf32>
    %193 = vector.shape_cast %164 : vector<2x8xf32> to vector<2x8x1xf32>
    %194 = vector.broadcast %193 : vector<2x8x1xf32> to vector<2x8x8xf32>
    %195 = arith.addf %194, %175 : vector<2x8x8xf32>
    %cst_61 = arith.constant dense<0xFF800000> : vector<2x8xf32>
    %196 = vector.multi_reduction <maximumf>, %195, %cst_61 [1] : vector<2x8x8xf32> to vector<2x8xf32>
    %197 = tpu.iota {dimensions = array<i32: 1>} : vector<2x8x8xi32>
    %198 = vector.shape_cast %196 : vector<2x8xf32> to vector<2x1x8xf32>
    %199 = vector.broadcast %198 : vector<2x1x8xf32> to vector<2x8x8xf32>
    %200 = arith.cmpf oge, %195, %199 : vector<2x8x8xf32>
    %c8_i32_62 = arith.constant 8 : i32
    %201 = vector.broadcast %c8_i32_62 : i32 to vector<2x8x8xi32>
    %202 = arith.select %200, %197, %201 : vector<2x8x8xi1>, vector<2x8x8xi32>
    %cst_63 = arith.constant dense<2147483647> : vector<2x8xi32>
    %203 = vector.multi_reduction <minsi>, %202, %cst_63 [1] : vector<2x8x8xi32> to vector<2x8xi32>
    %c1_i32_64 = arith.constant 1 : i32
    %204 = arith.subi %c3_i32, %c1_i32_64 : i32
    %205 = arith.index_cast %204 : i32 to index
    %c0_65 = arith.constant 0 : index
    %c0_66 = arith.constant 0 : index
    %206 = vector.load %arg12[%205, %c0_65, %c0_66] : memref<7x2x8xi32, #tpu.memory_space<vmem>>, vector<1x2x8xi32>
    %207 = vector.shape_cast %206 : vector<1x2x8xi32> to vector<2x8xi32>
    %208 = vector.shape_cast %203 : vector<2x8xi32> to vector<1x2x8xi32>
    tpu.vector_store %arg12[%205, %c0_65, %c0_66], %208 {strides = array<i32>} : memref<7x2x8xi32, #tpu.memory_space<vmem>>, vector<1x2x8xi32>,
    %cst_67 = arith.constant 5.000000e-01 : f32
    %209 = vector.broadcast %cst_67 : f32 to vector<2x1xf32>
    %210 = arith.cmpf ogt, %170, %209 : vector<2x1xf32>
    %211 = vector.shape_cast %210 : vector<2x1xi1> to vector<2x1xi1>
    %212 = vector.broadcast %211 : vector<2x1xi1> to vector<2x8xi1>
    %213 = arith.select %212, %196, %164 : vector<2x8xi1>, vector<2x8xf32>
    %c4_i32 = arith.constant 4 : i32
    %c2_i32_68 = arith.constant 2 : i32
    %214 = arith.muli %c4_i32, %c2_i32_68 : i32
    %215 = arith.index_cast %214 : i32 to index
    %c0_69 = arith.constant 0 : index
    %216 = vector.load %arg13[%215, %c0_69] : memref<16x8xf32, #tpu.memory_space<vmem>>, vector<2x8xf32>
    %c2_i32_70 = arith.constant 2 : i32
    %217 = arith.muli %c4_i32, %c2_i32_70 : i32
    %218 = arith.index_cast %217 : i32 to index
    %c0_71 = arith.constant 0 : index
    %219 = vector.load %arg8[%218, %c0_71] : memref<16x1xf32, #tpu.memory_space<vmem>>, vector<2x1xf32>
    %220 = vector.shape_cast %12 : vector<8x8xf32> to vector<1x8x8xf32>
    %221 = vector.shape_cast %216 : vector<2x8xf32> to vector<2x1x8xf32>
    %222 = vector.broadcast %220 : vector<1x8x8xf32> to vector<2x8x8xf32>
    %223 = vector.broadcast %221 : vector<2x1x8xf32> to vector<2x8x8xf32>
    %224 = arith.addf %222, %223 : vector<2x8x8xf32>
    %225 = vector.shape_cast %192 : vector<2x8xf32> to vector<2x8x1xf32>
    %226 = vector.broadcast %225 : vector<2x8x1xf32> to vector<2x8x8xf32>
    %227 = arith.addf %226, %224 : vector<2x8x8xf32>
    %cst_72 = arith.constant dense<0xFF800000> : vector<2x8xf32>
    %228 = vector.multi_reduction <maximumf>, %227, %cst_72 [1] : vector<2x8x8xf32> to vector<2x8xf32>
    %229 = vector.shape_cast %228 : vector<2x8xf32> to vector<2x1x8xf32>
    %230 = vector.shape_cast %229 : vector<2x1x8xf32> to vector<2x8xf32>
    %231 = vector.broadcast %229 : vector<2x1x8xf32> to vector<2x8x8xf32>
    %232 = arith.subf %227, %231 : vector<2x8x8xf32>
    %233 = math.exp %232 : vector<2x8x8xf32>
    %cst_73 = arith.constant dense<0.000000e+00> : vector<2x8xf32>
    %234 = vector.multi_reduction <add>, %233, %cst_73 [1] : vector<2x8x8xf32> to vector<2x8xf32>
    %235 = math.log %234 : vector<2x8xf32>
    %236 = arith.addf %230, %235 : vector<2x8xf32>
    %cst_74 = arith.constant 5.000000e-01 : f32
    %237 = vector.broadcast %cst_74 : f32 to vector<2x1xf32>
    %238 = arith.cmpf ogt, %219, %237 : vector<2x1xf32>
    %239 = vector.shape_cast %238 : vector<2x1xi1> to vector<2x1xi1>
    %240 = vector.broadcast %239 : vector<2x1xi1> to vector<2x8xi1>
    %241 = arith.select %240, %236, %192 : vector<2x8xi1>, vector<2x8xf32>
    %242 = vector.shape_cast %213 : vector<2x8xf32> to vector<2x8x1xf32>
    %243 = vector.broadcast %242 : vector<2x8x1xf32> to vector<2x8x8xf32>
    %244 = arith.addf %243, %224 : vector<2x8x8xf32>
    %cst_75 = arith.constant dense<0xFF800000> : vector<2x8xf32>
    %245 = vector.multi_reduction <maximumf>, %244, %cst_75 [1] : vector<2x8x8xf32> to vector<2x8xf32>
    %246 = tpu.iota {dimensions = array<i32: 1>} : vector<2x8x8xi32>
    %247 = vector.shape_cast %245 : vector<2x8xf32> to vector<2x1x8xf32>
    %248 = vector.broadcast %247 : vector<2x1x8xf32> to vector<2x8x8xf32>
    %249 = arith.cmpf oge, %244, %248 : vector<2x8x8xf32>
    %c8_i32_76 = arith.constant 8 : i32
    %250 = vector.broadcast %c8_i32_76 : i32 to vector<2x8x8xi32>
    %251 = arith.select %249, %246, %250 : vector<2x8x8xi1>, vector<2x8x8xi32>
    %cst_77 = arith.constant dense<2147483647> : vector<2x8xi32>
    %252 = vector.multi_reduction <minsi>, %251, %cst_77 [1] : vector<2x8x8xi32> to vector<2x8xi32>
    %c1_i32_78 = arith.constant 1 : i32
    %253 = arith.subi %c4_i32, %c1_i32_78 : i32
    %254 = arith.index_cast %253 : i32 to index
    %c0_79 = arith.constant 0 : index
    %c0_80 = arith.constant 0 : index
    %255 = vector.load %arg12[%254, %c0_79, %c0_80] : memref<7x2x8xi32, #tpu.memory_space<vmem>>, vector<1x2x8xi32>
    %256 = vector.shape_cast %255 : vector<1x2x8xi32> to vector<2x8xi32>
    %257 = vector.shape_cast %252 : vector<2x8xi32> to vector<1x2x8xi32>
    tpu.vector_store %arg12[%254, %c0_79, %c0_80], %257 {strides = array<i32>} : memref<7x2x8xi32, #tpu.memory_space<vmem>>, vector<1x2x8xi32>,
    %cst_81 = arith.constant 5.000000e-01 : f32
    %258 = vector.broadcast %cst_81 : f32 to vector<2x1xf32>
    %259 = arith.cmpf ogt, %219, %258 : vector<2x1xf32>
    %260 = vector.shape_cast %259 : vector<2x1xi1> to vector<2x1xi1>
    %261 = vector.broadcast %260 : vector<2x1xi1> to vector<2x8xi1>
    %262 = arith.select %261, %245, %213 : vector<2x8xi1>, vector<2x8xf32>
    %c5_i32 = arith.constant 5 : i32
    %c2_i32_82 = arith.constant 2 : i32
    %263 = arith.muli %c5_i32, %c2_i32_82 : i32
    %264 = arith.index_cast %263 : i32 to index
    %c0_83 = arith.constant 0 : index
    %265 = vector.load %arg13[%264, %c0_83] : memref<16x8xf32, #tpu.memory_space<vmem>>, vector<2x8xf32>
    %c2_i32_84 = arith.constant 2 : i32
    %266 = arith.muli %c5_i32, %c2_i32_84 : i32
    %267 = arith.index_cast %266 : i32 to index
    %c0_85 = arith.constant 0 : index
    %268 = vector.load %arg8[%267, %c0_85] : memref<16x1xf32, #tpu.memory_space<vmem>>, vector<2x1xf32>
    %269 = vector.shape_cast %12 : vector<8x8xf32> to vector<1x8x8xf32>
    %270 = vector.shape_cast %265 : vector<2x8xf32> to vector<2x1x8xf32>
    %271 = vector.broadcast %269 : vector<1x8x8xf32> to vector<2x8x8xf32>
    %272 = vector.broadcast %270 : vector<2x1x8xf32> to vector<2x8x8xf32>
    %273 = arith.addf %271, %272 : vector<2x8x8xf32>
    %274 = vector.shape_cast %241 : vector<2x8xf32> to vector<2x8x1xf32>
    %275 = vector.broadcast %274 : vector<2x8x1xf32> to vector<2x8x8xf32>
    %276 = arith.addf %275, %273 : vector<2x8x8xf32>
    %cst_86 = arith.constant dense<0xFF800000> : vector<2x8xf32>
    %277 = vector.multi_reduction <maximumf>, %276, %cst_86 [1] : vector<2x8x8xf32> to vector<2x8xf32>
    %278 = vector.shape_cast %277 : vector<2x8xf32> to vector<2x1x8xf32>
    %279 = vector.shape_cast %278 : vector<2x1x8xf32> to vector<2x8xf32>
    %280 = vector.broadcast %278 : vector<2x1x8xf32> to vector<2x8x8xf32>
    %281 = arith.subf %276, %280 : vector<2x8x8xf32>
    %282 = math.exp %281 : vector<2x8x8xf32>
    %cst_87 = arith.constant dense<0.000000e+00> : vector<2x8xf32>
    %283 = vector.multi_reduction <add>, %282, %cst_87 [1] : vector<2x8x8xf32> to vector<2x8xf32>
    %284 = math.log %283 : vector<2x8xf32>
    %285 = arith.addf %279, %284 : vector<2x8xf32>
    %cst_88 = arith.constant 5.000000e-01 : f32
    %286 = vector.broadcast %cst_88 : f32 to vector<2x1xf32>
    %287 = arith.cmpf ogt, %268, %286 : vector<2x1xf32>
    %288 = vector.shape_cast %287 : vector<2x1xi1> to vector<2x1xi1>
    %289 = vector.broadcast %288 : vector<2x1xi1> to vector<2x8xi1>
    %290 = arith.select %289, %285, %241 : vector<2x8xi1>, vector<2x8xf32>
    %291 = vector.shape_cast %262 : vector<2x8xf32> to vector<2x8x1xf32>
    %292 = vector.broadcast %291 : vector<2x8x1xf32> to vector<2x8x8xf32>
    %293 = arith.addf %292, %273 : vector<2x8x8xf32>
    %cst_89 = arith.constant dense<0xFF800000> : vector<2x8xf32>
    %294 = vector.multi_reduction <maximumf>, %293, %cst_89 [1] : vector<2x8x8xf32> to vector<2x8xf32>
    %295 = tpu.iota {dimensions = array<i32: 1>} : vector<2x8x8xi32>
    %296 = vector.shape_cast %294 : vector<2x8xf32> to vector<2x1x8xf32>
    %297 = vector.broadcast %296 : vector<2x1x8xf32> to vector<2x8x8xf32>
    %298 = arith.cmpf oge, %293, %297 : vector<2x8x8xf32>
    %c8_i32_90 = arith.constant 8 : i32
    %299 = vector.broadcast %c8_i32_90 : i32 to vector<2x8x8xi32>
    %300 = arith.select %298, %295, %299 : vector<2x8x8xi1>, vector<2x8x8xi32>
    %cst_91 = arith.constant dense<2147483647> : vector<2x8xi32>
    %301 = vector.multi_reduction <minsi>, %300, %cst_91 [1] : vector<2x8x8xi32> to vector<2x8xi32>
    %c1_i32_92 = arith.constant 1 : i32
    %302 = arith.subi %c5_i32, %c1_i32_92 : i32
    %303 = arith.index_cast %302 : i32 to index
    %c0_93 = arith.constant 0 : index
    %c0_94 = arith.constant 0 : index
    %304 = vector.load %arg12[%303, %c0_93, %c0_94] : memref<7x2x8xi32, #tpu.memory_space<vmem>>, vector<1x2x8xi32>
    %305 = vector.shape_cast %304 : vector<1x2x8xi32> to vector<2x8xi32>
    %306 = vector.shape_cast %301 : vector<2x8xi32> to vector<1x2x8xi32>
    tpu.vector_store %arg12[%303, %c0_93, %c0_94], %306 {strides = array<i32>} : memref<7x2x8xi32, #tpu.memory_space<vmem>>, vector<1x2x8xi32>,
    %cst_95 = arith.constant 5.000000e-01 : f32
    %307 = vector.broadcast %cst_95 : f32 to vector<2x1xf32>
    %308 = arith.cmpf ogt, %268, %307 : vector<2x1xf32>
    %309 = vector.shape_cast %308 : vector<2x1xi1> to vector<2x1xi1>
    %310 = vector.broadcast %309 : vector<2x1xi1> to vector<2x8xi1>
    %311 = arith.select %310, %294, %262 : vector<2x8xi1>, vector<2x8xf32>
    %c6_i32 = arith.constant 6 : i32
    %c2_i32_96 = arith.constant 2 : i32
    %312 = arith.muli %c6_i32, %c2_i32_96 : i32
    %313 = arith.index_cast %312 : i32 to index
    %c0_97 = arith.constant 0 : index
    %314 = vector.load %arg13[%313, %c0_97] : memref<16x8xf32, #tpu.memory_space<vmem>>, vector<2x8xf32>
    %c2_i32_98 = arith.constant 2 : i32
    %315 = arith.muli %c6_i32, %c2_i32_98 : i32
    %316 = arith.index_cast %315 : i32 to index
    %c0_99 = arith.constant 0 : index
    %317 = vector.load %arg8[%316, %c0_99] : memref<16x1xf32, #tpu.memory_space<vmem>>, vector<2x1xf32>
    %318 = vector.shape_cast %12 : vector<8x8xf32> to vector<1x8x8xf32>
    %319 = vector.shape_cast %314 : vector<2x8xf32> to vector<2x1x8xf32>
    %320 = vector.broadcast %318 : vector<1x8x8xf32> to vector<2x8x8xf32>
    %321 = vector.broadcast %319 : vector<2x1x8xf32> to vector<2x8x8xf32>
    %322 = arith.addf %320, %321 : vector<2x8x8xf32>
    %323 = vector.shape_cast %290 : vector<2x8xf32> to vector<2x8x1xf32>
    %324 = vector.broadcast %323 : vector<2x8x1xf32> to vector<2x8x8xf32>
    %325 = arith.addf %324, %322 : vector<2x8x8xf32>
    %cst_100 = arith.constant dense<0xFF800000> : vector<2x8xf32>
    %326 = vector.multi_reduction <maximumf>, %325, %cst_100 [1] : vector<2x8x8xf32> to vector<2x8xf32>
    %327 = vector.shape_cast %326 : vector<2x8xf32> to vector<2x1x8xf32>
    %328 = vector.shape_cast %327 : vector<2x1x8xf32> to vector<2x8xf32>
    %329 = vector.broadcast %327 : vector<2x1x8xf32> to vector<2x8x8xf32>
    %330 = arith.subf %325, %329 : vector<2x8x8xf32>
    %331 = math.exp %330 : vector<2x8x8xf32>
    %cst_101 = arith.constant dense<0.000000e+00> : vector<2x8xf32>
    %332 = vector.multi_reduction <add>, %331, %cst_101 [1] : vector<2x8x8xf32> to vector<2x8xf32>
    %333 = math.log %332 : vector<2x8xf32>
    %334 = arith.addf %328, %333 : vector<2x8xf32>
    %cst_102 = arith.constant 5.000000e-01 : f32
    %335 = vector.broadcast %cst_102 : f32 to vector<2x1xf32>
    %336 = arith.cmpf ogt, %317, %335 : vector<2x1xf32>
    %337 = vector.shape_cast %336 : vector<2x1xi1> to vector<2x1xi1>
    %338 = vector.broadcast %337 : vector<2x1xi1> to vector<2x8xi1>
    %339 = arith.select %338, %334, %290 : vector<2x8xi1>, vector<2x8xf32>
    %340 = vector.shape_cast %311 : vector<2x8xf32> to vector<2x8x1xf32>
    %341 = vector.broadcast %340 : vector<2x8x1xf32> to vector<2x8x8xf32>
    %342 = arith.addf %341, %322 : vector<2x8x8xf32>
    %cst_103 = arith.constant dense<0xFF800000> : vector<2x8xf32>
    %343 = vector.multi_reduction <maximumf>, %342, %cst_103 [1] : vector<2x8x8xf32> to vector<2x8xf32>
    %344 = tpu.iota {dimensions = array<i32: 1>} : vector<2x8x8xi32>
    %345 = vector.shape_cast %343 : vector<2x8xf32> to vector<2x1x8xf32>
    %346 = vector.broadcast %345 : vector<2x1x8xf32> to vector<2x8x8xf32>
    %347 = arith.cmpf oge, %342, %346 : vector<2x8x8xf32>
    %c8_i32_104 = arith.constant 8 : i32
    %348 = vector.broadcast %c8_i32_104 : i32 to vector<2x8x8xi32>
    %349 = arith.select %347, %344, %348 : vector<2x8x8xi1>, vector<2x8x8xi32>
    %cst_105 = arith.constant dense<2147483647> : vector<2x8xi32>
    %350 = vector.multi_reduction <minsi>, %349, %cst_105 [1] : vector<2x8x8xi32> to vector<2x8xi32>
    %c1_i32_106 = arith.constant 1 : i32
    %351 = arith.subi %c6_i32, %c1_i32_106 : i32
    %352 = arith.index_cast %351 : i32 to index
    %c0_107 = arith.constant 0 : index
    %c0_108 = arith.constant 0 : index
    %353 = vector.load %arg12[%352, %c0_107, %c0_108] : memref<7x2x8xi32, #tpu.memory_space<vmem>>, vector<1x2x8xi32>
    %354 = vector.shape_cast %353 : vector<1x2x8xi32> to vector<2x8xi32>
    %355 = vector.shape_cast %350 : vector<2x8xi32> to vector<1x2x8xi32>
    tpu.vector_store %arg12[%352, %c0_107, %c0_108], %355 {strides = array<i32>} : memref<7x2x8xi32, #tpu.memory_space<vmem>>, vector<1x2x8xi32>,
    %cst_109 = arith.constant 5.000000e-01 : f32
    %356 = vector.broadcast %cst_109 : f32 to vector<2x1xf32>
    %357 = arith.cmpf ogt, %317, %356 : vector<2x1xf32>
    %358 = vector.shape_cast %357 : vector<2x1xi1> to vector<2x1xi1>
    %359 = vector.broadcast %358 : vector<2x1xi1> to vector<2x8xi1>
    %360 = arith.select %359, %343, %311 : vector<2x8xi1>, vector<2x8xf32>
    %c7_i32 = arith.constant 7 : i32
    %c2_i32_110 = arith.constant 2 : i32
    %361 = arith.muli %c7_i32, %c2_i32_110 : i32
    %362 = arith.index_cast %361 : i32 to index
    %c0_111 = arith.constant 0 : index
    %363 = vector.load %arg13[%362, %c0_111] : memref<16x8xf32, #tpu.memory_space<vmem>>, vector<2x8xf32>
    %c2_i32_112 = arith.constant 2 : i32
    %364 = arith.muli %c7_i32, %c2_i32_112 : i32
    %365 = arith.index_cast %364 : i32 to index
    %c0_113 = arith.constant 0 : index
    %366 = vector.load %arg8[%365, %c0_113] : memref<16x1xf32, #tpu.memory_space<vmem>>, vector<2x1xf32>
    %367 = vector.shape_cast %12 : vector<8x8xf32> to vector<1x8x8xf32>
    %368 = vector.shape_cast %363 : vector<2x8xf32> to vector<2x1x8xf32>
    %369 = vector.broadcast %367 : vector<1x8x8xf32> to vector<2x8x8xf32>
    %370 = vector.broadcast %368 : vector<2x1x8xf32> to vector<2x8x8xf32>
    %371 = arith.addf %369, %370 : vector<2x8x8xf32>
    %372 = vector.shape_cast %339 : vector<2x8xf32> to vector<2x8x1xf32>
    %373 = vector.broadcast %372 : vector<2x8x1xf32> to vector<2x8x8xf32>
    %374 = arith.addf %373, %371 : vector<2x8x8xf32>
    %cst_114 = arith.constant dense<0xFF800000> : vector<2x8xf32>
    %375 = vector.multi_reduction <maximumf>, %374, %cst_114 [1] : vector<2x8x8xf32> to vector<2x8xf32>
    %376 = vector.shape_cast %375 : vector<2x8xf32> to vector<2x1x8xf32>
    %377 = vector.shape_cast %376 : vector<2x1x8xf32> to vector<2x8xf32>
    %378 = vector.broadcast %376 : vector<2x1x8xf32> to vector<2x8x8xf32>
    %379 = arith.subf %374, %378 : vector<2x8x8xf32>
    %380 = math.exp %379 : vector<2x8x8xf32>
    %cst_115 = arith.constant dense<0.000000e+00> : vector<2x8xf32>
    %381 = vector.multi_reduction <add>, %380, %cst_115 [1] : vector<2x8x8xf32> to vector<2x8xf32>
    %382 = math.log %381 : vector<2x8xf32>
    %383 = arith.addf %377, %382 : vector<2x8xf32>
    %cst_116 = arith.constant 5.000000e-01 : f32
    %384 = vector.broadcast %cst_116 : f32 to vector<2x1xf32>
    %385 = arith.cmpf ogt, %366, %384 : vector<2x1xf32>
    %386 = vector.shape_cast %385 : vector<2x1xi1> to vector<2x1xi1>
    %387 = vector.broadcast %386 : vector<2x1xi1> to vector<2x8xi1>
    %388 = arith.select %387, %383, %339 : vector<2x8xi1>, vector<2x8xf32>
    %389 = vector.shape_cast %360 : vector<2x8xf32> to vector<2x8x1xf32>
    %390 = vector.broadcast %389 : vector<2x8x1xf32> to vector<2x8x8xf32>
    %391 = arith.addf %390, %371 : vector<2x8x8xf32>
    %cst_117 = arith.constant dense<0xFF800000> : vector<2x8xf32>
    %392 = vector.multi_reduction <maximumf>, %391, %cst_117 [1] : vector<2x8x8xf32> to vector<2x8xf32>
    %393 = tpu.iota {dimensions = array<i32: 1>} : vector<2x8x8xi32>
    %394 = vector.shape_cast %392 : vector<2x8xf32> to vector<2x1x8xf32>
    %395 = vector.broadcast %394 : vector<2x1x8xf32> to vector<2x8x8xf32>
    %396 = arith.cmpf oge, %391, %395 : vector<2x8x8xf32>
    %c8_i32_118 = arith.constant 8 : i32
    %397 = vector.broadcast %c8_i32_118 : i32 to vector<2x8x8xi32>
    %398 = arith.select %396, %393, %397 : vector<2x8x8xi1>, vector<2x8x8xi32>
    %cst_119 = arith.constant dense<2147483647> : vector<2x8xi32>
    %399 = vector.multi_reduction <minsi>, %398, %cst_119 [1] : vector<2x8x8xi32> to vector<2x8xi32>
    %c1_i32_120 = arith.constant 1 : i32
    %400 = arith.subi %c7_i32, %c1_i32_120 : i32
    %401 = arith.index_cast %400 : i32 to index
    %c0_121 = arith.constant 0 : index
    %c0_122 = arith.constant 0 : index
    %402 = vector.load %arg12[%401, %c0_121, %c0_122] : memref<7x2x8xi32, #tpu.memory_space<vmem>>, vector<1x2x8xi32>
    %403 = vector.shape_cast %402 : vector<1x2x8xi32> to vector<2x8xi32>
    %404 = vector.shape_cast %399 : vector<2x8xi32> to vector<1x2x8xi32>
    tpu.vector_store %arg12[%401, %c0_121, %c0_122], %404 {strides = array<i32>} : memref<7x2x8xi32, #tpu.memory_space<vmem>>, vector<1x2x8xi32>,
    %cst_123 = arith.constant 5.000000e-01 : f32
    %405 = vector.broadcast %cst_123 : f32 to vector<2x1xf32>
    %406 = arith.cmpf ogt, %366, %405 : vector<2x1xf32>
    %407 = vector.shape_cast %406 : vector<2x1xi1> to vector<2x1xi1>
    %408 = vector.broadcast %407 : vector<2x1xi1> to vector<2x8xi1>
    %409 = arith.select %408, %392, %360 : vector<2x8xi1>, vector<2x8xf32>
    %c7_i32_124 = arith.constant 7 : i32
    %410 = vector.broadcast %14 : vector<1x8xf32> to vector<2x8xf32>
    %411 = arith.addf %388, %410 : vector<2x8xf32>
    %cst_125 = arith.constant dense<0xFF800000> : vector<2xf32>
    %412 = vector.multi_reduction <maximumf>, %411, %cst_125 [1] : vector<2x8xf32> to vector<2xf32>
    %413 = vector.shape_cast %412 : vector<2xf32> to vector<2x1xf32>
    %414 = vector.broadcast %413 : vector<2x1xf32> to vector<2x8xf32>
    %415 = arith.subf %411, %414 : vector<2x8xf32>
    %416 = math.exp %415 : vector<2x8xf32>
    %cst_126 = arith.constant dense<0.000000e+00> : vector<2xf32>
    %417 = vector.multi_reduction <add>, %416, %cst_126 [1] : vector<2x8xf32> to vector<2xf32>
    %418 = vector.shape_cast %417 : vector<2xf32> to vector<2x1xf32>
    %419 = math.log %418 : vector<2x1xf32>
    %420 = arith.addf %413, %419 : vector<2x1xf32>
    %421 = vector.shape_cast %420 : vector<2x1xf32> to vector<1x2x1xf32>
    %cst_127 = arith.constant dense<0.000000e+00> : vector<1xf32>
    %422 = vector.multi_reduction <add>, %421, %cst_127 [1, 2] : vector<1x2x1xf32> to vector<1xf32>
    %423 = vector.shape_cast %422 : vector<1xf32> to vector<1x1x1xf32>
    %424 = vector.extract %423[0, 0, 0] : f32 from vector<1x1x1xf32>
    %425 = arith.subf %63, %424 : f32
    %c0_128 = arith.constant 0 : index
    %c0_129 = arith.constant 0 : index
    %426 = memref.load %arg10[%c0_128, %c0_129] : memref<1x1xf32, #tpu.memory_space<smem>>
    memref.store %425, %arg10[%c0_128, %c0_129] : memref<1x1xf32, #tpu.memory_space<smem>>
    %427 = vector.broadcast %14 : vector<1x8xf32> to vector<2x8xf32>
    %428 = arith.addf %409, %427 : vector<2x8xf32>
    %c0_130 = arith.constant 0 : index
    %c0_131 = arith.constant 0 : index
    %429 = vector.load %arg11[%c0_130, %c0_131] : memref<2x8xf32, #tpu.memory_space<vmem>>, vector<2x8xf32>
    tpu.vector_store %arg11[%c0_130, %c0_131], %428 {strides = array<i32>} : memref<2x8xf32, #tpu.memory_space<vmem>>, vector<2x8xf32>,
    return
  }
  func.func @transform_0(%arg0: i32) -> (i32, i32) {
    %c0_i32 = arith.constant 0 : i32
    %c0_i32_0 = arith.constant 0 : i32
    %c0_i32_1 = arith.constant 0 : i32
    return %c0_i32, %c0_i32_0 : i32, i32
  }
  func.func @transform_1(%arg0: i32) -> (i32, i32) {
    %c0_i32 = arith.constant 0 : i32
    %c0_i32_0 = arith.constant 0 : i32
    %c0_i32_1 = arith.constant 0 : i32
    return %c0_i32, %c0_i32_0 : i32, i32
  }
  func.func @transform_2(%arg0: i32) -> (i32, i32) {
    %c0_i32 = arith.constant 0 : i32
    %c0_i32_0 = arith.constant 0 : i32
    %c0_i32_1 = arith.constant 0 : i32
    return %c0_i32, %c0_i32_0 : i32, i32
  }
  func.func @transform_3(%arg0: i32) -> (i32, i32) {
    %c0_i32 = arith.constant 0 : i32
    %c0_i32_0 = arith.constant 0 : i32
    %c0_i32_1 = arith.constant 0 : i32
    return %c0_i32, %c0_i32_0 : i32, i32
  }
  func.func @transform_4(%arg0: i32) -> (i32, i32) {
    %c0_i32 = arith.constant 0 : i32
    %c0_i32_0 = arith.constant 0 : i32
    %c0_i32_1 = arith.constant 0 : i32
    return %c0_i32, %c0_i32_0 : i32, i32
  }
  func.func @transform_5(%arg0: i32) -> (i32, i32) {
    %c0_i32 = arith.constant 0 : i32
    %c0_i32_0 = arith.constant 0 : i32
    %c0_i32_1 = arith.constant 0 : i32
    return %c0_i32, %c0_i32_0 : i32, i32
  }
  func.func @transform_6(%arg0: i32) -> (i32, i32) {
    %c0_i32 = arith.constant 0 : i32
    %c0_i32_0 = arith.constant 0 : i32
    %c0_i32_1 = arith.constant 0 : i32
    return %c0_i32, %c0_i32_0 : i32, i32
  }
  func.func @transform_7(%arg0: i32) -> (i32, i32) {
    %c0_i32 = arith.constant 0 : i32
    %c0_i32_0 = arith.constant 0 : i32
    %c0_i32_1 = arith.constant 0 : i32
    return %c0_i32, %c0_i32_0 : i32, i32
  }
  func.func @transform_8(%arg0: i32) -> (i32, i32) {
    %c0_i32 = arith.constant 0 : i32
    %c0_i32_0 = arith.constant 0 : i32
    %c0_i32_1 = arith.constant 0 : i32
    return %c0_i32, %c0_i32_0 : i32, i32
  }
  func.func @transform_9(%arg0: i32) -> (i32, i32) {
    %c0_i32 = arith.constant 0 : i32
    %c0_i32_0 = arith.constant 0 : i32
    %c0_i32_1 = arith.constant 0 : i32
    return %c0_i32, %c0_i32_0 : i32, i32
  }
  func.func @transform_10(%arg0: i32) -> (i32, i32) {
    %c0_i32 = arith.constant 0 : i32
    %c0_i32_0 = arith.constant 0 : i32
    %c0_i32_1 = arith.constant 0 : i32
    return %c0_i32, %c0_i32_0 : i32, i32
  }
  func.func @transform_11(%arg0: i32) -> (i32, i32, i32) {
    %c0_i32 = arith.constant 0 : i32
    %c0_i32_0 = arith.constant 0 : i32
    %c0_i32_1 = arith.constant 0 : i32
    %c0_i32_2 = arith.constant 0 : i32
    return %c0_i32, %c0_i32_0, %c0_i32_1 : i32, i32, i32
  }
}

</mosaic_0001>

<llo_original>
// kernel: kobert_bigru_crf_forward.3
$region0: #{kobert_bigru_crf_forward.3}
  #allocation0 [shape = 'u32[]', space=smem, size = 0x4, offset = 0x4, fixed_abs, tag = 'smem constant byte address 0x4 - core index']
  #allocation1 [shape = 'u32[144,128]{1,0:T(1,128)}', space=vmem, size = 0x12000, scoped, tag = 'internal scratch']
  %s0 = inlined_call_operand.vmem [shape: f32[16,32], index: 0, kind: input, shape index: {}]
  %s1 = inlined_call_operand.vmem [shape: f32[1,32], index: 1, kind: input, shape index: {}]
  %s2 = inlined_call_operand.vmem [shape: f32[1,32], index: 2, kind: input, shape index: {}]
  %s3 = inlined_call_operand.vmem [shape: f32[2,1,8], index: 3, kind: input, shape index: {}]
  %s4 = inlined_call_operand.vmem [shape: f32[2,32,96], index: 4, kind: input, shape index: {}]
  %s5 = inlined_call_operand.vmem [shape: f32[2,1,96], index: 5, kind: input, shape index: {}]
  %s6 = inlined_call_operand.vmem [shape: f32[2,32,32], index: 6, kind: input, shape index: {}]
  %s7 = inlined_call_operand.vmem [shape: f32[2,1,32], index: 7, kind: input, shape index: {}]
  %s8 = inlined_call_operand.vmem [shape: f32[2,1,32], index: 8, kind: input, shape index: {}]
  %s9 = inlined_call_operand.vmem [shape: f32[2,1,32], index: 9, kind: input, shape index: {}]
  %s10 = inlined_call_operand.vmem [shape: f32[2,32,64], index: 10, kind: input, shape index: {}]
  %s11 = inlined_call_operand.vmem [shape: f32[2,1,64], index: 11, kind: input, shape index: {}]
  %s12 = inlined_call_operand.vmem [shape: f32[2,64,32], index: 12, kind: input, shape index: {}]
  %s13 = inlined_call_operand.vmem [shape: f32[2,1,32], index: 13, kind: input, shape index: {}]
  %s14 = inlined_call_operand.vmem [shape: f32[2,1,32], index: 14, kind: input, shape index: {}]
  %s15 = inlined_call_operand.vmem [shape: f32[2,1,32], index: 15, kind: input, shape index: {}]
  %s16 = inlined_call_operand.vmem [shape: f32[16,32], index: 16, kind: output, shape index: {}]
  %s17 = sld [smem:[#allocation0]]
  $region101: #{kobert_bigru_crf_forward.3} parent=0
    _
  %s19 = ssub.s32 1, %s17
  %s20 = scalar_select 0, %s19, %s17
  loop: start=0, step=1, limit=6
  $region2: #{kobert_bigru_crf_forward.3} parent=0 // loop_pre_header
    _
  $region3: #{kobert_bigru_crf_forward.3} parent=0 // loop_header
    %s22 = sphi 0, %s26
    %p23 = scmp.ge.s32.totalorder %s22, 6
    %s29 = sphi 0, %s41
    %s30 = sphi 0, %s37
    %s31 = sphi 0, %s29
    %s32 = sphi 0, %s30
    %s33 = sphi 0, %s31
    %s34 = sphi 0, %s32
    %s44 = sphi 0, %s46
    %s47 = sphi 0, %s44
    %s48 = sphi 0, %s47
    %s64 = sphi 0, %s48
    %s68 = sphi 0, %s68
    %s70 = sphi 0, %s68
    %s71 = sphi 0, %s70
    %s85 = sphi 0, %s71
    %s89 = sphi 0, %s89
    %s91 = sphi 0, %s89
    %s92 = sphi 0, %s91
    %s106 = sphi 0, %s92
    %s112 = sphi 0, %s114
    %s115 = sphi 0, %s112
    %s116 = sphi 0, %s115
    %s132 = sphi 0, %s116
    %s138 = sphi 0, %s140
    %s141 = sphi 0, %s138
    %s142 = sphi 0, %s141
    %s158 = sphi 0, %s142
    %s164 = sphi 0, %s166
    %s167 = sphi 0, %s164
    %s168 = sphi 0, %s167
    %s184 = sphi 0, %s168
    %s190 = sphi 0, %s192
    %s193 = sphi 0, %s190
    %s194 = sphi 0, %s193
    %s210 = sphi 0, %s194
    %s216 = sphi 0, %s218
    %s219 = sphi 0, %s216
    %s220 = sphi 0, %s219
    %s236 = sphi 0, %s220
    %s242 = sphi 0, %s244
    %s245 = sphi 0, %s242
    %s246 = sphi 0, %s245
    %s262 = sphi 0, %s246
    %s268 = sphi 0, %s270
    %s271 = sphi 0, %s268
    %s272 = sphi 0, %s271
    %s288 = sphi 0, %s272
    %s294 = sphi 0, %s296
    %s297 = sphi 0, %s294
    %s298 = sphi 0, %s297
    %s314 = sphi 0, %s298
    %s320 = sphi 0, %s322
    %s323 = sphi 0, %s320
    %s324 = sphi 0, %s323
    %s340 = sphi 0, %s324
    %s346 = sphi 0, %s348
    %s349 = sphi 0, %s346
    %s350 = sphi 0, %s349
    %s366 = sphi 0, %s350
    %s372 = sphi 0, %s374
    %s375 = sphi 0, %s372
    %s376 = sphi 0, %s375
    %s392 = sphi 0, %s376
    %s398 = sphi 0, %s400
    %s401 = sphi 0, %s398
    %s402 = sphi 0, %s401
    %s418 = sphi 0, %s402
    %s424 = sphi 0, %s426
    %s427 = sphi 0, %s424
    %s428 = sphi 0, %s427
    %s444 = sphi 0, %s428
    %s450 = sphi 0, %s452
    %s453 = sphi 0, %s450
    %s454 = sphi 0, %s453
    %s470 = sphi 0, %s454
  $region4: #{kobert_bigru_crf_forward.3} parent=0 // loop_header_branch
    %25 = sbr.rel (%p23) target = $region8
  $region5: #{kobert_bigru_crf_forward.3} parent=0 // loop_body
    %s27 = ssub.s32 %s22, 1
    %s28 = ssub.s32 %s22, 2
    %s35 = sadd.s32 1, %s30
    %p36 = scmp.ge.s32.totalorder %s35, 2
    %s37 = scalar_select %p36, 0, %s35
    %s38 = sadd.s32 1, %s29
    %s39 = scalar_select %p36, %s38, %s29
    %p40 = scmp.ge.s32.totalorder %s39, 2
    %s41 = scalar_select %p40, 0, %s39
    %s42 = ssub.s32 %s29, %s41
    %p43 = scmp.eq.s32.totalorder %s42, 0
    %s45 = sadd.s32 %s44, 1
    %s46 = scalar_select %p43, %s44, %s45
    %p49 = pneg %p43
    %p50 = scmp.eq.s32.totalorder %s22, 3
    %p51 = por %p49, %p50
    %p52 = scmp.ne.s32.totalorder %s44, %s47
    %p53 = scmp.eq.s32.totalorder %s22, 0
    %p54 = por %p52, %p53
    %p55 = scmp.ne.s32.totalorder %s44, %s47
    %p56 = scmp.eq.s32.totalorder %s27, 3
    %p57 = por %p55, %p56
    %p58 = scmp.ne.s32.totalorder %s47, %s48
    %p59 = scmp.eq.s32.totalorder %s27, 0
    %p60 = por %p58, %p59
    %p61 = scmp.ne.s32.totalorder %s47, %s48
    %p62 = scmp.eq.s32.totalorder %s28, 3
    %p63 = por %p61, %p62
    %p65 = scmp.ne.s32.totalorder %s48, %s64
    %p66 = scmp.eq.s32.totalorder %s28, 0
    %p67 = por %p65, %p66
    %s69 = sadd.s32 %s68, 1
    %p72 = scmp.eq.s32.totalorder %s22, 3
    %p73 = scmp.ne.s32.totalorder %s68, %s70
    %p74 = scmp.eq.s32.totalorder %s22, 0
    %p75 = por %p73, %p74
    %p76 = scmp.ne.s32.totalorder %s68, %s70
    %p77 = scmp.eq.s32.totalorder %s27, 3
    %p78 = por %p76, %p77
    %p79 = scmp.ne.s32.totalorder %s70, %s71
    %p80 = scmp.eq.s32.totalorder %s27, 0
    %p81 = por %p79, %p80
    %p82 = scmp.ne.s32.totalorder %s70, %s71
    %p83 = scmp.eq.s32.totalorder %s28, 3
    %p84 = por %p82, %p83
    %p86 = scmp.ne.s32.totalorder %s71, %s85
    %p87 = scmp.eq.s32.totalorder %s28, 0
    %p88 = por %p86, %p87
    %s90 = sadd.s32 %s89, 1
    %p93 = scmp.eq.s32.totalorder %s22, 3
    %p94 = scmp.ne.s32.totalorder %s89, %s91
    %p95 = scmp.eq.s32.totalorder %s22, 0
    %p96 = por %p94, %p95
    %p97 = scmp.ne.s32.totalorder %s89, %s91
    %p98 = scmp.eq.s32.totalorder %s27, 3
    %p99 = por %p97, %p98
    %p100 = scmp.ne.s32.totalorder %s91, %s92
    %p101 = scmp.eq.s32.totalorder %s27, 0
    %p102 = por %p100, %p101
    %p103 = scmp.ne.s32.totalorder %s91, %s92
    %p104 = scmp.eq.s32.totalorder %s28, 3
    %p105 = por %p103, %p104
    %p107 = scmp.ne.s32.totalorder %s92, %s106
    %p108 = scmp.eq.s32.totalorder %s28, 0
    %p109 = por %p107, %p108
    %s110 = ssub.s32 %s29, %s41
    %p111 = scmp.eq.s32.totalorder %s110, 0
    %s113 = sadd.s32 %s112, 1
    %s114 = scalar_select %p111, %s112, %s113
    %p117 = pneg %p111
    %p118 = scmp.eq.s32.totalorder %s22, 3
    %p119 = por %p117, %p118
    %p120 = scmp.ne.s32.totalorder %s112, %s115
    %p121 = scmp.eq.s32.totalorder %s22, 0
    %p122 = por %p120, %p121
    %p123 = scmp.ne.s32.totalorder %s112, %s115
    %p124 = scmp.eq.s32.totalorder %s27, 3
    %p125 = por %p123, %p124
    %p126 = scmp.ne.s32.totalorder %s115, %s116
    %p127 = scmp.eq.s32.totalorder %s27, 0
    %p128 = por %p126, %p127
    %p129 = scmp.ne.s32.totalorder %s115, %s116
    %p130 = scmp.eq.s32.totalorder %s28, 3
    %p131 = por %p129, %p130
    %p133 = scmp.ne.s32.totalorder %s116, %s132
    %p134 = scmp.eq.s32.totalorder %s28, 0
    %p135 = por %p133, %p134
    %s136 = ssub.s32 %s30, %s37
    %p137 = scmp.eq.s32.totalorder %s136, 0
    %s139 = sadd.s32 %s138, 1
    %s140 = scalar_select %p137, %s138, %s139
    %p143 = pneg %p137
    %p144 = scmp.eq.s32.totalorder %s22, 3
    %p145 = por %p143, %p144
    %p146 = scmp.ne.s32.totalorder %s138, %s141
    %p147 = scmp.eq.s32.totalorder %s22, 0
    %p148 = por %p146, %p147
    %p149 = scmp.ne.s32.totalorder %s138, %s141
    %p150 = scmp.eq.s32.totalorder %s27, 3
    %p151 = por %p149, %p150
    %p152 = scmp.ne.s32.totalorder %s141, %s142
    %p153 = scmp.eq.s32.totalorder %s27, 0
    %p154 = por %p152, %p153
    %p155 = scmp.ne.s32.totalorder %s141, %s142
    %p156 = scmp.eq.s32.totalorder %s28, 3
    %p157 = por %p155, %p156
    %p159 = scmp.ne.s32.totalorder %s142, %s158
    %p160 = scmp.eq.s32.totalorder %s28, 0
    %p161 = por %p159, %p160
    %s162 = ssub.s32 %s30, %s37
    %p163 = scmp.eq.s32.totalorder %s162, 0
    %s165 = sadd.s32 %s164, 1
    %s166 = scalar_select %p163, %s164, %s165
    %p169 = pneg %p163
    %p170 = scmp.eq.s32.totalorder %s22, 3
    %p171 = por %p169, %p170
    %p172 = scmp.ne.s32.totalorder %s164, %s167
    %p173 = scmp.eq.s32.totalorder %s22, 0
    %p174 = por %p172, %p173
    %p175 = scmp.ne.s32.totalorder %s164, %s167
    %p176 = scmp.eq.s32.totalorder %s27, 3
    %p177 = por %p175, %p176
    %p178 = scmp.ne.s32.totalorder %s167, %s168
    %p179 = scmp.eq.s32.totalorder %s27, 0
    %p180 = por %p178, %p179
    %p181 = scmp.ne.s32.totalorder %s167, %s168
    %p182 = scmp.eq.s32.totalorder %s28, 3
    %p183 = por %p181, %p182
    %p185 = scmp.ne.s32.totalorder %s168, %s184
    %p186 = scmp.eq.s32.totalorder %s28, 0
    %p187 = por %p185, %p186
    %s188 = ssub.s32 %s30, %s37
    %p189 = scmp.eq.s32.totalorder %s188, 0
    %s191 = sadd.s32 %s190, 1
    %s192 = scalar_select %p189, %s190, %s191
    %p195 = pneg %p189
    %p196 = scmp.eq.s32.totalorder %s22, 3
    %p197 = por %p195, %p196
    %p198 = scmp.ne.s32.totalorder %s190, %s193
    %p199 = scmp.eq.s32.totalorder %s22, 0
    %p200 = por %p198, %p199
    %p201 = scmp.ne.s32.totalorder %s190, %s193
    %p202 = scmp.eq.s32.totalorder %s27, 3
    %p203 = por %p201, %p202
    %p204 = scmp.ne.s32.totalorder %s193, %s194
    %p205 = scmp.eq.s32.totalorder %s27, 0
    %p206 = por %p204, %p205
    %p207 = scmp.ne.s32.totalorder %s193, %s194
    %p208 = scmp.eq.s32.totalorder %s28, 3
    %p209 = por %p207, %p208
    %p211 = scmp.ne.s32.totalorder %s194, %s210
    %p212 = scmp.eq.s32.totalorder %s28, 0
    %p213 = por %p211, %p212
    %s214 = ssub.s32 %s30, %s37
    %p215 = scmp.eq.s32.totalorder %s214, 0
    %s217 = sadd.s32 %s216, 1
    %s218 = scalar_select %p215, %s216, %s217
    %p221 = pneg %p215
    %p222 = scmp.eq.s32.totalorder %s22, 3
    %p223 = por %p221, %p222
    %p224 = scmp.ne.s32.totalorder %s216, %s219
    %p225 = scmp.eq.s32.totalorder %s22, 0
    %p226 = por %p224, %p225
    %p227 = scmp.ne.s32.totalorder %s216, %s219
    %p228 = scmp.eq.s32.totalorder %s27, 3
    %p229 = por %p227, %p228
    %p230 = scmp.ne.s32.totalorder %s219, %s220
    %p231 = scmp.eq.s32.totalorder %s27, 0
    %p232 = por %p230, %p231
    %p233 = scmp.ne.s32.totalorder %s219, %s220
    %p234 = scmp.eq.s32.totalorder %s28, 3
    %p235 = por %p233, %p234
    %p237 = scmp.ne.s32.totalorder %s220, %s236
    %p238 = scmp.eq.s32.totalorder %s28, 0
    %p239 = por %p237, %p238
    %s240 = ssub.s32 %s30, %s37
    %p241 = scmp.eq.s32.totalorder %s240, 0
    %s243 = sadd.s32 %s242, 1
    %s244 = scalar_select %p241, %s242, %s243
    %p247 = pneg %p241
    %p248 = scmp.eq.s32.totalorder %s22, 3
    %p249 = por %p247, %p248
    %p250 = scmp.ne.s32.totalorder %s242, %s245
    %p251 = scmp.eq.s32.totalorder %s22, 0
    %p252 = por %p250, %p251
    %p253 = scmp.ne.s32.totalorder %s242, %s245
    %p254 = scmp.eq.s32.totalorder %s27, 3
    %p255 = por %p253, %p254
    %p256 = scmp.ne.s32.totalorder %s245, %s246
    %p257 = scmp.eq.s32.totalorder %s27, 0
    %p258 = por %p256, %p257
    %p259 = scmp.ne.s32.totalorder %s245, %s246
    %p260 = scmp.eq.s32.totalorder %s28, 3
    %p261 = por %p259, %p260
    %p263 = scmp.ne.s32.totalorder %s246, %s262
    %p264 = scmp.eq.s32.totalorder %s28, 0
    %p265 = por %p263, %p264
    %s266 = ssub.s32 %s30, %s37
    %p267 = scmp.eq.s32.totalorder %s266, 0
    %s269 = sadd.s32 %s268, 1
    %s270 = scalar_select %p267, %s268, %s269
    %p273 = pneg %p267
    %p274 = scmp.eq.s32.totalorder %s22, 3
    %p275 = por %p273, %p274
    %p276 = scmp.ne.s32.totalorder %s268, %s271
    %p277 = scmp.eq.s32.totalorder %s22, 0
    %p278 = por %p276, %p277
    %p279 = scmp.ne.s32.totalorder %s268, %s271
    %p280 = scmp.eq.s32.totalorder %s27, 3
    %p281 = por %p279, %p280
    %p282 = scmp.ne.s32.totalorder %s271, %s272
    %p283 = scmp.eq.s32.totalorder %s27, 0
    %p284 = por %p282, %p283
    %p285 = scmp.ne.s32.totalorder %s271, %s272
    %p286 = scmp.eq.s32.totalorder %s28, 3
    %p287 = por %p285, %p286
    %p289 = scmp.ne.s32.totalorder %s272, %s288
    %p290 = scmp.eq.s32.totalorder %s28, 0
    %p291 = por %p289, %p290
    %s292 = ssub.s32 %s30, %s37
    %p293 = scmp.eq.s32.totalorder %s292, 0
    %s295 = sadd.s32 %s294, 1
    %s296 = scalar_select %p293, %s294, %s295
    %p299 = pneg %p293
    %p300 = scmp.eq.s32.totalorder %s22, 3
    %p301 = por %p299, %p300
    %p302 = scmp.ne.s32.totalorder %s294, %s297
    %p303 = scmp.eq.s32.totalorder %s22, 0
    %p304 = por %p302, %p303
    %p305 = scmp.ne.s32.totalorder %s294, %s297
    %p306 = scmp.eq.s32.totalorder %s27, 3
    %p307 = por %p305, %p306
    %p308 = scmp.ne.s32.totalorder %s297, %s298
    %p309 = scmp.eq.s32.totalorder %s27, 0
    %p310 = por %p308, %p309
    %p311 = scmp.ne.s32.totalorder %s297, %s298
    %p312 = scmp.eq.s32.totalorder %s28, 3
    %p313 = por %p311, %p312
    %p315 = scmp.ne.s32.totalorder %s298, %s314
    %p316 = scmp.eq.s32.totalorder %s28, 0
    %p317 = por %p315, %p316
    %s318 = ssub.s32 %s30, %s37
    %p319 = scmp.eq.s32.totalorder %s318, 0
    %s321 = sadd.s32 %s320, 1
    %s322 = scalar_select %p319, %s320, %s321
    %p325 = pneg %p319
    %p326 = scmp.eq.s32.totalorder %s22, 3
    %p327 = por %p325, %p326
    %p328 = scmp.ne.s32.totalorder %s320, %s323
    %p329 = scmp.eq.s32.totalorder %s22, 0
    %p330 = por %p328, %p329
    %p331 = scmp.ne.s32.totalorder %s320, %s323
    %p332 = scmp.eq.s32.totalorder %s27, 3
    %p333 = por %p331, %p332
    %p334 = scmp.ne.s32.totalorder %s323, %s324
    %p335 = scmp.eq.s32.totalorder %s27, 0
    %p336 = por %p334, %p335
    %p337 = scmp.ne.s32.totalorder %s323, %s324
    %p338 = scmp.eq.s32.totalorder %s28, 3
    %p339 = por %p337, %p338
    %p341 = scmp.ne.s32.totalorder %s324, %s340
    %p342 = scmp.eq.s32.totalorder %s28, 0
    %p343 = por %p341, %p342
    %s344 = ssub.s32 %s30, %s37
    %p345 = scmp.eq.s32.totalorder %s344, 0
    %s347 = sadd.s32 %s346, 1
    %s348 = scalar_select %p345, %s346, %s347
    %p351 = pneg %p345
    %p352 = scmp.eq.s32.totalorder %s22, 3
    %p353 = por %p351, %p352
    %p354 = scmp.ne.s32.totalorder %s346, %s349
    %p355 = scmp.eq.s32.totalorder %s22, 0
    %p356 = por %p354, %p355
    %p357 = scmp.ne.s32.totalorder %s346, %s349
    %p358 = scmp.eq.s32.totalorder %s27, 3
    %p359 = por %p357, %p358
    %p360 = scmp.ne.s32.totalorder %s349, %s350
    %p361 = scmp.eq.s32.totalorder %s27, 0
    %p362 = por %p360, %p361
    %p363 = scmp.ne.s32.totalorder %s349, %s350
    %p364 = scmp.eq.s32.totalorder %s28, 3
    %p365 = por %p363, %p364
    %p367 = scmp.ne.s32.totalorder %s350, %s366
    %p368 = scmp.eq.s32.totalorder %s28, 0
    %p369 = por %p367, %p368
    %s370 = ssub.s32 %s30, %s37
    %p371 = scmp.eq.s32.totalorder %s370, 0
    %s373 = sadd.s32 %s372, 1
    %s374 = scalar_select %p371, %s372, %s373
    %p377 = pneg %p371
    %p378 = scmp.eq.s32.totalorder %s22, 3
    %p379 = por %p377, %p378
    %p380 = scmp.ne.s32.totalorder %s372, %s375
    %p381 = scmp.eq.s32.totalorder %s22, 0
    %p382 = por %p380, %p381
    %p383 = scmp.ne.s32.totalorder %s372, %s375
    %p384 = scmp.eq.s32.totalorder %s27, 3
    %p385 = por %p383, %p384
    %p386 = scmp.ne.s32.totalorder %s375, %s376
    %p387 = scmp.eq.s32.totalorder %s27, 0
    %p388 = por %p386, %p387
    %p389 = scmp.ne.s32.totalorder %s375, %s376
    %p390 = scmp.eq.s32.totalorder %s28, 3
    %p391 = por %p389, %p390
    %p393 = scmp.ne.s32.totalorder %s376, %s392
    %p394 = scmp.eq.s32.totalorder %s28, 0
    %p395 = por %p393, %p394
    %s396 = ssub.s32 %s30, %s37
    %p397 = scmp.eq.s32.totalorder %s396, 0
    %s399 = sadd.s32 %s398, 1
    %s400 = scalar_select %p397, %s398, %s399
    %p403 = pneg %p397
    %p404 = scmp.eq.s32.totalorder %s22, 3
    %p405 = por %p403, %p404
    %p406 = scmp.ne.s32.totalorder %s398, %s401
    %p407 = scmp.eq.s32.totalorder %s22, 0
    %p408 = por %p406, %p407
    %p409 = scmp.ne.s32.totalorder %s398, %s401
    %p410 = scmp.eq.s32.totalorder %s27, 3
    %p411 = por %p409, %p410
    %p412 = scmp.ne.s32.totalorder %s401, %s402
    %p413 = scmp.eq.s32.totalorder %s27, 0
    %p414 = por %p412, %p413
    %p415 = scmp.ne.s32.totalorder %s401, %s402
    %p416 = scmp.eq.s32.totalorder %s28, 3
    %p417 = por %p415, %p416
    %p419 = scmp.ne.s32.totalorder %s402, %s418
    %p420 = scmp.eq.s32.totalorder %s28, 0
    %p421 = por %p419, %p420
    %s422 = ssub.s32 %s30, %s37
    %p423 = scmp.eq.s32.totalorder %s422, 0
    %s425 = sadd.s32 %s424, 1
    %s426 = scalar_select %p423, %s424, %s425
    %p429 = pneg %p423
    %p430 = scmp.eq.s32.totalorder %s22, 3
    %p431 = por %p429, %p430
    %p432 = scmp.ne.s32.totalorder %s424, %s427
    %p433 = scmp.eq.s32.totalorder %s22, 0
    %p434 = por %p432, %p433
    %p435 = scmp.ne.s32.totalorder %s424, %s427
    %p436 = scmp.eq.s32.totalorder %s27, 3
    %p437 = por %p435, %p436
    %p438 = scmp.ne.s32.totalorder %s427, %s428
    %p439 = scmp.eq.s32.totalorder %s27, 0
    %p440 = por %p438, %p439
    %p441 = scmp.ne.s32.totalorder %s427, %s428
    %p442 = scmp.eq.s32.totalorder %s28, 3
    %p443 = por %p441, %p442
    %p445 = scmp.ne.s32.totalorder %s428, %s444
    %p446 = scmp.eq.s32.totalorder %s28, 0
    %p447 = por %p445, %p446
    %s448 = ssub.s32 %s29, %s41
    %p449 = scmp.eq.s32.totalorder %s448, 0
    %s451 = sadd.s32 %s450, 1
    %s452 = scalar_select %p449, %s450, %s451
    %p455 = pneg %p449
    %p456 = scmp.eq.s32.totalorder %s22, 3
    %p457 = por %p455, %p456
    %p458 = scmp.ne.s32.totalorder %s450, %s453
    %p459 = scmp.eq.s32.totalorder %s22, 0
    %p460 = por %p458, %p459
    %p461 = scmp.ne.s32.totalorder %s450, %s453
    %p462 = scmp.eq.s32.totalorder %s27, 3
    %p463 = por %p461, %p462
    %p464 = scmp.ne.s32.totalorder %s453, %s454
    %p465 = scmp.eq.s32.totalorder %s27, 0
    %p466 = por %p464, %p465
    %p467 = scmp.ne.s32.totalorder %s453, %s454
    %p468 = scmp.eq.s32.totalorder %s28, 3
    %p469 = por %p467, %p468
    %p471 = scmp.ne.s32.totalorder %s454, %s470
    %p472 = scmp.eq.s32.totalorder %s28, 0
    %p473 = por %p471, %p472
    %p474 = scmp.le.s32.totalorder 1, %s22
    %p475 = scmp.lt.s32.totalorder %s22, 5
    %p476 = pnand %p474, %p475
    %p477 = pneg %p476
    // Predicated region
    $region9: #{kobert_bigru_crf_forward.3} parent=5 // pred_check
      _
    $region10: #{kobert_bigru_crf_forward.3} parent=5 // pred_check_branch
      %479 = sbr.rel (%p476) target = $region12
    $region11: #{kobert_bigru_crf_forward.3} parent=5 // pred_region
      %s480 = ssub.s32 %s22, 1
      // Predicated region
      $region13: #{kobert_bigru_crf_forward.3} parent=11 // pred_check
        %p481 = pneg %p81
      $region14: #{kobert_bigru_crf_forward.3} parent=11 // pred_check_branch
        %483 = sbr.rel (%p481) target = $region16
      $region15: #{kobert_bigru_crf_forward.3} parent=11 // pred_region
        _
      $region16: #{kobert_bigru_crf_forward.3} parent=11 // pred_fallthru
        _
      // Predicated region
      $region17: #{kobert_bigru_crf_forward.3} parent=11 // pred_check
        %p484 = pneg %p102
      $region18: #{kobert_bigru_crf_forward.3} parent=11 // pred_check_branch
        %486 = sbr.rel (%p484) target = $region20
      $region19: #{kobert_bigru_crf_forward.3} parent=11 // pred_region
        _
      $region20: #{kobert_bigru_crf_forward.3} parent=11 // pred_fallthru
        _
    $region12: #{kobert_bigru_crf_forward.3} parent=5 // pred_fallthru
      _
    %p487 = scmp.lt.s32.totalorder %s22, 4
    // Predicated region
    $region21: #{kobert_bigru_crf_forward.3} parent=5 // pred_check
      %p488 = pneg %p487
    $region22: #{kobert_bigru_crf_forward.3} parent=5 // pred_check_branch
      %490 = sbr.rel (%p488) target = $region24
    $region23: #{kobert_bigru_crf_forward.3} parent=5 // pred_region
      // Predicated region
      $region25: #{kobert_bigru_crf_forward.3} parent=23 // pred_check
        %p491 = pneg %p54
      $region26: #{kobert_bigru_crf_forward.3} parent=23 // pred_check_branch
        %493 = sbr.rel (%p491) target = $region28
      $region27: #{kobert_bigru_crf_forward.3} parent=23 // pred_region
        %p494 = scmp.lt.s32.totalorder %s29, 1
        %s495 = scalar_select %p494, %s29, 1
        %s496 = smul.addr %s495, 8
        %s497 = scalar_lea.vmem %s0, %s496
      $region28: #{kobert_bigru_crf_forward.3} parent=23 // pred_fallthru
        _
      // Predicated region
      $region29: #{kobert_bigru_crf_forward.3} parent=23 // pred_check
        %p498 = pneg %p122
      $region30: #{kobert_bigru_crf_forward.3} parent=23 // pred_check_branch
        %500 = sbr.rel (%p498) target = $region32
      $region31: #{kobert_bigru_crf_forward.3} parent=23 // pred_region
        %p501 = scmp.lt.s32.totalorder %s29, 1
        %s502 = scalar_select %p501, %s29, 1
        %s503 = scalar_lea.vmem %s3, %s502
      $region32: #{kobert_bigru_crf_forward.3} parent=23 // pred_fallthru
        _
      // Predicated region
      $region33: #{kobert_bigru_crf_forward.3} parent=23 // pred_check
        %p504 = pneg %p148
      $region34: #{kobert_bigru_crf_forward.3} parent=23 // pred_check_branch
        %506 = sbr.rel (%p504) target = $region36
      $region35: #{kobert_bigru_crf_forward.3} parent=23 // pred_region
        %p507 = scmp.lt.s32.totalorder %s30, 1
        %s508 = scalar_select %p507, %s30, 1
        %s509 = smul.addr %s508, 4
        %s510 = smul.addr %s509, 8
        %s511 = scalar_lea.vmem %s4, %s510
      $region36: #{kobert_bigru_crf_forward.3} parent=23 // pred_fallthru
        _
      // Predicated region
      $region37: #{kobert_bigru_crf_forward.3} parent=23 // pred_check
        %p512 = pneg %p174
      $region38: #{kobert_bigru_crf_forward.3} parent=23 // pred_check_branch
        %514 = sbr.rel (%p512) target = $region40
      $region39: #{kobert_bigru_crf_forward.3} parent=23 // pred_region
        %p515 = scmp.lt.s32.totalorder %s30, 1
        %s516 = scalar_select %p515, %s30, 1
        %s517 = scalar_lea.vmem %s5, %s516
      $region40: #{kobert_bigru_crf_forward.3} parent=23 // pred_fallthru
        _
      // Predicated region
      $region41: #{kobert_bigru_crf_forward.3} parent=23 // pred_check
        %p518 = pneg %p200
      $region42: #{kobert_bigru_crf_forward.3} parent=23 // pred_check_branch
        %520 = sbr.rel (%p518) target = $region44
      $region43: #{kobert_bigru_crf_forward.3} parent=23 // pred_region
        %p521 = scmp.lt.s32.totalorder %s30, 1
        %s522 = scalar_select %p521, %s30, 1
        %s523 = smul.addr %s522, 4
        %s524 = smul.addr %s523, 8
        %s525 = scalar_lea.vmem %s6, %s524
      $region44: #{kobert_bigru_crf_forward.3} parent=23 // pred_fallthru
        _
      // Predicated region
      $region45: #{kobert_bigru_crf_forward.3} parent=23 // pred_check
        %p526 = pneg %p226
      $region46: #{kobert_bigru_crf_forward.3} parent=23 // pred_check_branch
        %528 = sbr.rel (%p526) target = $region48
      $region47: #{kobert_bigru_crf_forward.3} parent=23 // pred_region
        %p529 = scmp.lt.s32.totalorder %s30, 1
        %s530 = scalar_select %p529, %s30, 1
        %s531 = scalar_lea.vmem %s7, %s530
      $region48: #{kobert_bigru_crf_forward.3} parent=23 // pred_fallthru
        _
      // Predicated region
      $region49: #{kobert_bigru_crf_forward.3} parent=23 // pred_check
        %p532 = pneg %p252
      $region50: #{kobert_bigru_crf_forward.3} parent=23 // pred_check_branch
        %534 = sbr.rel (%p532) target = $region52
      $region51: #{kobert_bigru_crf_forward.3} parent=23 // pred_region
        %p535 = scmp.lt.s32.totalorder %s30, 1
        %s536 = scalar_select %p535, %s30, 1
        %s537 = scalar_lea.vmem %s8, %s536
      $region52: #{kobert_bigru_crf_forward.3} parent=23 // pred_fallthru
        _
      // Predicated region
      $region53: #{kobert_bigru_crf_forward.3} parent=23 // pred_check
        %p538 = pneg %p278
      $region54: #{kobert_bigru_crf_forward.3} parent=23 // pred_check_branch
        %540 = sbr.rel (%p538) target = $region56
      $region55: #{kobert_bigru_crf_forward.3} parent=23 // pred_region
        %p541 = scmp.lt.s32.totalorder %s30, 1
        %s542 = scalar_select %p541, %s30, 1
        %s543 = scalar_lea.vmem %s9, %s542
      $region56: #{kobert_bigru_crf_forward.3} parent=23 // pred_fallthru
        _
      // Predicated region
      $region57: #{kobert_bigru_crf_forward.3} parent=23 // pred_check
        %p544 = pneg %p304
      $region58: #{kobert_bigru_crf_forward.3} parent=23 // pred_check_branch
        %546 = sbr.rel (%p544) target = $region60
      $region59: #{kobert_bigru_crf_forward.3} parent=23 // pred_region
        %p547 = scmp.lt.s32.totalorder %s30, 1
        %s548 = scalar_select %p547, %s30, 1
        %s549 = smul.addr %s548, 4
        %s550 = smul.addr %s549, 8
        %s551 = scalar_lea.vmem %s10, %s550
      $region60: #{kobert_bigru_crf_forward.3} parent=23 // pred_fallthru
        _
      // Predicated region
      $region61: #{kobert_bigru_crf_forward.3} parent=23 // pred_check
        %p552 = pneg %p330
      $region62: #{kobert_bigru_crf_forward.3} parent=23 // pred_check_branch
        %554 = sbr.rel (%p552) target = $region64
      $region63: #{kobert_bigru_crf_forward.3} parent=23 // pred_region
        %p555 = scmp.lt.s32.totalorder %s30, 1
        %s556 = scalar_select %p555, %s30, 1
        %s557 = scalar_lea.vmem %s11, %s556
      $region64: #{kobert_bigru_crf_forward.3} parent=23 // pred_fallthru
        _
      // Predicated region
      $region65: #{kobert_bigru_crf_forward.3} parent=23 // pred_check
        %p558 = pneg %p356
      $region66: #{kobert_bigru_crf_forward.3} parent=23 // pred_check_branch
        %560 = sbr.rel (%p558) target = $region68
      $region67: #{kobert_bigru_crf_forward.3} parent=23 // pred_region
        %p561 = scmp.lt.s32.totalorder %s30, 1
        %s562 = scalar_select %p561, %s30, 1
        %s563 = smul.addr %s562, 8
        %s564 = smul.addr %s563, 8
        %s565 = scalar_lea.vmem %s12, %s564
      $region68: #{kobert_bigru_crf_forward.3} parent=23 // pred_fallthru
        _
      // Predicated region
      $region69: #{kobert_bigru_crf_forward.3} parent=23 // pred_check
        %p566 = pneg %p382
      $region70: #{kobert_bigru_crf_forward.3} parent=23 // pred_check_branch
        %568 = sbr.rel (%p566) target = $region72
      $region71: #{kobert_bigru_crf_forward.3} parent=23 // pred_region
        %p569 = scmp.lt.s32.totalorder %s30, 1
        %s570 = scalar_select %p569, %s30, 1
        %s571 = scalar_lea.vmem %s13, %s570
      $region72: #{kobert_bigru_crf_forward.3} parent=23 // pred_fallthru
        _
      // Predicated region
      $region73: #{kobert_bigru_crf_forward.3} parent=23 // pred_check
        %p572 = pneg %p408
      $region74: #{kobert_bigru_crf_forward.3} parent=23 // pred_check_branch
        %574 = sbr.rel (%p572) target = $region76
      $region75: #{kobert_bigru_crf_forward.3} parent=23 // pred_region
        %p575 = scmp.lt.s32.totalorder %s30, 1
        %s576 = scalar_select %p575, %s30, 1
        %s577 = scalar_lea.vmem %s14, %s576
      $region76: #{kobert_bigru_crf_forward.3} parent=23 // pred_fallthru
        _
      // Predicated region
      $region77: #{kobert_bigru_crf_forward.3} parent=23 // pred_check
        %p578 = pneg %p434
      $region78: #{kobert_bigru_crf_forward.3} parent=23 // pred_check_branch
        %580 = sbr.rel (%p578) target = $region80
      $region79: #{kobert_bigru_crf_forward.3} parent=23 // pred_region
        %p581 = scmp.lt.s32.totalorder %s30, 1
        %s582 = scalar_select %p581, %s30, 1
        %s583 = scalar_lea.vmem %s15, %s582
      $region80: #{kobert_bigru_crf_forward.3} parent=23 // pred_fallthru
        _
    $region24: #{kobert_bigru_crf_forward.3} parent=5 // pred_fallthru
      _
    %p584 = scmp.le.s32.totalorder 1, %s22
    %p585 = scmp.lt.s32.totalorder %s22, 5
    %p586 = pnand %p584, %p585
    %p587 = pneg %p586
    // Predicated region
    $region81: #{kobert_bigru_crf_forward.3} parent=5 // pred_check
      _
    $region82: #{kobert_bigru_crf_forward.3} parent=5 // pred_check_branch
      %589 = sbr.rel (%p586) target = $region84
    $region83: #{kobert_bigru_crf_forward.3} parent=5 // pred_region
      %s590 = ssub.s32 %s22, 1
      %p591 = scmp.lt.s32.totalorder %s31, 1
      %s592 = scalar_select %p591, %s31, 1
      %s593 = smul.addr %s592, 8
      %s594 = scalar_lea.vmem %s0, %s593
      %p595 = pneg %p60
      %p596 = pneg %p57
      %p597 = pneg %p81
      %p598 = pneg %p78
      %p599 = pneg %p102
      %p600 = pneg %p99
      %p601 = scmp.lt.s32.totalorder %s31, 1
      %s602 = scalar_select %p601, %s31, 1
      %s603 = scalar_lea.vmem %s3, %s602
      %p604 = pneg %p128
      %p605 = pneg %p125
      %p606 = scmp.lt.s32.totalorder %s32, 1
      %s607 = scalar_select %p606, %s32, 1
      %s608 = smul.addr %s607, 4
      %s609 = smul.addr %s608, 8
      %s610 = scalar_lea.vmem %s4, %s609
      %p611 = pneg %p154
      %p612 = pneg %p151
      %p613 = scmp.lt.s32.totalorder %s32, 1
      %s614 = scalar_select %p613, %s32, 1
      %s615 = scalar_lea.vmem %s5, %s614
      %p616 = pneg %p180
      %p617 = pneg %p177
      %p618 = scmp.lt.s32.totalorder %s32, 1
      %s619 = scalar_select %p618, %s32, 1
      %s620 = smul.addr %s619, 4
      %s621 = smul.addr %s620, 8
      %s622 = scalar_lea.vmem %s6, %s621
      %p623 = pneg %p206
      %p624 = pneg %p203
      %p625 = scmp.lt.s32.totalorder %s32, 1
      %s626 = scalar_select %p625, %s32, 1
      %s627 = scalar_lea.vmem %s7, %s626
      %p628 = pneg %p232
      %p629 = pneg %p229
      %p630 = scmp.lt.s32.totalorder %s32, 1
      %s631 = scalar_select %p630, %s32, 1
      %s632 = scalar_lea.vmem %s8, %s631
      %p633 = pneg %p258
      %p634 = pneg %p255
      %p635 = scmp.lt.s32.totalorder %s32, 1
      %s636 = scalar_select %p635, %s32, 1
      %s637 = scalar_lea.vmem %s9, %s636
      %p638 = pneg %p284
      %p639 = pneg %p281
      %p640 = scmp.lt.s32.totalorder %s32, 1
      %s641 = scalar_select %p640, %s32, 1
      %s642 = smul.addr %s641, 4
      %s643 = smul.addr %s642, 8
      %s644 = scalar_lea.vmem %s10, %s643
      %p645 = pneg %p310
      %p646 = pneg %p307
      %p647 = scmp.lt.s32.totalorder %s32, 1
      %s648 = scalar_select %p647, %s32, 1
      %s649 = scalar_lea.vmem %s11, %s648
      %p650 = pneg %p336
      %p651 = pneg %p333
      %p652 = scmp.lt.s32.totalorder %s32, 1
      %s653 = scalar_select %p652, %s32, 1
      %s654 = smul.addr %s653, 8
      %s655 = smul.addr %s654, 8
      %s656 = scalar_lea.vmem %s12, %s655
      %p657 = pneg %p362
      %p658 = pneg %p359
      %p659 = scmp.lt.s32.totalorder %s32, 1
      %s660 = scalar_select %p659, %s32, 1
      %s661 = scalar_lea.vmem %s13, %s660
      %p662 = pneg %p388
      %p663 = pneg %p385
      %p664 = scmp.lt.s32.totalorder %s32, 1
      %s665 = scalar_select %p664, %s32, 1
      %s666 = scalar_lea.vmem %s14, %s665
      %p667 = pneg %p414
      %p668 = pneg %p411
      %p669 = scmp.lt.s32.totalorder %s32, 1
      %s670 = scalar_select %p669, %s32, 1
      %s671 = scalar_lea.vmem %s15, %s670
      %p672 = pneg %p440
      %p673 = pneg %p437
      %p674 = pneg %p466
      %p675 = pneg %p463
      %p676 = scmp.lt.s32.totalorder %s31, 1
      %s677 = scalar_select %p676, %s31, 1
      %s678 = smul.addr %s677, 8
      %s679 = scalar_lea.vmem %s16, %s678
      %p680 = scmp.lt.s32.totalorder %s31, 1
      %s681 = scalar_select %p680, %s31, 1
      %s682 = smul.addr %s681, 8
      %s683 = scalar_lea.vmem %s0, %s682
      %p684 = scmp.lt.s32.totalorder %s31, 1
      %s685 = scalar_select %p684, %s31, 1
      %s686 = scalar_lea.vmem %s3, %s685
      %p687 = scmp.lt.s32.totalorder %s32, 1
      %s688 = scalar_select %p687, %s32, 1
      %s689 = smul.addr %s688, 4
      %s690 = smul.addr %s689, 8
      %s691 = scalar_lea.vmem %s4, %s690
      %p692 = scmp.lt.s32.totalorder %s32, 1
      %s693 = scalar_select %p692, %s32, 1
      %s694 = scalar_lea.vmem %s5, %s693
      %p695 = scmp.lt.s32.totalorder %s32, 1
      %s696 = scalar_select %p695, %s32, 1
      %s697 = smul.addr %s696, 4
      %s698 = smul.addr %s697, 8
      %s699 = scalar_lea.vmem %s6, %s698
      %p700 = scmp.lt.s32.totalorder %s32, 1
      %s701 = scalar_select %p700, %s32, 1
      %s702 = scalar_lea.vmem %s7, %s701
      %p703 = scmp.lt.s32.totalorder %s32, 1
      %s704 = scalar_select %p703, %s32, 1
      %s705 = scalar_lea.vmem %s8, %s704
      %p706 = scmp.lt.s32.totalorder %s32, 1
      %s707 = scalar_select %p706, %s32, 1
      %s708 = scalar_lea.vmem %s9, %s707
      %p709 = scmp.lt.s32.totalorder %s32, 1
      %s710 = scalar_select %p709, %s32, 1
      %s711 = smul.addr %s710, 4
      %s712 = smul.addr %s711, 8
      %s713 = scalar_lea.vmem %s10, %s712
      %p714 = scmp.lt.s32.totalorder %s32, 1
      %s715 = scalar_select %p714, %s32, 1
      %s716 = scalar_lea.vmem %s11, %s715
      %p717 = scmp.lt.s32.totalorder %s32, 1
      %s718 = scalar_select %p717, %s32, 1
      %s719 = smul.addr %s718, 8
      %s720 = smul.addr %s719, 8
      %s721 = scalar_lea.vmem %s12, %s720
      %p722 = scmp.lt.s32.totalorder %s32, 1
      %s723 = scalar_select %p722, %s32, 1
      %s724 = scalar_lea.vmem %s13, %s723
      %p725 = scmp.lt.s32.totalorder %s32, 1
      %s726 = scalar_select %p725, %s32, 1
      %s727 = scalar_lea.vmem %s14, %s726
      %p728 = scmp.lt.s32.totalorder %s32, 1
      %s729 = scalar_select %p728, %s32, 1
      %s730 = scalar_lea.vmem %s15, %s729
      %p731 = scmp.lt.s32.totalorder %s31, 1
      %s732 = scalar_select %p731, %s31, 1
      %s733 = smul.addr %s732, 8
      %s734 = scalar_lea.vmem %s16, %s733
      %p735 = scmp.eq.s32.totalorder %s32, 0
      // Predicated region
      $region85: #{kobert_bigru_crf_forward.3} parent=83 // pred_check
        %p736 = pneg %p735
      $region86: #{kobert_bigru_crf_forward.3} parent=83 // pred_check_branch
        %738 = sbr.rel (%p736) target = $region88
      $region87: #{kobert_bigru_crf_forward.3} parent=83 // pred_region
        %v739 = vld [vmem:[%s683] sm:$0xff]
        %v740 = vld [vmem:[%s1] sm:$0x1]
        %v741 = vld [vmem:[%s2] sm:$0x1]
        %vm742 = vcmask 261120
        %v743 = vsel %vm742, %v739, 0.0
        %744 = vadd.xlane.f32.xlu0 %v743
        %v745 = vpop.xlane.xlu0 %744
        %v746 = vrcp.pop 32.0
        %v747 = vmul.f32 %v745, %v746
        %v748 = vsub.f32 %v739, %v747
        %v749 = vmul.f32 %v748, %v748
        %v750 = vsel %vm742, %v749, 0.0
        %751 = vadd.xlane.f32.xlu0 %v750
        %v752 = vpop.xlane.xlu0 %751
        %v753 = vmul.f32 %v752, %v746
        %v754 = vadd.f32 %v753, 1e-12
        %v755 = vrsqrt.pop %v754
        %v756 = vmul.f32 %v748, %v755
        %v758 = vlaneseq
        %v759 = vshrl.u32 %v758, 7
        %v760 = vsub.s32 0, %v759
        %v761 = vrot.slane %v740, %v760
        %v763 = vmul.f32 %v756, %v761
        %v765 = vlaneseq
        %v766 = vshrl.u32 %v765, 7
        %v767 = vsub.s32 0, %v766
        %v768 = vrot.slane %v741, %v767
        %v770 = vadd.f32 %v763, %v768
        %771 = vst.msk [vmem:[%s734] sm:$0xff] %vm742, %v770
      $region88: #{kobert_bigru_crf_forward.3} parent=83 // pred_fallthru
        _
      %v772 = vld [vmem:[%s734] sm:$0xff]
      %v773 = vld [vmem:[%s691] sm:$0xff]
      %v774 = vld [vmem:[%s691 + $0x8] sm:$0xff]
      %v775 = vld [vmem:[%s691 + $0x10] sm:$0xff]
      %v776 = vld [vmem:[%s691 + $0x18] sm:$0xff]
      %v777 = vld [vmem:[%s694] sm:$0x1]
      %v779 = vlaneseq
      %v780 = vshrl.u32 %v779, 7
      %v781 = vsub.s32 0, %v780
      %v782 = vrot.slane %v777, %v781
      %vm784 = vcmask 261120
      %v786 = vsel %vm784, %v772, 0
      %788 = vmatprep.subr.mxu0 0.0
      %789 = vmatpush1.msra.mxu0 %v773
      %790 = vmatprep.subr.mxu0 0.0
      %791 = vmatpush1.msra.mxu0 %v774
      %792 = vmatprep.subr.mxu0 0.0
      %793 = vmatpush1.msra.mxu0 %v775
      %794 = vmatprep.subr.mxu0 0.0
      %795 = vmatpush1.msra.mxu0 %v776
      %796 = vmatprep.subr.mxu0 0.0
      %797 = vmatpush1.msra.mxu0 0.0
      %798 = vmatprep.subr.mxu0 0.0
      %799 = vmatpush1.msra.mxu0 0.0
      %800 = vmatprep.subr.mxu0 0.0
      %801 = vmatpush1.msra.mxu0 0.0
      %802 = vmatprep.subr.mxu0 0.0
      %803 = vmatpush1.msra.mxu0 0.0
      %804 = vmatprep.subr.mxu0 0.0
      %805 = vmatpush1.msra.mxu0 0.0
      %806 = vmatprep.subr.mxu0 0.0
      %807 = vmatpush1.msra.mxu0 0.0
      %808 = vmatprep.subr.mxu0 0.0
      %809 = vmatpush1.msra.mxu0 0.0
      %810 = vmatprep.subr.mxu0 0.0
      %811 = vmatpush1.msra.mxu0 0.0
      %812 = vmatprep.subr.mxu0 0.0
      %813 = vmatpush1.msra.mxu0 0.0
      %814 = vmatprep.subr.mxu0 0.0
      %815 = vmatpush1.msra.mxu0 0.0
      %816 = vmatprep.subr.mxu0 0.0
      %817 = vmatpush1.msra.mxu0 0.0
      %818 = vmatprep.subr.mxu0 0.0
      %819 = vmatpush1.msra.mxu0 0.0
      %820 = vmatprep.subr.mxu0 0.0
      %821 = vmatpush1.msra.mxu0 0.0
      %822 = vmatprep.subr.mxu0 0.0
      %823 = vmatpush1.msra.mxu0 0.0
      %824 = vmatprep.subr.mxu0 0.0
      %825 = vmatpush1.msra.mxu0 0.0
      %826 = vmatprep.subr.mxu0 0.0
      %827 = vmatpush1.msra.mxu0 0.0
      %828 = vmatprep.subr.mxu0 0.0
      %829 = vmatpush1.msra.mxu0 0.0
      %830 = vmatprep.subr.mxu0 0.0
      %831 = vmatpush1.msra.mxu0 0.0
      %832 = vmatprep.subr.mxu0 0.0
      %833 = vmatpush1.msra.mxu0 0.0
      %834 = vmatprep.subr.mxu0 0.0
      %835 = vmatpush1.msra.mxu0 0.0
      %836 = vmatprep.subr.mxu0 0.0
      %837 = vmatpush1.msra.mxu0 0.0
      %838 = vmatprep.subr.mxu0 0.0
      %839 = vmatpush1.msra.mxu0 0.0
      %840 = vmatprep.subr.mxu0 0.0
      %841 = vmatpush1.msra.mxu0 0.0
      %842 = vmatprep.subr.mxu0 0.0
      %843 = vmatpush1.msra.mxu0 0.0
      %844 = vmatprep.subr.mxu0 0.0
      %845 = vmatpush1.msra.mxu0 0.0
      %846 = vmatprep.subr.mxu0 0.0
      %847 = vmatpush1.msra.mxu0 0.0
      %848 = vmatprep.subr.mxu0 0.0
      %849 = vmatpush1.msra.mxu0 0.0
      %850 = vmatprep.subr.mxu0 0.0
      %851 = vmatpush1.msra.mxu0 0.0
      %852 = vmatprep.mubr.f32.mxu0 0.0
      %853 = vmatmul.mubr.f32.gmra.mrb[0].mxu0 %v786
      %v854 = vpop.f32.mrb[0].mxu0
      %v855 = vadd.f32 %v782, %v854
      %v856 = vpop.f32.mrb[0].mxu0
      %857 = vdwg.mxu0
      %v858 = vld [vmem:[%s686] sm:$0x1]
      %v859 = vld [vmem:[%s699] sm:$0xff]
      %v860 = vld [vmem:[%s699 + $0x8] sm:$0xff]
      %v861 = vld [vmem:[%s699 + $0x10] sm:$0xff]
      %v862 = vld [vmem:[%s699 + $0x18] sm:$0xff]
      %864 = vrot.lane.b32.xlu0 %v855, 96
      %v865 = vpop.permute.xlu0 %864
      %vm866 = vcmask 130048
      %v867 = vsel %vm866, %v855, 0
      %v869 = vsel %vm866, %v865, 0
      %871 = vmatprep.subr.mxu0 0.0
      %872 = vmatpush1.xpose.msra.mxu0 %v869
      %873 = vmatprep.subr.mxu0 0.0
      %874 = vmatpush1.xpose.msra.mxu0 0.0
      %875 = vmatprep.subr.mxu0 0.0
      %876 = vmatpush1.xpose.msra.mxu0 0.0
      %877 = vmatprep.subr.mxu0 0.0
      %878 = vmatpush1.xpose.msra.mxu0 0.0
      %879 = vmatprep.subr.mxu0 0.0
      %880 = vmatpush1.xpose.msra.mxu0 0.0
      %881 = vmatprep.subr.mxu0 0.0
      %882 = vmatpush1.xpose.msra.mxu0 0.0
      %883 = vmatprep.subr.mxu0 0.0
      %884 = vmatpush1.xpose.msra.mxu0 0.0
      %885 = vmatprep.subr.mxu0 0.0
      %886 = vmatpush1.xpose.msra.mxu0 0.0
      %887 = vmatprep.subr.mxu0 0.0
      %888 = vmatpush1.xpose.msra.mxu0 0.0
      %889 = vmatprep.subr.mxu0 0.0
      %890 = vmatpush1.xpose.msra.mxu0 0.0
      %891 = vmatprep.subr.mxu0 0.0
      %892 = vmatpush1.xpose.msra.mxu0 0.0
      %893 = vmatprep.subr.mxu0 0.0
      %894 = vmatpush1.xpose.msra.mxu0 0.0
      %895 = vmatprep.subr.mxu0 0.0
      %896 = vmatpush1.xpose.msra.mxu0 0.0
      %897 = vmatprep.subr.mxu0 0.0
      %898 = vmatpush1.xpose.msra.mxu0 0.0
      %899 = vmatprep.subr.mxu0 0.0
      %900 = vmatpush1.xpose.msra.mxu0 0.0
      %901 = vmatprep.subr.mxu0 0.0
      %902 = vmatpush1.xpose.msra.mxu0 0.0
      %903 = vmatprep.subr.mxu0 0.0
      %904 = vmatpush1.xpose.msra.mxu0 0.0
      %905 = vmatprep.subr.mxu0 0.0
      %906 = vmatpush1.xpose.msra.mxu0 0.0
      %907 = vmatprep.subr.mxu0 0.0
      %908 = vmatpush1.xpose.msra.mxu0 0.0
      %909 = vmatprep.subr.mxu0 0.0
      %910 = vmatpush1.xpose.msra.mxu0 0.0
      %911 = vmatprep.subr.mxu0 0.0
      %912 = vmatpush1.xpose.msra.mxu0 0.0
      %913 = vmatprep.subr.mxu0 0.0
      %914 = vmatpush1.xpose.msra.mxu0 0.0
      %915 = vmatprep.subr.mxu0 0.0
      %916 = vmatpush1.xpose.msra.mxu0 0.0
      %917 = vmatprep.subr.mxu0 0.0
      %918 = vmatpush1.xpose.msra.mxu0 0.0
      %919 = vmatprep.subr.mxu0 0.0
      %920 = vmatpush1.xpose.msra.mxu0 0.0
      %921 = vmatprep.subr.mxu0 0.0
      %922 = vmatpush1.xpose.msra.mxu0 0.0
      %923 = vmatprep.subr.mxu0 0.0
      %924 = vmatpush1.xpose.msra.mxu0 0.0
      %925 = vmatprep.subr.mxu0 0.0
      %926 = vmatpush1.xpose.msra.mxu0 0.0
      %927 = vmatprep.subr.mxu0 0.0
      %928 = vmatpush1.xpose.msra.mxu0 0.0
      %929 = vmatprep.subr.mxu0 0.0
      %930 = vmatpush1.xpose.msra.mxu0 0.0
      %931 = vmatprep.subr.mxu0 0.0
      %932 = vmatpush1.xpose.msra.mxu0 0.0
      %933 = vmatprep.subr.mxu0 0.0
      %934 = vmatpush1.xpose.msra.mxu0 0.0
      %935 = vmatprep.mubr.f32.mxu0 0.0
      %936 = vmatmul.mubr.f32.gmra.mrb[0].mxu0 %v867
      %v937 = vpop.f32.mrb[0].mxu0
      %v938 = vadd.f32 0.0, %v937
      %v939 = vpop.f32.mrb[0].mxu0
      %940 = vdwg.mxu0
      %v941 = vmul.f32 %v938, 0.25
      %v943 = vlaneseq
      %v944 = vshrl.u32 %v943, 7
      %v945 = vsub.s32 0, %v944
      %v946 = vrot.slane %v858, %v945
      %v948 = vadd.f32 %v941, %v946
      %vm949 = vcmask 64512
      %v950 = vsel %vm949, %v948, -inf
      %951 = vmax.xlane.f32.xlu0 %v950
      %v952 = vpop.xlane.xlu0 %951
      %v953 = vsub.f32 %v948, %v952
      %v954 = vmul.f32 %v953, 1.442695
      %v955 = vpow.pop %v954
      %v956 = vsel %vm949, %v955, 0.0
      %957 = vadd.xlane.f32.xlu0 %v956
      %v958 = vpop.xlane.xlu0 %957
      %v959 = vrcp.pop %v958
      %v960 = vmul.f32 %v955, %v959
      %961 = vrot.lane.b32.xlu0 %v855, 64
      %v962 = vpop.permute.xlu0 %961
      %v965 = vsel %vm949, %v960, 0
      %967 = vmatprep.subr.mxu0 0.0
      %968 = vmatpush1.msra.mxu0 %v962
      %969 = vmatprep.subr.mxu0 0.0
      %970 = vmatpush1.msra.mxu0 0.0
      %971 = vmatprep.subr.mxu0 0.0
      %972 = vmatpush1.msra.mxu0 0.0
      %973 = vmatprep.subr.mxu0 0.0
      %974 = vmatpush1.msra.mxu0 0.0
      %975 = vmatprep.subr.mxu0 0.0
      %976 = vmatpush1.msra.mxu0 0.0
      %977 = vmatprep.subr.mxu0 0.0
      %978 = vmatpush1.msra.mxu0 0.0
      %979 = vmatprep.subr.mxu0 0.0
      %980 = vmatpush1.msra.mxu0 0.0
      %981 = vmatprep.subr.mxu0 0.0
      %982 = vmatpush1.msra.mxu0 0.0
      %983 = vmatprep.subr.mxu0 0.0
      %984 = vmatpush1.msra.mxu0 0.0
      %985 = vmatprep.subr.mxu0 0.0
      %986 = vmatpush1.msra.mxu0 0.0
      %987 = vmatprep.subr.mxu0 0.0
      %988 = vmatpush1.msra.mxu0 0.0
      %989 = vmatprep.subr.mxu0 0.0
      %990 = vmatpush1.msra.mxu0 0.0
      %991 = vmatprep.subr.mxu0 0.0
      %992 = vmatpush1.msra.mxu0 0.0
      %993 = vmatprep.subr.mxu0 0.0
      %994 = vmatpush1.msra.mxu0 0.0
      %995 = vmatprep.subr.mxu0 0.0
      %996 = vmatpush1.msra.mxu0 0.0
      %997 = vmatprep.subr.mxu0 0.0
      %998 = vmatpush1.msra.mxu0 0.0
      %999 = vmatprep.subr.mxu0 0.0
      %1000 = vmatpush1.msra.mxu0 0.0
      %1001 = vmatprep.subr.mxu0 0.0
      %1002 = vmatpush1.msra.mxu0 0.0
      %1003 = vmatprep.subr.mxu0 0.0
      %1004 = vmatpush1.msra.mxu0 0.0
      %1005 = vmatprep.subr.mxu0 0.0
      %1006 = vmatpush1.msra.mxu0 0.0
      %1007 = vmatprep.subr.mxu0 0.0
      %1008 = vmatpush1.msra.mxu0 0.0
      %1009 = vmatprep.subr.mxu0 0.0
      %1010 = vmatpush1.msra.mxu0 0.0
      %1011 = vmatprep.subr.mxu0 0.0
      %1012 = vmatpush1.msra.mxu0 0.0
      %1013 = vmatprep.subr.mxu0 0.0
      %1014 = vmatpush1.msra.mxu0 0.0
      %1015 = vmatprep.subr.mxu0 0.0
      %1016 = vmatpush1.msra.mxu0 0.0
      %1017 = vmatprep.subr.mxu0 0.0
      %1018 = vmatpush1.msra.mxu0 0.0
      %1019 = vmatprep.subr.mxu0 0.0
      %1020 = vmatpush1.msra.mxu0 0.0
      %1021 = vmatprep.subr.mxu0 0.0
      %1022 = vmatpush1.msra.mxu0 0.0
      %1023 = vmatprep.subr.mxu0 0.0
      %1024 = vmatpush1.msra.mxu0 0.0
      %1025 = vmatprep.subr.mxu0 0.0
      %1026 = vmatpush1.msra.mxu0 0.0
      %1027 = vmatprep.subr.mxu0 0.0
      %1028 = vmatpush1.msra.mxu0 0.0
      %1029 = vmatprep.subr.mxu0 0.0
      %1030 = vmatpush1.msra.mxu0 0.0
      %1031 = vmatprep.mubr.f32.mxu0 0.0
      %1032 = vmatmul.mubr.f32.gmra.mrb[0].mxu0 %v965
      %v1033 = vpop.f32.mrb[0].mxu0
      %v1034 = vadd.f32 0.0, %v1033
      %v1035 = vpop.f32.mrb[0].mxu0
      %1036 = vdwg.mxu0
      %1037 = vrot.lane.b32.xlu0 %v855, 112
      %v1038 = vpop.permute.xlu0 %1037
      %1039 = vrot.lane.b32.xlu0 %v855, 80
      %v1040 = vpop.permute.xlu0 %1039
      %v1041 = vsel %vm866, %v1038, 0
      %v1043 = vsel %vm866, %v1040, 0
      %1045 = vmatprep.subr.mxu0 0.0
      %1046 = vmatpush1.xpose.msra.mxu0 %v1043
      %1047 = vmatprep.subr.mxu0 0.0
      %1048 = vmatpush1.xpose.msra.mxu0 0.0
      %1049 = vmatprep.subr.mxu0 0.0
      %1050 = vmatpush1.xpose.msra.mxu0 0.0
      %1051 = vmatprep.subr.mxu0 0.0
      %1052 = vmatpush1.xpose.msra.mxu0 0.0
      %1053 = vmatprep.subr.mxu0 0.0
      %1054 = vmatpush1.xpose.msra.mxu0 0.0
      %1055 = vmatprep.subr.mxu0 0.0
      %1056 = vmatpush1.xpose.msra.mxu0 0.0
      %1057 = vmatprep.subr.mxu0 0.0
      %1058 = vmatpush1.xpose.msra.mxu0 0.0
      %1059 = vmatprep.subr.mxu0 0.0
      %1060 = vmatpush1.xpose.msra.mxu0 0.0
      %1061 = vmatprep.subr.mxu0 0.0
      %1062 = vmatpush1.xpose.msra.mxu0 0.0
      %1063 = vmatprep.subr.mxu0 0.0
      %1064 = vmatpush1.xpose.msra.mxu0 0.0
      %1065 = vmatprep.subr.mxu0 0.0
      %1066 = vmatpush1.xpose.msra.mxu0 0.0
      %1067 = vmatprep.subr.mxu0 0.0
      %1068 = vmatpush1.xpose.msra.mxu0 0.0
      %1069 = vmatprep.subr.mxu0 0.0
      %1070 = vmatpush1.xpose.msra.mxu0 0.0
      %1071 = vmatprep.subr.mxu0 0.0
      %1072 = vmatpush1.xpose.msra.mxu0 0.0
      %1073 = vmatprep.subr.mxu0 0.0
      %1074 = vmatpush1.xpose.msra.mxu0 0.0
      %1075 = vmatprep.subr.mxu0 0.0
      %1076 = vmatpush1.xpose.msra.mxu0 0.0
      %1077 = vmatprep.subr.mxu0 0.0
      %1078 = vmatpush1.xpose.msra.mxu0 0.0
      %1079 = vmatprep.subr.mxu0 0.0
      %1080 = vmatpush1.xpose.msra.mxu0 0.0
      %1081 = vmatprep.subr.mxu0 0.0
      %1082 = vmatpush1.xpose.msra.mxu0 0.0
      %1083 = vmatprep.subr.mxu0 0.0
      %1084 = vmatpush1.xpose.msra.mxu0 0.0
      %1085 = vmatprep.subr.mxu0 0.0
      %1086 = vmatpush1.xpose.msra.mxu0 0.0
      %1087 = vmatprep.subr.mxu0 0.0
      %1088 = vmatpush1.xpose.msra.mxu0 0.0
      %1089 = vmatprep.subr.mxu0 0.0
      %1090 = vmatpush1.xpose.msra.mxu0 0.0
      %1091 = vmatprep.subr.mxu0 0.0
      %1092 = vmatpush1.xpose.msra.mxu0 0.0
      %1093 = vmatprep.subr.mxu0 0.0
      %1094 = vmatpush1.xpose.msra.mxu0 0.0
      %1095 = vmatprep.subr.mxu0 0.0
      %1096 = vmatpush1.xpose.msra.mxu0 0.0
      %1097 = vmatprep.subr.mxu0 0.0
      %1098 = vmatpush1.xpose.msra.mxu0 0.0
      %1099 = vmatprep.subr.mxu0 0.0
      %1100 = vmatpush1.xpose.msra.mxu0 0.0
      %1101 = vmatprep.subr.mxu0 0.0
      %1102 = vmatpush1.xpose.msra.mxu0 0.0
      %1103 = vmatprep.subr.mxu0 0.0
      %1104 = vmatpush1.xpose.msra.mxu0 0.0
      %1105 = vmatprep.subr.mxu0 0.0
      %1106 = vmatpush1.xpose.msra.mxu0 0.0
      %1107 = vmatprep.subr.mxu0 0.0
      %1108 = vmatpush1.xpose.msra.mxu0 0.0
      %1109 = vmatprep.mubr.f32.mxu0 0.0
      %1110 = vmatmul.mubr.f32.gmra.mrb[0].mxu0 %v1041
      %v1111 = vpop.f32.mrb[0].mxu0
      %v1112 = vadd.f32 0.0, %v1111
      %v1113 = vpop.f32.mrb[0].mxu0
      %1114 = vdwg.mxu0
      %v1115 = vmul.f32 %v1112, 0.25
      %v1116 = vadd.f32 %v1115, %v946
      %v1117 = vsel %vm949, %v1116, -inf
      %1118 = vmax.xlane.f32.xlu0 %v1117
      %v1119 = vpop.xlane.xlu0 %1118
      %v1120 = vsub.f32 %v1116, %v1119
      %v1121 = vmul.f32 %v1120, 1.442695
      %v1122 = vpow.pop %v1121
      %v1123 = vsel %vm949, %v1122, 0.0
      %1124 = vadd.xlane.f32.xlu0 %v1123
      %v1125 = vpop.xlane.xlu0 %1124
      %v1126 = vrcp.pop %v1125
      %v1127 = vmul.f32 %v1122, %v1126
      %1128 = vrot.lane.b32.xlu0 %v855, 48
      %v1129 = vpop.permute.xlu0 %1128
      %v1132 = vsel %vm949, %v1127, 0
      %1134 = vmatprep.subr.mxu0 0.0
      %1135 = vmatpush1.msra.mxu0 %v1129
      %1136 = vmatprep.subr.mxu0 0.0
      %1137 = vmatpush1.msra.mxu0 0.0
      %1138 = vmatprep.subr.mxu0 0.0
      %1139 = vmatpush1.msra.mxu0 0.0
      %1140 = vmatprep.subr.mxu0 0.0
      %1141 = vmatpush1.msra.mxu0 0.0
      %1142 = vmatprep.subr.mxu0 0.0
      %1143 = vmatpush1.msra.mxu0 0.0
      %1144 = vmatprep.subr.mxu0 0.0
      %1145 = vmatpush1.msra.mxu0 0.0
      %1146 = vmatprep.subr.mxu0 0.0
      %1147 = vmatpush1.msra.mxu0 0.0
      %1148 = vmatprep.subr.mxu0 0.0
      %1149 = vmatpush1.msra.mxu0 0.0
      %1150 = vmatprep.subr.mxu0 0.0
      %1151 = vmatpush1.msra.mxu0 0.0
      %1152 = vmatprep.subr.mxu0 0.0
      %1153 = vmatpush1.msra.mxu0 0.0
      %1154 = vmatprep.subr.mxu0 0.0
      %1155 = vmatpush1.msra.mxu0 0.0
      %1156 = vmatprep.subr.mxu0 0.0
      %1157 = vmatpush1.msra.mxu0 0.0
      %1158 = vmatprep.subr.mxu0 0.0
      %1159 = vmatpush1.msra.mxu0 0.0
      %1160 = vmatprep.subr.mxu0 0.0
      %1161 = vmatpush1.msra.mxu0 0.0
      %1162 = vmatprep.subr.mxu0 0.0
      %1163 = vmatpush1.msra.mxu0 0.0
      %1164 = vmatprep.subr.mxu0 0.0
      %1165 = vmatpush1.msra.mxu0 0.0
      %1166 = vmatprep.subr.mxu0 0.0
      %1167 = vmatpush1.msra.mxu0 0.0
      %1168 = vmatprep.subr.mxu0 0.0
      %1169 = vmatpush1.msra.mxu0 0.0
      %1170 = vmatprep.subr.mxu0 0.0
      %1171 = vmatpush1.msra.mxu0 0.0
      %1172 = vmatprep.subr.mxu0 0.0
      %1173 = vmatpush1.msra.mxu0 0.0
      %1174 = vmatprep.subr.mxu0 0.0
      %1175 = vmatpush1.msra.mxu0 0.0
      %1176 = vmatprep.subr.mxu0 0.0
      %1177 = vmatpush1.msra.mxu0 0.0
      %1178 = vmatprep.subr.mxu0 0.0
      %1179 = vmatpush1.msra.mxu0 0.0
      %1180 = vmatprep.subr.mxu0 0.0
      %1181 = vmatpush1.msra.mxu0 0.0
      %1182 = vmatprep.subr.mxu0 0.0
      %1183 = vmatpush1.msra.mxu0 0.0
      %1184 = vmatprep.subr.mxu0 0.0
      %1185 = vmatpush1.msra.mxu0 0.0
      %1186 = vmatprep.subr.mxu0 0.0
      %1187 = vmatpush1.msra.mxu0 0.0
      %1188 = vmatprep.subr.mxu0 0.0
      %1189 = vmatpush1.msra.mxu0 0.0
      %1190 = vmatprep.subr.mxu0 0.0
      %1191 = vmatpush1.msra.mxu0 0.0
      %1192 = vmatprep.subr.mxu0 0.0
      %1193 = vmatpush1.msra.mxu0 0.0
      %1194 = vmatprep.subr.mxu0 0.0
      %1195 = vmatpush1.msra.mxu0 0.0
      %1196 = vmatprep.subr.mxu0 0.0
      %1197 = vmatpush1.msra.mxu0 0.0
      %1198 = vmatprep.mubr.f32.mxu0 0.0
      %1199 = vmatmul.mubr.f32.gmra.mrb[0].mxu0 %v1132
      %v1200 = vpop.f32.mrb[0].mxu0
      %v1201 = vadd.f32 0.0, %v1200
      %v1202 = vpop.f32.mrb[0].mxu0
      %1203 = vdwg.mxu0
      %v1205 = vsel %vm866, %v1201, 0
      %1207 = vmatprep.subr.mxu0 0.0
      %1208 = vmatpush1.msra.mxu0 %v861
      %1209 = vmatprep.subr.mxu0 0.0
      %1210 = vmatpush1.msra.mxu0 %v862
      %1211 = vmatprep.subr.mxu0 0.0
      %1212 = vmatpush1.msra.mxu0 0.0
      %1213 = vmatprep.subr.mxu0 0.0
      %1214 = vmatpush1.msra.mxu0 0.0
      %1215 = vmatprep.subr.mxu0 0.0
      %1216 = vmatpush1.msra.mxu0 0.0
      %1217 = vmatprep.subr.mxu0 0.0
      %1218 = vmatpush1.msra.mxu0 0.0
      %1219 = vmatprep.subr.mxu0 0.0
      %1220 = vmatpush1.msra.mxu0 0.0
      %1221 = vmatprep.subr.mxu0 0.0
      %1222 = vmatpush1.msra.mxu0 0.0
      %1223 = vmatprep.subr.mxu0 0.0
      %1224 = vmatpush1.msra.mxu0 0.0
      %1225 = vmatprep.subr.mxu0 0.0
      %1226 = vmatpush1.msra.mxu0 0.0
      %1227 = vmatprep.subr.mxu0 0.0
      %1228 = vmatpush1.msra.mxu0 0.0
      %1229 = vmatprep.subr.mxu0 0.0
      %1230 = vmatpush1.msra.mxu0 0.0
      %1231 = vmatprep.subr.mxu0 0.0
      %1232 = vmatpush1.msra.mxu0 0.0
      %1233 = vmatprep.subr.mxu0 0.0
      %1234 = vmatpush1.msra.mxu0 0.0
      %1235 = vmatprep.subr.mxu0 0.0
      %1236 = vmatpush1.msra.mxu0 0.0
      %1237 = vmatprep.subr.mxu0 0.0
      %1238 = vmatpush1.msra.mxu0 0.0
      %1239 = vmatprep.subr.mxu0 0.0
      %1240 = vmatpush1.msra.mxu0 0.0
      %1241 = vmatprep.subr.mxu0 0.0
      %1242 = vmatpush1.msra.mxu0 0.0
      %1243 = vmatprep.subr.mxu0 0.0
      %1244 = vmatpush1.msra.mxu0 0.0
      %1245 = vmatprep.subr.mxu0 0.0
      %1246 = vmatpush1.msra.mxu0 0.0
      %1247 = vmatprep.subr.mxu0 0.0
      %1248 = vmatpush1.msra.mxu0 0.0
      %1249 = vmatprep.subr.mxu0 0.0
      %1250 = vmatpush1.msra.mxu0 0.0
      %1251 = vmatprep.subr.mxu0 0.0
      %1252 = vmatpush1.msra.mxu0 0.0
      %1253 = vmatprep.subr.mxu0 0.0
      %1254 = vmatpush1.msra.mxu0 0.0
      %1255 = vmatprep.subr.mxu0 0.0
      %1256 = vmatpush1.msra.mxu0 0.0
      %1257 = vmatprep.subr.mxu0 0.0
      %1258 = vmatpush1.msra.mxu0 0.0
      %1259 = vmatprep.subr.mxu0 0.0
      %1260 = vmatpush1.msra.mxu0 0.0
      %1261 = vmatprep.subr.mxu0 0.0
      %1262 = vmatpush1.msra.mxu0 0.0
      %1263 = vmatprep.subr.mxu0 0.0
      %1264 = vmatpush1.msra.mxu0 0.0
      %1265 = vmatprep.subr.mxu0 0.0
      %1266 = vmatpush1.msra.mxu0 0.0
      %1267 = vmatprep.subr.mxu0 0.0
      %1268 = vmatpush1.msra.mxu0 0.0
      %1269 = vmatprep.subr.mxu0 0.0
      %1270 = vmatpush1.msra.mxu0 0.0
      %1271 = vmatprep.mubr.f32.mxu0 0.0
      %1272 = vmatmul.mubr.f32.gmra.mrb[0].mxu0 %v1205
      %v1273 = vpop.f32.mrb[0].mxu0
      %v1274 = vadd.f32 0.0, %v1273
      %v1275 = vpop.f32.mrb[0].mxu0
      %1276 = vdwg.mxu0
      %v1278 = vsel %vm866, %v1034, 0
      %1280 = vmatprep.subr.mxu0 0.0
      %1281 = vmatpush1.msra.mxu0 %v859
      %1282 = vmatprep.subr.mxu0 0.0
      %1283 = vmatpush1.msra.mxu0 %v860
      %1284 = vmatprep.subr.mxu0 0.0
      %1285 = vmatpush1.msra.mxu0 0.0
      %1286 = vmatprep.subr.mxu0 0.0
      %1287 = vmatpush1.msra.mxu0 0.0
      %1288 = vmatprep.subr.mxu0 0.0
      %1289 = vmatpush1.msra.mxu0 0.0
      %1290 = vmatprep.subr.mxu0 0.0
      %1291 = vmatpush1.msra.mxu0 0.0
      %1292 = vmatprep.subr.mxu0 0.0
      %1293 = vmatpush1.msra.mxu0 0.0
      %1294 = vmatprep.subr.mxu0 0.0
      %1295 = vmatpush1.msra.mxu0 0.0
      %1296 = vmatprep.subr.mxu0 0.0
      %1297 = vmatpush1.msra.mxu0 0.0
      %1298 = vmatprep.subr.mxu0 0.0
      %1299 = vmatpush1.msra.mxu0 0.0
      %1300 = vmatprep.subr.mxu0 0.0
      %1301 = vmatpush1.msra.mxu0 0.0
      %1302 = vmatprep.subr.mxu0 0.0
      %1303 = vmatpush1.msra.mxu0 0.0
      %1304 = vmatprep.subr.mxu0 0.0
      %1305 = vmatpush1.msra.mxu0 0.0
      %1306 = vmatprep.subr.mxu0 0.0
      %1307 = vmatpush1.msra.mxu0 0.0
      %1308 = vmatprep.subr.mxu0 0.0
      %1309 = vmatpush1.msra.mxu0 0.0
      %1310 = vmatprep.subr.mxu0 0.0
      %1311 = vmatpush1.msra.mxu0 0.0
      %1312 = vmatprep.subr.mxu0 0.0
      %1313 = vmatpush1.msra.mxu0 0.0
      %1314 = vmatprep.subr.mxu0 0.0
      %1315 = vmatpush1.msra.mxu0 0.0
      %1316 = vmatprep.subr.mxu0 0.0
      %1317 = vmatpush1.msra.mxu0 0.0
      %1318 = vmatprep.subr.mxu0 0.0
      %1319 = vmatpush1.msra.mxu0 0.0
      %1320 = vmatprep.subr.mxu0 0.0
      %1321 = vmatpush1.msra.mxu0 0.0
      %1322 = vmatprep.subr.mxu0 0.0
      %1323 = vmatpush1.msra.mxu0 0.0
      %1324 = vmatprep.subr.mxu0 0.0
      %1325 = vmatpush1.msra.mxu0 0.0
      %1326 = vmatprep.subr.mxu0 0.0
      %1327 = vmatpush1.msra.mxu0 0.0
      %1328 = vmatprep.subr.mxu0 0.0
      %1329 = vmatpush1.msra.mxu0 0.0
      %1330 = vmatprep.subr.mxu0 0.0
      %1331 = vmatpush1.msra.mxu0 0.0
      %1332 = vmatprep.subr.mxu0 0.0
      %1333 = vmatpush1.msra.mxu0 0.0
      %1334 = vmatprep.subr.mxu0 0.0
      %1335 = vmatpush1.msra.mxu0 0.0
      %1336 = vmatprep.subr.mxu0 0.0
      %1337 = vmatpush1.msra.mxu0 0.0
      %1338 = vmatprep.subr.mxu0 0.0
      %1339 = vmatpush1.msra.mxu0 0.0
      %1340 = vmatprep.subr.mxu0 0.0
      %1341 = vmatpush1.msra.mxu0 0.0
      %1342 = vmatprep.subr.mxu0 0.0
      %1343 = vmatpush1.msra.mxu0 0.0
      %1344 = vmatprep.mubr.f32.mxu0 0.0
      %1345 = vmatmul.mubr.f32.gmra.mrb[0].mxu0 %v1278
      %v1346 = vpop.f32.mrb[0].mxu0
      %v1347 = vadd.f32 %v1274, %v1346
      %v1348 = vpop.f32.mrb[0].mxu0
      %1349 = vdwg.mxu0
      %v1350 = vld [vmem:[%s702] sm:$0x1]
      %v1352 = vlaneseq
      %v1353 = vshrl.u32 %v1352, 7
      %v1354 = vsub.s32 0, %v1353
      %v1355 = vrot.slane %v1350, %v1354
      %v1357 = vadd.f32 %v1347, %v1355
      %v1358 = vadd.f32 %v1357, %v772
      %v1359 = vld [vmem:[%s705] sm:$0x1]
      %v1360 = vld [vmem:[%s708] sm:$0x1]
      %v1361 = vsel %vm784, %v1358, 0.0
      %1362 = vadd.xlane.f32.xlu0 %v1361
      %v1363 = vpop.xlane.xlu0 %1362
      %v1364 = vrcp.pop 32.0
      %v1365 = vmul.f32 %v1363, %v1364
      %v1366 = vsub.f32 %v1358, %v1365
      %v1367 = vmul.f32 %v1366, %v1366
      %v1368 = vsel %vm784, %v1367, 0.0
      %1369 = vadd.xlane.f32.xlu0 %v1368
      %v1370 = vpop.xlane.xlu0 %1369
      %v1371 = vmul.f32 %v1370, %v1364
      %v1372 = vadd.f32 %v1371, 1e-12
      %v1373 = vrsqrt.pop %v1372
      %v1374 = vmul.f32 %v1366, %v1373
      %v1376 = vlaneseq
      %v1377 = vshrl.u32 %v1376, 7
      %v1378 = vsub.s32 0, %v1377
      %v1379 = vrot.slane %v1359, %v1378
      %v1381 = vmul.f32 %v1374, %v1379
      %v1383 = vlaneseq
      %v1384 = vshrl.u32 %v1383, 7
      %v1385 = vsub.s32 0, %v1384
      %v1386 = vrot.slane %v1360, %v1385
      %v1388 = vadd.f32 %v1381, %v1386
      %v1389 = vld [vmem:[%s713] sm:$0xff]
      %v1390 = vld [vmem:[%s713 + $0x8] sm:$0xff]
      %v1391 = vld [vmem:[%s713 + $0x10] sm:$0xff]
      %v1392 = vld [vmem:[%s713 + $0x18] sm:$0xff]
      %v1393 = vld [vmem:[%s716] sm:$0x1]
      %v1395 = vlaneseq
      %v1396 = vshrl.u32 %v1395, 7
      %v1397 = vsub.s32 0, %v1396
      %v1398 = vrot.slane %v1393, %v1397
      %v1401 = vsel %vm784, %v1388, 0
      %1403 = vmatprep.subr.mxu0 0.0
      %1404 = vmatpush1.msra.mxu0 %v1389
      %1405 = vmatprep.subr.mxu0 0.0
      %1406 = vmatpush1.msra.mxu0 %v1390
      %1407 = vmatprep.subr.mxu0 0.0
      %1408 = vmatpush1.msra.mxu0 %v1391
      %1409 = vmatprep.subr.mxu0 0.0
      %1410 = vmatpush1.msra.mxu0 %v1392
      %1411 = vmatprep.subr.mxu0 0.0
      %1412 = vmatpush1.msra.mxu0 0.0
      %1413 = vmatprep.subr.mxu0 0.0
      %1414 = vmatpush1.msra.mxu0 0.0
      %1415 = vmatprep.subr.mxu0 0.0
      %1416 = vmatpush1.msra.mxu0 0.0
      %1417 = vmatprep.subr.mxu0 0.0
      %1418 = vmatpush1.msra.mxu0 0.0
      %1419 = vmatprep.subr.mxu0 0.0
      %1420 = vmatpush1.msra.mxu0 0.0
      %1421 = vmatprep.subr.mxu0 0.0
      %1422 = vmatpush1.msra.mxu0 0.0
      %1423 = vmatprep.subr.mxu0 0.0
      %1424 = vmatpush1.msra.mxu0 0.0
      %1425 = vmatprep.subr.mxu0 0.0
      %1426 = vmatpush1.msra.mxu0 0.0
      %1427 = vmatprep.subr.mxu0 0.0
      %1428 = vmatpush1.msra.mxu0 0.0
      %1429 = vmatprep.subr.mxu0 0.0
      %1430 = vmatpush1.msra.mxu0 0.0
      %1431 = vmatprep.subr.mxu0 0.0
      %1432 = vmatpush1.msra.mxu0 0.0
      %1433 = vmatprep.subr.mxu0 0.0
      %1434 = vmatpush1.msra.mxu0 0.0
      %1435 = vmatprep.subr.mxu0 0.0
      %1436 = vmatpush1.msra.mxu0 0.0
      %1437 = vmatprep.subr.mxu0 0.0
      %1438 = vmatpush1.msra.mxu0 0.0
      %1439 = vmatprep.subr.mxu0 0.0
      %1440 = vmatpush1.msra.mxu0 0.0
      %1441 = vmatprep.subr.mxu0 0.0
      %1442 = vmatpush1.msra.mxu0 0.0
      %1443 = vmatprep.subr.mxu0 0.0
      %1444 = vmatpush1.msra.mxu0 0.0
      %1445 = vmatprep.subr.mxu0 0.0
      %1446 = vmatpush1.msra.mxu0 0.0
      %1447 = vmatprep.subr.mxu0 0.0
      %1448 = vmatpush1.msra.mxu0 0.0
      %1449 = vmatprep.subr.mxu0 0.0
      %1450 = vmatpush1.msra.mxu0 0.0
      %1451 = vmatprep.subr.mxu0 0.0
      %1452 = vmatpush1.msra.mxu0 0.0
      %1453 = vmatprep.subr.mxu0 0.0
      %1454 = vmatpush1.msra.mxu0 0.0
      %1455 = vmatprep.subr.mxu0 0.0
      %1456 = vmatpush1.msra.mxu0 0.0
      %1457 = vmatprep.subr.mxu0 0.0
      %1458 = vmatpush1.msra.mxu0 0.0
      %1459 = vmatprep.subr.mxu0 0.0
      %1460 = vmatpush1.msra.mxu0 0.0
      %1461 = vmatprep.subr.mxu0 0.0
      %1462 = vmatpush1.msra.mxu0 0.0
      %1463 = vmatprep.subr.mxu0 0.0
      %1464 = vmatpush1.msra.mxu0 0.0
      %1465 = vmatprep.subr.mxu0 0.0
      %1466 = vmatpush1.msra.mxu0 0.0
      %1467 = vmatprep.mubr.f32.mxu0 0.0
      %1468 = vmatmul.mubr.f32.gmra.mrb[0].mxu0 %v1401
      %v1469 = vpop.f32.mrb[0].mxu0
      %v1470 = vadd.f32 %v1398, %v1469
      %v1471 = vpop.f32.mrb[0].mxu0
      %1472 = vdwg.mxu0
      %v1473 = vmul.f32 %v1470, 0.5
      %v1474 = vmul.f32 %v1470, 0.70710677
      %v1475 = verf.f32.pop %v1474
      %v1476 = vadd.f32 %v1475, 1.0
      %v1477 = vmul.f32 %v1473, %v1476
      %v1478 = vld [vmem:[%s721] sm:$0xff]
      %v1479 = vld [vmem:[%s721 + $0x8] sm:$0xff]
      %v1480 = vld [vmem:[%s721 + $0x10] sm:$0xff]
      %v1481 = vld [vmem:[%s721 + $0x18] sm:$0xff]
      %v1482 = vld [vmem:[%s721 + $0x20] sm:$0xff]
      %v1483 = vld [vmem:[%s721 + $0x28] sm:$0xff]
      %v1484 = vld [vmem:[%s721 + $0x30] sm:$0xff]
      %v1485 = vld [vmem:[%s721 + $0x38] sm:$0xff]
      %v1486 = vld [vmem:[%s724] sm:$0x1]
      %v1488 = vlaneseq
      %v1489 = vshrl.u32 %v1488, 7
      %v1490 = vsub.s32 0, %v1489
      %v1491 = vrot.slane %v1486, %v1490
      %vm1493 = vcmask 523264
      %v1495 = vsel %vm1493, %v1477, 0
      %1497 = vmatprep.subr.mxu0 0.0
      %1498 = vmatpush1.msra.mxu0 %v1478
      %1499 = vmatprep.subr.mxu0 0.0
      %1500 = vmatpush1.msra.mxu0 %v1479
      %1501 = vmatprep.subr.mxu0 0.0
      %1502 = vmatpush1.msra.mxu0 %v1480
      %1503 = vmatprep.subr.mxu0 0.0
      %1504 = vmatpush1.msra.mxu0 %v1481
      %1505 = vmatprep.subr.mxu0 0.0
      %1506 = vmatpush1.msra.mxu0 %v1482
      %1507 = vmatprep.subr.mxu0 0.0
      %1508 = vmatpush1.msra.mxu0 %v1483
      %1509 = vmatprep.subr.mxu0 0.0
      %1510 = vmatpush1.msra.mxu0 %v1484
      %1511 = vmatprep.subr.mxu0 0.0
      %1512 = vmatpush1.msra.mxu0 %v1485
      %1513 = vmatprep.subr.mxu0 0.0
      %1514 = vmatpush1.msra.mxu0 0.0
      %1515 = vmatprep.subr.mxu0 0.0
      %1516 = vmatpush1.msra.mxu0 0.0
      %1517 = vmatprep.subr.mxu0 0.0
      %1518 = vmatpush1.msra.mxu0 0.0
      %1519 = vmatprep.subr.mxu0 0.0
      %1520 = vmatpush1.msra.mxu0 0.0
      %1521 = vmatprep.subr.mxu0 0.0
      %1522 = vmatpush1.msra.mxu0 0.0
      %1523 = vmatprep.subr.mxu0 0.0
      %1524 = vmatpush1.msra.mxu0 0.0
      %1525 = vmatprep.subr.mxu0 0.0
      %1526 = vmatpush1.msra.mxu0 0.0
      %1527 = vmatprep.subr.mxu0 0.0
      %1528 = vmatpush1.msra.mxu0 0.0
      %1529 = vmatprep.subr.mxu0 0.0
      %1530 = vmatpush1.msra.mxu0 0.0
      %1531 = vmatprep.subr.mxu0 0.0
      %1532 = vmatpush1.msra.mxu0 0.0
      %1533 = vmatprep.subr.mxu0 0.0
      %1534 = vmatpush1.msra.mxu0 0.0
      %1535 = vmatprep.subr.mxu0 0.0
      %1536 = vmatpush1.msra.mxu0 0.0
      %1537 = vmatprep.subr.mxu0 0.0
      %1538 = vmatpush1.msra.mxu0 0.0
      %1539 = vmatprep.subr.mxu0 0.0
      %1540 = vmatpush1.msra.mxu0 0.0
      %1541 = vmatprep.subr.mxu0 0.0
      %1542 = vmatpush1.msra.mxu0 0.0
      %1543 = vmatprep.subr.mxu0 0.0
      %1544 = vmatpush1.msra.mxu0 0.0
      %1545 = vmatprep.subr.mxu0 0.0
      %1546 = vmatpush1.msra.mxu0 0.0
      %1547 = vmatprep.subr.mxu0 0.0
      %1548 = vmatpush1.msra.mxu0 0.0
      %1549 = vmatprep.subr.mxu0 0.0
      %1550 = vmatpush1.msra.mxu0 0.0
      %1551 = vmatprep.subr.mxu0 0.0
      %1552 = vmatpush1.msra.mxu0 0.0
      %1553 = vmatprep.subr.mxu0 0.0
      %1554 = vmatpush1.msra.mxu0 0.0
      %1555 = vmatprep.subr.mxu0 0.0
      %1556 = vmatpush1.msra.mxu0 0.0
      %1557 = vmatprep.subr.mxu0 0.0
      %1558 = vmatpush1.msra.mxu0 0.0
      %1559 = vmatprep.subr.mxu0 0.0
      %1560 = vmatpush1.msra.mxu0 0.0
      %1561 = vmatprep.mubr.f32.mxu0 0.0
      %1562 = vmatmul.mubr.f32.gmra.mrb[0].mxu0 %v1495
      %v1563 = vpop.f32.mrb[0].mxu0
      %v1564 = vadd.f32 %v1491, %v1563
      %v1565 = vpop.f32.mrb[0].mxu0
      %1566 = vdwg.mxu0
      %v1567 = vadd.f32 %v1564, %v1388
      %v1568 = vld [vmem:[%s727] sm:$0x1]
      %v1569 = vld [vmem:[%s730] sm:$0x1]
      %v1570 = vsel %vm784, %v1567, 0.0
      %1571 = vadd.xlane.f32.xlu0 %v1570
      %v1572 = vpop.xlane.xlu0 %1571
      %v1573 = vmul.f32 %v1572, %v1364
      %v1574 = vsub.f32 %v1567, %v1573
      %v1575 = vmul.f32 %v1574, %v1574
      %v1576 = vsel %vm784, %v1575, 0.0
      %1577 = vadd.xlane.f32.xlu0 %v1576
      %v1578 = vpop.xlane.xlu0 %1577
      %v1579 = vmul.f32 %v1578, %v1364
      %v1580 = vadd.f32 %v1579, 1e-12
      %v1581 = vrsqrt.pop %v1580
      %v1582 = vmul.f32 %v1574, %v1581
      %v1584 = vlaneseq
      %v1585 = vshrl.u32 %v1584, 7
      %v1586 = vsub.s32 0, %v1585
      %v1587 = vrot.slane %v1568, %v1586
      %v1589 = vmul.f32 %v1582, %v1587
      %v1591 = vlaneseq
      %v1592 = vshrl.u32 %v1591, 7
      %v1593 = vsub.s32 0, %v1592
      %v1594 = vrot.slane %v1569, %v1593
      %v1596 = vadd.f32 %v1589, %v1594
      %1597 = vst.msk [vmem:[%s734] sm:$0xff] %vm784, %v1596
      %p1598 = scmp.lt.s32.totalorder %s31, 1
      %s1599 = scalar_select %p1598, %s31, 1
      %s1600 = smul.addr %s1599, 8
      %s1601 = scalar_lea.vmem %s16, %s1600
      // Predicated region
      $region89: #{kobert_bigru_crf_forward.3} parent=83 // pred_check
        %p1602 = pneg %p463
      $region90: #{kobert_bigru_crf_forward.3} parent=83 // pred_check_branch
        %1604 = sbr.rel (%p1602) target = $region92
      $region91: #{kobert_bigru_crf_forward.3} parent=83 // pred_region
        _
      $region92: #{kobert_bigru_crf_forward.3} parent=83 // pred_fallthru
        _
    $region84: #{kobert_bigru_crf_forward.3} parent=5 // pred_fallthru
      _
    %p1605 = scmp.le.s32.totalorder 2, %s22
    // Predicated region
    $region93: #{kobert_bigru_crf_forward.3} parent=5 // pred_check
      %p1606 = pneg %p1605
    $region94: #{kobert_bigru_crf_forward.3} parent=5 // pred_check_branch
      %1608 = sbr.rel (%p1606) target = $region96
    $region95: #{kobert_bigru_crf_forward.3} parent=5 // pred_region
      %s1609 = ssub.s32 %s22, 2
      // Predicated region
      $region97: #{kobert_bigru_crf_forward.3} parent=95 // pred_check
        %p1610 = pneg %p469
      $region98: #{kobert_bigru_crf_forward.3} parent=95 // pred_check_branch
        %1612 = sbr.rel (%p1610) target = $region100
      $region99: #{kobert_bigru_crf_forward.3} parent=95 // pred_region
        %p1613 = scmp.lt.s32.totalorder %s33, 1
        %s1614 = scalar_select %p1613, %s33, 1
        %s1615 = smul.addr %s1614, 8
        %s1616 = scalar_lea.vmem %s16, %s1615
      $region100: #{kobert_bigru_crf_forward.3} parent=95 // pred_fallthru
        _
    $region96: #{kobert_bigru_crf_forward.3} parent=5 // pred_fallthru
      _
  $region6: #{kobert_bigru_crf_forward.3} parent=0 // loop_footer
    %s26 = sadd.s32 1, %s22
  $region7: #{kobert_bigru_crf_forward.3} parent=0 // loop_footer_branch
    %21 = sbr.rel target = $region3
  $region8: #{kobert_bigru_crf_forward.3} parent=0 // loop_exit
    _

// kernel: kobert_bigru_crf_forward.5
$region0: #{kobert_bigru_crf_forward.5}
  #allocation0 [shape = 'u32[]', space=smem, size = 0x4, offset = 0x4, fixed_abs, tag = 'smem constant byte address 0x4 - core index']
  #allocation1 [shape = 'u32[144,128]{1,0:T(1,128)}', space=vmem, size = 0x12000, scoped, tag = 'internal scratch']
  #allocation2 [shape = 'f32[16,8]{1,0:T(8,128)}', space=vmem, size = 0x2000, scoped, tag = 'scratch operand']
  %s0 = inlined_call_operand.vmem [shape: f32[16,16], index: 0, kind: input, shape index: {}]
  %s1 = inlined_call_operand.vmem [shape: f32[16,16], index: 1, kind: input, shape index: {}]
  %s2 = inlined_call_operand.vmem [shape: f32[32,8], index: 2, kind: input, shape index: {}]
  %s3 = inlined_call_operand.vmem [shape: f32[1,8], index: 3, kind: input, shape index: {}]
  %s4 = inlined_call_operand.vmem [shape: f32[8,8], index: 4, kind: input, shape index: {}]
  %s5 = inlined_call_operand.vmem [shape: f32[1,8], index: 5, kind: input, shape index: {}]
  %s6 = inlined_call_operand.vmem [shape: f32[1,8], index: 6, kind: input, shape index: {}]
  %s7 = inlined_call_operand.vmem [shape: f32[16,1], index: 7, kind: input, shape index: {}]
  %s8 = inlined_call_operand.vmem [shape: s32[16,1], index: 8, kind: input, shape index: {}]
  %s9 = inlined_call_operand.hbm [shape: f32[1,1], index: 9, kind: output, shape index: {0}]
  %s10 = inlined_call_operand.hbm [shape: f32[2,8], index: 10, kind: output, shape index: {1}]
  %s11 = inlined_call_operand.hbm [shape: s32[7,2,8], index: 11, kind: output, shape index: {2}]
  %12 = xla_tuple %s9, %s10, %s11
  %s13 = sld [smem:[#allocation0]]
  $region62: #{kobert_bigru_crf_forward.5} parent=0
    _
  %s15 = ssub.s32 1, %s13
  %s16 = scalar_select 0, %s15, %s13
  $region1: #{kobert_bigru_crf_forward.5} parent=0
    #allocation3 [shape = 'u8[512]{0}', space=smem, size = 0x200, scoped, tag = 'output window, operand 0, single buffered']
    #allocation4 [shape = 's32[1]{0}', space=sflag, size = 0x4, scoped, tag = 'scoped memory for kobert_bigru_crf_forward.5']
    #allocation5 [shape = 's32[1]{0}', space=sflag, size = 0x4, scoped, tag = 'scoped memory for kobert_bigru_crf_forward.5']
    #allocation6 [shape = 'u8[1024]{0}', space=vmem, size = 0x400, scoped, tag = 'output window, operand 1, single buffered']
    #allocation7 [shape = 'u8[7168]{0}', space=vmem, size = 0x1c00, scoped, tag = 'output window, operand 2, single buffered']
    #allocation8 [shape = 's32[1]{0}', space=sflag, size = 0x4, scoped, tag = 'scoped memory for kobert_bigru_crf_forward.5']
    %17 = vsyncpa [#allocation5], 0
    %18 = vsyncpa [#allocation4], 0
    %19 = vsyncpa [#allocation8], 0
    // Predicated region
    $region2: #{kobert_bigru_crf_forward.5} parent=1 // pred_check
      _
    $region3: #{kobert_bigru_crf_forward.5} parent=1 // pred_check_branch
      %21 = sbr.rel (0) target = $region5
    $region4: #{kobert_bigru_crf_forward.5} parent=1 // pred_region
      _
    $region5: #{kobert_bigru_crf_forward.5} parent=1 // pred_fallthru
      _
    // Predicated region
    $region6: #{kobert_bigru_crf_forward.5} parent=1 // pred_check
      _
    $region7: #{kobert_bigru_crf_forward.5} parent=1 // pred_check_branch
      %23 = sbr.rel (0) target = $region9
    $region8: #{kobert_bigru_crf_forward.5} parent=1 // pred_region
      _
    $region9: #{kobert_bigru_crf_forward.5} parent=1 // pred_fallthru
      _
    // Predicated region
    $region10: #{kobert_bigru_crf_forward.5} parent=1 // pred_check
      _
    $region11: #{kobert_bigru_crf_forward.5} parent=1 // pred_check_branch
      %25 = sbr.rel (0) target = $region13
    $region12: #{kobert_bigru_crf_forward.5} parent=1 // pred_region
      _
    $region13: #{kobert_bigru_crf_forward.5} parent=1 // pred_fallthru
      _
    // Predicated region
    $region14: #{kobert_bigru_crf_forward.5} parent=1 // pred_check
      _
    $region15: #{kobert_bigru_crf_forward.5} parent=1 // pred_check_branch
      %27 = sbr.rel (0) target = $region17
    $region16: #{kobert_bigru_crf_forward.5} parent=1 // pred_region
      _
    $region17: #{kobert_bigru_crf_forward.5} parent=1 // pred_fallthru
      _
    // Predicated region
    $region18: #{kobert_bigru_crf_forward.5} parent=1 // pred_check
      _
    $region19: #{kobert_bigru_crf_forward.5} parent=1 // pred_check_branch
      %29 = sbr.rel (0) target = $region21
    $region20: #{kobert_bigru_crf_forward.5} parent=1 // pred_region
      _
    $region21: #{kobert_bigru_crf_forward.5} parent=1 // pred_fallthru
      _
    // Predicated region
    $region22: #{kobert_bigru_crf_forward.5} parent=1 // pred_check
      _
    $region23: #{kobert_bigru_crf_forward.5} parent=1 // pred_check_branch
      %31 = sbr.rel (0) target = $region25
    $region24: #{kobert_bigru_crf_forward.5} parent=1 // pred_region
      _
    $region25: #{kobert_bigru_crf_forward.5} parent=1 // pred_fallthru
      _
    // Predicated region
    $region26: #{kobert_bigru_crf_forward.5} parent=1 // pred_check
      _
    $region27: #{kobert_bigru_crf_forward.5} parent=1 // pred_check_branch
      %33 = sbr.rel (0) target = $region29
    $region28: #{kobert_bigru_crf_forward.5} parent=1 // pred_region
      _
    $region29: #{kobert_bigru_crf_forward.5} parent=1 // pred_fallthru
      _
    // Predicated region
    $region30: #{kobert_bigru_crf_forward.5} parent=1 // pred_check
      _
    $region31: #{kobert_bigru_crf_forward.5} parent=1 // pred_check_branch
      %35 = sbr.rel (0) target = $region33
    $region32: #{kobert_bigru_crf_forward.5} parent=1 // pred_region
      _
    $region33: #{kobert_bigru_crf_forward.5} parent=1 // pred_fallthru
      _
    // Predicated region
    $region34: #{kobert_bigru_crf_forward.5} parent=1 // pred_check
      _
    $region35: #{kobert_bigru_crf_forward.5} parent=1 // pred_check_branch
      %37 = sbr.rel (0) target = $region37
    $region36: #{kobert_bigru_crf_forward.5} parent=1 // pred_region
      _
    $region37: #{kobert_bigru_crf_forward.5} parent=1 // pred_fallthru
      _
    %v38 = vld [vmem:[%s2] sm:$0xff]
    %v39 = vld [vmem:[%s2 + $0x8] sm:$0xff]
    %v40 = vld [vmem:[%s2 + $0x10] sm:$0xff]
    %v41 = vld [vmem:[%s2 + $0x18] sm:$0xff]
    %v42 = vld [vmem:[%s0] sm:$0xff]
    %v43 = vld [vmem:[%s0 + $0x8] sm:$0xff]
    %v44 = vld [vmem:[%s1] sm:$0xff]
    %v45 = vld [vmem:[%s1 + $0x8] sm:$0xff]
    %vm46 = vcmask 130048
    %v48 = vsel %vm46, %v44, 0
    %v51 = vsel %vm46, %v45, 0
    %53 = vmatprep.subr.mxu0 0.0
    %54 = vmatpush1.msra.mxu0 %v40
    %55 = vmatprep.subr.mxu0 0.0
    %56 = vmatpush1.msra.mxu0 %v41
    %57 = vmatprep.subr.mxu0 0.0
    %58 = vmatpush1.msra.mxu0 0.0
    %59 = vmatprep.subr.mxu0 0.0
    %60 = vmatpush1.msra.mxu0 0.0
    %61 = vmatprep.subr.mxu0 0.0
    %62 = vmatpush1.msra.mxu0 0.0
    %63 = vmatprep.subr.mxu0 0.0
    %64 = vmatpush1.msra.mxu0 0.0
    %65 = vmatprep.subr.mxu0 0.0
    %66 = vmatpush1.msra.mxu0 0.0
    %67 = vmatprep.subr.mxu0 0.0
    %68 = vmatpush1.msra.mxu0 0.0
    %69 = vmatprep.subr.mxu0 0.0
    %70 = vmatpush1.msra.mxu0 0.0
    %71 = vmatprep.subr.mxu0 0.0
    %72 = vmatpush1.msra.mxu0 0.0
    %73 = vmatprep.subr.mxu0 0.0
    %74 = vmatpush1.msra.mxu0 0.0
    %75 = vmatprep.subr.mxu0 0.0
    %76 = vmatpush1.msra.mxu0 0.0
    %77 = vmatprep.subr.mxu0 0.0
    %78 = vmatpush1.msra.mxu0 0.0
    %79 = vmatprep.subr.mxu0 0.0
    %80 = vmatpush1.msra.mxu0 0.0
    %81 = vmatprep.subr.mxu0 0.0
    %82 = vmatpush1.msra.mxu0 0.0
    %83 = vmatprep.subr.mxu0 0.0
    %84 = vmatpush1.msra.mxu0 0.0
    %85 = vmatprep.subr.mxu0 0.0
    %86 = vmatpush1.msra.mxu0 0.0
    %87 = vmatprep.subr.mxu0 0.0
    %88 = vmatpush1.msra.mxu0 0.0
    %89 = vmatprep.subr.mxu0 0.0
    %90 = vmatpush1.msra.mxu0 0.0
    %91 = vmatprep.subr.mxu0 0.0
    %92 = vmatpush1.msra.mxu0 0.0
    %93 = vmatprep.subr.mxu0 0.0
    %94 = vmatpush1.msra.mxu0 0.0
    %95 = vmatprep.subr.mxu0 0.0
    %96 = vmatpush1.msra.mxu0 0.0
    %97 = vmatprep.subr.mxu0 0.0
    %98 = vmatpush1.msra.mxu0 0.0
    %99 = vmatprep.subr.mxu0 0.0
    %100 = vmatpush1.msra.mxu0 0.0
    %101 = vmatprep.subr.mxu0 0.0
    %102 = vmatpush1.msra.mxu0 0.0
    %103 = vmatprep.subr.mxu0 0.0
    %104 = vmatpush1.msra.mxu0 0.0
    %105 = vmatprep.subr.mxu0 0.0
    %106 = vmatpush1.msra.mxu0 0.0
    %107 = vmatprep.subr.mxu0 0.0
    %108 = vmatpush1.msra.mxu0 0.0
    %109 = vmatprep.subr.mxu0 0.0
    %110 = vmatpush1.msra.mxu0 0.0
    %111 = vmatprep.subr.mxu0 0.0
    %112 = vmatpush1.msra.mxu0 0.0
    %113 = vmatprep.subr.mxu0 0.0
    %114 = vmatpush1.msra.mxu0 0.0
    %115 = vmatprep.subr.mxu0 0.0
    %116 = vmatpush1.msra.mxu0 0.0
    %117 = vmatprep.mubr.f32.mxu0 0.0
    %118 = vmatmul.mubr.f32.gmra.mrb[0].mxu0 %v48
    %v119 = vpop.f32.mrb[0].mxu0
    %v120 = vadd.f32 0.0, %v119
    %v121 = vpop.f32.mrb[0].mxu0
    %122 = vmatprep.mubr.f32.mxu0 0.0
    %123 = vmatmul.mubr.f32.gmra.mrb[0].mxu0 %v51
    %v124 = vpop.f32.mrb[0].mxu0
    %v125 = vadd.f32 0.0, %v124
    %v126 = vpop.f32.mrb[0].mxu0
    %127 = vdwg.mxu0
    %v129 = vsel %vm46, %v42, 0
    %v132 = vsel %vm46, %v43, 0
    %134 = vmatprep.subr.mxu0 0.0
    %135 = vmatpush1.msra.mxu0 %v38
    %136 = vmatprep.subr.mxu0 0.0
    %137 = vmatpush1.msra.mxu0 %v39
    %138 = vmatprep.subr.mxu0 0.0
    %139 = vmatpush1.msra.mxu0 0.0
    %140 = vmatprep.subr.mxu0 0.0
    %141 = vmatpush1.msra.mxu0 0.0
    %142 = vmatprep.subr.mxu0 0.0
    %143 = vmatpush1.msra.mxu0 0.0
    %144 = vmatprep.subr.mxu0 0.0
    %145 = vmatpush1.msra.mxu0 0.0
    %146 = vmatprep.subr.mxu0 0.0
    %147 = vmatpush1.msra.mxu0 0.0
    %148 = vmatprep.subr.mxu0 0.0
    %149 = vmatpush1.msra.mxu0 0.0
    %150 = vmatprep.subr.mxu0 0.0
    %151 = vmatpush1.msra.mxu0 0.0
    %152 = vmatprep.subr.mxu0 0.0
    %153 = vmatpush1.msra.mxu0 0.0
    %154 = vmatprep.subr.mxu0 0.0
    %155 = vmatpush1.msra.mxu0 0.0
    %156 = vmatprep.subr.mxu0 0.0
    %157 = vmatpush1.msra.mxu0 0.0
    %158 = vmatprep.subr.mxu0 0.0
    %159 = vmatpush1.msra.mxu0 0.0
    %160 = vmatprep.subr.mxu0 0.0
    %161 = vmatpush1.msra.mxu0 0.0
    %162 = vmatprep.subr.mxu0 0.0
    %163 = vmatpush1.msra.mxu0 0.0
    %164 = vmatprep.subr.mxu0 0.0
    %165 = vmatpush1.msra.mxu0 0.0
    %166 = vmatprep.subr.mxu0 0.0
    %167 = vmatpush1.msra.mxu0 0.0
    %168 = vmatprep.subr.mxu0 0.0
    %169 = vmatpush1.msra.mxu0 0.0
    %170 = vmatprep.subr.mxu0 0.0
    %171 = vmatpush1.msra.mxu0 0.0
    %172 = vmatprep.subr.mxu0 0.0
    %173 = vmatpush1.msra.mxu0 0.0
    %174 = vmatprep.subr.mxu0 0.0
    %175 = vmatpush1.msra.mxu0 0.0
    %176 = vmatprep.subr.mxu0 0.0
    %177 = vmatpush1.msra.mxu0 0.0
    %178 = vmatprep.subr.mxu0 0.0
    %179 = vmatpush1.msra.mxu0 0.0
    %180 = vmatprep.subr.mxu0 0.0
    %181 = vmatpush1.msra.mxu0 0.0
    %182 = vmatprep.subr.mxu0 0.0
    %183 = vmatpush1.msra.mxu0 0.0
    %184 = vmatprep.subr.mxu0 0.0
    %185 = vmatpush1.msra.mxu0 0.0
    %186 = vmatprep.subr.mxu0 0.0
    %187 = vmatpush1.msra.mxu0 0.0
    %188 = vmatprep.subr.mxu0 0.0
    %189 = vmatpush1.msra.mxu0 0.0
    %190 = vmatprep.subr.mxu0 0.0
    %191 = vmatpush1.msra.mxu0 0.0
    %192 = vmatprep.subr.mxu0 0.0
    %193 = vmatpush1.msra.mxu0 0.0
    %194 = vmatprep.subr.mxu0 0.0
    %195 = vmatpush1.msra.mxu0 0.0
    %196 = vmatprep.subr.mxu0 0.0
    %197 = vmatpush1.msra.mxu0 0.0
    %198 = vmatprep.mubr.f32.mxu0 0.0
    %199 = vmatmul.mubr.f32.gmra.mrb[0].mxu0 %v129
    %v200 = vpop.f32.mrb[0].mxu0
    %v201 = vadd.f32 %v120, %v200
    %v202 = vpop.f32.mrb[0].mxu0
    %203 = vmatprep.mubr.f32.mxu0 0.0
    %204 = vmatmul.mubr.f32.gmra.mrb[0].mxu0 %v132
    %v205 = vpop.f32.mrb[0].mxu0
    %v206 = vadd.f32 %v125, %v205
    %v207 = vpop.f32.mrb[0].mxu0
    %208 = vdwg.mxu0
    %v209 = vld [vmem:[%s3] sm:$0x1]
    %v211 = vlaneseq
    %v212 = vshrl.u32 %v211, 7
    %v213 = vsub.s32 0, %v212
    %v214 = vrot.slane %v209, %v213
    %v216 = vadd.f32 %v201, %v214
    %v217 = vadd.f32 %v206, %v214
    %vm218 = vcmask 64512
    %219 = vst.msk [vmem:[#allocation2] sm:$0xff] %vm218, %v216
    %220 = vst.msk [vmem:[#allocation2 + $0x8] sm:$0xff] %vm218, %v217
    %v221 = vld [vmem:[%s4] sm:$0xff]
    %v222 = vld [vmem:[%s5] sm:$0x1]
    %v223 = vld [vmem:[%s6] sm:$0x1]
    %v224 = vld [vmem:[%s7] sm:$0xff]
    %v225 = vld [vmem:[%s7 + $0x8] sm:$0xff]
    %v226 = vlaneseq
    %v227 = vand.u32 %v226, 127
    %v228 = vld [vmem:[%s8] sm:$0xff]
    %v229 = vld [vmem:[%s8 + $0x8] sm:$0xff]
    %230 = vset.pattern.permute.xlu0 0
    %231 = vperm.xlu0 %230, %v228
    %v232 = vpop.permute.xlu0 %231
    %233 = vset.pattern.permute.xlu0 0
    %234 = vperm.xlu0 %233, %v229
    %v235 = vpop.permute.xlu0 %234
    %vm236 = vcmp.eq.s32.totalorder %v227, %v232
    %vm237 = vcmp.eq.s32.totalorder %v227, %v235
    %v238 = vsel %vm236, 1, 0
    %v239 = vsel %vm237, 1, 0
    %v240 = vcvt.s32.f32 %v238
    %v241 = vcvt.s32.f32 %v239
    %v243 = vlaneseq
    %v244 = vshrl.u32 %v243, 7
    %v245 = vsub.s32 0, %v244
    %v246 = vrot.slane %v222, %v245
    %v248 = vmul.f32 %v246, %v240
    %vm249 = vcmask 58368
    %v250 = vsel %vm249, %v248, 0.0
    %251 = vadd.xlane.f32.xlu0 %v250
    %v252 = vpop.xlane.xlu0 %251
    %v253 = vrot.slane %v252, 4
    %v254 = vadd.f32 %v252, %v253
    %v255 = vrot.slane %v254, 2
    %v256 = vadd.f32 %v254, %v255
    %v257 = vrot.slane %v256, 1
    %v258 = vadd.f32 %v256, %v257
    %s259 = vtos %v258
    %v260 = vmul.f32 %v216, %v240
    %v261 = vmul.f32 %v217, %v241
    %263 = vset.pattern.permute.xlu0 0
    %264 = vperm.xlu0 %263, %v224
    %v265 = vpop.permute.xlu0 %264
    %268 = vset.pattern.permute.xlu0 0
    %269 = vperm.xlu0 %268, %v225
    %v270 = vpop.permute.xlu0 %269
    %v272 = vmul.f32 %v260, %v265
    %v273 = vmul.f32 %v261, %v270
    %v274 = vsel %vm218, %v272, 0.0
    %v275 = vsel %vm218, %v273, 0.0
    %v276 = vadd.f32 %v274, %v275
    %277 = vadd.xlane.f32.xlu0 %v276
    %v278 = vpop.xlane.xlu0 %277
    %v279 = vrot.slane %v278, 4
    %v280 = vadd.f32 %v278, %v279
    %v281 = vrot.slane %v280, 2
    %v282 = vadd.f32 %v280, %v281
    %v283 = vrot.slane %v282, 1
    %v284 = vadd.f32 %v282, %v283
    %s285 = vtos %v284
    %v287 = vsel %vm218, %v240, 0
    %v290 = vsel %vm218, %v241, 0
    %292 = vmatprep.subr.mxu0 0.0
    %293 = vmatpush1.msra.mxu0 %v221
    %294 = vmatprep.subr.mxu0 0.0
    %295 = vmatpush1.msra.mxu0 0.0
    %296 = vmatprep.subr.mxu0 0.0
    %297 = vmatpush1.msra.mxu0 0.0
    %298 = vmatprep.subr.mxu0 0.0
    %299 = vmatpush1.msra.mxu0 0.0
    %300 = vmatprep.subr.mxu0 0.0
    %301 = vmatpush1.msra.mxu0 0.0
    %302 = vmatprep.subr.mxu0 0.0
    %303 = vmatpush1.msra.mxu0 0.0
    %304 = vmatprep.subr.mxu0 0.0
    %305 = vmatpush1.msra.mxu0 0.0
    %306 = vmatprep.subr.mxu0 0.0
    %307 = vmatpush1.msra.mxu0 0.0
    %308 = vmatprep.subr.mxu0 0.0
    %309 = vmatpush1.msra.mxu0 0.0
    %310 = vmatprep.subr.mxu0 0.0
    %311 = vmatpush1.msra.mxu0 0.0
    %312 = vmatprep.subr.mxu0 0.0
    %313 = vmatpush1.msra.mxu0 0.0
    %314 = vmatprep.subr.mxu0 0.0
    %315 = vmatpush1.msra.mxu0 0.0
    %316 = vmatprep.subr.mxu0 0.0
    %317 = vmatpush1.msra.mxu0 0.0
    %318 = vmatprep.subr.mxu0 0.0
    %319 = vmatpush1.msra.mxu0 0.0
    %320 = vmatprep.subr.mxu0 0.0
    %321 = vmatpush1.msra.mxu0 0.0
    %322 = vmatprep.subr.mxu0 0.0
    %323 = vmatpush1.msra.mxu0 0.0
    %324 = vmatprep.subr.mxu0 0.0
    %325 = vmatpush1.msra.mxu0 0.0
    %326 = vmatprep.subr.mxu0 0.0
    %327 = vmatpush1.msra.mxu0 0.0
    %328 = vmatprep.subr.mxu0 0.0
    %329 = vmatpush1.msra.mxu0 0.0
    %330 = vmatprep.subr.mxu0 0.0
    %331 = vmatpush1.msra.mxu0 0.0
    %332 = vmatprep.subr.mxu0 0.0
    %333 = vmatpush1.msra.mxu0 0.0
    %334 = vmatprep.subr.mxu0 0.0
    %335 = vmatpush1.msra.mxu0 0.0
    %336 = vmatprep.subr.mxu0 0.0
    %337 = vmatpush1.msra.mxu0 0.0
    %338 = vmatprep.subr.mxu0 0.0
    %339 = vmatpush1.msra.mxu0 0.0
    %340 = vmatprep.subr.mxu0 0.0
    %341 = vmatpush1.msra.mxu0 0.0
    %342 = vmatprep.subr.mxu0 0.0
    %343 = vmatpush1.msra.mxu0 0.0
    %344 = vmatprep.subr.mxu0 0.0
    %345 = vmatpush1.msra.mxu0 0.0
    %346 = vmatprep.subr.mxu0 0.0
    %347 = vmatpush1.msra.mxu0 0.0
    %348 = vmatprep.subr.mxu0 0.0
    %349 = vmatpush1.msra.mxu0 0.0
    %350 = vmatprep.subr.mxu0 0.0
    %351 = vmatpush1.msra.mxu0 0.0
    %352 = vmatprep.subr.mxu0 0.0
    %353 = vmatpush1.msra.mxu0 0.0
    %354 = vmatprep.subr.mxu0 0.0
    %355 = vmatpush1.msra.mxu0 0.0
    %356 = vmatprep.mubr.f32.mxu0 0.0
    %357 = vmatmul.mubr.f32.gmra.mrb[0].mxu0 %v287
    %v358 = vpop.f32.mrb[0].mxu0
    %v359 = vadd.f32 0.0, %v358
    %v360 = vpop.f32.mrb[0].mxu0
    %361 = vmatprep.mubr.f32.mxu0 0.0
    %362 = vmatmul.mubr.f32.gmra.mrb[0].mxu0 %v290
    %v363 = vpop.f32.mrb[0].mxu0
    %v364 = vadd.f32 0.0, %v363
    %v365 = vpop.f32.mrb[0].mxu0
    %366 = vdwg.mxu0
    %vm367 = vcmask 1045504
    %v368 = vrot.slane %v240, 2
    %v369 = vrot.slane %v241, 2
    %v370 = vsel %vm367, %v368, %v369
    %v373 = vmul.f32 %v359, %v370
    %v374 = vmul.f32 %v364, %v369
    %v375 = vrot.slane %v265, 2
    %v376 = vrot.slane %v270, 2
    %v377 = vsel %vm367, %v375, %v376
    %v380 = vmul.f32 %v373, %v377
    %v381 = vmul.f32 %v374, %v376
    %v382 = vsel %vm218, %v380, 0.0
    %vm383 = vcmask 62464
    %v384 = vsel %vm383, %v381, 0.0
    %v385 = vadd.f32 %v382, %v384
    %386 = vadd.xlane.f32.xlu0 %v385
    %v387 = vpop.xlane.xlu0 %386
    %v388 = vrot.slane %v387, 4
    %v389 = vadd.f32 %v387, %v388
    %v390 = vrot.slane %v389, 2
    %v391 = vadd.f32 %v389, %v390
    %v392 = vrot.slane %v391, 1
    %v393 = vadd.f32 %v391, %v392
    %s394 = vtos %v393
    %v395 = vrot.slane %v224, 2
    %v396 = vrot.slane %v225, 2
    %v397 = vsel %vm367, %v395, %v396
    %v400 = vsel %vm367, %v396, 0.0
    %v401 = vsub.f32 1.0, %v397
    %v402 = vsub.f32 1.0, %v400
    %v403 = vmul.f32 %v224, %v401
    %v404 = vmul.f32 %v225, %v402
    %406 = vset.pattern.permute.xlu0 0
    %407 = vperm.xlu0 %406, %v403
    %v408 = vpop.permute.xlu0 %407
    %411 = vset.pattern.permute.xlu0 0
    %412 = vperm.xlu0 %411, %v404
    %v413 = vpop.permute.xlu0 %412
    %v415 = vmul.f32 %v240, %v408
    %v416 = vmul.f32 %v241, %v413
    %v418 = vlaneseq
    %v419 = vshrl.u32 %v418, 7
    %v420 = vsub.s32 0, %v419
    %v421 = vrot.slane %v223, %v420
    %v423 = vmul.f32 %v415, %v421
    %v424 = vmul.f32 %v416, %v421
    %v425 = vsel %vm218, %v423, 0.0
    %v426 = vsel %vm218, %v424, 0.0
    %v427 = vadd.f32 %v425, %v426
    %428 = vadd.xlane.f32.xlu0 %v427
    %v429 = vpop.xlane.xlu0 %428
    %v430 = vrot.slane %v429, 4
    %v431 = vadd.f32 %v429, %v430
    %v432 = vrot.slane %v431, 2
    %v433 = vadd.f32 %v431, %v432
    %v434 = vrot.slane %v433, 1
    %v435 = vadd.f32 %v433, %v434
    %s436 = vtos %v435
    %s437 = sadd.f32 %s259, %s285
    %s438 = sadd.f32 %s437, %s394
    %s439 = sadd.f32 %s438, %s436
    %v440 = vadd.f32 %v246, %v216
    %v441 = vld [vmem:[#allocation2 + $0x2] sm:$0x3]
    %v442 = vld [vmem:[%s7 + $0x2] sm:$0x3]
    %v445 = vunpack.c.l.s4 1966171168
    %v446 = vunpack.c.0.s8 %v445
    %v447 = vlaneseq
    %v448 = vshrl.u32 %v447, 7
    %v449 = vsub.s32 %v446, %v448
    %v450 = vrot.slane %v441, %v449
    %v451 = vcombine.high %v450, %v450
    %v453 = vunpack.c.l.s4 1966171168
    %v454 = vunpack.c.0.s8 %v453
    %v455 = vlaneseq
    %v456 = vshrl.u32 %v455, 7
    %v457 = vsub.s32 %v454, %v456
    %v458 = vrot.slane %v450, %v457
    %v460 = vunpack.c.l.s4 1966171168
    %v461 = vunpack.c.0.s8 %v460
    %v462 = vlaneseq
    %v463 = vshrl.u32 %v462, 7
    %v464 = vsub.s32 %v461, %v463
    %v465 = vrot.slane %v451, %v464
    %v466 = vlaneseq
    %v467 = vshrl.u32 %v466, 7
    %v468 = vsub.s32 0, %v467
    %v469 = vrot.slane %v458, %v468
    %v470 = vlaneseq
    %v471 = vshrl.u32 %v470, 7
    %v472 = vsub.s32 0, %v471
    %v473 = vrot.slane %v465, %v472
    %v476 = vadd.f32 %v221, %v469
    %v477 = vadd.f32 %v221, %v473
    %v478 = vlaneseq
    %v479 = vshrl.u32 %v478, 7
    %v480 = vsub.s32 0, %v479
    %v481 = vrot.slane %v440, %v480
    %483 = vbcast.lane.b32.xlu0 %v481, 256
    %v484 = vpop.permute.xlu0 %483
    %v485 = vlaneseq
    %v486 = vshrl.u32 %v485, 7
    %v487 = vsub.s32 1, %v486
    %v488 = vrot.slane %v440, %v487
    %490 = vbcast.lane.b32.xlu0 %v488, 256
    %v491 = vpop.permute.xlu0 %490
    %v492 = vadd.f32 %v484, %v476
    %v493 = vadd.f32 %v491, %v477
    %v494 = vsel %vm218, %v492, -inf
    %v495 = vrot.slane %v494, 4
    %v496 = vmax.f32 %v494, %v495
    %v497 = vrot.slane %v496, 2
    %v498 = vmax.f32 %v496, %v497
    %v499 = vrot.slane %v498, 1
    %v500 = vmax.f32 %v498, %v499
    %v501 = vsel %vm218, %v493, -inf
    %v502 = vrot.slane %v501, 4
    %v503 = vmax.f32 %v501, %v502
    %v504 = vrot.slane %v503, 2
    %v505 = vmax.f32 %v503, %v504
    %v506 = vrot.slane %v505, 1
    %v507 = vmax.f32 %v505, %v506
    %v508 = vsub.f32 %v492, %v500
    %v509 = vsub.f32 %v493, %v507
    %v510 = vmul.f32 %v508, 1.442695
    %v511 = vpow.pop %v510
    %v512 = vmul.f32 %v509, 1.442695
    %v513 = vpow.pop %v512
    %v514 = vsel %vm218, %v511, 0.0
    %v515 = vrot.slane %v514, 4
    %v516 = vadd.f32 %v514, %v515
    %v517 = vrot.slane %v516, 2
    %v518 = vadd.f32 %v516, %v517
    %v519 = vrot.slane %v518, 1
    %v520 = vadd.f32 %v518, %v519
    %v521 = vsel %vm218, %v513, 0.0
    %v522 = vrot.slane %v521, 4
    %v523 = vadd.f32 %v521, %v522
    %v524 = vrot.slane %v523, 2
    %v525 = vadd.f32 %v523, %v524
    %v526 = vrot.slane %v525, 1
    %v527 = vadd.f32 %v525, %v526
    %v528 = vlog2.pop %v520
    %v529 = vmul.f32 %v528, 0.6931472
    %v530 = vlog2.pop %v527
    %v531 = vmul.f32 %v530, 0.6931472
    %v532 = vadd.f32 %v500, %v529
    %v533 = vadd.f32 %v507, %v531
    %vm534 = vcmp.gt.f32.partialorder %v442, 0.5
    %v535 = vsel %vm534, 1, 0
    %536 = vset.pattern.permute.xlu0 0
    %537 = vperm.xlu0 %536, %v535
    %v538 = vpop.permute.xlu0 %537
    %vm539 = vcmp.eq.s32.totalorder %v538, 1
    %vm542 = vcmask 1041409
    %v543 = vsel %vm542, %v533, %v532
    %v545 = vsel %vm539, %v543, %v440
    %v546 = vlaneseq
    %v547 = vshrl.u32 %v546, 7
    %vm548 = vcmp.ge.f32.partialorder %v492, %v500
    %vm549 = vcmp.ge.f32.partialorder %v493, %v507
    %v550 = vsel %vm548, %v547, 8
    %v551 = vsel %vm549, %v547, 8
    %v552 = vsel %vm218, %v550, 2147483647
    %v553 = vrot.slane %v552, 4
    %vm554 = vcmp.lt.s32.totalorder %v552, %v553
    %v555 = vsel %vm554, %v552, %v553
    %v556 = vrot.slane %v555, 2
    %vm557 = vcmp.lt.s32.totalorder %v555, %v556
    %v558 = vsel %vm557, %v555, %v556
    %v559 = vrot.slane %v558, 1
    %vm560 = vcmp.lt.s32.totalorder %v558, %v559
    %v561 = vsel %vm560, %v558, %v559
    %v562 = vsel %vm218, %v551, 2147483647
    %v563 = vrot.slane %v562, 4
    %vm564 = vcmp.lt.s32.totalorder %v562, %v563
    %v565 = vsel %vm564, %v562, %v563
    %v566 = vrot.slane %v565, 2
    %vm567 = vcmp.lt.s32.totalorder %v565, %v566
    %v568 = vsel %vm567, %v565, %v566
    %v569 = vrot.slane %v568, 1
    %vm570 = vcmp.lt.s32.totalorder %v568, %v569
    %v571 = vsel %vm570, %v568, %v569
    %v572 = vsel %vm542, %v571, %v561
    %573 = vst.msk [vmem:[#allocation7] sm:$0x3] %vm249, %v572
    %v576 = vsel %vm542, %v507, %v500
    %v578 = vsel %vm539, %v576, %v440
    %v579 = vld [vmem:[#allocation2 + $0x4] sm:$0x3]
    %v580 = vld [vmem:[%s7 + $0x4] sm:$0x3]
    %v583 = vunpack.c.l.s4 1966171168
    %v584 = vunpack.c.0.s8 %v583
    %v585 = vlaneseq
    %v586 = vshrl.u32 %v585, 7
    %v587 = vsub.s32 %v584, %v586
    %v588 = vrot.slane %v579, %v587
    %v589 = vcombine.high %v588, %v588
    %v591 = vunpack.c.l.s4 1966171168
    %v592 = vunpack.c.0.s8 %v591
    %v593 = vlaneseq
    %v594 = vshrl.u32 %v593, 7
    %v595 = vsub.s32 %v592, %v594
    %v596 = vrot.slane %v588, %v595
    %v598 = vunpack.c.l.s4 1966171168
    %v599 = vunpack.c.0.s8 %v598
    %v600 = vlaneseq
    %v601 = vshrl.u32 %v600, 7
    %v602 = vsub.s32 %v599, %v601
    %v603 = vrot.slane %v589, %v602
    %v604 = vlaneseq
    %v605 = vshrl.u32 %v604, 7
    %v606 = vsub.s32 0, %v605
    %v607 = vrot.slane %v596, %v606
    %v608 = vlaneseq
    %v609 = vshrl.u32 %v608, 7
    %v610 = vsub.s32 0, %v609
    %v611 = vrot.slane %v603, %v610
    %v614 = vadd.f32 %v221, %v607
    %v615 = vadd.f32 %v221, %v611
    %v616 = vlaneseq
    %v617 = vshrl.u32 %v616, 7
    %v618 = vsub.s32 0, %v617
    %v619 = vrot.slane %v545, %v618
    %621 = vbcast.lane.b32.xlu0 %v619, 256
    %v622 = vpop.permute.xlu0 %621
    %v623 = vlaneseq
    %v624 = vshrl.u32 %v623, 7
    %v625 = vsub.s32 1, %v624
    %v626 = vrot.slane %v545, %v625
    %628 = vbcast.lane.b32.xlu0 %v626, 256
    %v629 = vpop.permute.xlu0 %628
    %v630 = vadd.f32 %v622, %v614
    %v631 = vadd.f32 %v629, %v615
    %v632 = vsel %vm218, %v630, -inf
    %v633 = vrot.slane %v632, 4
    %v634 = vmax.f32 %v632, %v633
    %v635 = vrot.slane %v634, 2
    %v636 = vmax.f32 %v634, %v635
    %v637 = vrot.slane %v636, 1
    %v638 = vmax.f32 %v636, %v637
    %v639 = vsel %vm218, %v631, -inf
    %v640 = vrot.slane %v639, 4
    %v641 = vmax.f32 %v639, %v640
    %v642 = vrot.slane %v641, 2
    %v643 = vmax.f32 %v641, %v642
    %v644 = vrot.slane %v643, 1
    %v645 = vmax.f32 %v643, %v644
    %v646 = vsub.f32 %v630, %v638
    %v647 = vsub.f32 %v631, %v645
    %v648 = vmul.f32 %v646, 1.442695
    %v649 = vpow.pop %v648
    %v650 = vmul.f32 %v647, 1.442695
    %v651 = vpow.pop %v650
    %v652 = vsel %vm218, %v649, 0.0
    %v653 = vrot.slane %v652, 4
    %v654 = vadd.f32 %v652, %v653
    %v655 = vrot.slane %v654, 2
    %v656 = vadd.f32 %v654, %v655
    %v657 = vrot.slane %v656, 1
    %v658 = vadd.f32 %v656, %v657
    %v659 = vsel %vm218, %v651, 0.0
    %v660 = vrot.slane %v659, 4
    %v661 = vadd.f32 %v659, %v660
    %v662 = vrot.slane %v661, 2
    %v663 = vadd.f32 %v661, %v662
    %v664 = vrot.slane %v663, 1
    %v665 = vadd.f32 %v663, %v664
    %v666 = vlog2.pop %v658
    %v667 = vmul.f32 %v666, 0.6931472
    %v668 = vlog2.pop %v665
    %v669 = vmul.f32 %v668, 0.6931472
    %v670 = vadd.f32 %v638, %v667
    %v671 = vadd.f32 %v645, %v669
    %vm672 = vcmp.gt.f32.partialorder %v580, 0.5
    %v673 = vsel %vm672, 1, 0
    %674 = vset.pattern.permute.xlu0 0
    %675 = vperm.xlu0 %674, %v673
    %v676 = vpop.permute.xlu0 %675
    %vm677 = vcmp.eq.s32.totalorder %v676, 1
    %v680 = vsel %vm542, %v671, %v670
    %v682 = vsel %vm677, %v680, %v545
    %v683 = vlaneseq
    %v684 = vshrl.u32 %v683, 7
    %v685 = vsub.s32 0, %v684
    %v686 = vrot.slane %v578, %v685
    %688 = vbcast.lane.b32.xlu0 %v686, 256
    %v689 = vpop.permute.xlu0 %688
    %v690 = vlaneseq
    %v691 = vshrl.u32 %v690, 7
    %v692 = vsub.s32 1, %v691
    %v693 = vrot.slane %v578, %v692
    %695 = vbcast.lane.b32.xlu0 %v693, 256
    %v696 = vpop.permute.xlu0 %695
    %v697 = vadd.f32 %v689, %v614
    %v698 = vadd.f32 %v696, %v615
    %v699 = vsel %vm218, %v697, -inf
    %v700 = vrot.slane %v699, 4
    %v701 = vmax.f32 %v699, %v700
    %v702 = vrot.slane %v701, 2
    %v703 = vmax.f32 %v701, %v702
    %v704 = vrot.slane %v703, 1
    %v705 = vmax.f32 %v703, %v704
    %v706 = vsel %vm218, %v698, -inf
    %v707 = vrot.slane %v706, 4
    %v708 = vmax.f32 %v706, %v707
    %v709 = vrot.slane %v708, 2
    %v710 = vmax.f32 %v708, %v709
    %v711 = vrot.slane %v710, 1
    %v712 = vmax.f32 %v710, %v711
    %vm713 = vcmp.ge.f32.partialorder %v697, %v705
    %vm714 = vcmp.ge.f32.partialorder %v698, %v712
    %v715 = vsel %vm713, %v547, 8
    %v716 = vsel %vm714, %v547, 8
    %v717 = vsel %vm218, %v715, 2147483647
    %v718 = vrot.slane %v717, 4
    %vm719 = vcmp.lt.s32.totalorder %v717, %v718
    %v720 = vsel %vm719, %v717, %v718
    %v721 = vrot.slane %v720, 2
    %vm722 = vcmp.lt.s32.totalorder %v720, %v721
    %v723 = vsel %vm722, %v720, %v721
    %v724 = vrot.slane %v723, 1
    %vm725 = vcmp.lt.s32.totalorder %v723, %v724
    %v726 = vsel %vm725, %v723, %v724
    %v727 = vsel %vm218, %v716, 2147483647
    %v728 = vrot.slane %v727, 4
    %vm729 = vcmp.lt.s32.totalorder %v727, %v728
    %v730 = vsel %vm729, %v727, %v728
    %v731 = vrot.slane %v730, 2
    %vm732 = vcmp.lt.s32.totalorder %v730, %v731
    %v733 = vsel %vm732, %v730, %v731
    %v734 = vrot.slane %v733, 1
    %vm735 = vcmp.lt.s32.totalorder %v733, %v734
    %v736 = vsel %vm735, %v733, %v734
    %v737 = vsel %vm542, %v736, %v726
    %s738 = scalar_lea.vmem [#allocation7], 2
    %739 = vst.msk [vmem:[%s738] sm:$0x3] %vm249, %v737
    %v742 = vsel %vm542, %v712, %v705
    %v744 = vsel %vm677, %v742, %v578
    %v745 = vld [vmem:[#allocation2 + $0x6] sm:$0x3]
    %v746 = vld [vmem:[%s7 + $0x6] sm:$0x3]
    %v749 = vunpack.c.l.s4 1966171168
    %v750 = vunpack.c.0.s8 %v749
    %v751 = vlaneseq
    %v752 = vshrl.u32 %v751, 7
    %v753 = vsub.s32 %v750, %v752
    %v754 = vrot.slane %v745, %v753
    %v755 = vcombine.high %v754, %v754
    %v757 = vunpack.c.l.s4 1966171168
    %v758 = vunpack.c.0.s8 %v757
    %v759 = vlaneseq
    %v760 = vshrl.u32 %v759, 7
    %v761 = vsub.s32 %v758, %v760
    %v762 = vrot.slane %v754, %v761
    %v764 = vunpack.c.l.s4 1966171168
    %v765 = vunpack.c.0.s8 %v764
    %v766 = vlaneseq
    %v767 = vshrl.u32 %v766, 7
    %v768 = vsub.s32 %v765, %v767
    %v769 = vrot.slane %v755, %v768
    %v770 = vlaneseq
    %v771 = vshrl.u32 %v770, 7
    %v772 = vsub.s32 0, %v771
    %v773 = vrot.slane %v762, %v772
    %v774 = vlaneseq
    %v775 = vshrl.u32 %v774, 7
    %v776 = vsub.s32 0, %v775
    %v777 = vrot.slane %v769, %v776
    %v780 = vadd.f32 %v221, %v773
    %v781 = vadd.f32 %v221, %v777
    %v782 = vlaneseq
    %v783 = vshrl.u32 %v782, 7
    %v784 = vsub.s32 0, %v783
    %v785 = vrot.slane %v682, %v784
    %787 = vbcast.lane.b32.xlu0 %v785, 256
    %v788 = vpop.permute.xlu0 %787
    %v789 = vlaneseq
    %v790 = vshrl.u32 %v789, 7
    %v791 = vsub.s32 1, %v790
    %v792 = vrot.slane %v682, %v791
    %794 = vbcast.lane.b32.xlu0 %v792, 256
    %v795 = vpop.permute.xlu0 %794
    %v796 = vadd.f32 %v788, %v780
    %v797 = vadd.f32 %v795, %v781
    %v798 = vsel %vm218, %v796, -inf
    %v799 = vrot.slane %v798, 4
    %v800 = vmax.f32 %v798, %v799
    %v801 = vrot.slane %v800, 2
    %v802 = vmax.f32 %v800, %v801
    %v803 = vrot.slane %v802, 1
    %v804 = vmax.f32 %v802, %v803
    %v805 = vsel %vm218, %v797, -inf
    %v806 = vrot.slane %v805, 4
    %v807 = vmax.f32 %v805, %v806
    %v808 = vrot.slane %v807, 2
    %v809 = vmax.f32 %v807, %v808
    %v810 = vrot.slane %v809, 1
    %v811 = vmax.f32 %v809, %v810
    %v812 = vsub.f32 %v796, %v804
    %v813 = vsub.f32 %v797, %v811
    %v814 = vmul.f32 %v812, 1.442695
    %v815 = vpow.pop %v814
    %v816 = vmul.f32 %v813, 1.442695
    %v817 = vpow.pop %v816
    %v818 = vsel %vm218, %v815, 0.0
    %v819 = vrot.slane %v818, 4
    %v820 = vadd.f32 %v818, %v819
    %v821 = vrot.slane %v820, 2
    %v822 = vadd.f32 %v820, %v821
    %v823 = vrot.slane %v822, 1
    %v824 = vadd.f32 %v822, %v823
    %v825 = vsel %vm218, %v817, 0.0
    %v826 = vrot.slane %v825, 4
    %v827 = vadd.f32 %v825, %v826
    %v828 = vrot.slane %v827, 2
    %v829 = vadd.f32 %v827, %v828
    %v830 = vrot.slane %v829, 1
    %v831 = vadd.f32 %v829, %v830
    %v832 = vlog2.pop %v824
    %v833 = vmul.f32 %v832, 0.6931472
    %v834 = vlog2.pop %v831
    %v835 = vmul.f32 %v834, 0.6931472
    %v836 = vadd.f32 %v804, %v833
    %v837 = vadd.f32 %v811, %v835
    %vm838 = vcmp.gt.f32.partialorder %v746, 0.5
    %v839 = vsel %vm838, 1, 0
    %840 = vset.pattern.permute.xlu0 0
    %841 = vperm.xlu0 %840, %v839
    %v842 = vpop.permute.xlu0 %841
    %vm843 = vcmp.eq.s32.totalorder %v842, 1
    %v846 = vsel %vm542, %v837, %v836
    %v848 = vsel %vm843, %v846, %v682
    %v849 = vlaneseq
    %v850 = vshrl.u32 %v849, 7
    %v851 = vsub.s32 0, %v850
    %v852 = vrot.slane %v744, %v851
    %854 = vbcast.lane.b32.xlu0 %v852, 256
    %v855 = vpop.permute.xlu0 %854
    %v856 = vlaneseq
    %v857 = vshrl.u32 %v856, 7
    %v858 = vsub.s32 1, %v857
    %v859 = vrot.slane %v744, %v858
    %861 = vbcast.lane.b32.xlu0 %v859, 256
    %v862 = vpop.permute.xlu0 %861
    %v863 = vadd.f32 %v855, %v780
    %v864 = vadd.f32 %v862, %v781
    %v865 = vsel %vm218, %v863, -inf
    %v866 = vrot.slane %v865, 4
    %v867 = vmax.f32 %v865, %v866
    %v868 = vrot.slane %v867, 2
    %v869 = vmax.f32 %v867, %v868
    %v870 = vrot.slane %v869, 1
    %v871 = vmax.f32 %v869, %v870
    %v872 = vsel %vm218, %v864, -inf
    %v873 = vrot.slane %v872, 4
    %v874 = vmax.f32 %v872, %v873
    %v875 = vrot.slane %v874, 2
    %v876 = vmax.f32 %v874, %v875
    %v877 = vrot.slane %v876, 1
    %v878 = vmax.f32 %v876, %v877
    %vm879 = vcmp.ge.f32.partialorder %v863, %v871
    %vm880 = vcmp.ge.f32.partialorder %v864, %v878
    %v881 = vsel %vm879, %v547, 8
    %v882 = vsel %vm880, %v547, 8
    %v883 = vsel %vm218, %v881, 2147483647
    %v884 = vrot.slane %v883, 4
    %vm885 = vcmp.lt.s32.totalorder %v883, %v884
    %v886 = vsel %vm885, %v883, %v884
    %v887 = vrot.slane %v886, 2
    %vm888 = vcmp.lt.s32.totalorder %v886, %v887
    %v889 = vsel %vm888, %v886, %v887
    %v890 = vrot.slane %v889, 1
    %vm891 = vcmp.lt.s32.totalorder %v889, %v890
    %v892 = vsel %vm891, %v889, %v890
    %v893 = vsel %vm218, %v882, 2147483647
    %v894 = vrot.slane %v893, 4
    %vm895 = vcmp.lt.s32.totalorder %v893, %v894
    %v896 = vsel %vm895, %v893, %v894
    %v897 = vrot.slane %v896, 2
    %vm898 = vcmp.lt.s32.totalorder %v896, %v897
    %v899 = vsel %vm898, %v896, %v897
    %v900 = vrot.slane %v899, 1
    %vm901 = vcmp.lt.s32.totalorder %v899, %v900
    %v902 = vsel %vm901, %v899, %v900
    %v903 = vsel %vm542, %v902, %v892
    %s904 = scalar_lea.vmem [#allocation7], 4
    %905 = vst.msk [vmem:[%s904] sm:$0x3] %vm249, %v903
    %v908 = vsel %vm542, %v878, %v871
    %v910 = vsel %vm843, %v908, %v744
    %v911 = vld [vmem:[#allocation2 + $0x8] sm:$0x3]
    %v912 = vld [vmem:[%s7 + $0x8] sm:$0x3]
    %v915 = vunpack.c.l.s4 1966171168
    %v916 = vunpack.c.0.s8 %v915
    %v917 = vlaneseq
    %v918 = vshrl.u32 %v917, 7
    %v919 = vsub.s32 %v916, %v918
    %v920 = vrot.slane %v911, %v919
    %v921 = vcombine.high %v920, %v920
    %v923 = vunpack.c.l.s4 1966171168
    %v924 = vunpack.c.0.s8 %v923
    %v925 = vlaneseq
    %v926 = vshrl.u32 %v925, 7
    %v927 = vsub.s32 %v924, %v926
    %v928 = vrot.slane %v920, %v927
    %v930 = vunpack.c.l.s4 1966171168
    %v931 = vunpack.c.0.s8 %v930
    %v932 = vlaneseq
    %v933 = vshrl.u32 %v932, 7
    %v934 = vsub.s32 %v931, %v933
    %v935 = vrot.slane %v921, %v934
    %v936 = vlaneseq
    %v937 = vshrl.u32 %v936, 7
    %v938 = vsub.s32 0, %v937
    %v939 = vrot.slane %v928, %v938
    %v940 = vlaneseq
    %v941 = vshrl.u32 %v940, 7
    %v942 = vsub.s32 0, %v941
    %v943 = vrot.slane %v935, %v942
    %v946 = vadd.f32 %v221, %v939
    %v947 = vadd.f32 %v221, %v943
    %v948 = vlaneseq
    %v949 = vshrl.u32 %v948, 7
    %v950 = vsub.s32 0, %v949
    %v951 = vrot.slane %v848, %v950
    %953 = vbcast.lane.b32.xlu0 %v951, 256
    %v954 = vpop.permute.xlu0 %953
    %v955 = vlaneseq
    %v956 = vshrl.u32 %v955, 7
    %v957 = vsub.s32 1, %v956
    %v958 = vrot.slane %v848, %v957
    %960 = vbcast.lane.b32.xlu0 %v958, 256
    %v961 = vpop.permute.xlu0 %960
    %v962 = vadd.f32 %v954, %v946
    %v963 = vadd.f32 %v961, %v947
    %v964 = vsel %vm218, %v962, -inf
    %v965 = vrot.slane %v964, 4
    %v966 = vmax.f32 %v964, %v965
    %v967 = vrot.slane %v966, 2
    %v968 = vmax.f32 %v966, %v967
    %v969 = vrot.slane %v968, 1
    %v970 = vmax.f32 %v968, %v969
    %v971 = vsel %vm218, %v963, -inf
    %v972 = vrot.slane %v971, 4
    %v973 = vmax.f32 %v971, %v972
    %v974 = vrot.slane %v973, 2
    %v975 = vmax.f32 %v973, %v974
    %v976 = vrot.slane %v975, 1
    %v977 = vmax.f32 %v975, %v976
    %v978 = vsub.f32 %v962, %v970
    %v979 = vsub.f32 %v963, %v977
    %v980 = vmul.f32 %v978, 1.442695
    %v981 = vpow.pop %v980
    %v982 = vmul.f32 %v979, 1.442695
    %v983 = vpow.pop %v982
    %v984 = vsel %vm218, %v981, 0.0
    %v985 = vrot.slane %v984, 4
    %v986 = vadd.f32 %v984, %v985
    %v987 = vrot.slane %v986, 2
    %v988 = vadd.f32 %v986, %v987
    %v989 = vrot.slane %v988, 1
    %v990 = vadd.f32 %v988, %v989
    %v991 = vsel %vm218, %v983, 0.0
    %v992 = vrot.slane %v991, 4
    %v993 = vadd.f32 %v991, %v992
    %v994 = vrot.slane %v993, 2
    %v995 = vadd.f32 %v993, %v994
    %v996 = vrot.slane %v995, 1
    %v997 = vadd.f32 %v995, %v996
    %v998 = vlog2.pop %v990
    %v999 = vmul.f32 %v998, 0.6931472
    %v1000 = vlog2.pop %v997
    %v1001 = vmul.f32 %v1000, 0.6931472
    %v1002 = vadd.f32 %v970, %v999
    %v1003 = vadd.f32 %v977, %v1001
    %vm1004 = vcmp.gt.f32.partialorder %v912, 0.5
    %v1005 = vsel %vm1004, 1, 0
    %1006 = vset.pattern.permute.xlu0 0
    %1007 = vperm.xlu0 %1006, %v1005
    %v1008 = vpop.permute.xlu0 %1007
    %vm1009 = vcmp.eq.s32.totalorder %v1008, 1
    %v1012 = vsel %vm542, %v1003, %v1002
    %v1014 = vsel %vm1009, %v1012, %v848
    %v1015 = vlaneseq
    %v1016 = vshrl.u32 %v1015, 7
    %v1017 = vsub.s32 0, %v1016
    %v1018 = vrot.slane %v910, %v1017
    %1020 = vbcast.lane.b32.xlu0 %v1018, 256
    %v1021 = vpop.permute.xlu0 %1020
    %v1022 = vlaneseq
    %v1023 = vshrl.u32 %v1022, 7
    %v1024 = vsub.s32 1, %v1023
    %v1025 = vrot.slane %v910, %v1024
    %1027 = vbcast.lane.b32.xlu0 %v1025, 256
    %v1028 = vpop.permute.xlu0 %1027
    %v1029 = vadd.f32 %v1021, %v946
    %v1030 = vadd.f32 %v1028, %v947
    %v1031 = vsel %vm218, %v1029, -inf
    %v1032 = vrot.slane %v1031, 4
    %v1033 = vmax.f32 %v1031, %v1032
    %v1034 = vrot.slane %v1033, 2
    %v1035 = vmax.f32 %v1033, %v1034
    %v1036 = vrot.slane %v1035, 1
    %v1037 = vmax.f32 %v1035, %v1036
    %v1038 = vsel %vm218, %v1030, -inf
    %v1039 = vrot.slane %v1038, 4
    %v1040 = vmax.f32 %v1038, %v1039
    %v1041 = vrot.slane %v1040, 2
    %v1042 = vmax.f32 %v1040, %v1041
    %v1043 = vrot.slane %v1042, 1
    %v1044 = vmax.f32 %v1042, %v1043
    %vm1045 = vcmp.ge.f32.partialorder %v1029, %v1037
    %vm1046 = vcmp.ge.f32.partialorder %v1030, %v1044
    %v1047 = vsel %vm1045, %v547, 8
    %v1048 = vsel %vm1046, %v547, 8
    %v1049 = vsel %vm218, %v1047, 2147483647
    %v1050 = vrot.slane %v1049, 4
    %vm1051 = vcmp.lt.s32.totalorder %v1049, %v1050
    %v1052 = vsel %vm1051, %v1049, %v1050
    %v1053 = vrot.slane %v1052, 2
    %vm1054 = vcmp.lt.s32.totalorder %v1052, %v1053
    %v1055 = vsel %vm1054, %v1052, %v1053
    %v1056 = vrot.slane %v1055, 1
    %vm1057 = vcmp.lt.s32.totalorder %v1055, %v1056
    %v1058 = vsel %vm1057, %v1055, %v1056
    %v1059 = vsel %vm218, %v1048, 2147483647
    %v1060 = vrot.slane %v1059, 4
    %vm1061 = vcmp.lt.s32.totalorder %v1059, %v1060
    %v1062 = vsel %vm1061, %v1059, %v1060
    %v1063 = vrot.slane %v1062, 2
    %vm1064 = vcmp.lt.s32.totalorder %v1062, %v1063
    %v1065 = vsel %vm1064, %v1062, %v1063
    %v1066 = vrot.slane %v1065, 1
    %vm1067 = vcmp.lt.s32.totalorder %v1065, %v1066
    %v1068 = vsel %vm1067, %v1065, %v1066
    %v1069 = vsel %vm542, %v1068, %v1058
    %s1070 = scalar_lea.vmem [#allocation7], 6
    %1071 = vst.msk [vmem:[%s1070] sm:$0x3] %vm249, %v1069
    %v1074 = vsel %vm542, %v1044, %v1037
    %v1076 = vsel %vm1009, %v1074, %v910
    %v1077 = vld [vmem:[#allocation2 + $0xa] sm:$0x3]
    %v1078 = vld [vmem:[%s7 + $0xa] sm:$0x3]
    %v1081 = vunpack.c.l.s4 1966171168
    %v1082 = vunpack.c.0.s8 %v1081
    %v1083 = vlaneseq
    %v1084 = vshrl.u32 %v1083, 7
    %v1085 = vsub.s32 %v1082, %v1084
    %v1086 = vrot.slane %v1077, %v1085
    %v1087 = vcombine.high %v1086, %v1086
    %v1089 = vunpack.c.l.s4 1966171168
    %v1090 = vunpack.c.0.s8 %v1089
    %v1091 = vlaneseq
    %v1092 = vshrl.u32 %v1091, 7
    %v1093 = vsub.s32 %v1090, %v1092
    %v1094 = vrot.slane %v1086, %v1093
    %v1096 = vunpack.c.l.s4 1966171168
    %v1097 = vunpack.c.0.s8 %v1096
    %v1098 = vlaneseq
    %v1099 = vshrl.u32 %v1098, 7
    %v1100 = vsub.s32 %v1097, %v1099
    %v1101 = vrot.slane %v1087, %v1100
    %v1102 = vlaneseq
    %v1103 = vshrl.u32 %v1102, 7
    %v1104 = vsub.s32 0, %v1103
    %v1105 = vrot.slane %v1094, %v1104
    %v1106 = vlaneseq
    %v1107 = vshrl.u32 %v1106, 7
    %v1108 = vsub.s32 0, %v1107
    %v1109 = vrot.slane %v1101, %v1108
    %v1112 = vadd.f32 %v221, %v1105
    %v1113 = vadd.f32 %v221, %v1109
    %v1114 = vlaneseq
    %v1115 = vshrl.u32 %v1114, 7
    %v1116 = vsub.s32 0, %v1115
    %v1117 = vrot.slane %v1014, %v1116
    %1119 = vbcast.lane.b32.xlu0 %v1117, 256
    %v1120 = vpop.permute.xlu0 %1119
    %v1121 = vlaneseq
    %v1122 = vshrl.u32 %v1121, 7
    %v1123 = vsub.s32 1, %v1122
    %v1124 = vrot.slane %v1014, %v1123
    %1126 = vbcast.lane.b32.xlu0 %v1124, 256
    %v1127 = vpop.permute.xlu0 %1126
    %v1128 = vadd.f32 %v1120, %v1112
    %v1129 = vadd.f32 %v1127, %v1113
    %v1130 = vsel %vm218, %v1128, -inf
    %v1131 = vrot.slane %v1130, 4
    %v1132 = vmax.f32 %v1130, %v1131
    %v1133 = vrot.slane %v1132, 2
    %v1134 = vmax.f32 %v1132, %v1133
    %v1135 = vrot.slane %v1134, 1
    %v1136 = vmax.f32 %v1134, %v1135
    %v1137 = vsel %vm218, %v1129, -inf
    %v1138 = vrot.slane %v1137, 4
    %v1139 = vmax.f32 %v1137, %v1138
    %v1140 = vrot.slane %v1139, 2
    %v1141 = vmax.f32 %v1139, %v1140
    %v1142 = vrot.slane %v1141, 1
    %v1143 = vmax.f32 %v1141, %v1142
    %v1144 = vsub.f32 %v1128, %v1136
    %v1145 = vsub.f32 %v1129, %v1143
    %v1146 = vmul.f32 %v1144, 1.442695
    %v1147 = vpow.pop %v1146
    %v1148 = vmul.f32 %v1145, 1.442695
    %v1149 = vpow.pop %v1148
    %v1150 = vsel %vm218, %v1147, 0.0
    %v1151 = vrot.slane %v1150, 4
    %v1152 = vadd.f32 %v1150, %v1151
    %v1153 = vrot.slane %v1152, 2
    %v1154 = vadd.f32 %v1152, %v1153
    %v1155 = vrot.slane %v1154, 1
    %v1156 = vadd.f32 %v1154, %v1155
    %v1157 = vsel %vm218, %v1149, 0.0
    %v1158 = vrot.slane %v1157, 4
    %v1159 = vadd.f32 %v1157, %v1158
    %v1160 = vrot.slane %v1159, 2
    %v1161 = vadd.f32 %v1159, %v1160
    %v1162 = vrot.slane %v1161, 1
    %v1163 = vadd.f32 %v1161, %v1162
    %v1164 = vlog2.pop %v1156
    %v1165 = vmul.f32 %v1164, 0.6931472
    %v1166 = vlog2.pop %v1163
    %v1167 = vmul.f32 %v1166, 0.6931472
    %v1168 = vadd.f32 %v1136, %v1165
    %v1169 = vadd.f32 %v1143, %v1167
    %vm1170 = vcmp.gt.f32.partialorder %v1078, 0.5
    %v1171 = vsel %vm1170, 1, 0
    %1172 = vset.pattern.permute.xlu0 0
    %1173 = vperm.xlu0 %1172, %v1171
    %v1174 = vpop.permute.xlu0 %1173
    %vm1175 = vcmp.eq.s32.totalorder %v1174, 1
    %v1178 = vsel %vm542, %v1169, %v1168
    %v1180 = vsel %vm1175, %v1178, %v1014
    %v1181 = vlaneseq
    %v1182 = vshrl.u32 %v1181, 7
    %v1183 = vsub.s32 0, %v1182
    %v1184 = vrot.slane %v1076, %v1183
    %1186 = vbcast.lane.b32.xlu0 %v1184, 256
    %v1187 = vpop.permute.xlu0 %1186
    %v1188 = vlaneseq
    %v1189 = vshrl.u32 %v1188, 7
    %v1190 = vsub.s32 1, %v1189
    %v1191 = vrot.slane %v1076, %v1190
    %1193 = vbcast.lane.b32.xlu0 %v1191, 256
    %v1194 = vpop.permute.xlu0 %1193
    %v1195 = vadd.f32 %v1187, %v1112
    %v1196 = vadd.f32 %v1194, %v1113
    %v1197 = vsel %vm218, %v1195, -inf
    %v1198 = vrot.slane %v1197, 4
    %v1199 = vmax.f32 %v1197, %v1198
    %v1200 = vrot.slane %v1199, 2
    %v1201 = vmax.f32 %v1199, %v1200
    %v1202 = vrot.slane %v1201, 1
    %v1203 = vmax.f32 %v1201, %v1202
    %v1204 = vsel %vm218, %v1196, -inf
    %v1205 = vrot.slane %v1204, 4
    %v1206 = vmax.f32 %v1204, %v1205
    %v1207 = vrot.slane %v1206, 2
    %v1208 = vmax.f32 %v1206, %v1207
    %v1209 = vrot.slane %v1208, 1
    %v1210 = vmax.f32 %v1208, %v1209
    %vm1211 = vcmp.ge.f32.partialorder %v1195, %v1203
    %vm1212 = vcmp.ge.f32.partialorder %v1196, %v1210
    %v1213 = vsel %vm1211, %v547, 8
    %v1214 = vsel %vm1212, %v547, 8
    %v1215 = vsel %vm218, %v1213, 2147483647
    %v1216 = vrot.slane %v1215, 4
    %vm1217 = vcmp.lt.s32.totalorder %v1215, %v1216
    %v1218 = vsel %vm1217, %v1215, %v1216
    %v1219 = vrot.slane %v1218, 2
    %vm1220 = vcmp.lt.s32.totalorder %v1218, %v1219
    %v1221 = vsel %vm1220, %v1218, %v1219
    %v1222 = vrot.slane %v1221, 1
    %vm1223 = vcmp.lt.s32.totalorder %v1221, %v1222
    %v1224 = vsel %vm1223, %v1221, %v1222
    %v1225 = vsel %vm218, %v1214, 2147483647
    %v1226 = vrot.slane %v1225, 4
    %vm1227 = vcmp.lt.s32.totalorder %v1225, %v1226
    %v1228 = vsel %vm1227, %v1225, %v1226
    %v1229 = vrot.slane %v1228, 2
    %vm1230 = vcmp.lt.s32.totalorder %v1228, %v1229
    %v1231 = vsel %vm1230, %v1228, %v1229
    %v1232 = vrot.slane %v1231, 1
    %vm1233 = vcmp.lt.s32.totalorder %v1231, %v1232
    %v1234 = vsel %vm1233, %v1231, %v1232
    %v1235 = vsel %vm542, %v1234, %v1224
    %s1236 = scalar_lea.vmem [#allocation7], 8
    %1237 = vst.msk [vmem:[%s1236] sm:$0x3] %vm249, %v1235
    %v1240 = vsel %vm542, %v1210, %v1203
    %v1242 = vsel %vm1175, %v1240, %v1076
    %v1243 = vld [vmem:[#allocation2 + $0xc] sm:$0x3]
    %v1244 = vld [vmem:[%s7 + $0xc] sm:$0x3]
    %v1247 = vunpack.c.l.s4 1966171168
    %v1248 = vunpack.c.0.s8 %v1247
    %v1249 = vlaneseq
    %v1250 = vshrl.u32 %v1249, 7
    %v1251 = vsub.s32 %v1248, %v1250
    %v1252 = vrot.slane %v1243, %v1251
    %v1253 = vcombine.high %v1252, %v1252
    %v1255 = vunpack.c.l.s4 1966171168
    %v1256 = vunpack.c.0.s8 %v1255
    %v1257 = vlaneseq
    %v1258 = vshrl.u32 %v1257, 7
    %v1259 = vsub.s32 %v1256, %v1258
    %v1260 = vrot.slane %v1252, %v1259
    %v1262 = vunpack.c.l.s4 1966171168
    %v1263 = vunpack.c.0.s8 %v1262
    %v1264 = vlaneseq
    %v1265 = vshrl.u32 %v1264, 7
    %v1266 = vsub.s32 %v1263, %v1265
    %v1267 = vrot.slane %v1253, %v1266
    %v1268 = vlaneseq
    %v1269 = vshrl.u32 %v1268, 7
    %v1270 = vsub.s32 0, %v1269
    %v1271 = vrot.slane %v1260, %v1270
    %v1272 = vlaneseq
    %v1273 = vshrl.u32 %v1272, 7
    %v1274 = vsub.s32 0, %v1273
    %v1275 = vrot.slane %v1267, %v1274
    %v1278 = vadd.f32 %v221, %v1271
    %v1279 = vadd.f32 %v221, %v1275
    %v1280 = vlaneseq
    %v1281 = vshrl.u32 %v1280, 7
    %v1282 = vsub.s32 0, %v1281
    %v1283 = vrot.slane %v1180, %v1282
    %1285 = vbcast.lane.b32.xlu0 %v1283, 256
    %v1286 = vpop.permute.xlu0 %1285
    %v1287 = vlaneseq
    %v1288 = vshrl.u32 %v1287, 7
    %v1289 = vsub.s32 1, %v1288
    %v1290 = vrot.slane %v1180, %v1289
    %1292 = vbcast.lane.b32.xlu0 %v1290, 256
    %v1293 = vpop.permute.xlu0 %1292
    %v1294 = vadd.f32 %v1286, %v1278
    %v1295 = vadd.f32 %v1293, %v1279
    %v1296 = vsel %vm218, %v1294, -inf
    %v1297 = vrot.slane %v1296, 4
    %v1298 = vmax.f32 %v1296, %v1297
    %v1299 = vrot.slane %v1298, 2
    %v1300 = vmax.f32 %v1298, %v1299
    %v1301 = vrot.slane %v1300, 1
    %v1302 = vmax.f32 %v1300, %v1301
    %v1303 = vsel %vm218, %v1295, -inf
    %v1304 = vrot.slane %v1303, 4
    %v1305 = vmax.f32 %v1303, %v1304
    %v1306 = vrot.slane %v1305, 2
    %v1307 = vmax.f32 %v1305, %v1306
    %v1308 = vrot.slane %v1307, 1
    %v1309 = vmax.f32 %v1307, %v1308
    %v1310 = vsub.f32 %v1294, %v1302
    %v1311 = vsub.f32 %v1295, %v1309
    %v1312 = vmul.f32 %v1310, 1.442695
    %v1313 = vpow.pop %v1312
    %v1314 = vmul.f32 %v1311, 1.442695
    %v1315 = vpow.pop %v1314
    %v1316 = vsel %vm218, %v1313, 0.0
    %v1317 = vrot.slane %v1316, 4
    %v1318 = vadd.f32 %v1316, %v1317
    %v1319 = vrot.slane %v1318, 2
    %v1320 = vadd.f32 %v1318, %v1319
    %v1321 = vrot.slane %v1320, 1
    %v1322 = vadd.f32 %v1320, %v1321
    %v1323 = vsel %vm218, %v1315, 0.0
    %v1324 = vrot.slane %v1323, 4
    %v1325 = vadd.f32 %v1323, %v1324
    %v1326 = vrot.slane %v1325, 2
    %v1327 = vadd.f32 %v1325, %v1326
    %v1328 = vrot.slane %v1327, 1
    %v1329 = vadd.f32 %v1327, %v1328
    %v1330 = vlog2.pop %v1322
    %v1331 = vmul.f32 %v1330, 0.6931472
    %v1332 = vlog2.pop %v1329
    %v1333 = vmul.f32 %v1332, 0.6931472
    %v1334 = vadd.f32 %v1302, %v1331
    %v1335 = vadd.f32 %v1309, %v1333
    %vm1336 = vcmp.gt.f32.partialorder %v1244, 0.5
    %v1337 = vsel %vm1336, 1, 0
    %1338 = vset.pattern.permute.xlu0 0
    %1339 = vperm.xlu0 %1338, %v1337
    %v1340 = vpop.permute.xlu0 %1339
    %vm1341 = vcmp.eq.s32.totalorder %v1340, 1
    %v1344 = vsel %vm542, %v1335, %v1334
    %v1346 = vsel %vm1341, %v1344, %v1180
    %v1347 = vlaneseq
    %v1348 = vshrl.u32 %v1347, 7
    %v1349 = vsub.s32 0, %v1348
    %v1350 = vrot.slane %v1242, %v1349
    %1352 = vbcast.lane.b32.xlu0 %v1350, 256
    %v1353 = vpop.permute.xlu0 %1352
    %v1354 = vlaneseq
    %v1355 = vshrl.u32 %v1354, 7
    %v1356 = vsub.s32 1, %v1355
    %v1357 = vrot.slane %v1242, %v1356
    %1359 = vbcast.lane.b32.xlu0 %v1357, 256
    %v1360 = vpop.permute.xlu0 %1359
    %v1361 = vadd.f32 %v1353, %v1278
    %v1362 = vadd.f32 %v1360, %v1279
    %v1363 = vsel %vm218, %v1361, -inf
    %v1364 = vrot.slane %v1363, 4
    %v1365 = vmax.f32 %v1363, %v1364
    %v1366 = vrot.slane %v1365, 2
    %v1367 = vmax.f32 %v1365, %v1366
    %v1368 = vrot.slane %v1367, 1
    %v1369 = vmax.f32 %v1367, %v1368
    %v1370 = vsel %vm218, %v1362, -inf
    %v1371 = vrot.slane %v1370, 4
    %v1372 = vmax.f32 %v1370, %v1371
    %v1373 = vrot.slane %v1372, 2
    %v1374 = vmax.f32 %v1372, %v1373
    %v1375 = vrot.slane %v1374, 1
    %v1376 = vmax.f32 %v1374, %v1375
    %vm1377 = vcmp.ge.f32.partialorder %v1361, %v1369
    %vm1378 = vcmp.ge.f32.partialorder %v1362, %v1376
    %v1379 = vsel %vm1377, %v547, 8
    %v1380 = vsel %vm1378, %v547, 8
    %v1381 = vsel %vm218, %v1379, 2147483647
    %v1382 = vrot.slane %v1381, 4
    %vm1383 = vcmp.lt.s32.totalorder %v1381, %v1382
    %v1384 = vsel %vm1383, %v1381, %v1382
    %v1385 = vrot.slane %v1384, 2
    %vm1386 = vcmp.lt.s32.totalorder %v1384, %v1385
    %v1387 = vsel %vm1386, %v1384, %v1385
    %v1388 = vrot.slane %v1387, 1
    %vm1389 = vcmp.lt.s32.totalorder %v1387, %v1388
    %v1390 = vsel %vm1389, %v1387, %v1388
    %v1391 = vsel %vm218, %v1380, 2147483647
    %v1392 = vrot.slane %v1391, 4
    %vm1393 = vcmp.lt.s32.totalorder %v1391, %v1392
    %v1394 = vsel %vm1393, %v1391, %v1392
    %v1395 = vrot.slane %v1394, 2
    %vm1396 = vcmp.lt.s32.totalorder %v1394, %v1395
    %v1397 = vsel %vm1396, %v1394, %v1395
    %v1398 = vrot.slane %v1397, 1
    %vm1399 = vcmp.lt.s32.totalorder %v1397, %v1398
    %v1400 = vsel %vm1399, %v1397, %v1398
    %v1401 = vsel %vm542, %v1400, %v1390
    %s1402 = scalar_lea.vmem [#allocation7], 10
    %1403 = vst.msk [vmem:[%s1402] sm:$0x3] %vm249, %v1401
    %v1406 = vsel %vm542, %v1376, %v1369
    %v1408 = vsel %vm1341, %v1406, %v1242
    %v1409 = vld [vmem:[#allocation2 + $0xe] sm:$0x3]
    %v1410 = vld [vmem:[%s7 + $0xe] sm:$0x3]
    %v1413 = vunpack.c.l.s4 1966171168
    %v1414 = vunpack.c.0.s8 %v1413
    %v1415 = vlaneseq
    %v1416 = vshrl.u32 %v1415, 7
    %v1417 = vsub.s32 %v1414, %v1416
    %v1418 = vrot.slane %v1409, %v1417
    %v1419 = vcombine.high %v1418, %v1418
    %v1421 = vunpack.c.l.s4 1966171168
    %v1422 = vunpack.c.0.s8 %v1421
    %v1423 = vlaneseq
    %v1424 = vshrl.u32 %v1423, 7
    %v1425 = vsub.s32 %v1422, %v1424
    %v1426 = vrot.slane %v1418, %v1425
    %v1428 = vunpack.c.l.s4 1966171168
    %v1429 = vunpack.c.0.s8 %v1428
    %v1430 = vlaneseq
    %v1431 = vshrl.u32 %v1430, 7
    %v1432 = vsub.s32 %v1429, %v1431
    %v1433 = vrot.slane %v1419, %v1432
    %v1434 = vlaneseq
    %v1435 = vshrl.u32 %v1434, 7
    %v1436 = vsub.s32 0, %v1435
    %v1437 = vrot.slane %v1426, %v1436
    %v1438 = vlaneseq
    %v1439 = vshrl.u32 %v1438, 7
    %v1440 = vsub.s32 0, %v1439
    %v1441 = vrot.slane %v1433, %v1440
    %v1444 = vadd.f32 %v221, %v1437
    %v1445 = vadd.f32 %v221, %v1441
    %v1446 = vlaneseq
    %v1447 = vshrl.u32 %v1446, 7
    %v1448 = vsub.s32 0, %v1447
    %v1449 = vrot.slane %v1346, %v1448
    %1451 = vbcast.lane.b32.xlu0 %v1449, 256
    %v1452 = vpop.permute.xlu0 %1451
    %v1453 = vlaneseq
    %v1454 = vshrl.u32 %v1453, 7
    %v1455 = vsub.s32 1, %v1454
    %v1456 = vrot.slane %v1346, %v1455
    %1458 = vbcast.lane.b32.xlu0 %v1456, 256
    %v1459 = vpop.permute.xlu0 %1458
    %v1460 = vadd.f32 %v1452, %v1444
    %v1461 = vadd.f32 %v1459, %v1445
    %v1462 = vsel %vm218, %v1460, -inf
    %v1463 = vrot.slane %v1462, 4
    %v1464 = vmax.f32 %v1462, %v1463
    %v1465 = vrot.slane %v1464, 2
    %v1466 = vmax.f32 %v1464, %v1465
    %v1467 = vrot.slane %v1466, 1
    %v1468 = vmax.f32 %v1466, %v1467
    %v1469 = vsel %vm218, %v1461, -inf
    %v1470 = vrot.slane %v1469, 4
    %v1471 = vmax.f32 %v1469, %v1470
    %v1472 = vrot.slane %v1471, 2
    %v1473 = vmax.f32 %v1471, %v1472
    %v1474 = vrot.slane %v1473, 1
    %v1475 = vmax.f32 %v1473, %v1474
    %v1476 = vsub.f32 %v1460, %v1468
    %v1477 = vsub.f32 %v1461, %v1475
    %v1478 = vmul.f32 %v1476, 1.442695
    %v1479 = vpow.pop %v1478
    %v1480 = vmul.f32 %v1477, 1.442695
    %v1481 = vpow.pop %v1480
    %v1482 = vsel %vm218, %v1479, 0.0
    %v1483 = vrot.slane %v1482, 4
    %v1484 = vadd.f32 %v1482, %v1483
    %v1485 = vrot.slane %v1484, 2
    %v1486 = vadd.f32 %v1484, %v1485
    %v1487 = vrot.slane %v1486, 1
    %v1488 = vadd.f32 %v1486, %v1487
    %v1489 = vsel %vm218, %v1481, 0.0
    %v1490 = vrot.slane %v1489, 4
    %v1491 = vadd.f32 %v1489, %v1490
    %v1492 = vrot.slane %v1491, 2
    %v1493 = vadd.f32 %v1491, %v1492
    %v1494 = vrot.slane %v1493, 1
    %v1495 = vadd.f32 %v1493, %v1494
    %v1496 = vlog2.pop %v1488
    %v1497 = vmul.f32 %v1496, 0.6931472
    %v1498 = vlog2.pop %v1495
    %v1499 = vmul.f32 %v1498, 0.6931472
    %v1500 = vadd.f32 %v1468, %v1497
    %v1501 = vadd.f32 %v1475, %v1499
    %vm1502 = vcmp.gt.f32.partialorder %v1410, 0.5
    %v1503 = vsel %vm1502, 1, 0
    %1504 = vset.pattern.permute.xlu0 0
    %1505 = vperm.xlu0 %1504, %v1503
    %v1506 = vpop.permute.xlu0 %1505
    %vm1507 = vcmp.eq.s32.totalorder %v1506, 1
    %v1510 = vsel %vm542, %v1501, %v1500
    %v1512 = vsel %vm1507, %v1510, %v1346
    %v1513 = vlaneseq
    %v1514 = vshrl.u32 %v1513, 7
    %v1515 = vsub.s32 0, %v1514
    %v1516 = vrot.slane %v1408, %v1515
    %1518 = vbcast.lane.b32.xlu0 %v1516, 256
    %v1519 = vpop.permute.xlu0 %1518
    %v1520 = vlaneseq
    %v1521 = vshrl.u32 %v1520, 7
    %v1522 = vsub.s32 1, %v1521
    %v1523 = vrot.slane %v1408, %v1522
    %1525 = vbcast.lane.b32.xlu0 %v1523, 256
    %v1526 = vpop.permute.xlu0 %1525
    %v1527 = vadd.f32 %v1519, %v1444
    %v1528 = vadd.f32 %v1526, %v1445
    %v1529 = vsel %vm218, %v1527, -inf
    %v1530 = vrot.slane %v1529, 4
    %v1531 = vmax.f32 %v1529, %v1530
    %v1532 = vrot.slane %v1531, 2
    %v1533 = vmax.f32 %v1531, %v1532
    %v1534 = vrot.slane %v1533, 1
    %v1535 = vmax.f32 %v1533, %v1534
    %v1536 = vsel %vm218, %v1528, -inf
    %v1537 = vrot.slane %v1536, 4
    %v1538 = vmax.f32 %v1536, %v1537
    %v1539 = vrot.slane %v1538, 2
    %v1540 = vmax.f32 %v1538, %v1539
    %v1541 = vrot.slane %v1540, 1
    %v1542 = vmax.f32 %v1540, %v1541
    %vm1543 = vcmp.ge.f32.partialorder %v1527, %v1535
    %vm1544 = vcmp.ge.f32.partialorder %v1528, %v1542
    %v1545 = vsel %vm1543, %v547, 8
    %v1546 = vsel %vm1544, %v547, 8
    %v1547 = vsel %vm218, %v1545, 2147483647
    %v1548 = vrot.slane %v1547, 4
    %vm1549 = vcmp.lt.s32.totalorder %v1547, %v1548
    %v1550 = vsel %vm1549, %v1547, %v1548
    %v1551 = vrot.slane %v1550, 2
    %vm1552 = vcmp.lt.s32.totalorder %v1550, %v1551
    %v1553 = vsel %vm1552, %v1550, %v1551
    %v1554 = vrot.slane %v1553, 1
    %vm1555 = vcmp.lt.s32.totalorder %v1553, %v1554
    %v1556 = vsel %vm1555, %v1553, %v1554
    %v1557 = vsel %vm218, %v1546, 2147483647
    %v1558 = vrot.slane %v1557, 4
    %vm1559 = vcmp.lt.s32.totalorder %v1557, %v1558
    %v1560 = vsel %vm1559, %v1557, %v1558
    %v1561 = vrot.slane %v1560, 2
    %vm1562 = vcmp.lt.s32.totalorder %v1560, %v1561
    %v1563 = vsel %vm1562, %v1560, %v1561
    %v1564 = vrot.slane %v1563, 1
    %vm1565 = vcmp.lt.s32.totalorder %v1563, %v1564
    %v1566 = vsel %vm1565, %v1563, %v1564
    %v1567 = vsel %vm542, %v1566, %v1556
    %s1568 = scalar_lea.vmem [#allocation7], 12
    %1569 = vst.msk [vmem:[%s1568] sm:$0x3] %vm249, %v1567
    %v1572 = vsel %vm542, %v1542, %v1535
    %v1574 = vsel %vm1507, %v1572, %v1408
    %v1575 = vadd.f32 %v1512, %v421
    %v1576 = vsel %vm249, %v1575, -inf
    %1577 = vmax.xlane.f32.xlu0 %v1576
    %v1578 = vpop.xlane.xlu0 %1577
    %v1579 = vsub.f32 %v1575, %v1578
    %v1580 = vmul.f32 %v1579, 1.442695
    %v1581 = vpow.pop %v1580
    %v1582 = vsel %vm249, %v1581, 0.0
    %1583 = vadd.xlane.f32.xlu0 %v1582
    %v1584 = vpop.xlane.xlu0 %1583
    %v1585 = vlog2.pop %v1584
    %v1586 = vmul.f32 %v1585, 0.6931472
    %v1587 = vadd.f32 %v1578, %v1586
    %vm1588 = vcmask 1024
    %v1589 = vsel %vm1588, %v1587, 0.0
    %1590 = vadd.xlane.f32.xlu0 %v1589
    %v1591 = vpop.xlane.xlu0 %1590
    %v1592 = vrot.slane %v1591, 4
    %v1593 = vadd.f32 %v1591, %v1592
    %v1594 = vrot.slane %v1593, 2
    %v1595 = vadd.f32 %v1593, %v1594
    %v1596 = vrot.slane %v1595, 1
    %v1597 = vadd.f32 %v1595, %v1596
    %s1598 = vtos %v1597
    %s1599 = ssub.f32 %s439, %s1598
    %s1600 = scalar_lea.smem [#allocation3], 0
    %1601 = sst [smem:[%s1600]] %s1599
    %v1602 = vadd.f32 %v1574, %v421
    %1603 = vst.msk [vmem:[#allocation6] sm:$0x3] %vm249, %v1602
    // Predicated region
    $region38: #{kobert_bigru_crf_forward.5} parent=1 // pred_check
      _
    $region39: #{kobert_bigru_crf_forward.5} parent=1 // pred_check_branch
      %1605 = sbr.rel (0) target = $region41
    $region40: #{kobert_bigru_crf_forward.5} parent=1 // pred_region
      %s1607 = ssub.s32 16, 16
      %1608 = vsyncadd [#allocation5], %s1607
      %1611 = dma.smem_to_hbm [#allocation3], 16, %s9, [#allocation5]
    $region41: #{kobert_bigru_crf_forward.5} parent=1 // pred_fallthru
      _
    // Predicated region
    $region42: #{kobert_bigru_crf_forward.5} parent=1 // pred_check
      _
    $region43: #{kobert_bigru_crf_forward.5} parent=1 // pred_check_branch
      %1613 = sbr.rel (0) target = $region45
    $region44: #{kobert_bigru_crf_forward.5} parent=1 // pred_region
      %s1615 = ssub.s32 32, 32
      %1616 = vsyncadd [#allocation4], %s1615
      %s1618 = sshll.u32 [#allocation6], 4
      %s1619 = int_to_ptr.vmem [resolvable:$true] %s1618
      %1621 = dma.vmem_to_hbm [thread:$0]  %s1619, 32, %s10, [#allocation4]
    $region45: #{kobert_bigru_crf_forward.5} parent=1 // pred_fallthru
      _
    // Predicated region
    $region46: #{kobert_bigru_crf_forward.5} parent=1 // pred_check
      _
    $region47: #{kobert_bigru_crf_forward.5} parent=1 // pred_check_branch
      %1623 = sbr.rel (0) target = $region49
    $region48: #{kobert_bigru_crf_forward.5} parent=1 // pred_region
      %s1625 = ssub.s32 224, 224
      %1626 = vsyncadd [#allocation8], %s1625
      %s1627 = sshll.u32 [#allocation7], 4
      %s1628 = int_to_ptr.vmem [resolvable:$true] %s1627
      %1633 = dma.vmem_to_hbm [thread:$0]  %s1628, 224, %s11, [#allocation8], 32, 32, 2
    $region49: #{kobert_bigru_crf_forward.5} parent=1 // pred_fallthru
      _
    // Predicated region
    $region50: #{kobert_bigru_crf_forward.5} parent=1 // pred_check
      _
    $region51: #{kobert_bigru_crf_forward.5} parent=1 // pred_check_branch
      %1635 = sbr.rel (0) target = $region53
    $region52: #{kobert_bigru_crf_forward.5} parent=1 // pred_region
      %1636 = dma.done [#allocation5], 16
    $region53: #{kobert_bigru_crf_forward.5} parent=1 // pred_fallthru
      _
    // Predicated region
    $region54: #{kobert_bigru_crf_forward.5} parent=1 // pred_check
      _
    $region55: #{kobert_bigru_crf_forward.5} parent=1 // pred_check_branch
      %1638 = sbr.rel (0) target = $region57
    $region56: #{kobert_bigru_crf_forward.5} parent=1 // pred_region
      %1639 = dma.done [#allocation4], 32
    $region57: #{kobert_bigru_crf_forward.5} parent=1 // pred_fallthru
      _
    // Predicated region
    $region58: #{kobert_bigru_crf_forward.5} parent=1 // pred_check
      _
    $region59: #{kobert_bigru_crf_forward.5} parent=1 // pred_check_branch
      %1641 = sbr.rel (0) target = $region61
    $region60: #{kobert_bigru_crf_forward.5} parent=1 // pred_region
      %1642 = dma.done [#allocation8], 224
    $region61: #{kobert_bigru_crf_forward.5} parent=1 // pred_fallthru
      _
    %1643 = sfence
    %1644 = vsyncpa [#allocation4], 1
    %1645 = vsyncpa [#allocation8], 1
    %1646 = vsyncpa [#allocation5], 1

// kernel: kobert_bigru_crf_forward.4
$region0: #{kobert_bigru_crf_forward.4}
  #allocation0 [shape = 'u32[]', space=smem, size = 0x4, offset = 0x4, fixed_abs, tag = 'smem constant byte address 0x4 - core index']
  #allocation1 [shape = 'u32[144,128]{1,0:T(1,128)}', space=vmem, size = 0x12000, scoped, tag = 'internal scratch']
  #allocation2 [shape = 'f32[16,48]{1,0:T(8,128)}', space=vmem, size = 0x2000, scoped, tag = 'scratch operand']
  #allocation3 [shape = 'f32[16,48]{1,0:T(8,128)}', space=vmem, size = 0x2000, scoped, tag = 'scratch operand']
  %s0 = inlined_call_operand.vmem [shape: f32[16,32], index: 0, kind: input, shape index: {}]
  %s1 = inlined_call_operand.vmem [shape: f32[2,32,48], index: 1, kind: input, shape index: {}]
  %s2 = inlined_call_operand.vmem [shape: f32[2,1,48], index: 2, kind: input, shape index: {}]
  %s3 = inlined_call_operand.vmem [shape: f32[2,16,48], index: 3, kind: input, shape index: {}]
  %s4 = inlined_call_operand.vmem [shape: f32[2,1,48], index: 4, kind: input, shape index: {}]
  %s5 = inlined_call_operand.vmem [shape: f32[8,2,1], index: 5, kind: input, shape index: {}]
  %s6 = inlined_call_operand.vmem [shape: f32[16,16], index: 6, kind: output, shape index: {0}]
  %s7 = inlined_call_operand.vmem [shape: f32[16,16], index: 7, kind: output, shape index: {1}]
  %8 = xla_tuple %s6, %s7
  %s9 = sld [smem:[#allocation0]]
  $region42: #{kobert_bigru_crf_forward.4} parent=0
    _
  %s11 = ssub.s32 1, %s9
  %s12 = scalar_select 0, %s11, %s9
  // Predicated region
  $region2: #{kobert_bigru_crf_forward.4} parent=0 // pred_check
    _
  $region3: #{kobert_bigru_crf_forward.4} parent=0 // pred_check_branch
    %14 = sbr.rel (0) target = $region5
  $region4: #{kobert_bigru_crf_forward.4} parent=0 // pred_region
    _
  $region5: #{kobert_bigru_crf_forward.4} parent=0 // pred_fallthru
    _
  // Predicated region
  $region6: #{kobert_bigru_crf_forward.4} parent=0 // pred_check
    _
  $region7: #{kobert_bigru_crf_forward.4} parent=0 // pred_check_branch
    %16 = sbr.rel (0) target = $region9
  $region8: #{kobert_bigru_crf_forward.4} parent=0 // pred_region
    _
  $region9: #{kobert_bigru_crf_forward.4} parent=0 // pred_fallthru
    _
  // Predicated region
  $region10: #{kobert_bigru_crf_forward.4} parent=0 // pred_check
    _
  $region11: #{kobert_bigru_crf_forward.4} parent=0 // pred_check_branch
    %18 = sbr.rel (0) target = $region13
  $region12: #{kobert_bigru_crf_forward.4} parent=0 // pred_region
    _
  $region13: #{kobert_bigru_crf_forward.4} parent=0 // pred_fallthru
    _
  // Predicated region
  $region14: #{kobert_bigru_crf_forward.4} parent=0 // pred_check
    _
  $region15: #{kobert_bigru_crf_forward.4} parent=0 // pred_check_branch
    %20 = sbr.rel (0) target = $region17
  $region16: #{kobert_bigru_crf_forward.4} parent=0 // pred_region
    _
  $region17: #{kobert_bigru_crf_forward.4} parent=0 // pred_fallthru
    _
  // Predicated region
  $region18: #{kobert_bigru_crf_forward.4} parent=0 // pred_check
    _
  $region19: #{kobert_bigru_crf_forward.4} parent=0 // pred_check_branch
    %22 = sbr.rel (0) target = $region21
  $region20: #{kobert_bigru_crf_forward.4} parent=0 // pred_region
    _
  $region21: #{kobert_bigru_crf_forward.4} parent=0 // pred_fallthru
    _
  // Predicated region
  $region22: #{kobert_bigru_crf_forward.4} parent=0 // pred_check
    _
  $region23: #{kobert_bigru_crf_forward.4} parent=0 // pred_check_branch
    %24 = sbr.rel (0) target = $region25
  $region24: #{kobert_bigru_crf_forward.4} parent=0 // pred_region
    _
  $region25: #{kobert_bigru_crf_forward.4} parent=0 // pred_fallthru
    _
  %v25 = vld [vmem:[%s0] sm:$0xff]
  %v26 = vld [vmem:[%s0 + $0x8] sm:$0xff]
  %v27 = vld [vmem:[%s1] sm:$0xff]
  %v28 = vld [vmem:[%s1 + $0x8] sm:$0xff]
  %v29 = vld [vmem:[%s1 + $0x10] sm:$0xff]
  %v30 = vld [vmem:[%s1 + $0x18] sm:$0xff]
  %v31 = vld [vmem:[%s2] sm:$0x1]
  %v33 = vlaneseq
  %v34 = vshrl.u32 %v33, 7
  %v35 = vsub.s32 0, %v34
  %v36 = vrot.slane %v31, %v35
  %vm38 = vcmask 261120
  %v40 = vsel %vm38, %v25, 0
  %v43 = vsel %vm38, %v26, 0
  %45 = vmatprep.subr.mxu0 0.0
  %46 = vmatpush1.msra.mxu0 %v27
  %47 = vmatprep.subr.mxu0 0.0
  %48 = vmatpush1.msra.mxu0 %v28
  %49 = vmatprep.subr.mxu0 0.0
  %50 = vmatpush1.msra.mxu0 %v29
  %51 = vmatprep.subr.mxu0 0.0
  %52 = vmatpush1.msra.mxu0 %v30
  %53 = vmatprep.subr.mxu0 0.0
  %54 = vmatpush1.msra.mxu0 0.0
  %55 = vmatprep.subr.mxu0 0.0
  %56 = vmatpush1.msra.mxu0 0.0
  %57 = vmatprep.subr.mxu0 0.0
  %58 = vmatpush1.msra.mxu0 0.0
  %59 = vmatprep.subr.mxu0 0.0
  %60 = vmatpush1.msra.mxu0 0.0
  %61 = vmatprep.subr.mxu0 0.0
  %62 = vmatpush1.msra.mxu0 0.0
  %63 = vmatprep.subr.mxu0 0.0
  %64 = vmatpush1.msra.mxu0 0.0
  %65 = vmatprep.subr.mxu0 0.0
  %66 = vmatpush1.msra.mxu0 0.0
  %67 = vmatprep.subr.mxu0 0.0
  %68 = vmatpush1.msra.mxu0 0.0
  %69 = vmatprep.subr.mxu0 0.0
  %70 = vmatpush1.msra.mxu0 0.0
  %71 = vmatprep.subr.mxu0 0.0
  %72 = vmatpush1.msra.mxu0 0.0
  %73 = vmatprep.subr.mxu0 0.0
  %74 = vmatpush1.msra.mxu0 0.0
  %75 = vmatprep.subr.mxu0 0.0
  %76 = vmatpush1.msra.mxu0 0.0
  %77 = vmatprep.subr.mxu0 0.0
  %78 = vmatpush1.msra.mxu0 0.0
  %79 = vmatprep.subr.mxu0 0.0
  %80 = vmatpush1.msra.mxu0 0.0
  %81 = vmatprep.subr.mxu0 0.0
  %82 = vmatpush1.msra.mxu0 0.0
  %83 = vmatprep.subr.mxu0 0.0
  %84 = vmatpush1.msra.mxu0 0.0
  %85 = vmatprep.subr.mxu0 0.0
  %86 = vmatpush1.msra.mxu0 0.0
  %87 = vmatprep.subr.mxu0 0.0
  %88 = vmatpush1.msra.mxu0 0.0
  %89 = vmatprep.subr.mxu0 0.0
  %90 = vmatpush1.msra.mxu0 0.0
  %91 = vmatprep.subr.mxu0 0.0
  %92 = vmatpush1.msra.mxu0 0.0
  %93 = vmatprep.subr.mxu0 0.0
  %94 = vmatpush1.msra.mxu0 0.0
  %95 = vmatprep.subr.mxu0 0.0
  %96 = vmatpush1.msra.mxu0 0.0
  %97 = vmatprep.subr.mxu0 0.0
  %98 = vmatpush1.msra.mxu0 0.0
  %99 = vmatprep.subr.mxu0 0.0
  %100 = vmatpush1.msra.mxu0 0.0
  %101 = vmatprep.subr.mxu0 0.0
  %102 = vmatpush1.msra.mxu0 0.0
  %103 = vmatprep.subr.mxu0 0.0
  %104 = vmatpush1.msra.mxu0 0.0
  %105 = vmatprep.subr.mxu0 0.0
  %106 = vmatpush1.msra.mxu0 0.0
  %107 = vmatprep.subr.mxu0 0.0
  %108 = vmatpush1.msra.mxu0 0.0
  %109 = vmatprep.mubr.f32.mxu0 0.0
  %110 = vmatmul.mubr.f32.gmra.mrb[0].mxu0 %v40
  %v111 = vpop.f32.mrb[0].mxu0
  %v112 = vadd.f32 %v36, %v111
  %v113 = vpop.f32.mrb[0].mxu0
  %114 = vmatprep.mubr.f32.mxu0 0.0
  %115 = vmatmul.mubr.f32.gmra.mrb[0].mxu0 %v43
  %v116 = vpop.f32.mrb[0].mxu0
  %v117 = vadd.f32 %v36, %v116
  %v118 = vpop.f32.mrb[0].mxu0
  %119 = vdwg.mxu0
  %vm120 = vcmask 392192
  %121 = vst.msk [vmem:[#allocation2] sm:$0xff] %vm120, %v112
  %122 = vst.msk [vmem:[#allocation2 + $0x8] sm:$0xff] %vm120, %v117
  %s123 = scalar_lea.vmem %s1, 32
  %v124 = vld [vmem:[%s123] sm:$0xff]
  %v125 = vld [vmem:[%s123 + $0x8] sm:$0xff]
  %v126 = vld [vmem:[%s123 + $0x10] sm:$0xff]
  %v127 = vld [vmem:[%s123 + $0x18] sm:$0xff]
  %s128 = scalar_lea.vmem %s2, 1
  %v129 = vld [vmem:[%s128] sm:$0x1]
  %v131 = vlaneseq
  %v132 = vshrl.u32 %v131, 7
  %v133 = vsub.s32 0, %v132
  %v134 = vrot.slane %v129, %v133
  %136 = vmatprep.subr.mxu0 0.0
  %137 = vmatpush1.msra.mxu0 %v124
  %138 = vmatprep.subr.mxu0 0.0
  %139 = vmatpush1.msra.mxu0 %v125
  %140 = vmatprep.subr.mxu0 0.0
  %141 = vmatpush1.msra.mxu0 %v126
  %142 = vmatprep.subr.mxu0 0.0
  %143 = vmatpush1.msra.mxu0 %v127
  %144 = vmatprep.subr.mxu0 0.0
  %145 = vmatpush1.msra.mxu0 0.0
  %146 = vmatprep.subr.mxu0 0.0
  %147 = vmatpush1.msra.mxu0 0.0
  %148 = vmatprep.subr.mxu0 0.0
  %149 = vmatpush1.msra.mxu0 0.0
  %150 = vmatprep.subr.mxu0 0.0
  %151 = vmatpush1.msra.mxu0 0.0
  %152 = vmatprep.subr.mxu0 0.0
  %153 = vmatpush1.msra.mxu0 0.0
  %154 = vmatprep.subr.mxu0 0.0
  %155 = vmatpush1.msra.mxu0 0.0
  %156 = vmatprep.subr.mxu0 0.0
  %157 = vmatpush1.msra.mxu0 0.0
  %158 = vmatprep.subr.mxu0 0.0
  %159 = vmatpush1.msra.mxu0 0.0
  %160 = vmatprep.subr.mxu0 0.0
  %161 = vmatpush1.msra.mxu0 0.0
  %162 = vmatprep.subr.mxu0 0.0
  %163 = vmatpush1.msra.mxu0 0.0
  %164 = vmatprep.subr.mxu0 0.0
  %165 = vmatpush1.msra.mxu0 0.0
  %166 = vmatprep.subr.mxu0 0.0
  %167 = vmatpush1.msra.mxu0 0.0
  %168 = vmatprep.subr.mxu0 0.0
  %169 = vmatpush1.msra.mxu0 0.0
  %170 = vmatprep.subr.mxu0 0.0
  %171 = vmatpush1.msra.mxu0 0.0
  %172 = vmatprep.subr.mxu0 0.0
  %173 = vmatpush1.msra.mxu0 0.0
  %174 = vmatprep.subr.mxu0 0.0
  %175 = vmatpush1.msra.mxu0 0.0
  %176 = vmatprep.subr.mxu0 0.0
  %177 = vmatpush1.msra.mxu0 0.0
  %178 = vmatprep.subr.mxu0 0.0
  %179 = vmatpush1.msra.mxu0 0.0
  %180 = vmatprep.subr.mxu0 0.0
  %181 = vmatpush1.msra.mxu0 0.0
  %182 = vmatprep.subr.mxu0 0.0
  %183 = vmatpush1.msra.mxu0 0.0
  %184 = vmatprep.subr.mxu0 0.0
  %185 = vmatpush1.msra.mxu0 0.0
  %186 = vmatprep.subr.mxu0 0.0
  %187 = vmatpush1.msra.mxu0 0.0
  %188 = vmatprep.subr.mxu0 0.0
  %189 = vmatpush1.msra.mxu0 0.0
  %190 = vmatprep.subr.mxu0 0.0
  %191 = vmatpush1.msra.mxu0 0.0
  %192 = vmatprep.subr.mxu0 0.0
  %193 = vmatpush1.msra.mxu0 0.0
  %194 = vmatprep.subr.mxu0 0.0
  %195 = vmatpush1.msra.mxu0 0.0
  %196 = vmatprep.subr.mxu0 0.0
  %197 = vmatpush1.msra.mxu0 0.0
  %198 = vmatprep.subr.mxu0 0.0
  %199 = vmatpush1.msra.mxu0 0.0
  %200 = vmatprep.mubr.f32.mxu0 0.0
  %201 = vmatmul.mubr.f32.gmra.mrb[0].mxu0 %v40
  %v202 = vpop.f32.mrb[0].mxu0
  %v203 = vadd.f32 %v134, %v202
  %v204 = vpop.f32.mrb[0].mxu0
  %205 = vmatprep.mubr.f32.mxu0 0.0
  %206 = vmatmul.mubr.f32.gmra.mrb[0].mxu0 %v43
  %v207 = vpop.f32.mrb[0].mxu0
  %v208 = vadd.f32 %v134, %v207
  %v209 = vpop.f32.mrb[0].mxu0
  %210 = vdwg.mxu0
  %211 = vst.msk [vmem:[#allocation3] sm:$0xff] %vm120, %v203
  %212 = vst.msk [vmem:[#allocation3 + $0x8] sm:$0xff] %vm120, %v208
  %v213 = vld [vmem:[%s3] sm:$0xff]
  %v214 = vld [vmem:[%s3 + $0x8] sm:$0xff]
  %v215 = vld [vmem:[%s4] sm:$0x1]
  %s216 = scalar_lea.vmem %s3, 16
  %v217 = vld [vmem:[%s216] sm:$0xff]
  %v218 = vld [vmem:[%s216 + $0x8] sm:$0xff]
  %s219 = scalar_lea.vmem %s4, 1
  %v220 = vld [vmem:[%s219] sm:$0x1]
  %v221 = vld [vmem:[#allocation2] ss:$8 sm:$0x3]
  %s222 = scalar_lea.vmem [#allocation3], 7
  %v223 = vld [vmem:[%s222] ss:$8 sm:$0x3]
  %v225 = vlaneseq
  %v226 = vshrl.u32 %v225, 7
  %v227 = vsub.s32 0, %v226
  %v228 = vrot.slane %v215, %v227
  %vm230 = vcmask 130048
  %v232 = vsel %vm230, 0.0, 0
  %234 = vmatprep.subr.mxu0 0.0
  %235 = vmatpush1.msra.mxu0 %v213
  %236 = vmatprep.subr.mxu0 0.0
  %237 = vmatpush1.msra.mxu0 %v214
  %238 = vmatprep.subr.mxu0 0.0
  %239 = vmatpush1.msra.mxu0 0.0
  %240 = vmatprep.subr.mxu0 0.0
  %241 = vmatpush1.msra.mxu0 0.0
  %242 = vmatprep.subr.mxu0 0.0
  %243 = vmatpush1.msra.mxu0 0.0
  %244 = vmatprep.subr.mxu0 0.0
  %245 = vmatpush1.msra.mxu0 0.0
  %246 = vmatprep.subr.mxu0 0.0
  %247 = vmatpush1.msra.mxu0 0.0
  %248 = vmatprep.subr.mxu0 0.0
  %249 = vmatpush1.msra.mxu0 0.0
  %250 = vmatprep.subr.mxu0 0.0
  %251 = vmatpush1.msra.mxu0 0.0
  %252 = vmatprep.subr.mxu0 0.0
  %253 = vmatpush1.msra.mxu0 0.0
  %254 = vmatprep.subr.mxu0 0.0
  %255 = vmatpush1.msra.mxu0 0.0
  %256 = vmatprep.subr.mxu0 0.0
  %257 = vmatpush1.msra.mxu0 0.0
  %258 = vmatprep.subr.mxu0 0.0
  %259 = vmatpush1.msra.mxu0 0.0
  %260 = vmatprep.subr.mxu0 0.0
  %261 = vmatpush1.msra.mxu0 0.0
  %262 = vmatprep.subr.mxu0 0.0
  %263 = vmatpush1.msra.mxu0 0.0
  %264 = vmatprep.subr.mxu0 0.0
  %265 = vmatpush1.msra.mxu0 0.0
  %266 = vmatprep.subr.mxu0 0.0
  %267 = vmatpush1.msra.mxu0 0.0
  %268 = vmatprep.subr.mxu0 0.0
  %269 = vmatpush1.msra.mxu0 0.0
  %270 = vmatprep.subr.mxu0 0.0
  %271 = vmatpush1.msra.mxu0 0.0
  %272 = vmatprep.subr.mxu0 0.0
  %273 = vmatpush1.msra.mxu0 0.0
  %274 = vmatprep.subr.mxu0 0.0
  %275 = vmatpush1.msra.mxu0 0.0
  %276 = vmatprep.subr.mxu0 0.0
  %277 = vmatpush1.msra.mxu0 0.0
  %278 = vmatprep.subr.mxu0 0.0
  %279 = vmatpush1.msra.mxu0 0.0
  %280 = vmatprep.subr.mxu0 0.0
  %281 = vmatpush1.msra.mxu0 0.0
  %282 = vmatprep.subr.mxu0 0.0
  %283 = vmatpush1.msra.mxu0 0.0
  %284 = vmatprep.subr.mxu0 0.0
  %285 = vmatpush1.msra.mxu0 0.0
  %286 = vmatprep.subr.mxu0 0.0
  %287 = vmatpush1.msra.mxu0 0.0
  %288 = vmatprep.subr.mxu0 0.0
  %289 = vmatpush1.msra.mxu0 0.0
  %290 = vmatprep.subr.mxu0 0.0
  %291 = vmatpush1.msra.mxu0 0.0
  %292 = vmatprep.subr.mxu0 0.0
  %293 = vmatpush1.msra.mxu0 0.0
  %294 = vmatprep.subr.mxu0 0.0
  %295 = vmatpush1.msra.mxu0 0.0
  %296 = vmatprep.subr.mxu0 0.0
  %297 = vmatpush1.msra.mxu0 0.0
  %298 = vmatprep.mubr.f32.mxu0 0.0
  %299 = vmatmul.mubr.f32.gmra.mrb[0].mxu0 %v232
  %v300 = vpop.f32.mrb[0].mxu0
  %v301 = vadd.f32 %v228, %v300
  %v302 = vpop.f32.mrb[0].mxu0
  %303 = vdwg.mxu0
  %v305 = vlaneseq
  %v306 = vshrl.u32 %v305, 7
  %v307 = vsub.s32 0, %v306
  %v308 = vrot.slane %v220, %v307
  %310 = vmatprep.subr.mxu0 0.0
  %311 = vmatpush1.msra.mxu0 %v217
  %312 = vmatprep.subr.mxu0 0.0
  %313 = vmatpush1.msra.mxu0 %v218
  %314 = vmatprep.subr.mxu0 0.0
  %315 = vmatpush1.msra.mxu0 0.0
  %316 = vmatprep.subr.mxu0 0.0
  %317 = vmatpush1.msra.mxu0 0.0
  %318 = vmatprep.subr.mxu0 0.0
  %319 = vmatpush1.msra.mxu0 0.0
  %320 = vmatprep.subr.mxu0 0.0
  %321 = vmatpush1.msra.mxu0 0.0
  %322 = vmatprep.subr.mxu0 0.0
  %323 = vmatpush1.msra.mxu0 0.0
  %324 = vmatprep.subr.mxu0 0.0
  %325 = vmatpush1.msra.mxu0 0.0
  %326 = vmatprep.subr.mxu0 0.0
  %327 = vmatpush1.msra.mxu0 0.0
  %328 = vmatprep.subr.mxu0 0.0
  %329 = vmatpush1.msra.mxu0 0.0
  %330 = vmatprep.subr.mxu0 0.0
  %331 = vmatpush1.msra.mxu0 0.0
  %332 = vmatprep.subr.mxu0 0.0
  %333 = vmatpush1.msra.mxu0 0.0
  %334 = vmatprep.subr.mxu0 0.0
  %335 = vmatpush1.msra.mxu0 0.0
  %336 = vmatprep.subr.mxu0 0.0
  %337 = vmatpush1.msra.mxu0 0.0
  %338 = vmatprep.subr.mxu0 0.0
  %339 = vmatpush1.msra.mxu0 0.0
  %340 = vmatprep.subr.mxu0 0.0
  %341 = vmatpush1.msra.mxu0 0.0
  %342 = vmatprep.subr.mxu0 0.0
  %343 = vmatpush1.msra.mxu0 0.0
  %344 = vmatprep.subr.mxu0 0.0
  %345 = vmatpush1.msra.mxu0 0.0
  %346 = vmatprep.subr.mxu0 0.0
  %347 = vmatpush1.msra.mxu0 0.0
  %348 = vmatprep.subr.mxu0 0.0
  %349 = vmatpush1.msra.mxu0 0.0
  %350 = vmatprep.subr.mxu0 0.0
  %351 = vmatpush1.msra.mxu0 0.0
  %352 = vmatprep.subr.mxu0 0.0
  %353 = vmatpush1.msra.mxu0 0.0
  %354 = vmatprep.subr.mxu0 0.0
  %355 = vmatpush1.msra.mxu0 0.0
  %356 = vmatprep.subr.mxu0 0.0
  %357 = vmatpush1.msra.mxu0 0.0
  %358 = vmatprep.subr.mxu0 0.0
  %359 = vmatpush1.msra.mxu0 0.0
  %360 = vmatprep.subr.mxu0 0.0
  %361 = vmatpush1.msra.mxu0 0.0
  %362 = vmatprep.subr.mxu0 0.0
  %363 = vmatpush1.msra.mxu0 0.0
  %364 = vmatprep.subr.mxu0 0.0
  %365 = vmatpush1.msra.mxu0 0.0
  %366 = vmatprep.subr.mxu0 0.0
  %367 = vmatpush1.msra.mxu0 0.0
  %368 = vmatprep.subr.mxu0 0.0
  %369 = vmatpush1.msra.mxu0 0.0
  %370 = vmatprep.subr.mxu0 0.0
  %371 = vmatpush1.msra.mxu0 0.0
  %372 = vmatprep.subr.mxu0 0.0
  %373 = vmatpush1.msra.mxu0 0.0
  %374 = vmatprep.mubr.f32.mxu0 0.0
  %375 = vmatmul.mubr.f32.gmra.mrb[0].mxu0 %v232
  %v376 = vpop.f32.mrb[0].mxu0
  %v377 = vadd.f32 %v308, %v376
  %v378 = vpop.f32.mrb[0].mxu0
  %379 = vdwg.mxu0
  %v380 = vld [vmem:[%s5] sm:$0x3]
  %s381 = scalar_lea.vmem %s5, 14
  %v382 = vld [vmem:[%s381] sm:$0x3]
  %v383 = vadd.f32 %v221, %v301
  %v384 = vxor.u32 %v383, 2147483648
  %v385 = vmul.f32 %v384, 1.442695
  %v386 = vpow.pop %v385
  %v387 = vadd.f32 %v386, 1.0
  %v388 = vrcp.pop %v387
  %v389 = vmul.f32 1.0, %v388
  %391 = vrot.lane.b32.xlu0 %v301, 96
  %v392 = vpop.permute.xlu0 %391
  %v394 = vmul.f32 %v389, %v392
  %396 = vrot.lane.b32.xlu0 %v394, 32
  %v397 = vpop.permute.xlu0 %396
  %v399 = vadd.f32 %v221, %v397
  %v400 = vtanh.pop %v399
  %v401 = vsub.f32 1.0, %v389
  %403 = vrot.lane.b32.xlu0 %v400, 112
  %v404 = vpop.permute.xlu0 %403
  %v406 = vmul.f32 %v401, %v404
  %v407 = vmul.f32 %v389, 0.0
  %v408 = vadd.f32 %v406, %v407
  %v409 = vadd.f32 %v223, %v377
  %v410 = vxor.u32 %v409, 2147483648
  %v411 = vmul.f32 %v410, 1.442695
  %v412 = vpow.pop %v411
  %v413 = vadd.f32 %v412, 1.0
  %v414 = vrcp.pop %v413
  %v415 = vmul.f32 1.0, %v414
  %417 = vrot.lane.b32.xlu0 %v377, 96
  %v418 = vpop.permute.xlu0 %417
  %v420 = vmul.f32 %v415, %v418
  %422 = vrot.lane.b32.xlu0 %v420, 32
  %v423 = vpop.permute.xlu0 %422
  %v425 = vadd.f32 %v223, %v423
  %v426 = vtanh.pop %v425
  %v427 = vsub.f32 1.0, %v415
  %429 = vrot.lane.b32.xlu0 %v426, 112
  %v430 = vpop.permute.xlu0 %429
  %v432 = vmul.f32 %v427, %v430
  %v433 = vmul.f32 %v415, 0.0
  %v434 = vadd.f32 %v432, %v433
  %436 = vset.pattern.permute.xlu0 0
  %437 = vperm.xlu0 %436, %v380
  %v438 = vpop.permute.xlu0 %437
  %v440 = vmul.f32 %v438, %v408
  %v441 = vsub.f32 1.0, %v380
  %443 = vset.pattern.permute.xlu0 0
  %444 = vperm.xlu0 %443, %v441
  %v445 = vpop.permute.xlu0 %444
  %v447 = vmul.f32 %v445, 0.0
  %v448 = vadd.f32 %v440, %v447
  %450 = vset.pattern.permute.xlu0 0
  %451 = vperm.xlu0 %450, %v382
  %v452 = vpop.permute.xlu0 %451
  %v454 = vmul.f32 %v452, %v434
  %v455 = vsub.f32 1.0, %v382
  %457 = vset.pattern.permute.xlu0 0
  %458 = vperm.xlu0 %457, %v455
  %v459 = vpop.permute.xlu0 %458
  %v461 = vmul.f32 %v459, 0.0
  %v462 = vadd.f32 %v454, %v461
  %v463 = vmul.f32 %v438, %v448
  %v464 = vmul.f32 %v441, 0.0
  %466 = vset.pattern.permute.xlu0 0
  %467 = vperm.xlu0 %466, %v464
  %v468 = vpop.permute.xlu0 %467
  %v470 = vadd.f32 %v463, %v468
  %472 = vrot.lane.b32.xlu0 %v470, 112
  %v473 = vpop.permute.xlu0 %472
  %vm475 = vcmask 123904
  %476 = vst.msk [vmem:[%s6] sm:$0x3] %vm475, %v473
  %v477 = vmul.f32 %v452, %v462
  %v478 = vmul.f32 %v455, 0.0
  %480 = vset.pattern.permute.xlu0 0
  %481 = vperm.xlu0 %480, %v478
  %v482 = vpop.permute.xlu0 %481
  %v484 = vadd.f32 %v477, %v482
  %486 = vrot.lane.b32.xlu0 %v484, 112
  %v487 = vpop.permute.xlu0 %486
  %489 = vst.msk [vmem:[%s7 + $0xe] sm:$0x3] %vm475, %v487
  %s490 = scalar_lea.vmem [#allocation2], 1
  %v491 = vld [vmem:[%s490] ss:$8 sm:$0x3]
  %s492 = scalar_lea.vmem [#allocation3], 6
  %v493 = vld [vmem:[%s492] ss:$8 sm:$0x3]
  %495 = vrot.lane.b32.xlu0 %v448, 112
  %v496 = vpop.permute.xlu0 %495
  %v497 = vsel %vm230, %v496, 0
  %499 = vmatprep.subr.mxu0 0.0
  %500 = vmatpush1.msra.mxu0 %v213
  %501 = vmatprep.subr.mxu0 0.0
  %502 = vmatpush1.msra.mxu0 %v214
  %503 = vmatprep.subr.mxu0 0.0
  %504 = vmatpush1.msra.mxu0 0.0
  %505 = vmatprep.subr.mxu0 0.0
  %506 = vmatpush1.msra.mxu0 0.0
  %507 = vmatprep.subr.mxu0 0.0
  %508 = vmatpush1.msra.mxu0 0.0
  %509 = vmatprep.subr.mxu0 0.0
  %510 = vmatpush1.msra.mxu0 0.0
  %511 = vmatprep.subr.mxu0 0.0
  %512 = vmatpush1.msra.mxu0 0.0
  %513 = vmatprep.subr.mxu0 0.0
  %514 = vmatpush1.msra.mxu0 0.0
  %515 = vmatprep.subr.mxu0 0.0
  %516 = vmatpush1.msra.mxu0 0.0
  %517 = vmatprep.subr.mxu0 0.0
  %518 = vmatpush1.msra.mxu0 0.0
  %519 = vmatprep.subr.mxu0 0.0
  %520 = vmatpush1.msra.mxu0 0.0
  %521 = vmatprep.subr.mxu0 0.0
  %522 = vmatpush1.msra.mxu0 0.0
  %523 = vmatprep.subr.mxu0 0.0
  %524 = vmatpush1.msra.mxu0 0.0
  %525 = vmatprep.subr.mxu0 0.0
  %526 = vmatpush1.msra.mxu0 0.0
  %527 = vmatprep.subr.mxu0 0.0
  %528 = vmatpush1.msra.mxu0 0.0
  %529 = vmatprep.subr.mxu0 0.0
  %530 = vmatpush1.msra.mxu0 0.0
  %531 = vmatprep.subr.mxu0 0.0
  %532 = vmatpush1.msra.mxu0 0.0
  %533 = vmatprep.subr.mxu0 0.0
  %534 = vmatpush1.msra.mxu0 0.0
  %535 = vmatprep.subr.mxu0 0.0
  %536 = vmatpush1.msra.mxu0 0.0
  %537 = vmatprep.subr.mxu0 0.0
  %538 = vmatpush1.msra.mxu0 0.0
  %539 = vmatprep.subr.mxu0 0.0
  %540 = vmatpush1.msra.mxu0 0.0
  %541 = vmatprep.subr.mxu0 0.0
  %542 = vmatpush1.msra.mxu0 0.0
  %543 = vmatprep.subr.mxu0 0.0
  %544 = vmatpush1.msra.mxu0 0.0
  %545 = vmatprep.subr.mxu0 0.0
  %546 = vmatpush1.msra.mxu0 0.0
  %547 = vmatprep.subr.mxu0 0.0
  %548 = vmatpush1.msra.mxu0 0.0
  %549 = vmatprep.subr.mxu0 0.0
  %550 = vmatpush1.msra.mxu0 0.0
  %551 = vmatprep.subr.mxu0 0.0
  %552 = vmatpush1.msra.mxu0 0.0
  %553 = vmatprep.subr.mxu0 0.0
  %554 = vmatpush1.msra.mxu0 0.0
  %555 = vmatprep.subr.mxu0 0.0
  %556 = vmatpush1.msra.mxu0 0.0
  %557 = vmatprep.subr.mxu0 0.0
  %558 = vmatpush1.msra.mxu0 0.0
  %559 = vmatprep.subr.mxu0 0.0
  %560 = vmatpush1.msra.mxu0 0.0
  %561 = vmatprep.subr.mxu0 0.0
  %562 = vmatpush1.msra.mxu0 0.0
  %563 = vmatprep.mubr.f32.mxu0 0.0
  %564 = vmatmul.mubr.f32.gmra.mrb[0].mxu0 %v497
  %v565 = vpop.f32.mrb[0].mxu0
  %v566 = vadd.f32 %v228, %v565
  %v567 = vpop.f32.mrb[0].mxu0
  %568 = vdwg.mxu0
  %570 = vrot.lane.b32.xlu0 %v462, 112
  %v571 = vpop.permute.xlu0 %570
  %v572 = vsel %vm230, %v571, 0
  %574 = vmatprep.subr.mxu0 0.0
  %575 = vmatpush1.msra.mxu0 %v217
  %576 = vmatprep.subr.mxu0 0.0
  %577 = vmatpush1.msra.mxu0 %v218
  %578 = vmatprep.subr.mxu0 0.0
  %579 = vmatpush1.msra.mxu0 0.0
  %580 = vmatprep.subr.mxu0 0.0
  %581 = vmatpush1.msra.mxu0 0.0
  %582 = vmatprep.subr.mxu0 0.0
  %583 = vmatpush1.msra.mxu0 0.0
  %584 = vmatprep.subr.mxu0 0.0
  %585 = vmatpush1.msra.mxu0 0.0
  %586 = vmatprep.subr.mxu0 0.0
  %587 = vmatpush1.msra.mxu0 0.0
  %588 = vmatprep.subr.mxu0 0.0
  %589 = vmatpush1.msra.mxu0 0.0
  %590 = vmatprep.subr.mxu0 0.0
  %591 = vmatpush1.msra.mxu0 0.0
  %592 = vmatprep.subr.mxu0 0.0
  %593 = vmatpush1.msra.mxu0 0.0
  %594 = vmatprep.subr.mxu0 0.0
  %595 = vmatpush1.msra.mxu0 0.0
  %596 = vmatprep.subr.mxu0 0.0
  %597 = vmatpush1.msra.mxu0 0.0
  %598 = vmatprep.subr.mxu0 0.0
  %599 = vmatpush1.msra.mxu0 0.0
  %600 = vmatprep.subr.mxu0 0.0
  %601 = vmatpush1.msra.mxu0 0.0
  %602 = vmatprep.subr.mxu0 0.0
  %603 = vmatpush1.msra.mxu0 0.0
  %604 = vmatprep.subr.mxu0 0.0
  %605 = vmatpush1.msra.mxu0 0.0
  %606 = vmatprep.subr.mxu0 0.0
  %607 = vmatpush1.msra.mxu0 0.0
  %608 = vmatprep.subr.mxu0 0.0
  %609 = vmatpush1.msra.mxu0 0.0
  %610 = vmatprep.subr.mxu0 0.0
  %611 = vmatpush1.msra.mxu0 0.0
  %612 = vmatprep.subr.mxu0 0.0
  %613 = vmatpush1.msra.mxu0 0.0
  %614 = vmatprep.subr.mxu0 0.0
  %615 = vmatpush1.msra.mxu0 0.0
  %616 = vmatprep.subr.mxu0 0.0
  %617 = vmatpush1.msra.mxu0 0.0
  %618 = vmatprep.subr.mxu0 0.0
  %619 = vmatpush1.msra.mxu0 0.0
  %620 = vmatprep.subr.mxu0 0.0
  %621 = vmatpush1.msra.mxu0 0.0
  %622 = vmatprep.subr.mxu0 0.0
  %623 = vmatpush1.msra.mxu0 0.0
  %624 = vmatprep.subr.mxu0 0.0
  %625 = vmatpush1.msra.mxu0 0.0
  %626 = vmatprep.subr.mxu0 0.0
  %627 = vmatpush1.msra.mxu0 0.0
  %628 = vmatprep.subr.mxu0 0.0
  %629 = vmatpush1.msra.mxu0 0.0
  %630 = vmatprep.subr.mxu0 0.0
  %631 = vmatpush1.msra.mxu0 0.0
  %632 = vmatprep.subr.mxu0 0.0
  %633 = vmatpush1.msra.mxu0 0.0
  %634 = vmatprep.subr.mxu0 0.0
  %635 = vmatpush1.msra.mxu0 0.0
  %636 = vmatprep.subr.mxu0 0.0
  %637 = vmatpush1.msra.mxu0 0.0
  %638 = vmatprep.mubr.f32.mxu0 0.0
  %639 = vmatmul.mubr.f32.gmra.mrb[0].mxu0 %v572
  %v640 = vpop.f32.mrb[0].mxu0
  %v641 = vadd.f32 %v308, %v640
  %v642 = vpop.f32.mrb[0].mxu0
  %643 = vdwg.mxu0
  %s644 = scalar_lea.vmem %s5, 2
  %v645 = vld [vmem:[%s644] sm:$0x3]
  %s646 = scalar_lea.vmem %s5, 12
  %v647 = vld [vmem:[%s646] sm:$0x3]
  %v648 = vadd.f32 %v491, %v566
  %v649 = vxor.u32 %v648, 2147483648
  %v650 = vmul.f32 %v649, 1.442695
  %v651 = vpow.pop %v650
  %v652 = vadd.f32 %v651, 1.0
  %v653 = vrcp.pop %v652
  %v654 = vmul.f32 1.0, %v653
  %656 = vrot.lane.b32.xlu0 %v566, 96
  %v657 = vpop.permute.xlu0 %656
  %v659 = vmul.f32 %v654, %v657
  %661 = vrot.lane.b32.xlu0 %v659, 32
  %v662 = vpop.permute.xlu0 %661
  %v664 = vadd.f32 %v491, %v662
  %v665 = vtanh.pop %v664
  %v666 = vsub.f32 1.0, %v654
  %668 = vrot.lane.b32.xlu0 %v665, 112
  %v669 = vpop.permute.xlu0 %668
  %v671 = vmul.f32 %v666, %v669
  %v672 = vmul.f32 %v654, %v448
  %v673 = vadd.f32 %v671, %v672
  %v674 = vadd.f32 %v493, %v641
  %v675 = vxor.u32 %v674, 2147483648
  %v676 = vmul.f32 %v675, 1.442695
  %v677 = vpow.pop %v676
  %v678 = vadd.f32 %v677, 1.0
  %v679 = vrcp.pop %v678
  %v680 = vmul.f32 1.0, %v679
  %682 = vrot.lane.b32.xlu0 %v641, 96
  %v683 = vpop.permute.xlu0 %682
  %v685 = vmul.f32 %v680, %v683
  %687 = vrot.lane.b32.xlu0 %v685, 32
  %v688 = vpop.permute.xlu0 %687
  %v690 = vadd.f32 %v493, %v688
  %v691 = vtanh.pop %v690
  %v692 = vsub.f32 1.0, %v680
  %694 = vrot.lane.b32.xlu0 %v691, 112
  %v695 = vpop.permute.xlu0 %694
  %v697 = vmul.f32 %v692, %v695
  %v698 = vmul.f32 %v680, %v462
  %v699 = vadd.f32 %v697, %v698
  %701 = vset.pattern.permute.xlu0 0
  %702 = vperm.xlu0 %701, %v645
  %v703 = vpop.permute.xlu0 %702
  %v705 = vmul.f32 %v703, %v673
  %v706 = vsub.f32 1.0, %v645
  %708 = vset.pattern.permute.xlu0 0
  %709 = vperm.xlu0 %708, %v706
  %v710 = vpop.permute.xlu0 %709
  %v712 = vmul.f32 %v710, %v448
  %v713 = vadd.f32 %v705, %v712
  %715 = vset.pattern.permute.xlu0 0
  %716 = vperm.xlu0 %715, %v647
  %v717 = vpop.permute.xlu0 %716
  %v719 = vmul.f32 %v717, %v699
  %v720 = vsub.f32 1.0, %v647
  %722 = vset.pattern.permute.xlu0 0
  %723 = vperm.xlu0 %722, %v720
  %v724 = vpop.permute.xlu0 %723
  %v726 = vmul.f32 %v724, %v462
  %v727 = vadd.f32 %v719, %v726
  %v728 = vmul.f32 %v703, %v713
  %v729 = vmul.f32 %v706, 0.0
  %731 = vset.pattern.permute.xlu0 0
  %732 = vperm.xlu0 %731, %v729
  %v733 = vpop.permute.xlu0 %732
  %v735 = vadd.f32 %v728, %v733
  %737 = vrot.lane.b32.xlu0 %v735, 112
  %v738 = vpop.permute.xlu0 %737
  %740 = vst.msk [vmem:[%s6 + $0x2] sm:$0x3] %vm475, %v738
  %v741 = vmul.f32 %v717, %v727
  %v742 = vmul.f32 %v720, 0.0
  %744 = vset.pattern.permute.xlu0 0
  %745 = vperm.xlu0 %744, %v742
  %v746 = vpop.permute.xlu0 %745
  %v748 = vadd.f32 %v741, %v746
  %750 = vrot.lane.b32.xlu0 %v748, 112
  %v751 = vpop.permute.xlu0 %750
  %753 = vst.msk [vmem:[%s7 + $0xc] sm:$0x3] %vm475, %v751
  %s754 = scalar_lea.vmem [#allocation2], 2
  %v755 = vld [vmem:[%s754] ss:$8 sm:$0x3]
  %s756 = scalar_lea.vmem [#allocation3], 5
  %v757 = vld [vmem:[%s756] ss:$8 sm:$0x3]
  %759 = vrot.lane.b32.xlu0 %v713, 112
  %v760 = vpop.permute.xlu0 %759
  %v761 = vsel %vm230, %v760, 0
  %763 = vmatprep.subr.mxu0 0.0
  %764 = vmatpush1.msra.mxu0 %v213
  %765 = vmatprep.subr.mxu0 0.0
  %766 = vmatpush1.msra.mxu0 %v214
  %767 = vmatprep.subr.mxu0 0.0
  %768 = vmatpush1.msra.mxu0 0.0
  %769 = vmatprep.subr.mxu0 0.0
  %770 = vmatpush1.msra.mxu0 0.0
  %771 = vmatprep.subr.mxu0 0.0
  %772 = vmatpush1.msra.mxu0 0.0
  %773 = vmatprep.subr.mxu0 0.0
  %774 = vmatpush1.msra.mxu0 0.0
  %775 = vmatprep.subr.mxu0 0.0
  %776 = vmatpush1.msra.mxu0 0.0
  %777 = vmatprep.subr.mxu0 0.0
  %778 = vmatpush1.msra.mxu0 0.0
  %779 = vmatprep.subr.mxu0 0.0
  %780 = vmatpush1.msra.mxu0 0.0
  %781 = vmatprep.subr.mxu0 0.0
  %782 = vmatpush1.msra.mxu0 0.0
  %783 = vmatprep.subr.mxu0 0.0
  %784 = vmatpush1.msra.mxu0 0.0
  %785 = vmatprep.subr.mxu0 0.0
  %786 = vmatpush1.msra.mxu0 0.0
  %787 = vmatprep.subr.mxu0 0.0
  %788 = vmatpush1.msra.mxu0 0.0
  %789 = vmatprep.subr.mxu0 0.0
  %790 = vmatpush1.msra.mxu0 0.0
  %791 = vmatprep.subr.mxu0 0.0
  %792 = vmatpush1.msra.mxu0 0.0
  %793 = vmatprep.subr.mxu0 0.0
  %794 = vmatpush1.msra.mxu0 0.0
  %795 = vmatprep.subr.mxu0 0.0
  %796 = vmatpush1.msra.mxu0 0.0
  %797 = vmatprep.subr.mxu0 0.0
  %798 = vmatpush1.msra.mxu0 0.0
  %799 = vmatprep.subr.mxu0 0.0
  %800 = vmatpush1.msra.mxu0 0.0
  %801 = vmatprep.subr.mxu0 0.0
  %802 = vmatpush1.msra.mxu0 0.0
  %803 = vmatprep.subr.mxu0 0.0
  %804 = vmatpush1.msra.mxu0 0.0
  %805 = vmatprep.subr.mxu0 0.0
  %806 = vmatpush1.msra.mxu0 0.0
  %807 = vmatprep.subr.mxu0 0.0
  %808 = vmatpush1.msra.mxu0 0.0
  %809 = vmatprep.subr.mxu0 0.0
  %810 = vmatpush1.msra.mxu0 0.0
  %811 = vmatprep.subr.mxu0 0.0
  %812 = vmatpush1.msra.mxu0 0.0
  %813 = vmatprep.subr.mxu0 0.0
  %814 = vmatpush1.msra.mxu0 0.0
  %815 = vmatprep.subr.mxu0 0.0
  %816 = vmatpush1.msra.mxu0 0.0
  %817 = vmatprep.subr.mxu0 0.0
  %818 = vmatpush1.msra.mxu0 0.0
  %819 = vmatprep.subr.mxu0 0.0
  %820 = vmatpush1.msra.mxu0 0.0
  %821 = vmatprep.subr.mxu0 0.0
  %822 = vmatpush1.msra.mxu0 0.0
  %823 = vmatprep.subr.mxu0 0.0
  %824 = vmatpush1.msra.mxu0 0.0
  %825 = vmatprep.subr.mxu0 0.0
  %826 = vmatpush1.msra.mxu0 0.0
  %827 = vmatprep.mubr.f32.mxu0 0.0
  %828 = vmatmul.mubr.f32.gmra.mrb[0].mxu0 %v761
  %v829 = vpop.f32.mrb[0].mxu0
  %v830 = vadd.f32 %v228, %v829
  %v831 = vpop.f32.mrb[0].mxu0
  %832 = vdwg.mxu0
  %834 = vrot.lane.b32.xlu0 %v727, 112
  %v835 = vpop.permute.xlu0 %834
  %v836 = vsel %vm230, %v835, 0
  %838 = vmatprep.subr.mxu0 0.0
  %839 = vmatpush1.msra.mxu0 %v217
  %840 = vmatprep.subr.mxu0 0.0
  %841 = vmatpush1.msra.mxu0 %v218
  %842 = vmatprep.subr.mxu0 0.0
  %843 = vmatpush1.msra.mxu0 0.0
  %844 = vmatprep.subr.mxu0 0.0
  %845 = vmatpush1.msra.mxu0 0.0
  %846 = vmatprep.subr.mxu0 0.0
  %847 = vmatpush1.msra.mxu0 0.0
  %848 = vmatprep.subr.mxu0 0.0
  %849 = vmatpush1.msra.mxu0 0.0
  %850 = vmatprep.subr.mxu0 0.0
  %851 = vmatpush1.msra.mxu0 0.0
  %852 = vmatprep.subr.mxu0 0.0
  %853 = vmatpush1.msra.mxu0 0.0
  %854 = vmatprep.subr.mxu0 0.0
  %855 = vmatpush1.msra.mxu0 0.0
  %856 = vmatprep.subr.mxu0 0.0
  %857 = vmatpush1.msra.mxu0 0.0
  %858 = vmatprep.subr.mxu0 0.0
  %859 = vmatpush1.msra.mxu0 0.0
  %860 = vmatprep.subr.mxu0 0.0
  %861 = vmatpush1.msra.mxu0 0.0
  %862 = vmatprep.subr.mxu0 0.0
  %863 = vmatpush1.msra.mxu0 0.0
  %864 = vmatprep.subr.mxu0 0.0
  %865 = vmatpush1.msra.mxu0 0.0
  %866 = vmatprep.subr.mxu0 0.0
  %867 = vmatpush1.msra.mxu0 0.0
  %868 = vmatprep.subr.mxu0 0.0
  %869 = vmatpush1.msra.mxu0 0.0
  %870 = vmatprep.subr.mxu0 0.0
  %871 = vmatpush1.msra.mxu0 0.0
  %872 = vmatprep.subr.mxu0 0.0
  %873 = vmatpush1.msra.mxu0 0.0
  %874 = vmatprep.subr.mxu0 0.0
  %875 = vmatpush1.msra.mxu0 0.0
  %876 = vmatprep.subr.mxu0 0.0
  %877 = vmatpush1.msra.mxu0 0.0
  %878 = vmatprep.subr.mxu0 0.0
  %879 = vmatpush1.msra.mxu0 0.0
  %880 = vmatprep.subr.mxu0 0.0
  %881 = vmatpush1.msra.mxu0 0.0
  %882 = vmatprep.subr.mxu0 0.0
  %883 = vmatpush1.msra.mxu0 0.0
  %884 = vmatprep.subr.mxu0 0.0
  %885 = vmatpush1.msra.mxu0 0.0
  %886 = vmatprep.subr.mxu0 0.0
  %887 = vmatpush1.msra.mxu0 0.0
  %888 = vmatprep.subr.mxu0 0.0
  %889 = vmatpush1.msra.mxu0 0.0
  %890 = vmatprep.subr.mxu0 0.0
  %891 = vmatpush1.msra.mxu0 0.0
  %892 = vmatprep.subr.mxu0 0.0
  %893 = vmatpush1.msra.mxu0 0.0
  %894 = vmatprep.subr.mxu0 0.0
  %895 = vmatpush1.msra.mxu0 0.0
  %896 = vmatprep.subr.mxu0 0.0
  %897 = vmatpush1.msra.mxu0 0.0
  %898 = vmatprep.subr.mxu0 0.0
  %899 = vmatpush1.msra.mxu0 0.0
  %900 = vmatprep.subr.mxu0 0.0
  %901 = vmatpush1.msra.mxu0 0.0
  %902 = vmatprep.mubr.f32.mxu0 0.0
  %903 = vmatmul.mubr.f32.gmra.mrb[0].mxu0 %v836
  %v904 = vpop.f32.mrb[0].mxu0
  %v905 = vadd.f32 %v308, %v904
  %v906 = vpop.f32.mrb[0].mxu0
  %907 = vdwg.mxu0
  %s908 = scalar_lea.vmem %s5, 4
  %v909 = vld [vmem:[%s908] sm:$0x3]
  %s910 = scalar_lea.vmem %s5, 10
  %v911 = vld [vmem:[%s910] sm:$0x3]
  %v912 = vadd.f32 %v755, %v830
  %v913 = vxor.u32 %v912, 2147483648
  %v914 = vmul.f32 %v913, 1.442695
  %v915 = vpow.pop %v914
  %v916 = vadd.f32 %v915, 1.0
  %v917 = vrcp.pop %v916
  %v918 = vmul.f32 1.0, %v917
  %920 = vrot.lane.b32.xlu0 %v830, 96
  %v921 = vpop.permute.xlu0 %920
  %v923 = vmul.f32 %v918, %v921
  %925 = vrot.lane.b32.xlu0 %v923, 32
  %v926 = vpop.permute.xlu0 %925
  %v928 = vadd.f32 %v755, %v926
  %v929 = vtanh.pop %v928
  %v930 = vsub.f32 1.0, %v918
  %932 = vrot.lane.b32.xlu0 %v929, 112
  %v933 = vpop.permute.xlu0 %932
  %v935 = vmul.f32 %v930, %v933
  %v936 = vmul.f32 %v918, %v713
  %v937 = vadd.f32 %v935, %v936
  %v938 = vadd.f32 %v757, %v905
  %v939 = vxor.u32 %v938, 2147483648
  %v940 = vmul.f32 %v939, 1.442695
  %v941 = vpow.pop %v940
  %v942 = vadd.f32 %v941, 1.0
  %v943 = vrcp.pop %v942
  %v944 = vmul.f32 1.0, %v943
  %946 = vrot.lane.b32.xlu0 %v905, 96
  %v947 = vpop.permute.xlu0 %946
  %v949 = vmul.f32 %v944, %v947
  %951 = vrot.lane.b32.xlu0 %v949, 32
  %v952 = vpop.permute.xlu0 %951
  %v954 = vadd.f32 %v757, %v952
  %v955 = vtanh.pop %v954
  %v956 = vsub.f32 1.0, %v944
  %958 = vrot.lane.b32.xlu0 %v955, 112
  %v959 = vpop.permute.xlu0 %958
  %v961 = vmul.f32 %v956, %v959
  %v962 = vmul.f32 %v944, %v727
  %v963 = vadd.f32 %v961, %v962
  %965 = vset.pattern.permute.xlu0 0
  %966 = vperm.xlu0 %965, %v909
  %v967 = vpop.permute.xlu0 %966
  %v969 = vmul.f32 %v967, %v937
  %v970 = vsub.f32 1.0, %v909
  %972 = vset.pattern.permute.xlu0 0
  %973 = vperm.xlu0 %972, %v970
  %v974 = vpop.permute.xlu0 %973
  %v976 = vmul.f32 %v974, %v713
  %v977 = vadd.f32 %v969, %v976
  %979 = vset.pattern.permute.xlu0 0
  %980 = vperm.xlu0 %979, %v911
  %v981 = vpop.permute.xlu0 %980
  %v983 = vmul.f32 %v981, %v963
  %v984 = vsub.f32 1.0, %v911
  %986 = vset.pattern.permute.xlu0 0
  %987 = vperm.xlu0 %986, %v984
  %v988 = vpop.permute.xlu0 %987
  %v990 = vmul.f32 %v988, %v727
  %v991 = vadd.f32 %v983, %v990
  %v992 = vmul.f32 %v967, %v977
  %v993 = vmul.f32 %v970, 0.0
  %995 = vset.pattern.permute.xlu0 0
  %996 = vperm.xlu0 %995, %v993
  %v997 = vpop.permute.xlu0 %996
  %v999 = vadd.f32 %v992, %v997
  %1001 = vrot.lane.b32.xlu0 %v999, 112
  %v1002 = vpop.permute.xlu0 %1001
  %1004 = vst.msk [vmem:[%s6 + $0x4] sm:$0x3] %vm475, %v1002
  %v1005 = vmul.f32 %v981, %v991
  %v1006 = vmul.f32 %v984, 0.0
  %1008 = vset.pattern.permute.xlu0 0
  %1009 = vperm.xlu0 %1008, %v1006
  %v1010 = vpop.permute.xlu0 %1009
  %v1012 = vadd.f32 %v1005, %v1010
  %1014 = vrot.lane.b32.xlu0 %v1012, 112
  %v1015 = vpop.permute.xlu0 %1014
  %1017 = vst.msk [vmem:[%s7 + $0xa] sm:$0x3] %vm475, %v1015
  %s1018 = scalar_lea.vmem [#allocation2], 3
  %v1019 = vld [vmem:[%s1018] ss:$8 sm:$0x3]
  %s1020 = scalar_lea.vmem [#allocation3], 4
  %v1021 = vld [vmem:[%s1020] ss:$8 sm:$0x3]
  %1023 = vrot.lane.b32.xlu0 %v977, 112
  %v1024 = vpop.permute.xlu0 %1023
  %v1025 = vsel %vm230, %v1024, 0
  %1027 = vmatprep.subr.mxu0 0.0
  %1028 = vmatpush1.msra.mxu0 %v213
  %1029 = vmatprep.subr.mxu0 0.0
  %1030 = vmatpush1.msra.mxu0 %v214
  %1031 = vmatprep.subr.mxu0 0.0
  %1032 = vmatpush1.msra.mxu0 0.0
  %1033 = vmatprep.subr.mxu0 0.0
  %1034 = vmatpush1.msra.mxu0 0.0
  %1035 = vmatprep.subr.mxu0 0.0
  %1036 = vmatpush1.msra.mxu0 0.0
  %1037 = vmatprep.subr.mxu0 0.0
  %1038 = vmatpush1.msra.mxu0 0.0
  %1039 = vmatprep.subr.mxu0 0.0
  %1040 = vmatpush1.msra.mxu0 0.0
  %1041 = vmatprep.subr.mxu0 0.0
  %1042 = vmatpush1.msra.mxu0 0.0
  %1043 = vmatprep.subr.mxu0 0.0
  %1044 = vmatpush1.msra.mxu0 0.0
  %1045 = vmatprep.subr.mxu0 0.0
  %1046 = vmatpush1.msra.mxu0 0.0
  %1047 = vmatprep.subr.mxu0 0.0
  %1048 = vmatpush1.msra.mxu0 0.0
  %1049 = vmatprep.subr.mxu0 0.0
  %1050 = vmatpush1.msra.mxu0 0.0
  %1051 = vmatprep.subr.mxu0 0.0
  %1052 = vmatpush1.msra.mxu0 0.0
  %1053 = vmatprep.subr.mxu0 0.0
  %1054 = vmatpush1.msra.mxu0 0.0
  %1055 = vmatprep.subr.mxu0 0.0
  %1056 = vmatpush1.msra.mxu0 0.0
  %1057 = vmatprep.subr.mxu0 0.0
  %1058 = vmatpush1.msra.mxu0 0.0
  %1059 = vmatprep.subr.mxu0 0.0
  %1060 = vmatpush1.msra.mxu0 0.0
  %1061 = vmatprep.subr.mxu0 0.0
  %1062 = vmatpush1.msra.mxu0 0.0
  %1063 = vmatprep.subr.mxu0 0.0
  %1064 = vmatpush1.msra.mxu0 0.0
  %1065 = vmatprep.subr.mxu0 0.0
  %1066 = vmatpush1.msra.mxu0 0.0
  %1067 = vmatprep.subr.mxu0 0.0
  %1068 = vmatpush1.msra.mxu0 0.0
  %1069 = vmatprep.subr.mxu0 0.0
  %1070 = vmatpush1.msra.mxu0 0.0
  %1071 = vmatprep.subr.mxu0 0.0
  %1072 = vmatpush1.msra.mxu0 0.0
  %1073 = vmatprep.subr.mxu0 0.0
  %1074 = vmatpush1.msra.mxu0 0.0
  %1075 = vmatprep.subr.mxu0 0.0
  %1076 = vmatpush1.msra.mxu0 0.0
  %1077 = vmatprep.subr.mxu0 0.0
  %1078 = vmatpush1.msra.mxu0 0.0
  %1079 = vmatprep.subr.mxu0 0.0
  %1080 = vmatpush1.msra.mxu0 0.0
  %1081 = vmatprep.subr.mxu0 0.0
  %1082 = vmatpush1.msra.mxu0 0.0
  %1083 = vmatprep.subr.mxu0 0.0
  %1084 = vmatpush1.msra.mxu0 0.0
  %1085 = vmatprep.subr.mxu0 0.0
  %1086 = vmatpush1.msra.mxu0 0.0
  %1087 = vmatprep.subr.mxu0 0.0
  %1088 = vmatpush1.msra.mxu0 0.0
  %1089 = vmatprep.subr.mxu0 0.0
  %1090 = vmatpush1.msra.mxu0 0.0
  %1091 = vmatprep.mubr.f32.mxu0 0.0
  %1092 = vmatmul.mubr.f32.gmra.mrb[0].mxu0 %v1025
  %v1093 = vpop.f32.mrb[0].mxu0
  %v1094 = vadd.f32 %v228, %v1093
  %v1095 = vpop.f32.mrb[0].mxu0
  %1096 = vdwg.mxu0
  %1098 = vrot.lane.b32.xlu0 %v991, 112
  %v1099 = vpop.permute.xlu0 %1098
  %v1100 = vsel %vm230, %v1099, 0
  %1102 = vmatprep.subr.mxu0 0.0
  %1103 = vmatpush1.msra.mxu0 %v217
  %1104 = vmatprep.subr.mxu0 0.0
  %1105 = vmatpush1.msra.mxu0 %v218
  %1106 = vmatprep.subr.mxu0 0.0
  %1107 = vmatpush1.msra.mxu0 0.0
  %1108 = vmatprep.subr.mxu0 0.0
  %1109 = vmatpush1.msra.mxu0 0.0
  %1110 = vmatprep.subr.mxu0 0.0
  %1111 = vmatpush1.msra.mxu0 0.0
  %1112 = vmatprep.subr.mxu0 0.0
  %1113 = vmatpush1.msra.mxu0 0.0
  %1114 = vmatprep.subr.mxu0 0.0
  %1115 = vmatpush1.msra.mxu0 0.0
  %1116 = vmatprep.subr.mxu0 0.0
  %1117 = vmatpush1.msra.mxu0 0.0
  %1118 = vmatprep.subr.mxu0 0.0
  %1119 = vmatpush1.msra.mxu0 0.0
  %1120 = vmatprep.subr.mxu0 0.0
  %1121 = vmatpush1.msra.mxu0 0.0
  %1122 = vmatprep.subr.mxu0 0.0
  %1123 = vmatpush1.msra.mxu0 0.0
  %1124 = vmatprep.subr.mxu0 0.0
  %1125 = vmatpush1.msra.mxu0 0.0
  %1126 = vmatprep.subr.mxu0 0.0
  %1127 = vmatpush1.msra.mxu0 0.0
  %1128 = vmatprep.subr.mxu0 0.0
  %1129 = vmatpush1.msra.mxu0 0.0
  %1130 = vmatprep.subr.mxu0 0.0
  %1131 = vmatpush1.msra.mxu0 0.0
  %1132 = vmatprep.subr.mxu0 0.0
  %1133 = vmatpush1.msra.mxu0 0.0
  %1134 = vmatprep.subr.mxu0 0.0
  %1135 = vmatpush1.msra.mxu0 0.0
  %1136 = vmatprep.subr.mxu0 0.0
  %1137 = vmatpush1.msra.mxu0 0.0
  %1138 = vmatprep.subr.mxu0 0.0
  %1139 = vmatpush1.msra.mxu0 0.0
  %1140 = vmatprep.subr.mxu0 0.0
  %1141 = vmatpush1.msra.mxu0 0.0
  %1142 = vmatprep.subr.mxu0 0.0
  %1143 = vmatpush1.msra.mxu0 0.0
  %1144 = vmatprep.subr.mxu0 0.0
  %1145 = vmatpush1.msra.mxu0 0.0
  %1146 = vmatprep.subr.mxu0 0.0
  %1147 = vmatpush1.msra.mxu0 0.0
  %1148 = vmatprep.subr.mxu0 0.0
  %1149 = vmatpush1.msra.mxu0 0.0
  %1150 = vmatprep.subr.mxu0 0.0
  %1151 = vmatpush1.msra.mxu0 0.0
  %1152 = vmatprep.subr.mxu0 0.0
  %1153 = vmatpush1.msra.mxu0 0.0
  %1154 = vmatprep.subr.mxu0 0.0
  %1155 = vmatpush1.msra.mxu0 0.0
  %1156 = vmatprep.subr.mxu0 0.0
  %1157 = vmatpush1.msra.mxu0 0.0
  %1158 = vmatprep.subr.mxu0 0.0
  %1159 = vmatpush1.msra.mxu0 0.0
  %1160 = vmatprep.subr.mxu0 0.0
  %1161 = vmatpush1.msra.mxu0 0.0
  %1162 = vmatprep.subr.mxu0 0.0
  %1163 = vmatpush1.msra.mxu0 0.0
  %1164 = vmatprep.subr.mxu0 0.0
  %1165 = vmatpush1.msra.mxu0 0.0
  %1166 = vmatprep.mubr.f32.mxu0 0.0
  %1167 = vmatmul.mubr.f32.gmra.mrb[0].mxu0 %v1100
  %v1168 = vpop.f32.mrb[0].mxu0
  %v1169 = vadd.f32 %v308, %v1168
  %v1170 = vpop.f32.mrb[0].mxu0
  %1171 = vdwg.mxu0
  %s1172 = scalar_lea.vmem %s5, 6
  %v1173 = vld [vmem:[%s1172] sm:$0x3]
  %s1174 = scalar_lea.vmem %s5, 8
  %v1175 = vld [vmem:[%s1174] sm:$0x3]
  %v1176 = vadd.f32 %v1019, %v1094
  %v1177 = vxor.u32 %v1176, 2147483648
  %v1178 = vmul.f32 %v1177, 1.442695
  %v1179 = vpow.pop %v1178
  %v1180 = vadd.f32 %v1179, 1.0
  %v1181 = vrcp.pop %v1180
  %v1182 = vmul.f32 1.0, %v1181
  %1184 = vrot.lane.b32.xlu0 %v1094, 96
  %v1185 = vpop.permute.xlu0 %1184
  %v1187 = vmul.f32 %v1182, %v1185
  %1189 = vrot.lane.b32.xlu0 %v1187, 32
  %v1190 = vpop.permute.xlu0 %1189
  %v1192 = vadd.f32 %v1019, %v1190
  %v1193 = vtanh.pop %v1192
  %v1194 = vsub.f32 1.0, %v1182
  %1196 = vrot.lane.b32.xlu0 %v1193, 112
  %v1197 = vpop.permute.xlu0 %1196
  %v1199 = vmul.f32 %v1194, %v1197
  %v1200 = vmul.f32 %v1182, %v977
  %v1201 = vadd.f32 %v1199, %v1200
  %v1202 = vadd.f32 %v1021, %v1169
  %v1203 = vxor.u32 %v1202, 2147483648
  %v1204 = vmul.f32 %v1203, 1.442695
  %v1205 = vpow.pop %v1204
  %v1206 = vadd.f32 %v1205, 1.0
  %v1207 = vrcp.pop %v1206
  %v1208 = vmul.f32 1.0, %v1207
  %1210 = vrot.lane.b32.xlu0 %v1169, 96
  %v1211 = vpop.permute.xlu0 %1210
  %v1213 = vmul.f32 %v1208, %v1211
  %1215 = vrot.lane.b32.xlu0 %v1213, 32
  %v1216 = vpop.permute.xlu0 %1215
  %v1218 = vadd.f32 %v1021, %v1216
  %v1219 = vtanh.pop %v1218
  %v1220 = vsub.f32 1.0, %v1208
  %1222 = vrot.lane.b32.xlu0 %v1219, 112
  %v1223 = vpop.permute.xlu0 %1222
  %v1225 = vmul.f32 %v1220, %v1223
  %v1226 = vmul.f32 %v1208, %v991
  %v1227 = vadd.f32 %v1225, %v1226
  %1229 = vset.pattern.permute.xlu0 0
  %1230 = vperm.xlu0 %1229, %v1173
  %v1231 = vpop.permute.xlu0 %1230
  %v1233 = vmul.f32 %v1231, %v1201
  %v1234 = vsub.f32 1.0, %v1173
  %1236 = vset.pattern.permute.xlu0 0
  %1237 = vperm.xlu0 %1236, %v1234
  %v1238 = vpop.permute.xlu0 %1237
  %v1240 = vmul.f32 %v1238, %v977
  %v1241 = vadd.f32 %v1233, %v1240
  %1243 = vset.pattern.permute.xlu0 0
  %1244 = vperm.xlu0 %1243, %v1175
  %v1245 = vpop.permute.xlu0 %1244
  %v1247 = vmul.f32 %v1245, %v1227
  %v1248 = vsub.f32 1.0, %v1175
  %1250 = vset.pattern.permute.xlu0 0
  %1251 = vperm.xlu0 %1250, %v1248
  %v1252 = vpop.permute.xlu0 %1251
  %v1254 = vmul.f32 %v1252, %v991
  %v1255 = vadd.f32 %v1247, %v1254
  %v1256 = vmul.f32 %v1231, %v1241
  %v1257 = vmul.f32 %v1234, 0.0
  %1259 = vset.pattern.permute.xlu0 0
  %1260 = vperm.xlu0 %1259, %v1257
  %v1261 = vpop.permute.xlu0 %1260
  %v1263 = vadd.f32 %v1256, %v1261
  %1265 = vrot.lane.b32.xlu0 %v1263, 112
  %v1266 = vpop.permute.xlu0 %1265
  %1268 = vst.msk [vmem:[%s6 + $0x6] sm:$0x3] %vm475, %v1266
  %v1269 = vmul.f32 %v1245, %v1255
  %v1270 = vmul.f32 %v1248, 0.0
  %1272 = vset.pattern.permute.xlu0 0
  %1273 = vperm.xlu0 %1272, %v1270
  %v1274 = vpop.permute.xlu0 %1273
  %v1276 = vadd.f32 %v1269, %v1274
  %1278 = vrot.lane.b32.xlu0 %v1276, 112
  %v1279 = vpop.permute.xlu0 %1278
  %1281 = vst.msk [vmem:[%s7 + $0x8] sm:$0x3] %vm475, %v1279
  %s1282 = scalar_lea.vmem [#allocation2], 4
  %v1283 = vld [vmem:[%s1282] ss:$8 sm:$0x3]
  %s1284 = scalar_lea.vmem [#allocation3], 3
  %v1285 = vld [vmem:[%s1284] ss:$8 sm:$0x3]
  %1287 = vrot.lane.b32.xlu0 %v1241, 112
  %v1288 = vpop.permute.xlu0 %1287
  %v1289 = vsel %vm230, %v1288, 0
  %1291 = vmatprep.subr.mxu0 0.0
  %1292 = vmatpush1.msra.mxu0 %v213
  %1293 = vmatprep.subr.mxu0 0.0
  %1294 = vmatpush1.msra.mxu0 %v214
  %1295 = vmatprep.subr.mxu0 0.0
  %1296 = vmatpush1.msra.mxu0 0.0
  %1297 = vmatprep.subr.mxu0 0.0
  %1298 = vmatpush1.msra.mxu0 0.0
  %1299 = vmatprep.subr.mxu0 0.0
  %1300 = vmatpush1.msra.mxu0 0.0
  %1301 = vmatprep.subr.mxu0 0.0
  %1302 = vmatpush1.msra.mxu0 0.0
  %1303 = vmatprep.subr.mxu0 0.0
  %1304 = vmatpush1.msra.mxu0 0.0
  %1305 = vmatprep.subr.mxu0 0.0
  %1306 = vmatpush1.msra.mxu0 0.0
  %1307 = vmatprep.subr.mxu0 0.0
  %1308 = vmatpush1.msra.mxu0 0.0
  %1309 = vmatprep.subr.mxu0 0.0
  %1310 = vmatpush1.msra.mxu0 0.0
  %1311 = vmatprep.subr.mxu0 0.0
  %1312 = vmatpush1.msra.mxu0 0.0
  %1313 = vmatprep.subr.mxu0 0.0
  %1314 = vmatpush1.msra.mxu0 0.0
  %1315 = vmatprep.subr.mxu0 0.0
  %1316 = vmatpush1.msra.mxu0 0.0
  %1317 = vmatprep.subr.mxu0 0.0
  %1318 = vmatpush1.msra.mxu0 0.0
  %1319 = vmatprep.subr.mxu0 0.0
  %1320 = vmatpush1.msra.mxu0 0.0
  %1321 = vmatprep.subr.mxu0 0.0
  %1322 = vmatpush1.msra.mxu0 0.0
  %1323 = vmatprep.subr.mxu0 0.0
  %1324 = vmatpush1.msra.mxu0 0.0
  %1325 = vmatprep.subr.mxu0 0.0
  %1326 = vmatpush1.msra.mxu0 0.0
  %1327 = vmatprep.subr.mxu0 0.0
  %1328 = vmatpush1.msra.mxu0 0.0
  %1329 = vmatprep.subr.mxu0 0.0
  %1330 = vmatpush1.msra.mxu0 0.0
  %1331 = vmatprep.subr.mxu0 0.0
  %1332 = vmatpush1.msra.mxu0 0.0
  %1333 = vmatprep.subr.mxu0 0.0
  %1334 = vmatpush1.msra.mxu0 0.0
  %1335 = vmatprep.subr.mxu0 0.0
  %1336 = vmatpush1.msra.mxu0 0.0
  %1337 = vmatprep.subr.mxu0 0.0
  %1338 = vmatpush1.msra.mxu0 0.0
  %1339 = vmatprep.subr.mxu0 0.0
  %1340 = vmatpush1.msra.mxu0 0.0
  %1341 = vmatprep.subr.mxu0 0.0
  %1342 = vmatpush1.msra.mxu0 0.0
  %1343 = vmatprep.subr.mxu0 0.0
  %1344 = vmatpush1.msra.mxu0 0.0
  %1345 = vmatprep.subr.mxu0 0.0
  %1346 = vmatpush1.msra.mxu0 0.0
  %1347 = vmatprep.subr.mxu0 0.0
  %1348 = vmatpush1.msra.mxu0 0.0
  %1349 = vmatprep.subr.mxu0 0.0
  %1350 = vmatpush1.msra.mxu0 0.0
  %1351 = vmatprep.subr.mxu0 0.0
  %1352 = vmatpush1.msra.mxu0 0.0
  %1353 = vmatprep.subr.mxu0 0.0
  %1354 = vmatpush1.msra.mxu0 0.0
  %1355 = vmatprep.mubr.f32.mxu0 0.0
  %1356 = vmatmul.mubr.f32.gmra.mrb[0].mxu0 %v1289
  %v1357 = vpop.f32.mrb[0].mxu0
  %v1358 = vadd.f32 %v228, %v1357
  %v1359 = vpop.f32.mrb[0].mxu0
  %1360 = vdwg.mxu0
  %1362 = vrot.lane.b32.xlu0 %v1255, 112
  %v1363 = vpop.permute.xlu0 %1362
  %v1364 = vsel %vm230, %v1363, 0
  %1366 = vmatprep.subr.mxu0 0.0
  %1367 = vmatpush1.msra.mxu0 %v217
  %1368 = vmatprep.subr.mxu0 0.0
  %1369 = vmatpush1.msra.mxu0 %v218
  %1370 = vmatprep.subr.mxu0 0.0
  %1371 = vmatpush1.msra.mxu0 0.0
  %1372 = vmatprep.subr.mxu0 0.0
  %1373 = vmatpush1.msra.mxu0 0.0
  %1374 = vmatprep.subr.mxu0 0.0
  %1375 = vmatpush1.msra.mxu0 0.0
  %1376 = vmatprep.subr.mxu0 0.0
  %1377 = vmatpush1.msra.mxu0 0.0
  %1378 = vmatprep.subr.mxu0 0.0
  %1379 = vmatpush1.msra.mxu0 0.0
  %1380 = vmatprep.subr.mxu0 0.0
  %1381 = vmatpush1.msra.mxu0 0.0
  %1382 = vmatprep.subr.mxu0 0.0
  %1383 = vmatpush1.msra.mxu0 0.0
  %1384 = vmatprep.subr.mxu0 0.0
  %1385 = vmatpush1.msra.mxu0 0.0
  %1386 = vmatprep.subr.mxu0 0.0
  %1387 = vmatpush1.msra.mxu0 0.0
  %1388 = vmatprep.subr.mxu0 0.0
  %1389 = vmatpush1.msra.mxu0 0.0
  %1390 = vmatprep.subr.mxu0 0.0
  %1391 = vmatpush1.msra.mxu0 0.0
  %1392 = vmatprep.subr.mxu0 0.0
  %1393 = vmatpush1.msra.mxu0 0.0
  %1394 = vmatprep.subr.mxu0 0.0
  %1395 = vmatpush1.msra.mxu0 0.0
  %1396 = vmatprep.subr.mxu0 0.0
  %1397 = vmatpush1.msra.mxu0 0.0
  %1398 = vmatprep.subr.mxu0 0.0
  %1399 = vmatpush1.msra.mxu0 0.0
  %1400 = vmatprep.subr.mxu0 0.0
  %1401 = vmatpush1.msra.mxu0 0.0
  %1402 = vmatprep.subr.mxu0 0.0
  %1403 = vmatpush1.msra.mxu0 0.0
  %1404 = vmatprep.subr.mxu0 0.0
  %1405 = vmatpush1.msra.mxu0 0.0
  %1406 = vmatprep.subr.mxu0 0.0
  %1407 = vmatpush1.msra.mxu0 0.0
  %1408 = vmatprep.subr.mxu0 0.0
  %1409 = vmatpush1.msra.mxu0 0.0
  %1410 = vmatprep.subr.mxu0 0.0
  %1411 = vmatpush1.msra.mxu0 0.0
  %1412 = vmatprep.subr.mxu0 0.0
  %1413 = vmatpush1.msra.mxu0 0.0
  %1414 = vmatprep.subr.mxu0 0.0
  %1415 = vmatpush1.msra.mxu0 0.0
  %1416 = vmatprep.subr.mxu0 0.0
  %1417 = vmatpush1.msra.mxu0 0.0
  %1418 = vmatprep.subr.mxu0 0.0
  %1419 = vmatpush1.msra.mxu0 0.0
  %1420 = vmatprep.subr.mxu0 0.0
  %1421 = vmatpush1.msra.mxu0 0.0
  %1422 = vmatprep.subr.mxu0 0.0
  %1423 = vmatpush1.msra.mxu0 0.0
  %1424 = vmatprep.subr.mxu0 0.0
  %1425 = vmatpush1.msra.mxu0 0.0
  %1426 = vmatprep.subr.mxu0 0.0
  %1427 = vmatpush1.msra.mxu0 0.0
  %1428 = vmatprep.subr.mxu0 0.0
  %1429 = vmatpush1.msra.mxu0 0.0
  %1430 = vmatprep.mubr.f32.mxu0 0.0
  %1431 = vmatmul.mubr.f32.gmra.mrb[0].mxu0 %v1364
  %v1432 = vpop.f32.mrb[0].mxu0
  %v1433 = vadd.f32 %v308, %v1432
  %v1434 = vpop.f32.mrb[0].mxu0
  %1435 = vdwg.mxu0
  %v1436 = vld [vmem:[%s1174] sm:$0x3]
  %v1437 = vld [vmem:[%s1172] sm:$0x3]
  %v1438 = vadd.f32 %v1283, %v1358
  %v1439 = vxor.u32 %v1438, 2147483648
  %v1440 = vmul.f32 %v1439, 1.442695
  %v1441 = vpow.pop %v1440
  %v1442 = vadd.f32 %v1441, 1.0
  %v1443 = vrcp.pop %v1442
  %v1444 = vmul.f32 1.0, %v1443
  %1446 = vrot.lane.b32.xlu0 %v1358, 96
  %v1447 = vpop.permute.xlu0 %1446
  %v1449 = vmul.f32 %v1444, %v1447
  %1451 = vrot.lane.b32.xlu0 %v1449, 32
  %v1452 = vpop.permute.xlu0 %1451
  %v1454 = vadd.f32 %v1283, %v1452
  %v1455 = vtanh.pop %v1454
  %v1456 = vsub.f32 1.0, %v1444
  %1458 = vrot.lane.b32.xlu0 %v1455, 112
  %v1459 = vpop.permute.xlu0 %1458
  %v1461 = vmul.f32 %v1456, %v1459
  %v1462 = vmul.f32 %v1444, %v1241
  %v1463 = vadd.f32 %v1461, %v1462
  %v1464 = vadd.f32 %v1285, %v1433
  %v1465 = vxor.u32 %v1464, 2147483648
  %v1466 = vmul.f32 %v1465, 1.442695
  %v1467 = vpow.pop %v1466
  %v1468 = vadd.f32 %v1467, 1.0
  %v1469 = vrcp.pop %v1468
  %v1470 = vmul.f32 1.0, %v1469
  %1472 = vrot.lane.b32.xlu0 %v1433, 96
  %v1473 = vpop.permute.xlu0 %1472
  %v1475 = vmul.f32 %v1470, %v1473
  %1477 = vrot.lane.b32.xlu0 %v1475, 32
  %v1478 = vpop.permute.xlu0 %1477
  %v1480 = vadd.f32 %v1285, %v1478
  %v1481 = vtanh.pop %v1480
  %v1482 = vsub.f32 1.0, %v1470
  %1484 = vrot.lane.b32.xlu0 %v1481, 112
  %v1485 = vpop.permute.xlu0 %1484
  %v1487 = vmul.f32 %v1482, %v1485
  %v1488 = vmul.f32 %v1470, %v1255
  %v1489 = vadd.f32 %v1487, %v1488
  %1491 = vset.pattern.permute.xlu0 0
  %1492 = vperm.xlu0 %1491, %v1436
  %v1493 = vpop.permute.xlu0 %1492
  %v1495 = vmul.f32 %v1493, %v1463
  %v1496 = vsub.f32 1.0, %v1436
  %1498 = vset.pattern.permute.xlu0 0
  %1499 = vperm.xlu0 %1498, %v1496
  %v1500 = vpop.permute.xlu0 %1499
  %v1502 = vmul.f32 %v1500, %v1241
  %v1503 = vadd.f32 %v1495, %v1502
  %1505 = vset.pattern.permute.xlu0 0
  %1506 = vperm.xlu0 %1505, %v1437
  %v1507 = vpop.permute.xlu0 %1506
  %v1509 = vmul.f32 %v1507, %v1489
  %v1510 = vsub.f32 1.0, %v1437
  %1512 = vset.pattern.permute.xlu0 0
  %1513 = vperm.xlu0 %1512, %v1510
  %v1514 = vpop.permute.xlu0 %1513
  %v1516 = vmul.f32 %v1514, %v1255
  %v1517 = vadd.f32 %v1509, %v1516
  %v1518 = vmul.f32 %v1493, %v1503
  %v1519 = vmul.f32 %v1496, 0.0
  %1521 = vset.pattern.permute.xlu0 0
  %1522 = vperm.xlu0 %1521, %v1519
  %v1523 = vpop.permute.xlu0 %1522
  %v1525 = vadd.f32 %v1518, %v1523
  %1527 = vrot.lane.b32.xlu0 %v1525, 112
  %v1528 = vpop.permute.xlu0 %1527
  %1530 = vst.msk [vmem:[%s6 + $0x8] sm:$0x3] %vm475, %v1528
  %v1531 = vmul.f32 %v1507, %v1517
  %v1532 = vmul.f32 %v1510, 0.0
  %1534 = vset.pattern.permute.xlu0 0
  %1535 = vperm.xlu0 %1534, %v1532
  %v1536 = vpop.permute.xlu0 %1535
  %v1538 = vadd.f32 %v1531, %v1536
  %1540 = vrot.lane.b32.xlu0 %v1538, 112
  %v1541 = vpop.permute.xlu0 %1540
  %1543 = vst.msk [vmem:[%s7 + $0x6] sm:$0x3] %vm475, %v1541
  %s1544 = scalar_lea.vmem [#allocation2], 5
  %v1545 = vld [vmem:[%s1544] ss:$8 sm:$0x3]
  %s1546 = scalar_lea.vmem [#allocation3], 2
  %v1547 = vld [vmem:[%s1546] ss:$8 sm:$0x3]
  %1549 = vrot.lane.b32.xlu0 %v1503, 112
  %v1550 = vpop.permute.xlu0 %1549
  %v1551 = vsel %vm230, %v1550, 0
  %1553 = vmatprep.subr.mxu0 0.0
  %1554 = vmatpush1.msra.mxu0 %v213
  %1555 = vmatprep.subr.mxu0 0.0
  %1556 = vmatpush1.msra.mxu0 %v214
  %1557 = vmatprep.subr.mxu0 0.0
  %1558 = vmatpush1.msra.mxu0 0.0
  %1559 = vmatprep.subr.mxu0 0.0
  %1560 = vmatpush1.msra.mxu0 0.0
  %1561 = vmatprep.subr.mxu0 0.0
  %1562 = vmatpush1.msra.mxu0 0.0
  %1563 = vmatprep.subr.mxu0 0.0
  %1564 = vmatpush1.msra.mxu0 0.0
  %1565 = vmatprep.subr.mxu0 0.0
  %1566 = vmatpush1.msra.mxu0 0.0
  %1567 = vmatprep.subr.mxu0 0.0
  %1568 = vmatpush1.msra.mxu0 0.0
  %1569 = vmatprep.subr.mxu0 0.0
  %1570 = vmatpush1.msra.mxu0 0.0
  %1571 = vmatprep.subr.mxu0 0.0
  %1572 = vmatpush1.msra.mxu0 0.0
  %1573 = vmatprep.subr.mxu0 0.0
  %1574 = vmatpush1.msra.mxu0 0.0
  %1575 = vmatprep.subr.mxu0 0.0
  %1576 = vmatpush1.msra.mxu0 0.0
  %1577 = vmatprep.subr.mxu0 0.0
  %1578 = vmatpush1.msra.mxu0 0.0
  %1579 = vmatprep.subr.mxu0 0.0
  %1580 = vmatpush1.msra.mxu0 0.0
  %1581 = vmatprep.subr.mxu0 0.0
  %1582 = vmatpush1.msra.mxu0 0.0
  %1583 = vmatprep.subr.mxu0 0.0
  %1584 = vmatpush1.msra.mxu0 0.0
  %1585 = vmatprep.subr.mxu0 0.0
  %1586 = vmatpush1.msra.mxu0 0.0
  %1587 = vmatprep.subr.mxu0 0.0
  %1588 = vmatpush1.msra.mxu0 0.0
  %1589 = vmatprep.subr.mxu0 0.0
  %1590 = vmatpush1.msra.mxu0 0.0
  %1591 = vmatprep.subr.mxu0 0.0
  %1592 = vmatpush1.msra.mxu0 0.0
  %1593 = vmatprep.subr.mxu0 0.0
  %1594 = vmatpush1.msra.mxu0 0.0
  %1595 = vmatprep.subr.mxu0 0.0
  %1596 = vmatpush1.msra.mxu0 0.0
  %1597 = vmatprep.subr.mxu0 0.0
  %1598 = vmatpush1.msra.mxu0 0.0
  %1599 = vmatprep.subr.mxu0 0.0
  %1600 = vmatpush1.msra.mxu0 0.0
  %1601 = vmatprep.subr.mxu0 0.0
  %1602 = vmatpush1.msra.mxu0 0.0
  %1603 = vmatprep.subr.mxu0 0.0
  %1604 = vmatpush1.msra.mxu0 0.0
  %1605 = vmatprep.subr.mxu0 0.0
  %1606 = vmatpush1.msra.mxu0 0.0
  %1607 = vmatprep.subr.mxu0 0.0
  %1608 = vmatpush1.msra.mxu0 0.0
  %1609 = vmatprep.subr.mxu0 0.0
  %1610 = vmatpush1.msra.mxu0 0.0
  %1611 = vmatprep.subr.mxu0 0.0
  %1612 = vmatpush1.msra.mxu0 0.0
  %1613 = vmatprep.subr.mxu0 0.0
  %1614 = vmatpush1.msra.mxu0 0.0
  %1615 = vmatprep.subr.mxu0 0.0
  %1616 = vmatpush1.msra.mxu0 0.0
  %1617 = vmatprep.mubr.f32.mxu0 0.0
  %1618 = vmatmul.mubr.f32.gmra.mrb[0].mxu0 %v1551
  %v1619 = vpop.f32.mrb[0].mxu0
  %v1620 = vadd.f32 %v228, %v1619
  %v1621 = vpop.f32.mrb[0].mxu0
  %1622 = vdwg.mxu0
  %1624 = vrot.lane.b32.xlu0 %v1517, 112
  %v1625 = vpop.permute.xlu0 %1624
  %v1626 = vsel %vm230, %v1625, 0
  %1628 = vmatprep.subr.mxu0 0.0
  %1629 = vmatpush1.msra.mxu0 %v217
  %1630 = vmatprep.subr.mxu0 0.0
  %1631 = vmatpush1.msra.mxu0 %v218
  %1632 = vmatprep.subr.mxu0 0.0
  %1633 = vmatpush1.msra.mxu0 0.0
  %1634 = vmatprep.subr.mxu0 0.0
  %1635 = vmatpush1.msra.mxu0 0.0
  %1636 = vmatprep.subr.mxu0 0.0
  %1637 = vmatpush1.msra.mxu0 0.0
  %1638 = vmatprep.subr.mxu0 0.0
  %1639 = vmatpush1.msra.mxu0 0.0
  %1640 = vmatprep.subr.mxu0 0.0
  %1641 = vmatpush1.msra.mxu0 0.0
  %1642 = vmatprep.subr.mxu0 0.0
  %1643 = vmatpush1.msra.mxu0 0.0
  %1644 = vmatprep.subr.mxu0 0.0
  %1645 = vmatpush1.msra.mxu0 0.0
  %1646 = vmatprep.subr.mxu0 0.0
  %1647 = vmatpush1.msra.mxu0 0.0
  %1648 = vmatprep.subr.mxu0 0.0
  %1649 = vmatpush1.msra.mxu0 0.0
  %1650 = vmatprep.subr.mxu0 0.0
  %1651 = vmatpush1.msra.mxu0 0.0
  %1652 = vmatprep.subr.mxu0 0.0
  %1653 = vmatpush1.msra.mxu0 0.0
  %1654 = vmatprep.subr.mxu0 0.0
  %1655 = vmatpush1.msra.mxu0 0.0
  %1656 = vmatprep.subr.mxu0 0.0
  %1657 = vmatpush1.msra.mxu0 0.0
  %1658 = vmatprep.subr.mxu0 0.0
  %1659 = vmatpush1.msra.mxu0 0.0
  %1660 = vmatprep.subr.mxu0 0.0
  %1661 = vmatpush1.msra.mxu0 0.0
  %1662 = vmatprep.subr.mxu0 0.0
  %1663 = vmatpush1.msra.mxu0 0.0
  %1664 = vmatprep.subr.mxu0 0.0
  %1665 = vmatpush1.msra.mxu0 0.0
  %1666 = vmatprep.subr.mxu0 0.0
  %1667 = vmatpush1.msra.mxu0 0.0
  %1668 = vmatprep.subr.mxu0 0.0
  %1669 = vmatpush1.msra.mxu0 0.0
  %1670 = vmatprep.subr.mxu0 0.0
  %1671 = vmatpush1.msra.mxu0 0.0
  %1672 = vmatprep.subr.mxu0 0.0
  %1673 = vmatpush1.msra.mxu0 0.0
  %1674 = vmatprep.subr.mxu0 0.0
  %1675 = vmatpush1.msra.mxu0 0.0
  %1676 = vmatprep.subr.mxu0 0.0
  %1677 = vmatpush1.msra.mxu0 0.0
  %1678 = vmatprep.subr.mxu0 0.0
  %1679 = vmatpush1.msra.mxu0 0.0
  %1680 = vmatprep.subr.mxu0 0.0
  %1681 = vmatpush1.msra.mxu0 0.0
  %1682 = vmatprep.subr.mxu0 0.0
  %1683 = vmatpush1.msra.mxu0 0.0
  %1684 = vmatprep.subr.mxu0 0.0
  %1685 = vmatpush1.msra.mxu0 0.0
  %1686 = vmatprep.subr.mxu0 0.0
  %1687 = vmatpush1.msra.mxu0 0.0
  %1688 = vmatprep.subr.mxu0 0.0
  %1689 = vmatpush1.msra.mxu0 0.0
  %1690 = vmatprep.subr.mxu0 0.0
  %1691 = vmatpush1.msra.mxu0 0.0
  %1692 = vmatprep.mubr.f32.mxu0 0.0
  %1693 = vmatmul.mubr.f32.gmra.mrb[0].mxu0 %v1626
  %v1694 = vpop.f32.mrb[0].mxu0
  %v1695 = vadd.f32 %v308, %v1694
  %v1696 = vpop.f32.mrb[0].mxu0
  %1697 = vdwg.mxu0
  %v1698 = vld [vmem:[%s910] sm:$0x3]
  %v1699 = vld [vmem:[%s908] sm:$0x3]
  %v1700 = vadd.f32 %v1545, %v1620
  %v1701 = vxor.u32 %v1700, 2147483648
  %v1702 = vmul.f32 %v1701, 1.442695
  %v1703 = vpow.pop %v1702
  %v1704 = vadd.f32 %v1703, 1.0
  %v1705 = vrcp.pop %v1704
  %v1706 = vmul.f32 1.0, %v1705
  %1708 = vrot.lane.b32.xlu0 %v1620, 96
  %v1709 = vpop.permute.xlu0 %1708
  %v1711 = vmul.f32 %v1706, %v1709
  %1713 = vrot.lane.b32.xlu0 %v1711, 32
  %v1714 = vpop.permute.xlu0 %1713
  %v1716 = vadd.f32 %v1545, %v1714
  %v1717 = vtanh.pop %v1716
  %v1718 = vsub.f32 1.0, %v1706
  %1720 = vrot.lane.b32.xlu0 %v1717, 112
  %v1721 = vpop.permute.xlu0 %1720
  %v1723 = vmul.f32 %v1718, %v1721
  %v1724 = vmul.f32 %v1706, %v1503
  %v1725 = vadd.f32 %v1723, %v1724
  %v1726 = vadd.f32 %v1547, %v1695
  %v1727 = vxor.u32 %v1726, 2147483648
  %v1728 = vmul.f32 %v1727, 1.442695
  %v1729 = vpow.pop %v1728
  %v1730 = vadd.f32 %v1729, 1.0
  %v1731 = vrcp.pop %v1730
  %v1732 = vmul.f32 1.0, %v1731
  %1734 = vrot.lane.b32.xlu0 %v1695, 96
  %v1735 = vpop.permute.xlu0 %1734
  %v1737 = vmul.f32 %v1732, %v1735
  %1739 = vrot.lane.b32.xlu0 %v1737, 32
  %v1740 = vpop.permute.xlu0 %1739
  %v1742 = vadd.f32 %v1547, %v1740
  %v1743 = vtanh.pop %v1742
  %v1744 = vsub.f32 1.0, %v1732
  %1746 = vrot.lane.b32.xlu0 %v1743, 112
  %v1747 = vpop.permute.xlu0 %1746
  %v1749 = vmul.f32 %v1744, %v1747
  %v1750 = vmul.f32 %v1732, %v1517
  %v1751 = vadd.f32 %v1749, %v1750
  %1753 = vset.pattern.permute.xlu0 0
  %1754 = vperm.xlu0 %1753, %v1698
  %v1755 = vpop.permute.xlu0 %1754
  %v1757 = vmul.f32 %v1755, %v1725
  %v1758 = vsub.f32 1.0, %v1698
  %1760 = vset.pattern.permute.xlu0 0
  %1761 = vperm.xlu0 %1760, %v1758
  %v1762 = vpop.permute.xlu0 %1761
  %v1764 = vmul.f32 %v1762, %v1503
  %v1765 = vadd.f32 %v1757, %v1764
  %1767 = vset.pattern.permute.xlu0 0
  %1768 = vperm.xlu0 %1767, %v1699
  %v1769 = vpop.permute.xlu0 %1768
  %v1771 = vmul.f32 %v1769, %v1751
  %v1772 = vsub.f32 1.0, %v1699
  %1774 = vset.pattern.permute.xlu0 0
  %1775 = vperm.xlu0 %1774, %v1772
  %v1776 = vpop.permute.xlu0 %1775
  %v1778 = vmul.f32 %v1776, %v1517
  %v1779 = vadd.f32 %v1771, %v1778
  %v1780 = vmul.f32 %v1755, %v1765
  %v1781 = vmul.f32 %v1758, 0.0
  %1783 = vset.pattern.permute.xlu0 0
  %1784 = vperm.xlu0 %1783, %v1781
  %v1785 = vpop.permute.xlu0 %1784
  %v1787 = vadd.f32 %v1780, %v1785
  %1789 = vrot.lane.b32.xlu0 %v1787, 112
  %v1790 = vpop.permute.xlu0 %1789
  %1792 = vst.msk [vmem:[%s6 + $0xa] sm:$0x3] %vm475, %v1790
  %v1793 = vmul.f32 %v1769, %v1779
  %v1794 = vmul.f32 %v1772, 0.0
  %1796 = vset.pattern.permute.xlu0 0
  %1797 = vperm.xlu0 %1796, %v1794
  %v1798 = vpop.permute.xlu0 %1797
  %v1800 = vadd.f32 %v1793, %v1798
  %1802 = vrot.lane.b32.xlu0 %v1800, 112
  %v1803 = vpop.permute.xlu0 %1802
  %1805 = vst.msk [vmem:[%s7 + $0x4] sm:$0x3] %vm475, %v1803
  %s1806 = scalar_lea.vmem [#allocation2], 6
  %v1807 = vld [vmem:[%s1806] ss:$8 sm:$0x3]
  %s1808 = scalar_lea.vmem [#allocation3], 1
  %v1809 = vld [vmem:[%s1808] ss:$8 sm:$0x3]
  %1811 = vrot.lane.b32.xlu0 %v1765, 112
  %v1812 = vpop.permute.xlu0 %1811
  %v1813 = vsel %vm230, %v1812, 0
  %1815 = vmatprep.subr.mxu0 0.0
  %1816 = vmatpush1.msra.mxu0 %v213
  %1817 = vmatprep.subr.mxu0 0.0
  %1818 = vmatpush1.msra.mxu0 %v214
  %1819 = vmatprep.subr.mxu0 0.0
  %1820 = vmatpush1.msra.mxu0 0.0
  %1821 = vmatprep.subr.mxu0 0.0
  %1822 = vmatpush1.msra.mxu0 0.0
  %1823 = vmatprep.subr.mxu0 0.0
  %1824 = vmatpush1.msra.mxu0 0.0
  %1825 = vmatprep.subr.mxu0 0.0
  %1826 = vmatpush1.msra.mxu0 0.0
  %1827 = vmatprep.subr.mxu0 0.0
  %1828 = vmatpush1.msra.mxu0 0.0
  %1829 = vmatprep.subr.mxu0 0.0
  %1830 = vmatpush1.msra.mxu0 0.0
  %1831 = vmatprep.subr.mxu0 0.0
  %1832 = vmatpush1.msra.mxu0 0.0
  %1833 = vmatprep.subr.mxu0 0.0
  %1834 = vmatpush1.msra.mxu0 0.0
  %1835 = vmatprep.subr.mxu0 0.0
  %1836 = vmatpush1.msra.mxu0 0.0
  %1837 = vmatprep.subr.mxu0 0.0
  %1838 = vmatpush1.msra.mxu0 0.0
  %1839 = vmatprep.subr.mxu0 0.0
  %1840 = vmatpush1.msra.mxu0 0.0
  %1841 = vmatprep.subr.mxu0 0.0
  %1842 = vmatpush1.msra.mxu0 0.0
  %1843 = vmatprep.subr.mxu0 0.0
  %1844 = vmatpush1.msra.mxu0 0.0
  %1845 = vmatprep.subr.mxu0 0.0
  %1846 = vmatpush1.msra.mxu0 0.0
  %1847 = vmatprep.subr.mxu0 0.0
  %1848 = vmatpush1.msra.mxu0 0.0
  %1849 = vmatprep.subr.mxu0 0.0
  %1850 = vmatpush1.msra.mxu0 0.0
  %1851 = vmatprep.subr.mxu0 0.0
  %1852 = vmatpush1.msra.mxu0 0.0
  %1853 = vmatprep.subr.mxu0 0.0
  %1854 = vmatpush1.msra.mxu0 0.0
  %1855 = vmatprep.subr.mxu0 0.0
  %1856 = vmatpush1.msra.mxu0 0.0
  %1857 = vmatprep.subr.mxu0 0.0
  %1858 = vmatpush1.msra.mxu0 0.0
  %1859 = vmatprep.subr.mxu0 0.0
  %1860 = vmatpush1.msra.mxu0 0.0
  %1861 = vmatprep.subr.mxu0 0.0
  %1862 = vmatpush1.msra.mxu0 0.0
  %1863 = vmatprep.subr.mxu0 0.0
  %1864 = vmatpush1.msra.mxu0 0.0
  %1865 = vmatprep.subr.mxu0 0.0
  %1866 = vmatpush1.msra.mxu0 0.0
  %1867 = vmatprep.subr.mxu0 0.0
  %1868 = vmatpush1.msra.mxu0 0.0
  %1869 = vmatprep.subr.mxu0 0.0
  %1870 = vmatpush1.msra.mxu0 0.0
  %1871 = vmatprep.subr.mxu0 0.0
  %1872 = vmatpush1.msra.mxu0 0.0
  %1873 = vmatprep.subr.mxu0 0.0
  %1874 = vmatpush1.msra.mxu0 0.0
  %1875 = vmatprep.subr.mxu0 0.0
  %1876 = vmatpush1.msra.mxu0 0.0
  %1877 = vmatprep.subr.mxu0 0.0
  %1878 = vmatpush1.msra.mxu0 0.0
  %1879 = vmatprep.mubr.f32.mxu0 0.0
  %1880 = vmatmul.mubr.f32.gmra.mrb[0].mxu0 %v1813
  %v1881 = vpop.f32.mrb[0].mxu0
  %v1882 = vadd.f32 %v228, %v1881
  %v1883 = vpop.f32.mrb[0].mxu0
  %1884 = vdwg.mxu0
  %1886 = vrot.lane.b32.xlu0 %v1779, 112
  %v1887 = vpop.permute.xlu0 %1886
  %v1888 = vsel %vm230, %v1887, 0
  %1890 = vmatprep.subr.mxu0 0.0
  %1891 = vmatpush1.msra.mxu0 %v217
  %1892 = vmatprep.subr.mxu0 0.0
  %1893 = vmatpush1.msra.mxu0 %v218
  %1894 = vmatprep.subr.mxu0 0.0
  %1895 = vmatpush1.msra.mxu0 0.0
  %1896 = vmatprep.subr.mxu0 0.0
  %1897 = vmatpush1.msra.mxu0 0.0
  %1898 = vmatprep.subr.mxu0 0.0
  %1899 = vmatpush1.msra.mxu0 0.0
  %1900 = vmatprep.subr.mxu0 0.0
  %1901 = vmatpush1.msra.mxu0 0.0
  %1902 = vmatprep.subr.mxu0 0.0
  %1903 = vmatpush1.msra.mxu0 0.0
  %1904 = vmatprep.subr.mxu0 0.0
  %1905 = vmatpush1.msra.mxu0 0.0
  %1906 = vmatprep.subr.mxu0 0.0
  %1907 = vmatpush1.msra.mxu0 0.0
  %1908 = vmatprep.subr.mxu0 0.0
  %1909 = vmatpush1.msra.mxu0 0.0
  %1910 = vmatprep.subr.mxu0 0.0
  %1911 = vmatpush1.msra.mxu0 0.0
  %1912 = vmatprep.subr.mxu0 0.0
  %1913 = vmatpush1.msra.mxu0 0.0
  %1914 = vmatprep.subr.mxu0 0.0
  %1915 = vmatpush1.msra.mxu0 0.0
  %1916 = vmatprep.subr.mxu0 0.0
  %1917 = vmatpush1.msra.mxu0 0.0
  %1918 = vmatprep.subr.mxu0 0.0
  %1919 = vmatpush1.msra.mxu0 0.0
  %1920 = vmatprep.subr.mxu0 0.0
  %1921 = vmatpush1.msra.mxu0 0.0
  %1922 = vmatprep.subr.mxu0 0.0
  %1923 = vmatpush1.msra.mxu0 0.0
  %1924 = vmatprep.subr.mxu0 0.0
  %1925 = vmatpush1.msra.mxu0 0.0
  %1926 = vmatprep.subr.mxu0 0.0
  %1927 = vmatpush1.msra.mxu0 0.0
  %1928 = vmatprep.subr.mxu0 0.0
  %1929 = vmatpush1.msra.mxu0 0.0
  %1930 = vmatprep.subr.mxu0 0.0
  %1931 = vmatpush1.msra.mxu0 0.0
  %1932 = vmatprep.subr.mxu0 0.0
  %1933 = vmatpush1.msra.mxu0 0.0
  %1934 = vmatprep.subr.mxu0 0.0
  %1935 = vmatpush1.msra.mxu0 0.0
  %1936 = vmatprep.subr.mxu0 0.0
  %1937 = vmatpush1.msra.mxu0 0.0
  %1938 = vmatprep.subr.mxu0 0.0
  %1939 = vmatpush1.msra.mxu0 0.0
  %1940 = vmatprep.subr.mxu0 0.0
  %1941 = vmatpush1.msra.mxu0 0.0
  %1942 = vmatprep.subr.mxu0 0.0
  %1943 = vmatpush1.msra.mxu0 0.0
  %1944 = vmatprep.subr.mxu0 0.0
  %1945 = vmatpush1.msra.mxu0 0.0
  %1946 = vmatprep.subr.mxu0 0.0
  %1947 = vmatpush1.msra.mxu0 0.0
  %1948 = vmatprep.subr.mxu0 0.0
  %1949 = vmatpush1.msra.mxu0 0.0
  %1950 = vmatprep.subr.mxu0 0.0
  %1951 = vmatpush1.msra.mxu0 0.0
  %1952 = vmatprep.subr.mxu0 0.0
  %1953 = vmatpush1.msra.mxu0 0.0
  %1954 = vmatprep.mubr.f32.mxu0 0.0
  %1955 = vmatmul.mubr.f32.gmra.mrb[0].mxu0 %v1888
  %v1956 = vpop.f32.mrb[0].mxu0
  %v1957 = vadd.f32 %v308, %v1956
  %v1958 = vpop.f32.mrb[0].mxu0
  %1959 = vdwg.mxu0
  %v1960 = vld [vmem:[%s646] sm:$0x3]
  %v1961 = vld [vmem:[%s644] sm:$0x3]
  %v1962 = vadd.f32 %v1807, %v1882
  %v1963 = vxor.u32 %v1962, 2147483648
  %v1964 = vmul.f32 %v1963, 1.442695
  %v1965 = vpow.pop %v1964
  %v1966 = vadd.f32 %v1965, 1.0
  %v1967 = vrcp.pop %v1966
  %v1968 = vmul.f32 1.0, %v1967
  %1970 = vrot.lane.b32.xlu0 %v1882, 96
  %v1971 = vpop.permute.xlu0 %1970
  %v1973 = vmul.f32 %v1968, %v1971
  %1975 = vrot.lane.b32.xlu0 %v1973, 32
  %v1976 = vpop.permute.xlu0 %1975
  %v1978 = vadd.f32 %v1807, %v1976
  %v1979 = vtanh.pop %v1978
  %v1980 = vsub.f32 1.0, %v1968
  %1982 = vrot.lane.b32.xlu0 %v1979, 112
  %v1983 = vpop.permute.xlu0 %1982
  %v1985 = vmul.f32 %v1980, %v1983
  %v1986 = vmul.f32 %v1968, %v1765
  %v1987 = vadd.f32 %v1985, %v1986
  %v1988 = vadd.f32 %v1809, %v1957
  %v1989 = vxor.u32 %v1988, 2147483648
  %v1990 = vmul.f32 %v1989, 1.442695
  %v1991 = vpow.pop %v1990
  %v1992 = vadd.f32 %v1991, 1.0
  %v1993 = vrcp.pop %v1992
  %v1994 = vmul.f32 1.0, %v1993
  %1996 = vrot.lane.b32.xlu0 %v1957, 96
  %v1997 = vpop.permute.xlu0 %1996
  %v1999 = vmul.f32 %v1994, %v1997
  %2001 = vrot.lane.b32.xlu0 %v1999, 32
  %v2002 = vpop.permute.xlu0 %2001
  %v2004 = vadd.f32 %v1809, %v2002
  %v2005 = vtanh.pop %v2004
  %v2006 = vsub.f32 1.0, %v1994
  %2008 = vrot.lane.b32.xlu0 %v2005, 112
  %v2009 = vpop.permute.xlu0 %2008
  %v2011 = vmul.f32 %v2006, %v2009
  %v2012 = vmul.f32 %v1994, %v1779
  %v2013 = vadd.f32 %v2011, %v2012
  %2015 = vset.pattern.permute.xlu0 0
  %2016 = vperm.xlu0 %2015, %v1960
  %v2017 = vpop.permute.xlu0 %2016
  %v2019 = vmul.f32 %v2017, %v1987
  %v2020 = vsub.f32 1.0, %v1960
  %2022 = vset.pattern.permute.xlu0 0
  %2023 = vperm.xlu0 %2022, %v2020
  %v2024 = vpop.permute.xlu0 %2023
  %v2026 = vmul.f32 %v2024, %v1765
  %v2027 = vadd.f32 %v2019, %v2026
  %2029 = vset.pattern.permute.xlu0 0
  %2030 = vperm.xlu0 %2029, %v1961
  %v2031 = vpop.permute.xlu0 %2030
  %v2033 = vmul.f32 %v2031, %v2013
  %v2034 = vsub.f32 1.0, %v1961
  %2036 = vset.pattern.permute.xlu0 0
  %2037 = vperm.xlu0 %2036, %v2034
  %v2038 = vpop.permute.xlu0 %2037
  %v2040 = vmul.f32 %v2038, %v1779
  %v2041 = vadd.f32 %v2033, %v2040
  %v2042 = vmul.f32 %v2017, %v2027
  %v2043 = vmul.f32 %v2020, 0.0
  %2045 = vset.pattern.permute.xlu0 0
  %2046 = vperm.xlu0 %2045, %v2043
  %v2047 = vpop.permute.xlu0 %2046
  %v2049 = vadd.f32 %v2042, %v2047
  %2051 = vrot.lane.b32.xlu0 %v2049, 112
  %v2052 = vpop.permute.xlu0 %2051
  %2054 = vst.msk [vmem:[%s6 + $0xc] sm:$0x3] %vm475, %v2052
  %v2055 = vmul.f32 %v2031, %v2041
  %v2056 = vmul.f32 %v2034, 0.0
  %2058 = vset.pattern.permute.xlu0 0
  %2059 = vperm.xlu0 %2058, %v2056
  %v2060 = vpop.permute.xlu0 %2059
  %v2062 = vadd.f32 %v2055, %v2060
  %2064 = vrot.lane.b32.xlu0 %v2062, 112
  %v2065 = vpop.permute.xlu0 %2064
  %2067 = vst.msk [vmem:[%s7 + $0x2] sm:$0x3] %vm475, %v2065
  %s2068 = scalar_lea.vmem [#allocation2], 7
  %v2069 = vld [vmem:[%s2068] ss:$8 sm:$0x3]
  %v2070 = vld [vmem:[#allocation3] ss:$8 sm:$0x3]
  %2072 = vrot.lane.b32.xlu0 %v2027, 112
  %v2073 = vpop.permute.xlu0 %2072
  %v2074 = vsel %vm230, %v2073, 0
  %2076 = vmatprep.subr.mxu0 0.0
  %2077 = vmatpush1.msra.mxu0 %v213
  %2078 = vmatprep.subr.mxu0 0.0
  %2079 = vmatpush1.msra.mxu0 %v214
  %2080 = vmatprep.subr.mxu0 0.0
  %2081 = vmatpush1.msra.mxu0 0.0
  %2082 = vmatprep.subr.mxu0 0.0
  %2083 = vmatpush1.msra.mxu0 0.0
  %2084 = vmatprep.subr.mxu0 0.0
  %2085 = vmatpush1.msra.mxu0 0.0
  %2086 = vmatprep.subr.mxu0 0.0
  %2087 = vmatpush1.msra.mxu0 0.0
  %2088 = vmatprep.subr.mxu0 0.0
  %2089 = vmatpush1.msra.mxu0 0.0
  %2090 = vmatprep.subr.mxu0 0.0
  %2091 = vmatpush1.msra.mxu0 0.0
  %2092 = vmatprep.subr.mxu0 0.0
  %2093 = vmatpush1.msra.mxu0 0.0
  %2094 = vmatprep.subr.mxu0 0.0
  %2095 = vmatpush1.msra.mxu0 0.0
  %2096 = vmatprep.subr.mxu0 0.0
  %2097 = vmatpush1.msra.mxu0 0.0
  %2098 = vmatprep.subr.mxu0 0.0
  %2099 = vmatpush1.msra.mxu0 0.0
  %2100 = vmatprep.subr.mxu0 0.0
  %2101 = vmatpush1.msra.mxu0 0.0
  %2102 = vmatprep.subr.mxu0 0.0
  %2103 = vmatpush1.msra.mxu0 0.0
  %2104 = vmatprep.subr.mxu0 0.0
  %2105 = vmatpush1.msra.mxu0 0.0
  %2106 = vmatprep.subr.mxu0 0.0
  %2107 = vmatpush1.msra.mxu0 0.0
  %2108 = vmatprep.subr.mxu0 0.0
  %2109 = vmatpush1.msra.mxu0 0.0
  %2110 = vmatprep.subr.mxu0 0.0
  %2111 = vmatpush1.msra.mxu0 0.0
  %2112 = vmatprep.subr.mxu0 0.0
  %2113 = vmatpush1.msra.mxu0 0.0
  %2114 = vmatprep.subr.mxu0 0.0
  %2115 = vmatpush1.msra.mxu0 0.0
  %2116 = vmatprep.subr.mxu0 0.0
  %2117 = vmatpush1.msra.mxu0 0.0
  %2118 = vmatprep.subr.mxu0 0.0
  %2119 = vmatpush1.msra.mxu0 0.0
  %2120 = vmatprep.subr.mxu0 0.0
  %2121 = vmatpush1.msra.mxu0 0.0
  %2122 = vmatprep.subr.mxu0 0.0
  %2123 = vmatpush1.msra.mxu0 0.0
  %2124 = vmatprep.subr.mxu0 0.0
  %2125 = vmatpush1.msra.mxu0 0.0
  %2126 = vmatprep.subr.mxu0 0.0
  %2127 = vmatpush1.msra.mxu0 0.0
  %2128 = vmatprep.subr.mxu0 0.0
  %2129 = vmatpush1.msra.mxu0 0.0
  %2130 = vmatprep.subr.mxu0 0.0
  %2131 = vmatpush1.msra.mxu0 0.0
  %2132 = vmatprep.subr.mxu0 0.0
  %2133 = vmatpush1.msra.mxu0 0.0
  %2134 = vmatprep.subr.mxu0 0.0
  %2135 = vmatpush1.msra.mxu0 0.0
  %2136 = vmatprep.subr.mxu0 0.0
  %2137 = vmatpush1.msra.mxu0 0.0
  %2138 = vmatprep.subr.mxu0 0.0
  %2139 = vmatpush1.msra.mxu0 0.0
  %2140 = vmatprep.mubr.f32.mxu0 0.0
  %2141 = vmatmul.mubr.f32.gmra.mrb[0].mxu0 %v2074
  %v2142 = vpop.f32.mrb[0].mxu0
  %v2143 = vadd.f32 %v228, %v2142
  %v2144 = vpop.f32.mrb[0].mxu0
  %2145 = vdwg.mxu0
  %2147 = vrot.lane.b32.xlu0 %v2041, 112
  %v2148 = vpop.permute.xlu0 %2147
  %v2149 = vsel %vm230, %v2148, 0
  %2151 = vmatprep.subr.mxu0 0.0
  %2152 = vmatpush1.msra.mxu0 %v217
  %2153 = vmatprep.subr.mxu0 0.0
  %2154 = vmatpush1.msra.mxu0 %v218
  %2155 = vmatprep.subr.mxu0 0.0
  %2156 = vmatpush1.msra.mxu0 0.0
  %2157 = vmatprep.subr.mxu0 0.0
  %2158 = vmatpush1.msra.mxu0 0.0
  %2159 = vmatprep.subr.mxu0 0.0
  %2160 = vmatpush1.msra.mxu0 0.0
  %2161 = vmatprep.subr.mxu0 0.0
  %2162 = vmatpush1.msra.mxu0 0.0
  %2163 = vmatprep.subr.mxu0 0.0
  %2164 = vmatpush1.msra.mxu0 0.0
  %2165 = vmatprep.subr.mxu0 0.0
  %2166 = vmatpush1.msra.mxu0 0.0
  %2167 = vmatprep.subr.mxu0 0.0
  %2168 = vmatpush1.msra.mxu0 0.0
  %2169 = vmatprep.subr.mxu0 0.0
  %2170 = vmatpush1.msra.mxu0 0.0
  %2171 = vmatprep.subr.mxu0 0.0
  %2172 = vmatpush1.msra.mxu0 0.0
  %2173 = vmatprep.subr.mxu0 0.0
  %2174 = vmatpush1.msra.mxu0 0.0
  %2175 = vmatprep.subr.mxu0 0.0
  %2176 = vmatpush1.msra.mxu0 0.0
  %2177 = vmatprep.subr.mxu0 0.0
  %2178 = vmatpush1.msra.mxu0 0.0
  %2179 = vmatprep.subr.mxu0 0.0
  %2180 = vmatpush1.msra.mxu0 0.0
  %2181 = vmatprep.subr.mxu0 0.0
  %2182 = vmatpush1.msra.mxu0 0.0
  %2183 = vmatprep.subr.mxu0 0.0
  %2184 = vmatpush1.msra.mxu0 0.0
  %2185 = vmatprep.subr.mxu0 0.0
  %2186 = vmatpush1.msra.mxu0 0.0
  %2187 = vmatprep.subr.mxu0 0.0
  %2188 = vmatpush1.msra.mxu0 0.0
  %2189 = vmatprep.subr.mxu0 0.0
  %2190 = vmatpush1.msra.mxu0 0.0
  %2191 = vmatprep.subr.mxu0 0.0
  %2192 = vmatpush1.msra.mxu0 0.0
  %2193 = vmatprep.subr.mxu0 0.0
  %2194 = vmatpush1.msra.mxu0 0.0
  %2195 = vmatprep.subr.mxu0 0.0
  %2196 = vmatpush1.msra.mxu0 0.0
  %2197 = vmatprep.subr.mxu0 0.0
  %2198 = vmatpush1.msra.mxu0 0.0
  %2199 = vmatprep.subr.mxu0 0.0
  %2200 = vmatpush1.msra.mxu0 0.0
  %2201 = vmatprep.subr.mxu0 0.0
  %2202 = vmatpush1.msra.mxu0 0.0
  %2203 = vmatprep.subr.mxu0 0.0
  %2204 = vmatpush1.msra.mxu0 0.0
  %2205 = vmatprep.subr.mxu0 0.0
  %2206 = vmatpush1.msra.mxu0 0.0
  %2207 = vmatprep.subr.mxu0 0.0
  %2208 = vmatpush1.msra.mxu0 0.0
  %2209 = vmatprep.subr.mxu0 0.0
  %2210 = vmatpush1.msra.mxu0 0.0
  %2211 = vmatprep.subr.mxu0 0.0
  %2212 = vmatpush1.msra.mxu0 0.0
  %2213 = vmatprep.subr.mxu0 0.0
  %2214 = vmatpush1.msra.mxu0 0.0
  %2215 = vmatprep.mubr.f32.mxu0 0.0
  %2216 = vmatmul.mubr.f32.gmra.mrb[0].mxu0 %v2149
  %v2217 = vpop.f32.mrb[0].mxu0
  %v2218 = vadd.f32 %v308, %v2217
  %v2219 = vpop.f32.mrb[0].mxu0
  %2220 = vdwg.mxu0
  %v2221 = vld [vmem:[%s381] sm:$0x3]
  %v2222 = vld [vmem:[%s5] sm:$0x3]
  %v2223 = vadd.f32 %v2069, %v2143
  %v2224 = vxor.u32 %v2223, 2147483648
  %v2225 = vmul.f32 %v2224, 1.442695
  %v2226 = vpow.pop %v2225
  %v2227 = vadd.f32 %v2226, 1.0
  %v2228 = vrcp.pop %v2227
  %v2229 = vmul.f32 1.0, %v2228
  %2231 = vrot.lane.b32.xlu0 %v2143, 96
  %v2232 = vpop.permute.xlu0 %2231
  %v2234 = vmul.f32 %v2229, %v2232
  %2236 = vrot.lane.b32.xlu0 %v2234, 32
  %v2237 = vpop.permute.xlu0 %2236
  %v2239 = vadd.f32 %v2069, %v2237
  %v2240 = vtanh.pop %v2239
  %v2241 = vsub.f32 1.0, %v2229
  %2243 = vrot.lane.b32.xlu0 %v2240, 112
  %v2244 = vpop.permute.xlu0 %2243
  %v2246 = vmul.f32 %v2241, %v2244
  %v2247 = vmul.f32 %v2229, %v2027
  %v2248 = vadd.f32 %v2246, %v2247
  %v2249 = vadd.f32 %v2070, %v2218
  %v2250 = vxor.u32 %v2249, 2147483648
  %v2251 = vmul.f32 %v2250, 1.442695
  %v2252 = vpow.pop %v2251
  %v2253 = vadd.f32 %v2252, 1.0
  %v2254 = vrcp.pop %v2253
  %v2255 = vmul.f32 1.0, %v2254
  %2257 = vrot.lane.b32.xlu0 %v2218, 96
  %v2258 = vpop.permute.xlu0 %2257
  %v2260 = vmul.f32 %v2255, %v2258
  %2262 = vrot.lane.b32.xlu0 %v2260, 32
  %v2263 = vpop.permute.xlu0 %2262
  %v2265 = vadd.f32 %v2070, %v2263
  %v2266 = vtanh.pop %v2265
  %v2267 = vsub.f32 1.0, %v2255
  %2269 = vrot.lane.b32.xlu0 %v2266, 112
  %v2270 = vpop.permute.xlu0 %2269
  %v2272 = vmul.f32 %v2267, %v2270
  %v2273 = vmul.f32 %v2255, %v2041
  %v2274 = vadd.f32 %v2272, %v2273
  %2276 = vset.pattern.permute.xlu0 0
  %2277 = vperm.xlu0 %2276, %v2221
  %v2278 = vpop.permute.xlu0 %2277
  %v2280 = vmul.f32 %v2278, %v2248
  %v2281 = vsub.f32 1.0, %v2221
  %2283 = vset.pattern.permute.xlu0 0
  %2284 = vperm.xlu0 %2283, %v2281
  %v2285 = vpop.permute.xlu0 %2284
  %v2287 = vmul.f32 %v2285, %v2027
  %v2288 = vadd.f32 %v2280, %v2287
  %2290 = vset.pattern.permute.xlu0 0
  %2291 = vperm.xlu0 %2290, %v2222
  %v2292 = vpop.permute.xlu0 %2291
  %v2294 = vmul.f32 %v2292, %v2274
  %v2295 = vsub.f32 1.0, %v2222
  %2297 = vset.pattern.permute.xlu0 0
  %2298 = vperm.xlu0 %2297, %v2295
  %v2299 = vpop.permute.xlu0 %2298
  %v2301 = vmul.f32 %v2299, %v2041
  %v2302 = vadd.f32 %v2294, %v2301
  %v2303 = vmul.f32 %v2278, %v2288
  %v2304 = vmul.f32 %v2281, 0.0
  %2306 = vset.pattern.permute.xlu0 0
  %2307 = vperm.xlu0 %2306, %v2304
  %v2308 = vpop.permute.xlu0 %2307
  %v2310 = vadd.f32 %v2303, %v2308
  %2312 = vrot.lane.b32.xlu0 %v2310, 112
  %v2313 = vpop.permute.xlu0 %2312
  %2315 = vst.msk [vmem:[%s6 + $0xe] sm:$0x3] %vm475, %v2313
  %v2316 = vmul.f32 %v2292, %v2302
  %v2317 = vmul.f32 %v2295, 0.0
  %2319 = vset.pattern.permute.xlu0 0
  %2320 = vperm.xlu0 %2319, %v2317
  %v2321 = vpop.permute.xlu0 %2320
  %v2323 = vadd.f32 %v2316, %v2321
  %2325 = vrot.lane.b32.xlu0 %v2323, 112
  %v2326 = vpop.permute.xlu0 %2325
  %2328 = vst.msk [vmem:[%s7] sm:$0x3] %vm475, %v2326
  // Predicated region
  $region26: #{kobert_bigru_crf_forward.4} parent=0 // pred_check
    _
  $region27: #{kobert_bigru_crf_forward.4} parent=0 // pred_check_branch
    %2330 = sbr.rel (0) target = $region29
  $region28: #{kobert_bigru_crf_forward.4} parent=0 // pred_region
    _
  $region29: #{kobert_bigru_crf_forward.4} parent=0 // pred_fallthru
    _
  // Predicated region
  $region30: #{kobert_bigru_crf_forward.4} parent=0 // pred_check
    _
  $region31: #{kobert_bigru_crf_forward.4} parent=0 // pred_check_branch
    %2332 = sbr.rel (0) target = $region33
  $region32: #{kobert_bigru_crf_forward.4} parent=0 // pred_region
    _
  $region33: #{kobert_bigru_crf_forward.4} parent=0 // pred_fallthru
    _
  // Predicated region
  $region34: #{kobert_bigru_crf_forward.4} parent=0 // pred_check
    _
  $region35: #{kobert_bigru_crf_forward.4} parent=0 // pred_check_branch
    %2334 = sbr.rel (0) target = $region37
  $region36: #{kobert_bigru_crf_forward.4} parent=0 // pred_region
    _
  $region37: #{kobert_bigru_crf_forward.4} parent=0 // pred_fallthru
    _
  // Predicated region
  $region38: #{kobert_bigru_crf_forward.4} parent=0 // pred_check
    _
  $region39: #{kobert_bigru_crf_forward.4} parent=0 // pred_check_branch
    %2336 = sbr.rel (0) target = $region41
  $region40: #{kobert_bigru_crf_forward.4} parent=0 // pred_region
    _
  $region41: #{kobert_bigru_crf_forward.4} parent=0 // pred_fallthru
    _

</llo_original>
